<compile_context>
chip_gen: v7x
topology: tpu7x:2x2x1
jax: 0.10.0
libtpu: 0.0.40
codegen_flags: <defaults>
</compile_context>

<pallas_src>
import functools
import math

import jax
import jax.numpy as jnp
from jax.experimental import pallas as pl
from jax.experimental.pallas import tpu as pltpu


# Padded contraction (K) sizes for the three im2col matmuls.
_K1, _K2, _K3 = 32, 128, 256     # 9*3=27 -> 32, 9*10=90 -> 128, 9*16=144 -> 256


# ----------------------------- in-kernel helpers -----------------------------

def _im2col_conv3x3(x, p_ref, w_ref, b_ref):
    """VALID 3x3 conv as ONE im2col matmul.

    Each of the 9 taps is stored directly into its column slice of the bf16 VMEM
    scratch `p_ref` (no concatenate, no second patch copy).
    x: [TB,H,W,Cin]; p_ref: [TB*Ho*Wo, Kp] bf16; w_ref: [Kp,Cout] bf16 (rows beyond
    9*Cin are zero); b_ref: [1,Cout] f32.  Returns [TB*Ho*Wo, Cout] f32,
    rows ordered (tb, ho, wo) with wo fastest.
    """
    tb, H, W, cin = x.shape
    Ho, Wo = H - 2, W - 2
    M = tb * Ho * Wo
    K = 9 * cin
    Kp = p_ref.shape[1]
    if Kp > K:
        # Keep pad columns finite: stale VMEM could hold NaN/Inf and 0*NaN = NaN.
        p_ref[:, K:] = jnp.zeros((M, Kp - K), jnp.bfloat16)
    t = 0
    for ky in range(3):
        for kx in range(3):
            # TODO(synk): each shifted-window reshape still materializes a small
            #             relayout copy; a strip-by-strip builder would remove it.
            col = x[:, ky:ky + Ho, kx:kx + Wo, :].reshape(M, cin)
            p_ref[:, t * cin:(t + 1) * cin] = col.astype(jnp.bfloat16)
            t += 1
    acc = jnp.dot(p_ref[...], w_ref[...], preferred_element_type=jnp.float32)
    return acc + b_ref[...]


def _prelu(y, a_ref):
    """Per-channel PReLU on a [M, C] activation; a_ref: [1, C] f32."""
    a = a_ref[...]
    return jnp.where(y > 0, y, y * a)


def _maxpool_2x2_ceil(x):
    """MaxPool2d(kernel=2, stride=2, ceil_mode=True) on [TB,H,W,C] f32."""
    tb, H, W, C = x.shape
    Hp, Wp = (H + 1) // 2, (W + 1) // 2
    ph, pw = 2 * Hp - H, 2 * Wp - W
    if ph or pw:  # ceil_mode padding; statically skipped for even H/W
        x = jnp.pad(x, ((0, 0), (0, ph), (0, pw), (0, 0)),
                    constant_values=-jnp.inf)
    # H direction: leading-axis split + reduce (no sublane/lane regroup).
    x = x.reshape(tb, Hp, 2, 2 * Wp, C).max(axis=2)
    # W direction: one sublane-pair regroup, then a pairwise max.
    x = x.reshape(tb, Hp, Wp, 2, C).max(axis=3)
    return x


# --------------------------------- the kernel --------------------------------

def pnet_kernel(x_ref,
                w1_ref, b1_ref, a1_ref,
                w2_ref, b2_ref, a2_ref,
                w3_ref, b3_ref, a3_ref,
                w4_ref, b4_ref,
                out_ref,
                p1_ref, p2_ref, p3_ref, *, training):
    x = x_ref[...]                                            # [TB,H,W,3] bf16
    tb, H, W, _ = x.shape
    H1, W1 = H - 2, W - 2

    y = _prelu(_im2col_conv3x3(x, p1_ref, w1_ref, b1_ref), a1_ref)      # conv1+prelu1
    y = _maxpool_2x2_ceil(y.reshape(tb, H1, W1, 10))                    # maxpool1
    Hp, Wp = y.shape[1], y.shape[2]
    H2, W2 = Hp - 2, Wp - 2

    y = _prelu(_im2col_conv3x3(y, p2_ref, w2_ref, b2_ref), a2_ref)      # conv2+prelu2
    y = y.reshape(tb, H2, W2, 16)
    feat = _prelu(_im2col_conv3x3(y, p3_ref, w3_ref, b3_ref), a3_ref)   # conv3+prelu3
    H3, W3 = H2 - 2, W2 - 2
    S = H3 * W3
    # TODO(synk): self.feature_map attribute caching (stateful side effect) not exposed.

    # Fused 1x1 heads: columns 0:2 = prob, 2:6 = offset, 6:16 = landmark.
    heads = jnp.dot(feat.astype(jnp.bfloat16), w4_ref[...],
                    preferred_element_type=jnp.float32) + b4_ref[...]   # [TB*S,16]

    # Minor-dim swap so the store layout matches PyTorch's NCHW flatten order.
    out = jnp.transpose(heads.reshape(tb, S, 16), (0, 2, 1))            # [TB,16,S]

    if not training:
        # F.softmax over the flattened 2*H3*W3 prob vector, per batch element.
        prob = out[:, 0:2, :]
        m = prob.max(axis=2, keepdims=True).max(axis=1, keepdims=True)
        e = jnp.exp(prob - m)
        s = e.sum(axis=2, keepdims=True).sum(axis=1, keepdims=True)
        prob = e * pl.reciprocal(s, approx=True)
        out = jnp.concatenate([prob, out[:, 2:, :]], axis=1)

    # Single lane-dense full-block store (S padded to >=128 in out_shape).
    S_pad = out_ref.shape[2]
    if S_pad > S:
        out = jnp.pad(out, ((0, 0), (0, 0), (0, S_pad - S)))
    out_ref[...] = out


# --------------------------------- wrapper -----------------------------------

def _vmem_limit_bytes():
    # Generation-aware: ~3/4 of physical VMEM, capped; safe fallback for v7x (64 MiB).
    try:
        cap = int(pltpu.get_tpu_info().vmem_capacity_bytes)
        return max(32 * 1024 * 1024, min((cap * 3) // 4, 96 * 1024 * 1024))
    except Exception:
        return 48 * 1024 * 1024


@functools.partial(jax.jit, static_argnames=("training", "batch_block"))
def pnet_forward(x_nchw, packed_params, training=True, batch_block=8):
    B, C, H, W = x_nchw.shape
    assert C == 3

    tb = min(batch_block, B)
    grid_b = pl.cdiv(B, tb)
    if grid_b < 2 and B > 1:
        tb = pl.cdiv(B, 2)          # keep >=2 grid steps so both v7x TCs get work
        grid_b = pl.cdiv(B, tb)
    B_pad = grid_b * tb

    # NCHW -> NHWC once, shipped as bf16 (halves the per-step input DMA).
    x = jnp.transpose(x_nchw, (0, 2, 3, 1)).astype(jnp.bfloat16)
    if B_pad != B:
        x = jnp.pad(x, ((0, B_pad - B), (0, 0), (0, 0), (0, 0)))

    H1, W1 = H - 2, W - 2
    Hp, Wp = (H1 + 1) // 2, (W1 + 1) // 2
    H2, W2 = Hp - 2, Wp - 2
    H3, W3 = H2 - 2, W2 - 2
    S = H3 * W3
    S_pad = max(128, pl.cdiv(S, 128) * 128)

    def full_spec(arr):
        nd = arr.ndim
        return pl.BlockSpec(arr.shape, lambda b, _nd=nd: (0,) * _nd)

    in_specs = [pl.BlockSpec((tb, H, W, 3), lambda b: (b, 0, 0, 0))]
    in_specs += [full_spec(p) for p in packed_params]

    # TODO(synk): for large pyramid scales add an H-strip grid axis with 2-row halos.
    out = pl.pallas_call(
        functools.partial(pnet_kernel, training=training),
        out_shape=jax.ShapeDtypeStruct((B_pad, 16, S_pad), jnp.float32),
        grid_spec=pltpu.PrefetchScalarGridSpec(
            num_scalar_prefetch=0,
            grid=(grid_b,),
            in_specs=in_specs,
            out_specs=pl.BlockSpec((tb, 16, S_pad), lambda b: (b, 0, 0)),
            scratch_shapes=[
                pltpu.VMEM((tb * H1 * W1, _K1), jnp.bfloat16),   # conv1 patches
                pltpu.VMEM((tb * H2 * W2, _K2), jnp.bfloat16),   # conv2 patches
                pltpu.VMEM((tb * H3 * W3, _K3), jnp.bfloat16),   # conv3 patches
            ],
        ),
        compiler_params=pltpu.CompilerParams(
            dimension_semantics=("parallel",),
            vmem_limit_bytes=_vmem_limit_bytes(),
        ),
    )(x, *packed_params)

    out = out[:B, :, :S]
    # Channel-major layout already matches nn.Flatten over NCHW -> plain reshapes.
    prob = out[:, 0:2, :].reshape(B, 2 * S)
    off = out[:, 2:6, :].reshape(B, 4 * S)
    lmk = out[:, 6:16, :].reshape(B, 10 * S)
    return prob, off, lmk


# ------------------------ deterministic parameter init ------------------------

def init_pnet_params(key):
    """f32 params in natural (HWIO / vector) layouts, used by the reference."""
    ks = jax.random.split(key, 12)

    def conv_w(k, kh, kw, cin, cout):
        fan_in = kh * kw * cin
        return jax.random.normal(k, (kh, kw, cin, cout), jnp.float32) / math.sqrt(fan_in)

    def head_w(k, cin, cout):
        return jax.random.normal(k, (cin, cout), jnp.float32) / math.sqrt(cin)

    def bias(k, c):
        return jax.random.normal(k, (c,), jnp.float32) * 0.1

    def prelu_a(c):
        return jnp.full((c,), 0.25, jnp.float32)   # PyTorch PReLU default init

    return (
        conv_w(ks[0], 3, 3, 3, 10), bias(ks[1], 10), prelu_a(10),
        conv_w(ks[2], 3, 3, 10, 16), bias(ks[3], 16), prelu_a(16),
        conv_w(ks[4], 3, 3, 16, 32), bias(ks[5], 32), prelu_a(32),
        head_w(ks[6], 32, 2), bias(ks[7], 2),
        head_w(ks[8], 32, 4), bias(ks[9], 4),
        head_w(ks[10], 32, 10), bias(ks[11], 10),
    )


def pack_pnet_params(params):
    """Repack into kernel layouts: K-padded im2col weights (bf16), fused 1x1 head."""
    (w1, b1, a1, w2, b2, a2, w3, b3, a3,
     w41, b41, w42, b42, w43, b43) = params

    def cw(w, k_pad):   # [3,3,cin,cout] -> [k_pad, cout] bf16, zero-padded rows
        kh, kw, cin, cout = w.shape
        k = kh * kw * cin
        w2d = w.reshape(k, cout)
        w2d = jnp.pad(w2d, ((0, k_pad - k), (0, 0)))
        return w2d.astype(jnp.bfloat16)

    def vec(v):         # [c] -> [1, c] f32
        return v.reshape(1, -1).astype(jnp.float32)

    w4 = jnp.concatenate([w41, w42, w43], axis=1).astype(jnp.bfloat16)          # [32,16]
    b4 = jnp.concatenate([b41, b42, b43], axis=0).reshape(1, -1).astype(jnp.float32)
    return (cw(w1, _K1), vec(b1), vec(a1),
            cw(w2, _K2), vec(b2), vec(a2),
            cw(w3, _K3), vec(b3), vec(a3),
            w4, b4)


# --------------------------- pure-JAX reference check -------------------------

def pnet_reference(x_nchw, params, training=True):
    (w1, b1, a1, w2, b2, a2, w3, b3, a3,
     w41, b41, w42, b42, w43, b43) = params
    x = jnp.transpose(x_nchw, (0, 2, 3, 1)).astype(jnp.float32)

    def conv(v, w, b):
        y = jax.lax.conv_general_dilated(
            v, w, window_strides=(1, 1), padding="VALID",
            dimension_numbers=("NHWC", "HWIO", "NHWC"))
        return y + b.reshape(1, 1, 1, -1)

    def prelu(v, a):
        return jnp.where(v > 0, v, v * a.reshape(1, 1, 1, -1))

    y = prelu(conv(x, w1, b1), a1)
    # MaxPool2d(2, 2, ceil_mode=True); spatial dims are even here so VALID == ceil.
    y = jax.lax.reduce_window(y, -jnp.inf, jax.lax.max,
                              (1, 2, 2, 1), (1, 2, 2, 1), "VALID")
    y = prelu(conv(y, w2, b2), a2)
    feat = prelu(conv(y, w3, b3), a3)

    def head(w, b):
        o = jnp.einsum("bhwc,cf->bhwf", feat, w) + b.reshape(1, 1, 1, -1)
        return jnp.transpose(o, (0, 3, 1, 2)).reshape(o.shape[0], -1)

    prob = head(w41, b41)
    off = head(w42, b42)
    lmk = head(w43, b43)
    if not training:
        prob = jax.nn.softmax(prob, axis=1)
    return prob, off, lmk


# ----------------------------------- main -------------------------------------

if __name__ == "__main__":
    key = jax.random.PRNGKey(0)
    kx, kp = jax.random.split(key)
    x = jax.random.normal(kx, (2, 3, 16, 16), jnp.float32)   # [batch, 3, H, W]
    params = init_pnet_params(kp)
    packed = pack_pnet_params(params)

    def check(a, b, name):
        err = float(jnp.max(jnp.abs(a - b)))
        assert jnp.allclose(a, b, atol=2e-2, rtol=5e-2), (name, err)

    # eval mode (module.eval()) -> softmax branch of the PyTorch forward
    prob, off, lmk = pnet_forward(x, packed, training=False)
    jax.block_until_ready((prob, off, lmk))
    assert prob.shape == (2, 2 * 3 * 3)
    assert off.shape == (2, 4 * 3 * 3)
    assert lmk.shape == (2, 10 * 3 * 3)
    rp, ro, rl = pnet_reference(x, params, training=False)
    check(prob, rp, "prob")
    check(off, ro, "offset")
    check(lmk, rl, "landmark")

    # training mode (no softmax)
    tp, to, tl = pnet_forward(x, packed, training=True)
    jax.block_until_ready((tp, to, tl))
    rp, ro, rl = pnet_reference(x, params, training=True)
    check(tp, rp, "prob_train")
    check(to, ro, "offset_train")
    check(tl, rl, "landmark_train")

    print("KERNEL_OK")
</pallas_src>

<mosaic_0001>
module attributes {stable_mosaic.version = 11 : i64} {
  func.func @pnet_kernel(%arg0: i32, %arg1: memref<1x16x16x3xbf16, #tpu.memory_space<vmem>>, %arg2: memref<32x10xbf16, #tpu.memory_space<vmem>>, %arg3: memref<1x10xf32, #tpu.memory_space<vmem>>, %arg4: memref<1x10xf32, #tpu.memory_space<vmem>>, %arg5: memref<128x16xbf16, #tpu.memory_space<vmem>>, %arg6: memref<1x16xf32, #tpu.memory_space<vmem>>, %arg7: memref<1x16xf32, #tpu.memory_space<vmem>>, %arg8: memref<256x32xbf16, #tpu.memory_space<vmem>>, %arg9: memref<1x32xf32, #tpu.memory_space<vmem>>, %arg10: memref<1x32xf32, #tpu.memory_space<vmem>>, %arg11: memref<32x16xbf16, #tpu.memory_space<vmem>>, %arg12: memref<1x16xf32, #tpu.memory_space<vmem>>, %arg13: memref<1x16x128xf32, #tpu.memory_space<vmem>>, %arg14: memref<196x32xbf16, #tpu.memory_space<vmem>>, %arg15: memref<25x128xbf16, #tpu.memory_space<vmem>>, %arg16: memref<9x256xbf16, #tpu.memory_space<vmem>>) attributes {dimension_semantics = [#tpu.dimension_semantics<parallel>], iteration_bounds = array<i64: 2>, scalar_prefetch = 0 : i64, scratch_operands = 3 : i64, tpu.core_type = #tpu.core_type<tc>, window_params = [{transform_indices = @transform_0, window_bounds = array<i64: 1, 16, 16, 3>}, {pipeline_mode = #tpu.pipeline_mode<synchronous>, transform_indices = @transform_1, window_bounds = array<i64: 32, 10>}, {pipeline_mode = #tpu.pipeline_mode<synchronous>, transform_indices = @transform_2, window_bounds = array<i64: 1, 10>}, {pipeline_mode = #tpu.pipeline_mode<synchronous>, transform_indices = @transform_3, window_bounds = array<i64: 1, 10>}, {pipeline_mode = #tpu.pipeline_mode<synchronous>, transform_indices = @transform_4, window_bounds = array<i64: 128, 16>}, {pipeline_mode = #tpu.pipeline_mode<synchronous>, transform_indices = @transform_5, window_bounds = array<i64: 1, 16>}, {pipeline_mode = #tpu.pipeline_mode<synchronous>, transform_indices = @transform_6, window_bounds = array<i64: 1, 16>}, {pipeline_mode = #tpu.pipeline_mode<synchronous>, transform_indices = @transform_7, window_bounds = array<i64: 256, 32>}, {pipeline_mode = #tpu.pipeline_mode<synchronous>, transform_indices = @transform_8, window_bounds = array<i64: 1, 32>}, {pipeline_mode = #tpu.pipeline_mode<synchronous>, transform_indices = @transform_9, window_bounds = array<i64: 1, 32>}, {pipeline_mode = #tpu.pipeline_mode<synchronous>, transform_indices = @transform_10, window_bounds = array<i64: 32, 16>}, {pipeline_mode = #tpu.pipeline_mode<synchronous>, transform_indices = @transform_11, window_bounds = array<i64: 1, 16>}, {transform_indices = @transform_12, window_bounds = array<i64: 1, 16, 128>}]} {
    %c0 = arith.constant 0 : index
    %c0_0 = arith.constant 0 : index
    %c0_1 = arith.constant 0 : index
    %c0_2 = arith.constant 0 : index
    %0 = vector.load %arg1[%c0, %c0_0, %c0_1, %c0_2] : memref<1x16x16x3xbf16, #tpu.memory_space<vmem>>, vector<1x16x16x3xbf16>
    %cst = arith.constant 0.000000e+00 : bf16
    %1 = vector.broadcast %cst : bf16 to vector<196x5xbf16>
    %c0_3 = arith.constant 0 : index
    %c27 = arith.constant 27 : index
    %2 = vector.load %arg14[%c0_3, %c27] : memref<196x32xbf16, #tpu.memory_space<vmem>>, vector<196x5xbf16>
    tpu.vector_store %arg14[%c0_3, %c27], %1 {strides = array<i32>} : memref<196x32xbf16, #tpu.memory_space<vmem>>, vector<196x5xbf16>,
    %3 = vector.extract_strided_slice %0 {offsets = [0, 0, 0, 0], sizes = [1, 14, 14, 3], strides = [1, 1, 1, 1]} : vector<1x16x16x3xbf16> to vector<1x14x14x3xbf16>
    %4 = vector.shape_cast %3 : vector<1x14x14x3xbf16> to vector<196x3xbf16>
    %c0_4 = arith.constant 0 : index
    %c0_5 = arith.constant 0 : index
    %5 = vector.load %arg14[%c0_4, %c0_5] : memref<196x32xbf16, #tpu.memory_space<vmem>>, vector<196x3xbf16>
    tpu.vector_store %arg14[%c0_4, %c0_5], %4 {strides = array<i32>} : memref<196x32xbf16, #tpu.memory_space<vmem>>, vector<196x3xbf16>,
    %6 = vector.extract_strided_slice %0 {offsets = [0, 0, 1, 0], sizes = [1, 14, 14, 3], strides = [1, 1, 1, 1]} : vector<1x16x16x3xbf16> to vector<1x14x14x3xbf16>
    %7 = vector.shape_cast %6 : vector<1x14x14x3xbf16> to vector<196x3xbf16>
    %c0_6 = arith.constant 0 : index
    %c3 = arith.constant 3 : index
    %8 = vector.load %arg14[%c0_6, %c3] : memref<196x32xbf16, #tpu.memory_space<vmem>>, vector<196x3xbf16>
    tpu.vector_store %arg14[%c0_6, %c3], %7 {strides = array<i32>} : memref<196x32xbf16, #tpu.memory_space<vmem>>, vector<196x3xbf16>,
    %9 = vector.extract_strided_slice %0 {offsets = [0, 0, 2, 0], sizes = [1, 14, 14, 3], strides = [1, 1, 1, 1]} : vector<1x16x16x3xbf16> to vector<1x14x14x3xbf16>
    %10 = vector.shape_cast %9 : vector<1x14x14x3xbf16> to vector<196x3xbf16>
    %c0_7 = arith.constant 0 : index
    %c6 = arith.constant 6 : index
    %11 = vector.load %arg14[%c0_7, %c6] : memref<196x32xbf16, #tpu.memory_space<vmem>>, vector<196x3xbf16>
    tpu.vector_store %arg14[%c0_7, %c6], %10 {strides = array<i32>} : memref<196x32xbf16, #tpu.memory_space<vmem>>, vector<196x3xbf16>,
    %12 = vector.extract_strided_slice %0 {offsets = [0, 1, 0, 0], sizes = [1, 14, 14, 3], strides = [1, 1, 1, 1]} : vector<1x16x16x3xbf16> to vector<1x14x14x3xbf16>
    %13 = vector.shape_cast %12 : vector<1x14x14x3xbf16> to vector<196x3xbf16>
    %c0_8 = arith.constant 0 : index
    %c9 = arith.constant 9 : index
    %14 = vector.load %arg14[%c0_8, %c9] : memref<196x32xbf16, #tpu.memory_space<vmem>>, vector<196x3xbf16>
    tpu.vector_store %arg14[%c0_8, %c9], %13 {strides = array<i32>} : memref<196x32xbf16, #tpu.memory_space<vmem>>, vector<196x3xbf16>,
    %15 = vector.extract_strided_slice %0 {offsets = [0, 1, 1, 0], sizes = [1, 14, 14, 3], strides = [1, 1, 1, 1]} : vector<1x16x16x3xbf16> to vector<1x14x14x3xbf16>
    %16 = vector.shape_cast %15 : vector<1x14x14x3xbf16> to vector<196x3xbf16>
    %c0_9 = arith.constant 0 : index
    %c12 = arith.constant 12 : index
    %17 = vector.load %arg14[%c0_9, %c12] : memref<196x32xbf16, #tpu.memory_space<vmem>>, vector<196x3xbf16>
    tpu.vector_store %arg14[%c0_9, %c12], %16 {strides = array<i32>} : memref<196x32xbf16, #tpu.memory_space<vmem>>, vector<196x3xbf16>,
    %18 = vector.extract_strided_slice %0 {offsets = [0, 1, 2, 0], sizes = [1, 14, 14, 3], strides = [1, 1, 1, 1]} : vector<1x16x16x3xbf16> to vector<1x14x14x3xbf16>
    %19 = vector.shape_cast %18 : vector<1x14x14x3xbf16> to vector<196x3xbf16>
    %c0_10 = arith.constant 0 : index
    %c15 = arith.constant 15 : index
    %20 = vector.load %arg14[%c0_10, %c15] : memref<196x32xbf16, #tpu.memory_space<vmem>>, vector<196x3xbf16>
    tpu.vector_store %arg14[%c0_10, %c15], %19 {strides = array<i32>} : memref<196x32xbf16, #tpu.memory_space<vmem>>, vector<196x3xbf16>,
    %21 = vector.extract_strided_slice %0 {offsets = [0, 2, 0, 0], sizes = [1, 14, 14, 3], strides = [1, 1, 1, 1]} : vector<1x16x16x3xbf16> to vector<1x14x14x3xbf16>
    %22 = vector.shape_cast %21 : vector<1x14x14x3xbf16> to vector<196x3xbf16>
    %c0_11 = arith.constant 0 : index
    %c18 = arith.constant 18 : index
    %23 = vector.load %arg14[%c0_11, %c18] : memref<196x32xbf16, #tpu.memory_space<vmem>>, vector<196x3xbf16>
    tpu.vector_store %arg14[%c0_11, %c18], %22 {strides = array<i32>} : memref<196x32xbf16, #tpu.memory_space<vmem>>, vector<196x3xbf16>,
    %24 = vector.extract_strided_slice %0 {offsets = [0, 2, 1, 0], sizes = [1, 14, 14, 3], strides = [1, 1, 1, 1]} : vector<1x16x16x3xbf16> to vector<1x14x14x3xbf16>
    %25 = vector.shape_cast %24 : vector<1x14x14x3xbf16> to vector<196x3xbf16>
    %c0_12 = arith.constant 0 : index
    %c21 = arith.constant 21 : index
    %26 = vector.load %arg14[%c0_12, %c21] : memref<196x32xbf16, #tpu.memory_space<vmem>>, vector<196x3xbf16>
    tpu.vector_store %arg14[%c0_12, %c21], %25 {strides = array<i32>} : memref<196x32xbf16, #tpu.memory_space<vmem>>, vector<196x3xbf16>,
    %27 = vector.extract_strided_slice %0 {offsets = [0, 2, 2, 0], sizes = [1, 14, 14, 3], strides = [1, 1, 1, 1]} : vector<1x16x16x3xbf16> to vector<1x14x14x3xbf16>
    %28 = vector.shape_cast %27 : vector<1x14x14x3xbf16> to vector<196x3xbf16>
    %c0_13 = arith.constant 0 : index
    %c24 = arith.constant 24 : index
    %29 = vector.load %arg14[%c0_13, %c24] : memref<196x32xbf16, #tpu.memory_space<vmem>>, vector<196x3xbf16>
    tpu.vector_store %arg14[%c0_13, %c24], %28 {strides = array<i32>} : memref<196x32xbf16, #tpu.memory_space<vmem>>, vector<196x3xbf16>,
    %c0_14 = arith.constant 0 : index
    %c0_15 = arith.constant 0 : index
    %30 = vector.load %arg14[%c0_14, %c0_15] : memref<196x32xbf16, #tpu.memory_space<vmem>>, vector<196x32xbf16>
    %c0_16 = arith.constant 0 : index
    %c0_17 = arith.constant 0 : index
    %31 = vector.load %arg2[%c0_16, %c0_17] : memref<32x10xbf16, #tpu.memory_space<vmem>>, vector<32x10xbf16>
    %cst_18 = arith.constant dense<0.000000e+00> : vector<196x10xf32>
    %32 = tpu.matmul %30, %31, %cst_18 {dimension_numbers = #tpu.dot_dimension_numbers<[1], [0], [0], [1], [0, 0, 1, 1], [], []>} : vector<196x32xbf16>, vector<32x10xbf16>, vector<196x10xf32> -> vector<196x10xf32>
    %c0_19 = arith.constant 0 : index
    %c0_20 = arith.constant 0 : index
    %33 = vector.load %arg3[%c0_19, %c0_20] : memref<1x10xf32, #tpu.memory_space<vmem>>, vector<1x10xf32>
    %34 = vector.broadcast %33 : vector<1x10xf32> to vector<196x10xf32>
    %35 = arith.addf %32, %34 : vector<196x10xf32>
    %c0_21 = arith.constant 0 : index
    %c0_22 = arith.constant 0 : index
    %36 = vector.load %arg4[%c0_21, %c0_22] : memref<1x10xf32, #tpu.memory_space<vmem>>, vector<1x10xf32>
    %cst_23 = arith.constant 0.000000e+00 : f32
    %37 = vector.broadcast %cst_23 : f32 to vector<196x10xf32>
    %38 = arith.cmpf ogt, %35, %37 : vector<196x10xf32>
    %39 = vector.broadcast %36 : vector<1x10xf32> to vector<196x10xf32>
    %40 = arith.mulf %35, %39 : vector<196x10xf32>
    %41 = arith.select %38, %35, %40 : vector<196x10xi1>, vector<196x10xf32>
    %42 = vector.shape_cast %41 : vector<196x10xf32> to vector<1x14x14x10xf32>
    %43 = vector.shape_cast %42 : vector<1x14x14x10xf32> to vector<1x7x2x14x10xf32>
    %cst_24 = arith.constant dense<0xFF800000> : vector<1x7x14x10xf32>
    %44 = vector.multi_reduction <maximumf>, %43, %cst_24 [2] : vector<1x7x2x14x10xf32> to vector<1x7x14x10xf32>
    %45 = vector.shape_cast %44 : vector<1x7x14x10xf32> to vector<1x7x7x2x10xf32>
    %cst_25 = arith.constant dense<0xFF800000> : vector<1x7x7x10xf32>
    %46 = vector.multi_reduction <maximumf>, %45, %cst_25 [3] : vector<1x7x7x2x10xf32> to vector<1x7x7x10xf32>
    %cst_26 = arith.constant 0.000000e+00 : bf16
    %47 = vector.broadcast %cst_26 : bf16 to vector<25x38xbf16>
    %c0_27 = arith.constant 0 : index
    %c90 = arith.constant 90 : index
    %48 = vector.load %arg15[%c0_27, %c90] : memref<25x128xbf16, #tpu.memory_space<vmem>>, vector<25x38xbf16>
    tpu.vector_store %arg15[%c0_27, %c90], %47 {strides = array<i32>} : memref<25x128xbf16, #tpu.memory_space<vmem>>, vector<25x38xbf16>,
    %49 = vector.extract_strided_slice %46 {offsets = [0, 0, 0, 0], sizes = [1, 5, 5, 10], strides = [1, 1, 1, 1]} : vector<1x7x7x10xf32> to vector<1x5x5x10xf32>
    %50 = vector.shape_cast %49 : vector<1x5x5x10xf32> to vector<25x10xf32>
    %51 = arith.truncf %50 : vector<25x10xf32> to vector<25x10xbf16>
    %c0_28 = arith.constant 0 : index
    %c0_29 = arith.constant 0 : index
    %52 = vector.load %arg15[%c0_28, %c0_29] : memref<25x128xbf16, #tpu.memory_space<vmem>>, vector<25x10xbf16>
    tpu.vector_store %arg15[%c0_28, %c0_29], %51 {strides = array<i32>} : memref<25x128xbf16, #tpu.memory_space<vmem>>, vector<25x10xbf16>,
    %53 = vector.extract_strided_slice %46 {offsets = [0, 0, 1, 0], sizes = [1, 5, 5, 10], strides = [1, 1, 1, 1]} : vector<1x7x7x10xf32> to vector<1x5x5x10xf32>
    %54 = vector.shape_cast %53 : vector<1x5x5x10xf32> to vector<25x10xf32>
    %55 = arith.truncf %54 : vector<25x10xf32> to vector<25x10xbf16>
    %c0_30 = arith.constant 0 : index
    %c10 = arith.constant 10 : index
    %56 = vector.load %arg15[%c0_30, %c10] : memref<25x128xbf16, #tpu.memory_space<vmem>>, vector<25x10xbf16>
    tpu.vector_store %arg15[%c0_30, %c10], %55 {strides = array<i32>} : memref<25x128xbf16, #tpu.memory_space<vmem>>, vector<25x10xbf16>,
    %57 = vector.extract_strided_slice %46 {offsets = [0, 0, 2, 0], sizes = [1, 5, 5, 10], strides = [1, 1, 1, 1]} : vector<1x7x7x10xf32> to vector<1x5x5x10xf32>
    %58 = vector.shape_cast %57 : vector<1x5x5x10xf32> to vector<25x10xf32>
    %59 = arith.truncf %58 : vector<25x10xf32> to vector<25x10xbf16>
    %c0_31 = arith.constant 0 : index
    %c20 = arith.constant 20 : index
    %60 = vector.load %arg15[%c0_31, %c20] : memref<25x128xbf16, #tpu.memory_space<vmem>>, vector<25x10xbf16>
    tpu.vector_store %arg15[%c0_31, %c20], %59 {strides = array<i32>} : memref<25x128xbf16, #tpu.memory_space<vmem>>, vector<25x10xbf16>,
    %61 = vector.extract_strided_slice %46 {offsets = [0, 1, 0, 0], sizes = [1, 5, 5, 10], strides = [1, 1, 1, 1]} : vector<1x7x7x10xf32> to vector<1x5x5x10xf32>
    %62 = vector.shape_cast %61 : vector<1x5x5x10xf32> to vector<25x10xf32>
    %63 = arith.truncf %62 : vector<25x10xf32> to vector<25x10xbf16>
    %c0_32 = arith.constant 0 : index
    %c30 = arith.constant 30 : index
    %64 = vector.load %arg15[%c0_32, %c30] : memref<25x128xbf16, #tpu.memory_space<vmem>>, vector<25x10xbf16>
    tpu.vector_store %arg15[%c0_32, %c30], %63 {strides = array<i32>} : memref<25x128xbf16, #tpu.memory_space<vmem>>, vector<25x10xbf16>,
    %65 = vector.extract_strided_slice %46 {offsets = [0, 1, 1, 0], sizes = [1, 5, 5, 10], strides = [1, 1, 1, 1]} : vector<1x7x7x10xf32> to vector<1x5x5x10xf32>
    %66 = vector.shape_cast %65 : vector<1x5x5x10xf32> to vector<25x10xf32>
    %67 = arith.truncf %66 : vector<25x10xf32> to vector<25x10xbf16>
    %c0_33 = arith.constant 0 : index
    %c40 = arith.constant 40 : index
    %68 = vector.load %arg15[%c0_33, %c40] : memref<25x128xbf16, #tpu.memory_space<vmem>>, vector<25x10xbf16>
    tpu.vector_store %arg15[%c0_33, %c40], %67 {strides = array<i32>} : memref<25x128xbf16, #tpu.memory_space<vmem>>, vector<25x10xbf16>,
    %69 = vector.extract_strided_slice %46 {offsets = [0, 1, 2, 0], sizes = [1, 5, 5, 10], strides = [1, 1, 1, 1]} : vector<1x7x7x10xf32> to vector<1x5x5x10xf32>
    %70 = vector.shape_cast %69 : vector<1x5x5x10xf32> to vector<25x10xf32>
    %71 = arith.truncf %70 : vector<25x10xf32> to vector<25x10xbf16>
    %c0_34 = arith.constant 0 : index
    %c50 = arith.constant 50 : index
    %72 = vector.load %arg15[%c0_34, %c50] : memref<25x128xbf16, #tpu.memory_space<vmem>>, vector<25x10xbf16>
    tpu.vector_store %arg15[%c0_34, %c50], %71 {strides = array<i32>} : memref<25x128xbf16, #tpu.memory_space<vmem>>, vector<25x10xbf16>,
    %73 = vector.extract_strided_slice %46 {offsets = [0, 2, 0, 0], sizes = [1, 5, 5, 10], strides = [1, 1, 1, 1]} : vector<1x7x7x10xf32> to vector<1x5x5x10xf32>
    %74 = vector.shape_cast %73 : vector<1x5x5x10xf32> to vector<25x10xf32>
    %75 = arith.truncf %74 : vector<25x10xf32> to vector<25x10xbf16>
    %c0_35 = arith.constant 0 : index
    %c60 = arith.constant 60 : index
    %76 = vector.load %arg15[%c0_35, %c60] : memref<25x128xbf16, #tpu.memory_space<vmem>>, vector<25x10xbf16>
    tpu.vector_store %arg15[%c0_35, %c60], %75 {strides = array<i32>} : memref<25x128xbf16, #tpu.memory_space<vmem>>, vector<25x10xbf16>,
    %77 = vector.extract_strided_slice %46 {offsets = [0, 2, 1, 0], sizes = [1, 5, 5, 10], strides = [1, 1, 1, 1]} : vector<1x7x7x10xf32> to vector<1x5x5x10xf32>
    %78 = vector.shape_cast %77 : vector<1x5x5x10xf32> to vector<25x10xf32>
    %79 = arith.truncf %78 : vector<25x10xf32> to vector<25x10xbf16>
    %c0_36 = arith.constant 0 : index
    %c70 = arith.constant 70 : index
    %80 = vector.load %arg15[%c0_36, %c70] : memref<25x128xbf16, #tpu.memory_space<vmem>>, vector<25x10xbf16>
    tpu.vector_store %arg15[%c0_36, %c70], %79 {strides = array<i32>} : memref<25x128xbf16, #tpu.memory_space<vmem>>, vector<25x10xbf16>,
    %81 = vector.extract_strided_slice %46 {offsets = [0, 2, 2, 0], sizes = [1, 5, 5, 10], strides = [1, 1, 1, 1]} : vector<1x7x7x10xf32> to vector<1x5x5x10xf32>
    %82 = vector.shape_cast %81 : vector<1x5x5x10xf32> to vector<25x10xf32>
    %83 = arith.truncf %82 : vector<25x10xf32> to vector<25x10xbf16>
    %c0_37 = arith.constant 0 : index
    %c80 = arith.constant 80 : index
    %84 = vector.load %arg15[%c0_37, %c80] : memref<25x128xbf16, #tpu.memory_space<vmem>>, vector<25x10xbf16>
    tpu.vector_store %arg15[%c0_37, %c80], %83 {strides = array<i32>} : memref<25x128xbf16, #tpu.memory_space<vmem>>, vector<25x10xbf16>,
    %c0_38 = arith.constant 0 : index
    %c0_39 = arith.constant 0 : index
    %85 = vector.load %arg15[%c0_38, %c0_39] : memref<25x128xbf16, #tpu.memory_space<vmem>>, vector<25x128xbf16>
    %c0_40 = arith.constant 0 : index
    %c0_41 = arith.constant 0 : index
    %86 = vector.load %arg5[%c0_40, %c0_41] : memref<128x16xbf16, #tpu.memory_space<vmem>>, vector<128x16xbf16>
    %cst_42 = arith.constant dense<0.000000e+00> : vector<25x16xf32>
    %87 = tpu.matmul %85, %86, %cst_42 {dimension_numbers = #tpu.dot_dimension_numbers<[1], [0], [0], [1], [0, 0, 1, 1], [], []>} : vector<25x128xbf16>, vector<128x16xbf16>, vector<25x16xf32> -> vector<25x16xf32>
    %c0_43 = arith.constant 0 : index
    %c0_44 = arith.constant 0 : index
    %88 = vector.load %arg6[%c0_43, %c0_44] : memref<1x16xf32, #tpu.memory_space<vmem>>, vector<1x16xf32>
    %89 = vector.broadcast %88 : vector<1x16xf32> to vector<25x16xf32>
    %90 = arith.addf %87, %89 : vector<25x16xf32>
    %c0_45 = arith.constant 0 : index
    %c0_46 = arith.constant 0 : index
    %91 = vector.load %arg7[%c0_45, %c0_46] : memref<1x16xf32, #tpu.memory_space<vmem>>, vector<1x16xf32>
    %cst_47 = arith.constant 0.000000e+00 : f32
    %92 = vector.broadcast %cst_47 : f32 to vector<25x16xf32>
    %93 = arith.cmpf ogt, %90, %92 : vector<25x16xf32>
    %94 = vector.broadcast %91 : vector<1x16xf32> to vector<25x16xf32>
    %95 = arith.mulf %90, %94 : vector<25x16xf32>
    %96 = arith.select %93, %90, %95 : vector<25x16xi1>, vector<25x16xf32>
    %97 = vector.shape_cast %96 : vector<25x16xf32> to vector<1x5x5x16xf32>
    %cst_48 = arith.constant 0.000000e+00 : bf16
    %98 = vector.broadcast %cst_48 : bf16 to vector<9x112xbf16>
    %c0_49 = arith.constant 0 : index
    %c144 = arith.constant 144 : index
    %99 = vector.load %arg16[%c0_49, %c144] : memref<9x256xbf16, #tpu.memory_space<vmem>>, vector<9x112xbf16>
    tpu.vector_store %arg16[%c0_49, %c144], %98 {strides = array<i32>} : memref<9x256xbf16, #tpu.memory_space<vmem>>, vector<9x112xbf16>,
    %100 = vector.extract_strided_slice %97 {offsets = [0, 0, 0, 0], sizes = [1, 3, 3, 16], strides = [1, 1, 1, 1]} : vector<1x5x5x16xf32> to vector<1x3x3x16xf32>
    %101 = vector.shape_cast %100 : vector<1x3x3x16xf32> to vector<9x16xf32>
    %102 = arith.truncf %101 : vector<9x16xf32> to vector<9x16xbf16>
    %c0_50 = arith.constant 0 : index
    %c0_51 = arith.constant 0 : index
    %103 = vector.load %arg16[%c0_50, %c0_51] : memref<9x256xbf16, #tpu.memory_space<vmem>>, vector<9x16xbf16>
    tpu.vector_store %arg16[%c0_50, %c0_51], %102 {strides = array<i32>} : memref<9x256xbf16, #tpu.memory_space<vmem>>, vector<9x16xbf16>,
    %104 = vector.extract_strided_slice %97 {offsets = [0, 0, 1, 0], sizes = [1, 3, 3, 16], strides = [1, 1, 1, 1]} : vector<1x5x5x16xf32> to vector<1x3x3x16xf32>
    %105 = vector.shape_cast %104 : vector<1x3x3x16xf32> to vector<9x16xf32>
    %106 = arith.truncf %105 : vector<9x16xf32> to vector<9x16xbf16>
    %c0_52 = arith.constant 0 : index
    %c16 = arith.constant 16 : index
    %107 = vector.load %arg16[%c0_52, %c16] : memref<9x256xbf16, #tpu.memory_space<vmem>>, vector<9x16xbf16>
    tpu.vector_store %arg16[%c0_52, %c16], %106 {strides = array<i32>} : memref<9x256xbf16, #tpu.memory_space<vmem>>, vector<9x16xbf16>,
    %108 = vector.extract_strided_slice %97 {offsets = [0, 0, 2, 0], sizes = [1, 3, 3, 16], strides = [1, 1, 1, 1]} : vector<1x5x5x16xf32> to vector<1x3x3x16xf32>
    %109 = vector.shape_cast %108 : vector<1x3x3x16xf32> to vector<9x16xf32>
    %110 = arith.truncf %109 : vector<9x16xf32> to vector<9x16xbf16>
    %c0_53 = arith.constant 0 : index
    %c32 = arith.constant 32 : index
    %111 = vector.load %arg16[%c0_53, %c32] : memref<9x256xbf16, #tpu.memory_space<vmem>>, vector<9x16xbf16>
    tpu.vector_store %arg16[%c0_53, %c32], %110 {strides = array<i32>} : memref<9x256xbf16, #tpu.memory_space<vmem>>, vector<9x16xbf16>,
    %112 = vector.extract_strided_slice %97 {offsets = [0, 1, 0, 0], sizes = [1, 3, 3, 16], strides = [1, 1, 1, 1]} : vector<1x5x5x16xf32> to vector<1x3x3x16xf32>
    %113 = vector.shape_cast %112 : vector<1x3x3x16xf32> to vector<9x16xf32>
    %114 = arith.truncf %113 : vector<9x16xf32> to vector<9x16xbf16>
    %c0_54 = arith.constant 0 : index
    %c48 = arith.constant 48 : index
    %115 = vector.load %arg16[%c0_54, %c48] : memref<9x256xbf16, #tpu.memory_space<vmem>>, vector<9x16xbf16>
    tpu.vector_store %arg16[%c0_54, %c48], %114 {strides = array<i32>} : memref<9x256xbf16, #tpu.memory_space<vmem>>, vector<9x16xbf16>,
    %116 = vector.extract_strided_slice %97 {offsets = [0, 1, 1, 0], sizes = [1, 3, 3, 16], strides = [1, 1, 1, 1]} : vector<1x5x5x16xf32> to vector<1x3x3x16xf32>
    %117 = vector.shape_cast %116 : vector<1x3x3x16xf32> to vector<9x16xf32>
    %118 = arith.truncf %117 : vector<9x16xf32> to vector<9x16xbf16>
    %c0_55 = arith.constant 0 : index
    %c64 = arith.constant 64 : index
    %119 = vector.load %arg16[%c0_55, %c64] : memref<9x256xbf16, #tpu.memory_space<vmem>>, vector<9x16xbf16>
    tpu.vector_store %arg16[%c0_55, %c64], %118 {strides = array<i32>} : memref<9x256xbf16, #tpu.memory_space<vmem>>, vector<9x16xbf16>,
    %120 = vector.extract_strided_slice %97 {offsets = [0, 1, 2, 0], sizes = [1, 3, 3, 16], strides = [1, 1, 1, 1]} : vector<1x5x5x16xf32> to vector<1x3x3x16xf32>
    %121 = vector.shape_cast %120 : vector<1x3x3x16xf32> to vector<9x16xf32>
    %122 = arith.truncf %121 : vector<9x16xf32> to vector<9x16xbf16>
    %c0_56 = arith.constant 0 : index
    %c80_57 = arith.constant 80 : index
    %123 = vector.load %arg16[%c0_56, %c80_57] : memref<9x256xbf16, #tpu.memory_space<vmem>>, vector<9x16xbf16>
    tpu.vector_store %arg16[%c0_56, %c80_57], %122 {strides = array<i32>} : memref<9x256xbf16, #tpu.memory_space<vmem>>, vector<9x16xbf16>,
    %124 = vector.extract_strided_slice %97 {offsets = [0, 2, 0, 0], sizes = [1, 3, 3, 16], strides = [1, 1, 1, 1]} : vector<1x5x5x16xf32> to vector<1x3x3x16xf32>
    %125 = vector.shape_cast %124 : vector<1x3x3x16xf32> to vector<9x16xf32>
    %126 = arith.truncf %125 : vector<9x16xf32> to vector<9x16xbf16>
    %c0_58 = arith.constant 0 : index
    %c96 = arith.constant 96 : index
    %127 = vector.load %arg16[%c0_58, %c96] : memref<9x256xbf16, #tpu.memory_space<vmem>>, vector<9x16xbf16>
    tpu.vector_store %arg16[%c0_58, %c96], %126 {strides = array<i32>} : memref<9x256xbf16, #tpu.memory_space<vmem>>, vector<9x16xbf16>,
    %128 = vector.extract_strided_slice %97 {offsets = [0, 2, 1, 0], sizes = [1, 3, 3, 16], strides = [1, 1, 1, 1]} : vector<1x5x5x16xf32> to vector<1x3x3x16xf32>
    %129 = vector.shape_cast %128 : vector<1x3x3x16xf32> to vector<9x16xf32>
    %130 = arith.truncf %129 : vector<9x16xf32> to vector<9x16xbf16>
    %c0_59 = arith.constant 0 : index
    %c112 = arith.constant 112 : index
    %131 = vector.load %arg16[%c0_59, %c112] : memref<9x256xbf16, #tpu.memory_space<vmem>>, vector<9x16xbf16>
    tpu.vector_store %arg16[%c0_59, %c112], %130 {strides = array<i32>} : memref<9x256xbf16, #tpu.memory_space<vmem>>, vector<9x16xbf16>,
    %132 = vector.extract_strided_slice %97 {offsets = [0, 2, 2, 0], sizes = [1, 3, 3, 16], strides = [1, 1, 1, 1]} : vector<1x5x5x16xf32> to vector<1x3x3x16xf32>
    %133 = vector.shape_cast %132 : vector<1x3x3x16xf32> to vector<9x16xf32>
    %134 = arith.truncf %133 : vector<9x16xf32> to vector<9x16xbf16>
    %c0_60 = arith.constant 0 : index
    %c128 = arith.constant 128 : index
    %135 = vector.load %arg16[%c0_60, %c128] : memref<9x256xbf16, #tpu.memory_space<vmem>>, vector<9x16xbf16>
    tpu.vector_store %arg16[%c0_60, %c128], %134 {strides = array<i32>} : memref<9x256xbf16, #tpu.memory_space<vmem>>, vector<9x16xbf16>,
    %c0_61 = arith.constant 0 : index
    %c0_62 = arith.constant 0 : index
    %136 = vector.load %arg16[%c0_61, %c0_62] : memref<9x256xbf16, #tpu.memory_space<vmem>>, vector<9x256xbf16>
    %c0_63 = arith.constant 0 : index
    %c0_64 = arith.constant 0 : index
    %137 = vector.load %arg8[%c0_63, %c0_64] : memref<256x32xbf16, #tpu.memory_space<vmem>>, vector<256x32xbf16>
    %cst_65 = arith.constant dense<0.000000e+00> : vector<9x32xf32>
    %138 = tpu.matmul %136, %137, %cst_65 {dimension_numbers = #tpu.dot_dimension_numbers<[1], [0], [0], [1], [0, 0, 1, 1], [], []>} : vector<9x256xbf16>, vector<256x32xbf16>, vector<9x32xf32> -> vector<9x32xf32>
    %c0_66 = arith.constant 0 : index
    %c0_67 = arith.constant 0 : index
    %139 = vector.load %arg9[%c0_66, %c0_67] : memref<1x32xf32, #tpu.memory_space<vmem>>, vector<1x32xf32>
    %140 = vector.broadcast %139 : vector<1x32xf32> to vector<9x32xf32>
    %141 = arith.addf %138, %140 : vector<9x32xf32>
    %c0_68 = arith.constant 0 : index
    %c0_69 = arith.constant 0 : index
    %142 = vector.load %arg10[%c0_68, %c0_69] : memref<1x32xf32, #tpu.memory_space<vmem>>, vector<1x32xf32>
    %cst_70 = arith.constant 0.000000e+00 : f32
    %143 = vector.broadcast %cst_70 : f32 to vector<9x32xf32>
    %144 = arith.cmpf ogt, %141, %143 : vector<9x32xf32>
    %145 = vector.broadcast %142 : vector<1x32xf32> to vector<9x32xf32>
    %146 = arith.mulf %141, %145 : vector<9x32xf32>
    %147 = arith.select %144, %141, %146 : vector<9x32xi1>, vector<9x32xf32>
    %148 = arith.truncf %147 : vector<9x32xf32> to vector<9x32xbf16>
    %c0_71 = arith.constant 0 : index
    %c0_72 = arith.constant 0 : index
    %149 = vector.load %arg11[%c0_71, %c0_72] : memref<32x16xbf16, #tpu.memory_space<vmem>>, vector<32x16xbf16>
    %cst_73 = arith.constant dense<0.000000e+00> : vector<9x16xf32>
    %150 = tpu.matmul %148, %149, %cst_73 {dimension_numbers = #tpu.dot_dimension_numbers<[1], [0], [0], [1], [0, 0, 1, 1], [], []>} : vector<9x32xbf16>, vector<32x16xbf16>, vector<9x16xf32> -> vector<9x16xf32>
    %c0_74 = arith.constant 0 : index
    %c0_75 = arith.constant 0 : index
    %151 = vector.load %arg12[%c0_74, %c0_75] : memref<1x16xf32, #tpu.memory_space<vmem>>, vector<1x16xf32>
    %152 = vector.broadcast %151 : vector<1x16xf32> to vector<9x16xf32>
    %153 = arith.addf %150, %152 : vector<9x16xf32>
    %154 = vector.shape_cast %153 : vector<9x16xf32> to vector<1x9x16xf32>
    %155 = tpu.transpose %154, [0, 2, 1] : vector<1x9x16xf32> -> vector<1x16x9xf32>
    %156 = vector.extract_strided_slice %155 {offsets = [0, 0, 0], sizes = [1, 2, 9], strides = [1, 1, 1]} : vector<1x16x9xf32> to vector<1x2x9xf32>
    %cst_76 = arith.constant dense<0xFF800000> : vector<1x2xf32>
    %157 = vector.multi_reduction <maximumf>, %156, %cst_76 [2] : vector<1x2x9xf32> to vector<1x2xf32>
    %158 = vector.shape_cast %157 : vector<1x2xf32> to vector<1x2x1xf32>
    %cst_77 = arith.constant dense<0xFF800000> : vector<1x1xf32>
    %159 = vector.multi_reduction <maximumf>, %158, %cst_77 [1] : vector<1x2x1xf32> to vector<1x1xf32>
    %160 = vector.shape_cast %159 : vector<1x1xf32> to vector<1x1x1xf32>
    %161 = vector.broadcast %160 : vector<1x1x1xf32> to vector<1x2x9xf32>
    %162 = arith.subf %156, %161 : vector<1x2x9xf32>
    %163 = math.exp %162 : vector<1x2x9xf32>
    %cst_78 = arith.constant dense<0.000000e+00> : vector<1x2xf32>
    %164 = vector.multi_reduction <add>, %163, %cst_78 [2] : vector<1x2x9xf32> to vector<1x2xf32>
    %165 = vector.shape_cast %164 : vector<1x2xf32> to vector<1x2x1xf32>
    %cst_79 = arith.constant dense<0.000000e+00> : vector<1x1xf32>
    %166 = vector.multi_reduction <add>, %165, %cst_79 [1] : vector<1x2x1xf32> to vector<1x1xf32>
    %167 = vector.shape_cast %166 : vector<1x1xf32> to vector<1x1x1xf32>
    %168 = tpu.reciprocal %167 {approx = true} : vector<1x1x1xf32> -> vector<1x1x1xf32>
    %169 = vector.broadcast %168 : vector<1x1x1xf32> to vector<1x2x9xf32>
    %170 = arith.mulf %163, %169 : vector<1x2x9xf32>
    %171 = vector.extract_strided_slice %155 {offsets = [0, 2, 0], sizes = [1, 14, 9], strides = [1, 1, 1]} : vector<1x16x9xf32> to vector<1x14x9xf32>
    %172 = tpu.concatenate %170, %171 in 1 : vector<1x2x9xf32>, vector<1x14x9xf32> -> vector<1x16x9xf32>
    %c0_i32 = arith.constant 0 : i32
    %173 = arith.sitofp %c0_i32 : i32 to f32
    %174 = vector.broadcast %173 : f32 to vector<1x16x119xf32>
    %175 = tpu.concatenate %172, %174 in 2 : vector<1x16x9xf32>, vector<1x16x119xf32> -> vector<1x16x128xf32>
    %c0_80 = arith.constant 0 : index
    %c0_81 = arith.constant 0 : index
    %c0_82 = arith.constant 0 : index
    %176 = vector.load %arg13[%c0_80, %c0_81, %c0_82] : memref<1x16x128xf32, #tpu.memory_space<vmem>>, vector<1x16x128xf32>
    tpu.vector_store %arg13[%c0_80, %c0_81, %c0_82], %175 {strides = array<i32>} : memref<1x16x128xf32, #tpu.memory_space<vmem>>, vector<1x16x128xf32>,
    return
  }
  func.func @transform_0(%arg0: i32) -> (i32, i32, i32, i32) {
    %c0_i32 = arith.constant 0 : i32
    %c0_i32_0 = arith.constant 0 : i32
    %c0_i32_1 = arith.constant 0 : i32
    %c0_i32_2 = arith.constant 0 : i32
    return %arg0, %c0_i32, %c0_i32_0, %c0_i32_1 : i32, i32, i32, i32
  }
  func.func @transform_1(%arg0: i32) -> (i32, i32) {
    %c0_i32 = arith.constant 0 : i32
    %c0_i32_0 = arith.constant 0 : i32
    %c0_i32_1 = arith.constant 0 : i32
    return %c0_i32, %c0_i32_0 : i32, i32
  }
  func.func @transform_2(%arg0: i32) -> (i32, i32) {
    %c0_i32 = arith.constant 0 : i32
    %c0_i32_0 = arith.constant 0 : i32
    %c0_i32_1 = arith.constant 0 : i32
    return %c0_i32, %c0_i32_0 : i32, i32
  }
  func.func @transform_3(%arg0: i32) -> (i32, i32) {
    %c0_i32 = arith.constant 0 : i32
    %c0_i32_0 = arith.constant 0 : i32
    %c0_i32_1 = arith.constant 0 : i32
    return %c0_i32, %c0_i32_0 : i32, i32
  }
  func.func @transform_4(%arg0: i32) -> (i32, i32) {
    %c0_i32 = arith.constant 0 : i32
    %c0_i32_0 = arith.constant 0 : i32
    %c0_i32_1 = arith.constant 0 : i32
    return %c0_i32, %c0_i32_0 : i32, i32
  }
  func.func @transform_5(%arg0: i32) -> (i32, i32) {
    %c0_i32 = arith.constant 0 : i32
    %c0_i32_0 = arith.constant 0 : i32
    %c0_i32_1 = arith.constant 0 : i32
    return %c0_i32, %c0_i32_0 : i32, i32
  }
  func.func @transform_6(%arg0: i32) -> (i32, i32) {
    %c0_i32 = arith.constant 0 : i32
    %c0_i32_0 = arith.constant 0 : i32
    %c0_i32_1 = arith.constant 0 : i32
    return %c0_i32, %c0_i32_0 : i32, i32
  }
  func.func @transform_7(%arg0: i32) -> (i32, i32) {
    %c0_i32 = arith.constant 0 : i32
    %c0_i32_0 = arith.constant 0 : i32
    %c0_i32_1 = arith.constant 0 : i32
    return %c0_i32, %c0_i32_0 : i32, i32
  }
  func.func @transform_8(%arg0: i32) -> (i32, i32) {
    %c0_i32 = arith.constant 0 : i32
    %c0_i32_0 = arith.constant 0 : i32
    %c0_i32_1 = arith.constant 0 : i32
    return %c0_i32, %c0_i32_0 : i32, i32
  }
  func.func @transform_9(%arg0: i32) -> (i32, i32) {
    %c0_i32 = arith.constant 0 : i32
    %c0_i32_0 = arith.constant 0 : i32
    %c0_i32_1 = arith.constant 0 : i32
    return %c0_i32, %c0_i32_0 : i32, i32
  }
  func.func @transform_10(%arg0: i32) -> (i32, i32) {
    %c0_i32 = arith.constant 0 : i32
    %c0_i32_0 = arith.constant 0 : i32
    %c0_i32_1 = arith.constant 0 : i32
    return %c0_i32, %c0_i32_0 : i32, i32
  }
  func.func @transform_11(%arg0: i32) -> (i32, i32) {
    %c0_i32 = arith.constant 0 : i32
    %c0_i32_0 = arith.constant 0 : i32
    %c0_i32_1 = arith.constant 0 : i32
    return %c0_i32, %c0_i32_0 : i32, i32
  }
  func.func @transform_12(%arg0: i32) -> (i32, i32, i32) {
    %c0_i32 = arith.constant 0 : i32
    %c0_i32_0 = arith.constant 0 : i32
    %c0_i32_1 = arith.constant 0 : i32
    return %arg0, %c0_i32, %c0_i32_0 : i32, i32, i32
  }
}

</mosaic_0001>

<llo_original>
// kernel: pnet_forward.1
$region0: #{pnet_forward.1}
  #allocation0 [shape = 'u32[]', space=smem, size = 0x4, offset = 0x4, fixed_abs, tag = 'smem constant byte address 0x4 - core index']
  #allocation1 [shape = 'u32[144,128]{1,0:T(1,128)}', space=vmem, size = 0x12000, scoped, tag = 'internal scratch']
  #allocation2 [shape = 'bf16[196,32]{1,0:T(8,128)(2,1)}', space=vmem, size = 0xc800, scoped, tag = 'scratch operand']
  #allocation3 [shape = 'bf16[25,128]{1,0:T(8,128)(2,1)}', space=vmem, size = 0x2000, scoped, tag = 'scratch operand']
  #allocation4 [shape = 'bf16[9,256]{1,0:T(8,128)(2,1)}', space=vmem, size = 0x2000, scoped, tag = 'scratch operand']
  %s0 = inlined_call_operand.vmem [shape: bf16[2,16,16,3], index: 0, kind: input, shape index: {}]
  %s1 = inlined_call_operand.vmem [shape: bf16[32,10], index: 1, kind: input, shape index: {}]
  %s2 = inlined_call_operand.vmem [shape: f32[1,10], index: 2, kind: input, shape index: {}]
  %s3 = inlined_call_operand.vmem [shape: f32[1,10], index: 3, kind: input, shape index: {}]
  %s4 = inlined_call_operand.vmem [shape: bf16[128,16], index: 4, kind: input, shape index: {}]
  %s5 = inlined_call_operand.vmem [shape: f32[1,16], index: 5, kind: input, shape index: {}]
  %s6 = inlined_call_operand.vmem [shape: f32[1,16], index: 6, kind: input, shape index: {}]
  %s7 = inlined_call_operand.vmem [shape: bf16[256,32], index: 7, kind: input, shape index: {}]
  %s8 = inlined_call_operand.vmem [shape: f32[1,32], index: 8, kind: input, shape index: {}]
  %s9 = inlined_call_operand.vmem [shape: f32[1,32], index: 9, kind: input, shape index: {}]
  %s10 = inlined_call_operand.vmem [shape: bf16[32,16], index: 10, kind: input, shape index: {}]
  %s11 = inlined_call_operand.vmem [shape: f32[1,16], index: 11, kind: input, shape index: {}]
  %s12 = inlined_call_operand.vmem [shape: f32[2,16,128], index: 12, kind: output, shape index: {}]
  %s13 = sld [smem:[#allocation0]]
  $region81: #{pnet_forward.1} parent=0
    _
  %s15 = ssub.s32 1, %s13
  %s16 = scalar_select 0, %s15, %s13
  loop: start=0, step=1, limit=4
  $region2: #{pnet_forward.1} parent=0 // loop_pre_header
    _
  $region3: #{pnet_forward.1} parent=0 // loop_header
    %s18 = sphi 0, %s22
    %p19 = scmp.ge.s32.totalorder %s18, 4
    %s28 = sphi 0, %s30
    %s31 = sphi 0, %s28
    %s32 = sphi 0, %s31
    %s48 = sphi 0, %s32
    %s52 = sphi 0, %s52
    %s54 = sphi 0, %s52
    %s55 = sphi 0, %s54
    %s69 = sphi 0, %s55
    %s73 = sphi 0, %s73
    %s75 = sphi 0, %s73
    %s76 = sphi 0, %s75
    %s90 = sphi 0, %s76
    %s94 = sphi 0, %s94
    %s96 = sphi 0, %s94
    %s97 = sphi 0, %s96
    %s111 = sphi 0, %s97
    %s115 = sphi 0, %s115
    %s117 = sphi 0, %s115
    %s118 = sphi 0, %s117
    %s132 = sphi 0, %s118
    %s136 = sphi 0, %s136
    %s138 = sphi 0, %s136
    %s139 = sphi 0, %s138
    %s153 = sphi 0, %s139
    %s157 = sphi 0, %s157
    %s159 = sphi 0, %s157
    %s160 = sphi 0, %s159
    %s174 = sphi 0, %s160
    %s178 = sphi 0, %s178
    %s180 = sphi 0, %s178
    %s181 = sphi 0, %s180
    %s195 = sphi 0, %s181
    %s199 = sphi 0, %s199
    %s201 = sphi 0, %s199
    %s202 = sphi 0, %s201
    %s216 = sphi 0, %s202
    %s220 = sphi 0, %s220
    %s222 = sphi 0, %s220
    %s223 = sphi 0, %s222
    %s237 = sphi 0, %s223
    %s241 = sphi 0, %s241
    %s243 = sphi 0, %s241
    %s244 = sphi 0, %s243
    %s258 = sphi 0, %s244
    %s262 = sphi 0, %s262
    %s264 = sphi 0, %s262
    %s265 = sphi 0, %s264
    %s279 = sphi 0, %s265
    %s285 = sphi 0, %s287
    %s288 = sphi 0, %s285
    %s289 = sphi 0, %s288
    %s305 = sphi 0, %s289
  $region4: #{pnet_forward.1} parent=0 // loop_header_branch
    %21 = sbr.rel (%p19) target = $region8
  $region5: #{pnet_forward.1} parent=0 // loop_body
    %s23 = ssub.s32 %s18, 1
    %s24 = ssub.s32 %s18, 2
    %s25 = sadd.s32 %s18, 1
    %s26 = ssub.s32 %s18, %s25
    %p27 = scmp.eq.s32.totalorder %s26, 0
    %s29 = sadd.s32 %s28, 1
    %s30 = scalar_select %p27, %s28, %s29
    %p33 = pneg %p27
    %p34 = scmp.eq.s32.totalorder %s18, 1
    %p35 = por %p33, %p34
    %p36 = scmp.ne.s32.totalorder %s28, %s31
    %p37 = scmp.eq.s32.totalorder %s18, 0
    %p38 = por %p36, %p37
    %p39 = scmp.ne.s32.totalorder %s28, %s31
    %p40 = scmp.eq.s32.totalorder %s23, 1
    %p41 = por %p39, %p40
    %p42 = scmp.ne.s32.totalorder %s31, %s32
    %p43 = scmp.eq.s32.totalorder %s23, 0
    %p44 = por %p42, %p43
    %p45 = scmp.ne.s32.totalorder %s31, %s32
    %p46 = scmp.eq.s32.totalorder %s24, 1
    %p47 = por %p45, %p46
    %p49 = scmp.ne.s32.totalorder %s32, %s48
    %p50 = scmp.eq.s32.totalorder %s24, 0
    %p51 = por %p49, %p50
    %s53 = sadd.s32 %s52, 1
    %p56 = scmp.eq.s32.totalorder %s18, 1
    %p57 = scmp.ne.s32.totalorder %s52, %s54
    %p58 = scmp.eq.s32.totalorder %s18, 0
    %p59 = por %p57, %p58
    %p60 = scmp.ne.s32.totalorder %s52, %s54
    %p61 = scmp.eq.s32.totalorder %s23, 1
    %p62 = por %p60, %p61
    %p63 = scmp.ne.s32.totalorder %s54, %s55
    %p64 = scmp.eq.s32.totalorder %s23, 0
    %p65 = por %p63, %p64
    %p66 = scmp.ne.s32.totalorder %s54, %s55
    %p67 = scmp.eq.s32.totalorder %s24, 1
    %p68 = por %p66, %p67
    %p70 = scmp.ne.s32.totalorder %s55, %s69
    %p71 = scmp.eq.s32.totalorder %s24, 0
    %p72 = por %p70, %p71
    %s74 = sadd.s32 %s73, 1
    %p77 = scmp.eq.s32.totalorder %s18, 1
    %p78 = scmp.ne.s32.totalorder %s73, %s75
    %p79 = scmp.eq.s32.totalorder %s18, 0
    %p80 = por %p78, %p79
    %p81 = scmp.ne.s32.totalorder %s73, %s75
    %p82 = scmp.eq.s32.totalorder %s23, 1
    %p83 = por %p81, %p82
    %p84 = scmp.ne.s32.totalorder %s75, %s76
    %p85 = scmp.eq.s32.totalorder %s23, 0
    %p86 = por %p84, %p85
    %p87 = scmp.ne.s32.totalorder %s75, %s76
    %p88 = scmp.eq.s32.totalorder %s24, 1
    %p89 = por %p87, %p88
    %p91 = scmp.ne.s32.totalorder %s76, %s90
    %p92 = scmp.eq.s32.totalorder %s24, 0
    %p93 = por %p91, %p92
    %s95 = sadd.s32 %s94, 1
    %p98 = scmp.eq.s32.totalorder %s18, 1
    %p99 = scmp.ne.s32.totalorder %s94, %s96
    %p100 = scmp.eq.s32.totalorder %s18, 0
    %p101 = por %p99, %p100
    %p102 = scmp.ne.s32.totalorder %s94, %s96
    %p103 = scmp.eq.s32.totalorder %s23, 1
    %p104 = por %p102, %p103
    %p105 = scmp.ne.s32.totalorder %s96, %s97
    %p106 = scmp.eq.s32.totalorder %s23, 0
    %p107 = por %p105, %p106
    %p108 = scmp.ne.s32.totalorder %s96, %s97
    %p109 = scmp.eq.s32.totalorder %s24, 1
    %p110 = por %p108, %p109
    %p112 = scmp.ne.s32.totalorder %s97, %s111
    %p113 = scmp.eq.s32.totalorder %s24, 0
    %p114 = por %p112, %p113
    %s116 = sadd.s32 %s115, 1
    %p119 = scmp.eq.s32.totalorder %s18, 1
    %p120 = scmp.ne.s32.totalorder %s115, %s117
    %p121 = scmp.eq.s32.totalorder %s18, 0
    %p122 = por %p120, %p121
    %p123 = scmp.ne.s32.totalorder %s115, %s117
    %p124 = scmp.eq.s32.totalorder %s23, 1
    %p125 = por %p123, %p124
    %p126 = scmp.ne.s32.totalorder %s117, %s118
    %p127 = scmp.eq.s32.totalorder %s23, 0
    %p128 = por %p126, %p127
    %p129 = scmp.ne.s32.totalorder %s117, %s118
    %p130 = scmp.eq.s32.totalorder %s24, 1
    %p131 = por %p129, %p130
    %p133 = scmp.ne.s32.totalorder %s118, %s132
    %p134 = scmp.eq.s32.totalorder %s24, 0
    %p135 = por %p133, %p134
    %s137 = sadd.s32 %s136, 1
    %p140 = scmp.eq.s32.totalorder %s18, 1
    %p141 = scmp.ne.s32.totalorder %s136, %s138
    %p142 = scmp.eq.s32.totalorder %s18, 0
    %p143 = por %p141, %p142
    %p144 = scmp.ne.s32.totalorder %s136, %s138
    %p145 = scmp.eq.s32.totalorder %s23, 1
    %p146 = por %p144, %p145
    %p147 = scmp.ne.s32.totalorder %s138, %s139
    %p148 = scmp.eq.s32.totalorder %s23, 0
    %p149 = por %p147, %p148
    %p150 = scmp.ne.s32.totalorder %s138, %s139
    %p151 = scmp.eq.s32.totalorder %s24, 1
    %p152 = por %p150, %p151
    %p154 = scmp.ne.s32.totalorder %s139, %s153
    %p155 = scmp.eq.s32.totalorder %s24, 0
    %p156 = por %p154, %p155
    %s158 = sadd.s32 %s157, 1
    %p161 = scmp.eq.s32.totalorder %s18, 1
    %p162 = scmp.ne.s32.totalorder %s157, %s159
    %p163 = scmp.eq.s32.totalorder %s18, 0
    %p164 = por %p162, %p163
    %p165 = scmp.ne.s32.totalorder %s157, %s159
    %p166 = scmp.eq.s32.totalorder %s23, 1
    %p167 = por %p165, %p166
    %p168 = scmp.ne.s32.totalorder %s159, %s160
    %p169 = scmp.eq.s32.totalorder %s23, 0
    %p170 = por %p168, %p169
    %p171 = scmp.ne.s32.totalorder %s159, %s160
    %p172 = scmp.eq.s32.totalorder %s24, 1
    %p173 = por %p171, %p172
    %p175 = scmp.ne.s32.totalorder %s160, %s174
    %p176 = scmp.eq.s32.totalorder %s24, 0
    %p177 = por %p175, %p176
    %s179 = sadd.s32 %s178, 1
    %p182 = scmp.eq.s32.totalorder %s18, 1
    %p183 = scmp.ne.s32.totalorder %s178, %s180
    %p184 = scmp.eq.s32.totalorder %s18, 0
    %p185 = por %p183, %p184
    %p186 = scmp.ne.s32.totalorder %s178, %s180
    %p187 = scmp.eq.s32.totalorder %s23, 1
    %p188 = por %p186, %p187
    %p189 = scmp.ne.s32.totalorder %s180, %s181
    %p190 = scmp.eq.s32.totalorder %s23, 0
    %p191 = por %p189, %p190
    %p192 = scmp.ne.s32.totalorder %s180, %s181
    %p193 = scmp.eq.s32.totalorder %s24, 1
    %p194 = por %p192, %p193
    %p196 = scmp.ne.s32.totalorder %s181, %s195
    %p197 = scmp.eq.s32.totalorder %s24, 0
    %p198 = por %p196, %p197
    %s200 = sadd.s32 %s199, 1
    %p203 = scmp.eq.s32.totalorder %s18, 1
    %p204 = scmp.ne.s32.totalorder %s199, %s201
    %p205 = scmp.eq.s32.totalorder %s18, 0
    %p206 = por %p204, %p205
    %p207 = scmp.ne.s32.totalorder %s199, %s201
    %p208 = scmp.eq.s32.totalorder %s23, 1
    %p209 = por %p207, %p208
    %p210 = scmp.ne.s32.totalorder %s201, %s202
    %p211 = scmp.eq.s32.totalorder %s23, 0
    %p212 = por %p210, %p211
    %p213 = scmp.ne.s32.totalorder %s201, %s202
    %p214 = scmp.eq.s32.totalorder %s24, 1
    %p215 = por %p213, %p214
    %p217 = scmp.ne.s32.totalorder %s202, %s216
    %p218 = scmp.eq.s32.totalorder %s24, 0
    %p219 = por %p217, %p218
    %s221 = sadd.s32 %s220, 1
    %p224 = scmp.eq.s32.totalorder %s18, 1
    %p225 = scmp.ne.s32.totalorder %s220, %s222
    %p226 = scmp.eq.s32.totalorder %s18, 0
    %p227 = por %p225, %p226
    %p228 = scmp.ne.s32.totalorder %s220, %s222
    %p229 = scmp.eq.s32.totalorder %s23, 1
    %p230 = por %p228, %p229
    %p231 = scmp.ne.s32.totalorder %s222, %s223
    %p232 = scmp.eq.s32.totalorder %s23, 0
    %p233 = por %p231, %p232
    %p234 = scmp.ne.s32.totalorder %s222, %s223
    %p235 = scmp.eq.s32.totalorder %s24, 1
    %p236 = por %p234, %p235
    %p238 = scmp.ne.s32.totalorder %s223, %s237
    %p239 = scmp.eq.s32.totalorder %s24, 0
    %p240 = por %p238, %p239
    %s242 = sadd.s32 %s241, 1
    %p245 = scmp.eq.s32.totalorder %s18, 1
    %p246 = scmp.ne.s32.totalorder %s241, %s243
    %p247 = scmp.eq.s32.totalorder %s18, 0
    %p248 = por %p246, %p247
    %p249 = scmp.ne.s32.totalorder %s241, %s243
    %p250 = scmp.eq.s32.totalorder %s23, 1
    %p251 = por %p249, %p250
    %p252 = scmp.ne.s32.totalorder %s243, %s244
    %p253 = scmp.eq.s32.totalorder %s23, 0
    %p254 = por %p252, %p253
    %p255 = scmp.ne.s32.totalorder %s243, %s244
    %p256 = scmp.eq.s32.totalorder %s24, 1
    %p257 = por %p255, %p256
    %p259 = scmp.ne.s32.totalorder %s244, %s258
    %p260 = scmp.eq.s32.totalorder %s24, 0
    %p261 = por %p259, %p260
    %s263 = sadd.s32 %s262, 1
    %p266 = scmp.eq.s32.totalorder %s18, 1
    %p267 = scmp.ne.s32.totalorder %s262, %s264
    %p268 = scmp.eq.s32.totalorder %s18, 0
    %p269 = por %p267, %p268
    %p270 = scmp.ne.s32.totalorder %s262, %s264
    %p271 = scmp.eq.s32.totalorder %s23, 1
    %p272 = por %p270, %p271
    %p273 = scmp.ne.s32.totalorder %s264, %s265
    %p274 = scmp.eq.s32.totalorder %s23, 0
    %p275 = por %p273, %p274
    %p276 = scmp.ne.s32.totalorder %s264, %s265
    %p277 = scmp.eq.s32.totalorder %s24, 1
    %p278 = por %p276, %p277
    %p280 = scmp.ne.s32.totalorder %s265, %s279
    %p281 = scmp.eq.s32.totalorder %s24, 0
    %p282 = por %p280, %p281
    %s283 = ssub.s32 %s18, %s25
    %p284 = scmp.eq.s32.totalorder %s283, 0
    %s286 = sadd.s32 %s285, 1
    %s287 = scalar_select %p284, %s285, %s286
    %p290 = pneg %p284
    %p291 = scmp.eq.s32.totalorder %s18, 1
    %p292 = por %p290, %p291
    %p293 = scmp.ne.s32.totalorder %s285, %s288
    %p294 = scmp.eq.s32.totalorder %s18, 0
    %p295 = por %p293, %p294
    %p296 = scmp.ne.s32.totalorder %s285, %s288
    %p297 = scmp.eq.s32.totalorder %s23, 1
    %p298 = por %p296, %p297
    %p299 = scmp.ne.s32.totalorder %s288, %s289
    %p300 = scmp.eq.s32.totalorder %s23, 0
    %p301 = por %p299, %p300
    %p302 = scmp.ne.s32.totalorder %s288, %s289
    %p303 = scmp.eq.s32.totalorder %s24, 1
    %p304 = por %p302, %p303
    %p306 = scmp.ne.s32.totalorder %s289, %s305
    %p307 = scmp.eq.s32.totalorder %s24, 0
    %p308 = por %p306, %p307
    %p309 = scmp.le.s32.totalorder 1, %s18
    %p310 = scmp.lt.s32.totalorder %s18, 3
    %p311 = pnand %p309, %p310
    %p312 = pneg %p311
    // Predicated region
    $region9: #{pnet_forward.1} parent=5 // pred_check
      _
    $region10: #{pnet_forward.1} parent=5 // pred_check_branch
      %314 = sbr.rel (%p311) target = $region12
    $region11: #{pnet_forward.1} parent=5 // pred_region
      %s315 = ssub.s32 %s18, 1
      // Predicated region
      $region13: #{pnet_forward.1} parent=11 // pred_check
        %p316 = pneg %p65
      $region14: #{pnet_forward.1} parent=11 // pred_check_branch
        %318 = sbr.rel (%p316) target = $region16
      $region15: #{pnet_forward.1} parent=11 // pred_region
        _
      $region16: #{pnet_forward.1} parent=11 // pred_fallthru
        _
      // Predicated region
      $region17: #{pnet_forward.1} parent=11 // pred_check
        %p319 = pneg %p86
      $region18: #{pnet_forward.1} parent=11 // pred_check_branch
        %321 = sbr.rel (%p319) target = $region20
      $region19: #{pnet_forward.1} parent=11 // pred_region
        _
      $region20: #{pnet_forward.1} parent=11 // pred_fallthru
        _
      // Predicated region
      $region21: #{pnet_forward.1} parent=11 // pred_check
        %p322 = pneg %p107
      $region22: #{pnet_forward.1} parent=11 // pred_check_branch
        %324 = sbr.rel (%p322) target = $region24
      $region23: #{pnet_forward.1} parent=11 // pred_region
        _
      $region24: #{pnet_forward.1} parent=11 // pred_fallthru
        _
      // Predicated region
      $region25: #{pnet_forward.1} parent=11 // pred_check
        %p325 = pneg %p128
      $region26: #{pnet_forward.1} parent=11 // pred_check_branch
        %327 = sbr.rel (%p325) target = $region28
      $region27: #{pnet_forward.1} parent=11 // pred_region
        _
      $region28: #{pnet_forward.1} parent=11 // pred_fallthru
        _
      // Predicated region
      $region29: #{pnet_forward.1} parent=11 // pred_check
        %p328 = pneg %p149
      $region30: #{pnet_forward.1} parent=11 // pred_check_branch
        %330 = sbr.rel (%p328) target = $region32
      $region31: #{pnet_forward.1} parent=11 // pred_region
        _
      $region32: #{pnet_forward.1} parent=11 // pred_fallthru
        _
      // Predicated region
      $region33: #{pnet_forward.1} parent=11 // pred_check
        %p331 = pneg %p170
      $region34: #{pnet_forward.1} parent=11 // pred_check_branch
        %333 = sbr.rel (%p331) target = $region36
      $region35: #{pnet_forward.1} parent=11 // pred_region
        _
      $region36: #{pnet_forward.1} parent=11 // pred_fallthru
        _
      // Predicated region
      $region37: #{pnet_forward.1} parent=11 // pred_check
        %p334 = pneg %p191
      $region38: #{pnet_forward.1} parent=11 // pred_check_branch
        %336 = sbr.rel (%p334) target = $region40
      $region39: #{pnet_forward.1} parent=11 // pred_region
        _
      $region40: #{pnet_forward.1} parent=11 // pred_fallthru
        _
      // Predicated region
      $region41: #{pnet_forward.1} parent=11 // pred_check
        %p337 = pneg %p212
      $region42: #{pnet_forward.1} parent=11 // pred_check_branch
        %339 = sbr.rel (%p337) target = $region44
      $region43: #{pnet_forward.1} parent=11 // pred_region
        _
      $region44: #{pnet_forward.1} parent=11 // pred_fallthru
        _
      // Predicated region
      $region45: #{pnet_forward.1} parent=11 // pred_check
        %p340 = pneg %p233
      $region46: #{pnet_forward.1} parent=11 // pred_check_branch
        %342 = sbr.rel (%p340) target = $region48
      $region47: #{pnet_forward.1} parent=11 // pred_region
        _
      $region48: #{pnet_forward.1} parent=11 // pred_fallthru
        _
      // Predicated region
      $region49: #{pnet_forward.1} parent=11 // pred_check
        %p343 = pneg %p254
      $region50: #{pnet_forward.1} parent=11 // pred_check_branch
        %345 = sbr.rel (%p343) target = $region52
      $region51: #{pnet_forward.1} parent=11 // pred_region
        _
      $region52: #{pnet_forward.1} parent=11 // pred_fallthru
        _
      // Predicated region
      $region53: #{pnet_forward.1} parent=11 // pred_check
        %p346 = pneg %p275
      $region54: #{pnet_forward.1} parent=11 // pred_check_branch
        %348 = sbr.rel (%p346) target = $region56
      $region55: #{pnet_forward.1} parent=11 // pred_region
        _
      $region56: #{pnet_forward.1} parent=11 // pred_fallthru
        _
    $region12: #{pnet_forward.1} parent=5 // pred_fallthru
      _
    %p349 = scmp.lt.s32.totalorder %s18, 2
    // Predicated region
    $region57: #{pnet_forward.1} parent=5 // pred_check
      %p350 = pneg %p349
    $region58: #{pnet_forward.1} parent=5 // pred_check_branch
      %352 = sbr.rel (%p350) target = $region60
    $region59: #{pnet_forward.1} parent=5 // pred_region
      // Predicated region
      $region61: #{pnet_forward.1} parent=59 // pred_check
        %p353 = pneg %p38
      $region62: #{pnet_forward.1} parent=59 // pred_check_branch
        %355 = sbr.rel (%p353) target = $region64
      $region63: #{pnet_forward.1} parent=59 // pred_region
        %p356 = scmp.lt.s32.totalorder %s18, 1
        %s357 = scalar_select %p356, %s18, 1
        %s358 = smul.addr %s357, 32
        %s359 = smul.addr %s358, 4
        %s360 = scalar_lea.vmem %s0, %s359
      $region64: #{pnet_forward.1} parent=59 // pred_fallthru
        _
    $region60: #{pnet_forward.1} parent=5 // pred_fallthru
      _
    %p361 = scmp.le.s32.totalorder 1, %s18
    %p362 = scmp.lt.s32.totalorder %s18, 3
    %p363 = pnand %p361, %p362
    %p364 = pneg %p363
    // Predicated region
    $region65: #{pnet_forward.1} parent=5 // pred_check
      _
    $region66: #{pnet_forward.1} parent=5 // pred_check_branch
      %366 = sbr.rel (%p363) target = $region68
    $region67: #{pnet_forward.1} parent=5 // pred_region
      %s367 = ssub.s32 %s18, 1
      %p368 = scmp.lt.s32.totalorder %s23, 1
      %s369 = scalar_select %p368, %s23, 1
      %s370 = smul.addr %s369, 32
      %s371 = smul.addr %s370, 4
      %s372 = scalar_lea.vmem %s0, %s371
      %p373 = pneg %p44
      %p374 = pneg %p41
      %p375 = pneg %p65
      %p376 = pneg %p62
      %p377 = pneg %p86
      %p378 = pneg %p83
      %p379 = pneg %p107
      %p380 = pneg %p104
      %p381 = pneg %p128
      %p382 = pneg %p125
      %p383 = pneg %p149
      %p384 = pneg %p146
      %p385 = pneg %p170
      %p386 = pneg %p167
      %p387 = pneg %p191
      %p388 = pneg %p188
      %p389 = pneg %p212
      %p390 = pneg %p209
      %p391 = pneg %p233
      %p392 = pneg %p230
      %p393 = pneg %p254
      %p394 = pneg %p251
      %p395 = pneg %p275
      %p396 = pneg %p272
      %p397 = pneg %p301
      %p398 = pneg %p298
      %p399 = scmp.lt.s32.totalorder %s23, 1
      %s400 = scalar_select %p399, %s23, 1
      %s401 = smul.addr %s400, 2
      %s402 = smul.addr %s401, 8
      %s403 = scalar_lea.vmem %s12, %s402
      %p404 = scmp.lt.s32.totalorder %s23, 1
      %s405 = scalar_select %p404, %s23, 1
      %s406 = smul.addr %s405, 32
      %s407 = smul.addr %s406, 4
      %s408 = scalar_lea.vmem %s0, %s407
      %p409 = scmp.lt.s32.totalorder %s23, 1
      %s410 = scalar_select %p409, %s23, 1
      %s411 = smul.addr %s410, 2
      %s412 = smul.addr %s411, 8
      %s413 = scalar_lea.vmem %s12, %s412
      %v415 = vld [vmem:[%s408] sm:$0xf]
      %v416 = vld [vmem:[%s408 + $0x4] sm:$0xf]
      %v417 = vld [vmem:[%s408 + $0x8] sm:$0xf]
      %v418 = vld [vmem:[%s408 + $0xc] sm:$0xf]
      %v419 = vld [vmem:[%s408 + $0x10] sm:$0xf]
      %v420 = vld [vmem:[%s408 + $0x14] sm:$0xf]
      %v421 = vld [vmem:[%s408 + $0x18] sm:$0xf]
      %v422 = vld [vmem:[%s408 + $0x1c] sm:$0xf]
      %v423 = vld [vmem:[%s408 + $0x20] sm:$0xf]
      %v424 = vld [vmem:[%s408 + $0x24] sm:$0xf]
      %v425 = vld [vmem:[%s408 + $0x28] sm:$0xf]
      %v426 = vld [vmem:[%s408 + $0x2c] sm:$0xf]
      %v427 = vld [vmem:[%s408 + $0x30] sm:$0xf]
      %v428 = vld [vmem:[%s408 + $0x34] sm:$0xf]
      %v429 = vld [vmem:[%s408 + $0x38] sm:$0xf]
      %v430 = vld [vmem:[%s408 + $0x3c] sm:$0xf]
      %v431 = vld [vmem:[%s408 + $0x40] sm:$0xf]
      %v432 = vld [vmem:[%s408 + $0x44] sm:$0xf]
      %v433 = vld [vmem:[%s408 + $0x48] sm:$0xf]
      %v434 = vld [vmem:[%s408 + $0x4c] sm:$0xf]
      %v435 = vld [vmem:[%s408 + $0x50] sm:$0xf]
      %v436 = vld [vmem:[%s408 + $0x54] sm:$0xf]
      %v437 = vld [vmem:[%s408 + $0x58] sm:$0xf]
      %v438 = vld [vmem:[%s408 + $0x5c] sm:$0xf]
      %v439 = vld [vmem:[%s408 + $0x60] sm:$0xf]
      %v440 = vld [vmem:[%s408 + $0x64] sm:$0xf]
      %v441 = vld [vmem:[%s408 + $0x68] sm:$0xf]
      %v442 = vld [vmem:[%s408 + $0x6c] sm:$0xf]
      %v443 = vld [vmem:[%s408 + $0x70] sm:$0xf]
      %v444 = vld [vmem:[%s408 + $0x74] sm:$0xf]
      %v445 = vld [vmem:[%s408 + $0x78] sm:$0xf]
      %v446 = vld [vmem:[%s408 + $0x7c] sm:$0xf]
      %vm447 = vcmask 257240
      %448 = vst.msk [vmem:[#allocation2] sm:$0xf] %vm447, 0
      %449 = vst.msk [vmem:[#allocation2 + $0x4] sm:$0xf] %vm447, 0
      %450 = vst.msk [vmem:[#allocation2 + $0x8] sm:$0xf] %vm447, 0
      %451 = vst.msk [vmem:[#allocation2 + $0xc] sm:$0xf] %vm447, 0
      %452 = vst.msk [vmem:[#allocation2 + $0x10] sm:$0xf] %vm447, 0
      %453 = vst.msk [vmem:[#allocation2 + $0x14] sm:$0xf] %vm447, 0
      %454 = vst.msk [vmem:[#allocation2 + $0x18] sm:$0xf] %vm447, 0
      %455 = vst.msk [vmem:[#allocation2 + $0x1c] sm:$0xf] %vm447, 0
      %456 = vst.msk [vmem:[#allocation2 + $0x20] sm:$0xf] %vm447, 0
      %457 = vst.msk [vmem:[#allocation2 + $0x24] sm:$0xf] %vm447, 0
      %458 = vst.msk [vmem:[#allocation2 + $0x28] sm:$0xf] %vm447, 0
      %459 = vst.msk [vmem:[#allocation2 + $0x2c] sm:$0xf] %vm447, 0
      %460 = vst.msk [vmem:[#allocation2 + $0x30] sm:$0xf] %vm447, 0
      %461 = vst.msk [vmem:[#allocation2 + $0x34] sm:$0xf] %vm447, 0
      %462 = vst.msk [vmem:[#allocation2 + $0x38] sm:$0xf] %vm447, 0
      %463 = vst.msk [vmem:[#allocation2 + $0x3c] sm:$0xf] %vm447, 0
      %464 = vst.msk [vmem:[#allocation2 + $0x40] sm:$0xf] %vm447, 0
      %465 = vst.msk [vmem:[#allocation2 + $0x44] sm:$0xf] %vm447, 0
      %466 = vst.msk [vmem:[#allocation2 + $0x48] sm:$0xf] %vm447, 0
      %467 = vst.msk [vmem:[#allocation2 + $0x4c] sm:$0xf] %vm447, 0
      %468 = vst.msk [vmem:[#allocation2 + $0x50] sm:$0xf] %vm447, 0
      %469 = vst.msk [vmem:[#allocation2 + $0x54] sm:$0xf] %vm447, 0
      %470 = vst.msk [vmem:[#allocation2 + $0x58] sm:$0xf] %vm447, 0
      %471 = vst.msk [vmem:[#allocation2 + $0x5c] sm:$0xf] %vm447, 0
      %vm472 = vcmask 255192
      %473 = vst.msk [vmem:[#allocation2 + $0x60] sm:$0x3] %vm472, 0
      %v503 = vunpack.c.l.s4 1966171168
      %v504 = vunpack.c.0.s8 %v503
      %v505 = vlaneseq
      %v506 = vshrl.u32 %v505, 7
      %v507 = vsub.s32 %v504, %v506
      %v508 = vrot.slane %v415, %v507
      %v509 = vcombine.high %v508, %v508
      %v511 = vunpack.c.l.s4 1966171168
      %v512 = vunpack.c.0.s8 %v511
      %v513 = vlaneseq
      %v514 = vshrl.u32 %v513, 7
      %v515 = vsub.s32 %v512, %v514
      %v516 = vrot.slane %v508, %v515
      %v518 = vunpack.c.l.s4 1966171168
      %v519 = vunpack.c.0.s8 %v518
      %v520 = vlaneseq
      %v521 = vshrl.u32 %v520, 7
      %v522 = vsub.s32 %v519, %v521
      %v523 = vrot.slane %v509, %v522
      %v524 = vcombine.high %v516, %v516
      %v525 = vcombine.high %v523, %v523
      %v527 = vunpack.c.l.s4 1966171168
      %v528 = vunpack.c.0.s8 %v527
      %v529 = vlaneseq
      %v530 = vshrl.u32 %v529, 7
      %v531 = vsub.s32 %v528, %v530
      %v532 = vrot.slane %v416, %v531
      %v533 = vcombine.high %v532, %v532
      %v535 = vunpack.c.l.s4 1966171168
      %v536 = vunpack.c.0.s8 %v535
      %v537 = vlaneseq
      %v538 = vshrl.u32 %v537, 7
      %v539 = vsub.s32 %v536, %v538
      %v540 = vrot.slane %v532, %v539
      %v542 = vunpack.c.l.s4 1966171168
      %v543 = vunpack.c.0.s8 %v542
      %v544 = vlaneseq
      %v545 = vshrl.u32 %v544, 7
      %v546 = vsub.s32 %v543, %v545
      %v547 = vrot.slane %v533, %v546
      %v548 = vcombine.high %v540, %v540
      %v550 = vunpack.c.l.s4 1966171168
      %v551 = vunpack.c.0.s8 %v550
      %v552 = vlaneseq
      %v553 = vshrl.u32 %v552, 7
      %v554 = vsub.s32 %v551, %v553
      %v555 = vrot.slane %v417, %v554
      %v556 = vcombine.high %v555, %v555
      %v558 = vunpack.c.l.s4 1966171168
      %v559 = vunpack.c.0.s8 %v558
      %v560 = vlaneseq
      %v561 = vshrl.u32 %v560, 7
      %v562 = vsub.s32 %v559, %v561
      %v563 = vrot.slane %v555, %v562
      %v565 = vunpack.c.l.s4 1966171168
      %v566 = vunpack.c.0.s8 %v565
      %v567 = vlaneseq
      %v568 = vshrl.u32 %v567, 7
      %v569 = vsub.s32 %v566, %v568
      %v570 = vrot.slane %v556, %v569
      %v571 = vcombine.high %v563, %v563
      %v572 = vcombine.high %v570, %v570
      %v574 = vunpack.c.l.s4 1966171168
      %v575 = vunpack.c.0.s8 %v574
      %v576 = vlaneseq
      %v577 = vshrl.u32 %v576, 7
      %v578 = vsub.s32 %v575, %v577
      %v579 = vrot.slane %v418, %v578
      %v580 = vcombine.high %v579, %v579
      %v582 = vunpack.c.l.s4 1966171168
      %v583 = vunpack.c.0.s8 %v582
      %v584 = vlaneseq
      %v585 = vshrl.u32 %v584, 7
      %v586 = vsub.s32 %v583, %v585
      %v587 = vrot.slane %v579, %v586
      %v589 = vunpack.c.l.s4 1966171168
      %v590 = vunpack.c.0.s8 %v589
      %v591 = vlaneseq
      %v592 = vshrl.u32 %v591, 7
      %v593 = vsub.s32 %v590, %v592
      %v594 = vrot.slane %v580, %v593
      %v595 = vcombine.high %v587, %v587
      %v597 = vunpack.c.l.s4 1966171168
      %v598 = vunpack.c.0.s8 %v597
      %v599 = vlaneseq
      %v600 = vshrl.u32 %v599, 7
      %v601 = vsub.s32 %v598, %v600
      %v602 = vrot.slane %v419, %v601
      %v603 = vcombine.high %v602, %v602
      %v605 = vunpack.c.l.s4 1966171168
      %v606 = vunpack.c.0.s8 %v605
      %v607 = vlaneseq
      %v608 = vshrl.u32 %v607, 7
      %v609 = vsub.s32 %v606, %v608
      %v610 = vrot.slane %v602, %v609
      %v612 = vunpack.c.l.s4 1966171168
      %v613 = vunpack.c.0.s8 %v612
      %v614 = vlaneseq
      %v615 = vshrl.u32 %v614, 7
      %v616 = vsub.s32 %v613, %v615
      %v617 = vrot.slane %v603, %v616
      %v618 = vcombine.high %v610, %v610
      %v619 = vcombine.high %v617, %v617
      %v621 = vunpack.c.l.s4 1966171168
      %v622 = vunpack.c.0.s8 %v621
      %v623 = vlaneseq
      %v624 = vshrl.u32 %v623, 7
      %v625 = vsub.s32 %v622, %v624
      %v626 = vrot.slane %v420, %v625
      %v627 = vcombine.high %v626, %v626
      %v629 = vunpack.c.l.s4 1966171168
      %v630 = vunpack.c.0.s8 %v629
      %v631 = vlaneseq
      %v632 = vshrl.u32 %v631, 7
      %v633 = vsub.s32 %v630, %v632
      %v634 = vrot.slane %v626, %v633
      %v636 = vunpack.c.l.s4 1966171168
      %v637 = vunpack.c.0.s8 %v636
      %v638 = vlaneseq
      %v639 = vshrl.u32 %v638, 7
      %v640 = vsub.s32 %v637, %v639
      %v641 = vrot.slane %v627, %v640
      %v642 = vcombine.high %v634, %v634
      %v644 = vunpack.c.l.s4 1966171168
      %v645 = vunpack.c.0.s8 %v644
      %v646 = vlaneseq
      %v647 = vshrl.u32 %v646, 7
      %v648 = vsub.s32 %v645, %v647
      %v649 = vrot.slane %v421, %v648
      %v650 = vcombine.high %v649, %v649
      %v652 = vunpack.c.l.s4 1966171168
      %v653 = vunpack.c.0.s8 %v652
      %v654 = vlaneseq
      %v655 = vshrl.u32 %v654, 7
      %v656 = vsub.s32 %v653, %v655
      %v657 = vrot.slane %v649, %v656
      %v659 = vunpack.c.l.s4 1966171168
      %v660 = vunpack.c.0.s8 %v659
      %v661 = vlaneseq
      %v662 = vshrl.u32 %v661, 7
      %v663 = vsub.s32 %v660, %v662
      %v664 = vrot.slane %v650, %v663
      %v665 = vcombine.high %v657, %v657
      %v666 = vcombine.high %v664, %v664
      %v668 = vunpack.c.l.s4 1966171168
      %v669 = vunpack.c.0.s8 %v668
      %v670 = vlaneseq
      %v671 = vshrl.u32 %v670, 7
      %v672 = vsub.s32 %v669, %v671
      %v673 = vrot.slane %v422, %v672
      %v674 = vcombine.high %v673, %v673
      %v676 = vunpack.c.l.s4 1966171168
      %v677 = vunpack.c.0.s8 %v676
      %v678 = vlaneseq
      %v679 = vshrl.u32 %v678, 7
      %v680 = vsub.s32 %v677, %v679
      %v681 = vrot.slane %v673, %v680
      %v683 = vunpack.c.l.s4 1966171168
      %v684 = vunpack.c.0.s8 %v683
      %v685 = vlaneseq
      %v686 = vshrl.u32 %v685, 7
      %v687 = vsub.s32 %v684, %v686
      %v688 = vrot.slane %v674, %v687
      %v689 = vcombine.high %v681, %v681
      %v691 = vunpack.c.l.s4 1966171168
      %v692 = vunpack.c.0.s8 %v691
      %v693 = vlaneseq
      %v694 = vshrl.u32 %v693, 7
      %v695 = vsub.s32 %v692, %v694
      %v696 = vrot.slane %v423, %v695
      %v697 = vcombine.high %v696, %v696
      %v699 = vunpack.c.l.s4 1966171168
      %v700 = vunpack.c.0.s8 %v699
      %v701 = vlaneseq
      %v702 = vshrl.u32 %v701, 7
      %v703 = vsub.s32 %v700, %v702
      %v704 = vrot.slane %v696, %v703
      %v706 = vunpack.c.l.s4 1966171168
      %v707 = vunpack.c.0.s8 %v706
      %v708 = vlaneseq
      %v709 = vshrl.u32 %v708, 7
      %v710 = vsub.s32 %v707, %v709
      %v711 = vrot.slane %v697, %v710
      %v712 = vcombine.high %v704, %v704
      %v713 = vcombine.high %v711, %v711
      %v715 = vunpack.c.l.s4 1966171168
      %v716 = vunpack.c.0.s8 %v715
      %v717 = vlaneseq
      %v718 = vshrl.u32 %v717, 7
      %v719 = vsub.s32 %v716, %v718
      %v720 = vrot.slane %v424, %v719
      %v721 = vcombine.high %v720, %v720
      %v723 = vunpack.c.l.s4 1966171168
      %v724 = vunpack.c.0.s8 %v723
      %v725 = vlaneseq
      %v726 = vshrl.u32 %v725, 7
      %v727 = vsub.s32 %v724, %v726
      %v728 = vrot.slane %v720, %v727
      %v730 = vunpack.c.l.s4 1966171168
      %v731 = vunpack.c.0.s8 %v730
      %v732 = vlaneseq
      %v733 = vshrl.u32 %v732, 7
      %v734 = vsub.s32 %v731, %v733
      %v735 = vrot.slane %v721, %v734
      %v736 = vcombine.high %v728, %v728
      %v738 = vunpack.c.l.s4 1966171168
      %v739 = vunpack.c.0.s8 %v738
      %v740 = vlaneseq
      %v741 = vshrl.u32 %v740, 7
      %v742 = vsub.s32 %v739, %v741
      %v743 = vrot.slane %v425, %v742
      %v744 = vcombine.high %v743, %v743
      %v746 = vunpack.c.l.s4 1966171168
      %v747 = vunpack.c.0.s8 %v746
      %v748 = vlaneseq
      %v749 = vshrl.u32 %v748, 7
      %v750 = vsub.s32 %v747, %v749
      %v751 = vrot.slane %v743, %v750
      %v753 = vunpack.c.l.s4 1966171168
      %v754 = vunpack.c.0.s8 %v753
      %v755 = vlaneseq
      %v756 = vshrl.u32 %v755, 7
      %v757 = vsub.s32 %v754, %v756
      %v758 = vrot.slane %v744, %v757
      %v759 = vcombine.high %v751, %v751
      %v760 = vcombine.high %v758, %v758
      %v762 = vunpack.c.l.s4 1966171168
      %v763 = vunpack.c.0.s8 %v762
      %v764 = vlaneseq
      %v765 = vshrl.u32 %v764, 7
      %v766 = vsub.s32 %v763, %v765
      %v767 = vrot.slane %v426, %v766
      %v768 = vcombine.high %v767, %v767
      %v770 = vunpack.c.l.s4 1966171168
      %v771 = vunpack.c.0.s8 %v770
      %v772 = vlaneseq
      %v773 = vshrl.u32 %v772, 7
      %v774 = vsub.s32 %v771, %v773
      %v775 = vrot.slane %v767, %v774
      %v777 = vunpack.c.l.s4 1966171168
      %v778 = vunpack.c.0.s8 %v777
      %v779 = vlaneseq
      %v780 = vshrl.u32 %v779, 7
      %v781 = vsub.s32 %v778, %v780
      %v782 = vrot.slane %v768, %v781
      %v783 = vcombine.high %v775, %v775
      %v785 = vunpack.c.l.s4 1966171168
      %v786 = vunpack.c.0.s8 %v785
      %v787 = vlaneseq
      %v788 = vshrl.u32 %v787, 7
      %v789 = vsub.s32 %v786, %v788
      %v790 = vrot.slane %v427, %v789
      %v791 = vcombine.high %v790, %v790
      %v793 = vunpack.c.l.s4 1966171168
      %v794 = vunpack.c.0.s8 %v793
      %v795 = vlaneseq
      %v796 = vshrl.u32 %v795, 7
      %v797 = vsub.s32 %v794, %v796
      %v798 = vrot.slane %v790, %v797
      %v800 = vunpack.c.l.s4 1966171168
      %v801 = vunpack.c.0.s8 %v800
      %v802 = vlaneseq
      %v803 = vshrl.u32 %v802, 7
      %v804 = vsub.s32 %v801, %v803
      %v805 = vrot.slane %v791, %v804
      %v806 = vcombine.high %v798, %v798
      %v807 = vcombine.high %v805, %v805
      %v809 = vunpack.c.l.s4 1966171168
      %v810 = vunpack.c.0.s8 %v809
      %v811 = vlaneseq
      %v812 = vshrl.u32 %v811, 7
      %v813 = vsub.s32 %v810, %v812
      %v814 = vrot.slane %v428, %v813
      %v815 = vcombine.high %v814, %v814
      %v817 = vunpack.c.l.s4 1966171168
      %v818 = vunpack.c.0.s8 %v817
      %v819 = vlaneseq
      %v820 = vshrl.u32 %v819, 7
      %v821 = vsub.s32 %v818, %v820
      %v822 = vrot.slane %v814, %v821
      %v824 = vunpack.c.l.s4 1966171168
      %v825 = vunpack.c.0.s8 %v824
      %v826 = vlaneseq
      %v827 = vshrl.u32 %v826, 7
      %v828 = vsub.s32 %v825, %v827
      %v829 = vrot.slane %v815, %v828
      %v830 = vcombine.high %v822, %v822
      %v832 = vunpack.c.l.s4 1966171168
      %v833 = vunpack.c.0.s8 %v832
      %v834 = vlaneseq
      %v835 = vshrl.u32 %v834, 7
      %v836 = vsub.s32 %v833, %v835
      %v837 = vrot.slane %v429, %v836
      %v838 = vcombine.high %v837, %v837
      %v840 = vunpack.c.l.s4 1966171168
      %v841 = vunpack.c.0.s8 %v840
      %v842 = vlaneseq
      %v843 = vshrl.u32 %v842, 7
      %v844 = vsub.s32 %v841, %v843
      %v845 = vrot.slane %v837, %v844
      %v847 = vunpack.c.l.s4 1966171168
      %v848 = vunpack.c.0.s8 %v847
      %v849 = vlaneseq
      %v850 = vshrl.u32 %v849, 7
      %v851 = vsub.s32 %v848, %v850
      %v852 = vrot.slane %v838, %v851
      %v853 = vcombine.high %v845, %v845
      %v854 = vcombine.high %v852, %v852
      %v856 = vunpack.c.l.s4 1966171168
      %v857 = vunpack.c.0.s8 %v856
      %v858 = vlaneseq
      %v859 = vshrl.u32 %v858, 7
      %v860 = vsub.s32 %v857, %v859
      %v861 = vrot.slane %v430, %v860
      %v862 = vcombine.high %v861, %v861
      %v864 = vunpack.c.l.s4 1966171168
      %v865 = vunpack.c.0.s8 %v864
      %v866 = vlaneseq
      %v867 = vshrl.u32 %v866, 7
      %v868 = vsub.s32 %v865, %v867
      %v869 = vrot.slane %v861, %v868
      %v871 = vunpack.c.l.s4 1966171168
      %v872 = vunpack.c.0.s8 %v871
      %v873 = vlaneseq
      %v874 = vshrl.u32 %v873, 7
      %v875 = vsub.s32 %v872, %v874
      %v876 = vrot.slane %v862, %v875
      %v877 = vcombine.high %v869, %v869
      %v879 = vunpack.c.l.s4 1966171168
      %v880 = vunpack.c.0.s8 %v879
      %v881 = vlaneseq
      %v882 = vshrl.u32 %v881, 7
      %v883 = vsub.s32 %v880, %v882
      %v884 = vrot.slane %v431, %v883
      %v885 = vcombine.high %v884, %v884
      %v887 = vunpack.c.l.s4 1966171168
      %v888 = vunpack.c.0.s8 %v887
      %v889 = vlaneseq
      %v890 = vshrl.u32 %v889, 7
      %v891 = vsub.s32 %v888, %v890
      %v892 = vrot.slane %v884, %v891
      %v894 = vunpack.c.l.s4 1966171168
      %v895 = vunpack.c.0.s8 %v894
      %v896 = vlaneseq
      %v897 = vshrl.u32 %v896, 7
      %v898 = vsub.s32 %v895, %v897
      %v899 = vrot.slane %v885, %v898
      %v900 = vcombine.high %v892, %v892
      %v901 = vcombine.high %v899, %v899
      %v903 = vunpack.c.l.s4 1966171168
      %v904 = vunpack.c.0.s8 %v903
      %v905 = vlaneseq
      %v906 = vshrl.u32 %v905, 7
      %v907 = vsub.s32 %v904, %v906
      %v908 = vrot.slane %v432, %v907
      %v909 = vcombine.high %v908, %v908
      %v911 = vunpack.c.l.s4 1966171168
      %v912 = vunpack.c.0.s8 %v911
      %v913 = vlaneseq
      %v914 = vshrl.u32 %v913, 7
      %v915 = vsub.s32 %v912, %v914
      %v916 = vrot.slane %v908, %v915
      %v918 = vunpack.c.l.s4 1966171168
      %v919 = vunpack.c.0.s8 %v918
      %v920 = vlaneseq
      %v921 = vshrl.u32 %v920, 7
      %v922 = vsub.s32 %v919, %v921
      %v923 = vrot.slane %v909, %v922
      %v924 = vcombine.high %v916, %v916
      %v926 = vunpack.c.l.s4 1966171168
      %v927 = vunpack.c.0.s8 %v926
      %v928 = vlaneseq
      %v929 = vshrl.u32 %v928, 7
      %v930 = vsub.s32 %v927, %v929
      %v931 = vrot.slane %v433, %v930
      %v932 = vcombine.high %v931, %v931
      %v934 = vunpack.c.l.s4 1966171168
      %v935 = vunpack.c.0.s8 %v934
      %v936 = vlaneseq
      %v937 = vshrl.u32 %v936, 7
      %v938 = vsub.s32 %v935, %v937
      %v939 = vrot.slane %v931, %v938
      %v941 = vunpack.c.l.s4 1966171168
      %v942 = vunpack.c.0.s8 %v941
      %v943 = vlaneseq
      %v944 = vshrl.u32 %v943, 7
      %v945 = vsub.s32 %v942, %v944
      %v946 = vrot.slane %v932, %v945
      %v947 = vcombine.high %v939, %v939
      %v948 = vcombine.high %v946, %v946
      %v950 = vunpack.c.l.s4 1966171168
      %v951 = vunpack.c.0.s8 %v950
      %v952 = vlaneseq
      %v953 = vshrl.u32 %v952, 7
      %v954 = vsub.s32 %v951, %v953
      %v955 = vrot.slane %v434, %v954
      %v956 = vcombine.high %v955, %v955
      %v958 = vunpack.c.l.s4 1966171168
      %v959 = vunpack.c.0.s8 %v958
      %v960 = vlaneseq
      %v961 = vshrl.u32 %v960, 7
      %v962 = vsub.s32 %v959, %v961
      %v963 = vrot.slane %v955, %v962
      %v965 = vunpack.c.l.s4 1966171168
      %v966 = vunpack.c.0.s8 %v965
      %v967 = vlaneseq
      %v968 = vshrl.u32 %v967, 7
      %v969 = vsub.s32 %v966, %v968
      %v970 = vrot.slane %v956, %v969
      %v971 = vcombine.high %v963, %v963
      %v973 = vunpack.c.l.s4 1966171168
      %v974 = vunpack.c.0.s8 %v973
      %v975 = vlaneseq
      %v976 = vshrl.u32 %v975, 7
      %v977 = vsub.s32 %v974, %v976
      %v978 = vrot.slane %v435, %v977
      %v979 = vcombine.high %v978, %v978
      %v981 = vunpack.c.l.s4 1966171168
      %v982 = vunpack.c.0.s8 %v981
      %v983 = vlaneseq
      %v984 = vshrl.u32 %v983, 7
      %v985 = vsub.s32 %v982, %v984
      %v986 = vrot.slane %v978, %v985
      %v988 = vunpack.c.l.s4 1966171168
      %v989 = vunpack.c.0.s8 %v988
      %v990 = vlaneseq
      %v991 = vshrl.u32 %v990, 7
      %v992 = vsub.s32 %v989, %v991
      %v993 = vrot.slane %v979, %v992
      %v994 = vcombine.high %v986, %v986
      %v995 = vcombine.high %v993, %v993
      %v997 = vunpack.c.l.s4 1966171168
      %v998 = vunpack.c.0.s8 %v997
      %v999 = vlaneseq
      %v1000 = vshrl.u32 %v999, 7
      %v1001 = vsub.s32 %v998, %v1000
      %v1002 = vrot.slane %v436, %v1001
      %v1003 = vcombine.high %v1002, %v1002
      %v1005 = vunpack.c.l.s4 1966171168
      %v1006 = vunpack.c.0.s8 %v1005
      %v1007 = vlaneseq
      %v1008 = vshrl.u32 %v1007, 7
      %v1009 = vsub.s32 %v1006, %v1008
      %v1010 = vrot.slane %v1002, %v1009
      %v1012 = vunpack.c.l.s4 1966171168
      %v1013 = vunpack.c.0.s8 %v1012
      %v1014 = vlaneseq
      %v1015 = vshrl.u32 %v1014, 7
      %v1016 = vsub.s32 %v1013, %v1015
      %v1017 = vrot.slane %v1003, %v1016
      %v1018 = vcombine.high %v1010, %v1010
      %v1020 = vunpack.c.l.s4 1966171168
      %v1021 = vunpack.c.0.s8 %v1020
      %v1022 = vlaneseq
      %v1023 = vshrl.u32 %v1022, 7
      %v1024 = vsub.s32 %v1021, %v1023
      %v1025 = vrot.slane %v437, %v1024
      %v1026 = vcombine.high %v1025, %v1025
      %v1028 = vunpack.c.l.s4 1966171168
      %v1029 = vunpack.c.0.s8 %v1028
      %v1030 = vlaneseq
      %v1031 = vshrl.u32 %v1030, 7
      %v1032 = vsub.s32 %v1029, %v1031
      %v1033 = vrot.slane %v1025, %v1032
      %v1035 = vunpack.c.l.s4 1966171168
      %v1036 = vunpack.c.0.s8 %v1035
      %v1037 = vlaneseq
      %v1038 = vshrl.u32 %v1037, 7
      %v1039 = vsub.s32 %v1036, %v1038
      %v1040 = vrot.slane %v1026, %v1039
      %v1041 = vcombine.high %v1033, %v1033
      %v1042 = vcombine.high %v1040, %v1040
      %v1044 = vunpack.c.l.s4 1966171168
      %v1045 = vunpack.c.0.s8 %v1044
      %v1046 = vlaneseq
      %v1047 = vshrl.u32 %v1046, 7
      %v1048 = vsub.s32 %v1045, %v1047
      %v1049 = vrot.slane %v438, %v1048
      %v1050 = vcombine.high %v1049, %v1049
      %v1052 = vunpack.c.l.s4 1966171168
      %v1053 = vunpack.c.0.s8 %v1052
      %v1054 = vlaneseq
      %v1055 = vshrl.u32 %v1054, 7
      %v1056 = vsub.s32 %v1053, %v1055
      %v1057 = vrot.slane %v1049, %v1056
      %v1059 = vunpack.c.l.s4 1966171168
      %v1060 = vunpack.c.0.s8 %v1059
      %v1061 = vlaneseq
      %v1062 = vshrl.u32 %v1061, 7
      %v1063 = vsub.s32 %v1060, %v1062
      %v1064 = vrot.slane %v1050, %v1063
      %v1065 = vcombine.high %v1057, %v1057
      %v1067 = vunpack.c.l.s4 1966171168
      %v1068 = vunpack.c.0.s8 %v1067
      %v1069 = vlaneseq
      %v1070 = vshrl.u32 %v1069, 7
      %v1071 = vsub.s32 %v1068, %v1070
      %v1072 = vrot.slane %v439, %v1071
      %v1073 = vcombine.high %v1072, %v1072
      %v1075 = vunpack.c.l.s4 1966171168
      %v1076 = vunpack.c.0.s8 %v1075
      %v1077 = vlaneseq
      %v1078 = vshrl.u32 %v1077, 7
      %v1079 = vsub.s32 %v1076, %v1078
      %v1080 = vrot.slane %v1072, %v1079
      %v1082 = vunpack.c.l.s4 1966171168
      %v1083 = vunpack.c.0.s8 %v1082
      %v1084 = vlaneseq
      %v1085 = vshrl.u32 %v1084, 7
      %v1086 = vsub.s32 %v1083, %v1085
      %v1087 = vrot.slane %v1073, %v1086
      %v1088 = vcombine.high %v1080, %v1080
      %v1089 = vcombine.high %v1087, %v1087
      %v1091 = vunpack.c.l.s4 1966171168
      %v1092 = vunpack.c.0.s8 %v1091
      %v1093 = vlaneseq
      %v1094 = vshrl.u32 %v1093, 7
      %v1095 = vsub.s32 %v1092, %v1094
      %v1096 = vrot.slane %v440, %v1095
      %v1097 = vcombine.high %v1096, %v1096
      %v1099 = vunpack.c.l.s4 1966171168
      %v1100 = vunpack.c.0.s8 %v1099
      %v1101 = vlaneseq
      %v1102 = vshrl.u32 %v1101, 7
      %v1103 = vsub.s32 %v1100, %v1102
      %v1104 = vrot.slane %v1096, %v1103
      %v1106 = vunpack.c.l.s4 1966171168
      %v1107 = vunpack.c.0.s8 %v1106
      %v1108 = vlaneseq
      %v1109 = vshrl.u32 %v1108, 7
      %v1110 = vsub.s32 %v1107, %v1109
      %v1111 = vrot.slane %v1097, %v1110
      %v1112 = vcombine.high %v1104, %v1104
      %v1114 = vunpack.c.l.s4 1966171168
      %v1115 = vunpack.c.0.s8 %v1114
      %v1116 = vlaneseq
      %v1117 = vshrl.u32 %v1116, 7
      %v1118 = vsub.s32 %v1115, %v1117
      %v1119 = vrot.slane %v441, %v1118
      %v1120 = vcombine.high %v1119, %v1119
      %v1122 = vunpack.c.l.s4 1966171168
      %v1123 = vunpack.c.0.s8 %v1122
      %v1124 = vlaneseq
      %v1125 = vshrl.u32 %v1124, 7
      %v1126 = vsub.s32 %v1123, %v1125
      %v1127 = vrot.slane %v1119, %v1126
      %v1129 = vunpack.c.l.s4 1966171168
      %v1130 = vunpack.c.0.s8 %v1129
      %v1131 = vlaneseq
      %v1132 = vshrl.u32 %v1131, 7
      %v1133 = vsub.s32 %v1130, %v1132
      %v1134 = vrot.slane %v1120, %v1133
      %v1135 = vcombine.high %v1127, %v1127
      %v1136 = vcombine.high %v1134, %v1134
      %v1138 = vunpack.c.l.s4 1966171168
      %v1139 = vunpack.c.0.s8 %v1138
      %v1140 = vlaneseq
      %v1141 = vshrl.u32 %v1140, 7
      %v1142 = vsub.s32 %v1139, %v1141
      %v1143 = vrot.slane %v442, %v1142
      %v1144 = vcombine.high %v1143, %v1143
      %v1146 = vunpack.c.l.s4 1966171168
      %v1147 = vunpack.c.0.s8 %v1146
      %v1148 = vlaneseq
      %v1149 = vshrl.u32 %v1148, 7
      %v1150 = vsub.s32 %v1147, %v1149
      %v1151 = vrot.slane %v1143, %v1150
      %v1153 = vunpack.c.l.s4 1966171168
      %v1154 = vunpack.c.0.s8 %v1153
      %v1155 = vlaneseq
      %v1156 = vshrl.u32 %v1155, 7
      %v1157 = vsub.s32 %v1154, %v1156
      %v1158 = vrot.slane %v1144, %v1157
      %v1159 = vcombine.high %v1151, %v1151
      %v1160 = vcombine.low %v516, %v524
      %v1161 = vcombine.low %v523, %v525
      %v1163 = vunpack.c.l.s4 1935823168
      %v1164 = vunpack.c.0.s8 %v1163
      %v1165 = vlaneseq
      %v1166 = vshrl.u32 %v1165, 7
      %v1167 = vsub.s32 %v1164, %v1166
      %v1168 = vrot.slane %v1160, %v1167
      %v1170 = vunpack.c.l.s4 1935823168
      %v1171 = vunpack.c.0.s8 %v1170
      %v1172 = vlaneseq
      %v1173 = vshrl.u32 %v1172, 7
      %v1174 = vsub.s32 %v1171, %v1173
      %v1175 = vrot.slane %v1161, %v1174
      %v1176 = vcombine.low %v1168, %v1175
      %v1178 = vunpack.c.l.s4 1935823168
      %v1179 = vunpack.c.0.s8 %v1178
      %v1180 = vlaneseq
      %v1181 = vshrl.u32 %v1180, 7
      %v1182 = vsub.s32 %v1179, %v1181
      %v1183 = vrot.slane %v1176, %v1182
      %v1184 = vcombine.low %v540, %v548
      %v1185 = vcombine.low %v547, %v563
      %v1187 = vunpack.c.l.s4 1935823168
      %v1188 = vunpack.c.0.s8 %v1187
      %v1189 = vlaneseq
      %v1190 = vshrl.u32 %v1189, 7
      %v1191 = vsub.s32 %v1188, %v1190
      %v1192 = vrot.slane %v1184, %v1191
      %v1194 = vunpack.c.l.s4 1935823168
      %v1195 = vunpack.c.0.s8 %v1194
      %v1196 = vlaneseq
      %v1197 = vshrl.u32 %v1196, 7
      %v1198 = vsub.s32 %v1195, %v1197
      %v1199 = vrot.slane %v1185, %v1198
      %v1200 = vcombine.low %v1192, %v1199
      %v1202 = vunpack.c.l.s4 1935823168
      %v1203 = vunpack.c.0.s8 %v1202
      %v1204 = vlaneseq
      %v1205 = vshrl.u32 %v1204, 7
      %v1206 = vsub.s32 %v1203, %v1205
      %v1207 = vrot.slane %v1200, %v1206
      %v1208 = vcombine.low %v570, %v572
      %v1209 = vcombine.low %v571, %v587
      %v1211 = vunpack.c.l.s4 1935823168
      %v1212 = vunpack.c.0.s8 %v1211
      %v1213 = vlaneseq
      %v1214 = vshrl.u32 %v1213, 7
      %v1215 = vsub.s32 %v1212, %v1214
      %v1216 = vrot.slane %v1208, %v1215
      %v1218 = vunpack.c.l.s4 1935823168
      %v1219 = vunpack.c.0.s8 %v1218
      %v1220 = vlaneseq
      %v1221 = vshrl.u32 %v1220, 7
      %v1222 = vsub.s32 %v1219, %v1221
      %v1223 = vrot.slane %v1209, %v1222
      %v1224 = vcombine.low %v1216, %v1223
      %v1226 = vunpack.c.l.s4 1935823168
      %v1227 = vunpack.c.0.s8 %v1226
      %v1228 = vlaneseq
      %v1229 = vshrl.u32 %v1228, 7
      %v1230 = vsub.s32 %v1227, %v1229
      %v1231 = vrot.slane %v1224, %v1230
      %v1232 = vcombine.low %v594, %v610
      %v1233 = vcombine.low %v595, %v617
      %v1235 = vunpack.c.l.s4 1935823168
      %v1236 = vunpack.c.0.s8 %v1235
      %v1237 = vlaneseq
      %v1238 = vshrl.u32 %v1237, 7
      %v1239 = vsub.s32 %v1236, %v1238
      %v1240 = vrot.slane %v1232, %v1239
      %v1242 = vunpack.c.l.s4 1935823168
      %v1243 = vunpack.c.0.s8 %v1242
      %v1244 = vlaneseq
      %v1245 = vshrl.u32 %v1244, 7
      %v1246 = vsub.s32 %v1243, %v1245
      %v1247 = vrot.slane %v1233, %v1246
      %v1248 = vcombine.low %v1240, %v1247
      %v1250 = vunpack.c.l.s4 1935823168
      %v1251 = vunpack.c.0.s8 %v1250
      %v1252 = vlaneseq
      %v1253 = vshrl.u32 %v1252, 7
      %v1254 = vsub.s32 %v1251, %v1253
      %v1255 = vrot.slane %v1248, %v1254
      %v1256 = vcombine.low %v618, %v634
      %v1257 = vcombine.low %v619, %v641
      %v1259 = vunpack.c.l.s4 1935823168
      %v1260 = vunpack.c.0.s8 %v1259
      %v1261 = vlaneseq
      %v1262 = vshrl.u32 %v1261, 7
      %v1263 = vsub.s32 %v1260, %v1262
      %v1264 = vrot.slane %v1256, %v1263
      %v1266 = vunpack.c.l.s4 1935823168
      %v1267 = vunpack.c.0.s8 %v1266
      %v1268 = vlaneseq
      %v1269 = vshrl.u32 %v1268, 7
      %v1270 = vsub.s32 %v1267, %v1269
      %v1271 = vrot.slane %v1257, %v1270
      %v1272 = vcombine.low %v1264, %v1271
      %v1274 = vunpack.c.l.s4 1935823168
      %v1275 = vunpack.c.0.s8 %v1274
      %v1276 = vlaneseq
      %v1277 = vshrl.u32 %v1276, 7
      %v1278 = vsub.s32 %v1275, %v1277
      %v1279 = vrot.slane %v1272, %v1278
      %v1280 = vcombine.low %v642, %v664
      %v1281 = vcombine.low %v657, %v665
      %v1283 = vunpack.c.l.s4 1935823168
      %v1284 = vunpack.c.0.s8 %v1283
      %v1285 = vlaneseq
      %v1286 = vshrl.u32 %v1285, 7
      %v1287 = vsub.s32 %v1284, %v1286
      %v1288 = vrot.slane %v1280, %v1287
      %v1290 = vunpack.c.l.s4 1935823168
      %v1291 = vunpack.c.0.s8 %v1290
      %v1292 = vlaneseq
      %v1293 = vshrl.u32 %v1292, 7
      %v1294 = vsub.s32 %v1291, %v1293
      %v1295 = vrot.slane %v1281, %v1294
      %v1296 = vcombine.low %v1288, %v1295
      %v1298 = vunpack.c.l.s4 1935823168
      %v1299 = vunpack.c.0.s8 %v1298
      %v1300 = vlaneseq
      %v1301 = vshrl.u32 %v1300, 7
      %v1302 = vsub.s32 %v1299, %v1301
      %v1303 = vrot.slane %v1296, %v1302
      %v1304 = vcombine.low %v666, %v688
      %v1305 = vcombine.low %v681, %v689
      %v1307 = vunpack.c.l.s4 1935823168
      %v1308 = vunpack.c.0.s8 %v1307
      %v1309 = vlaneseq
      %v1310 = vshrl.u32 %v1309, 7
      %v1311 = vsub.s32 %v1308, %v1310
      %v1312 = vrot.slane %v1304, %v1311
      %v1314 = vunpack.c.l.s4 1935823168
      %v1315 = vunpack.c.0.s8 %v1314
      %v1316 = vlaneseq
      %v1317 = vshrl.u32 %v1316, 7
      %v1318 = vsub.s32 %v1315, %v1317
      %v1319 = vrot.slane %v1305, %v1318
      %v1320 = vcombine.low %v1312, %v1319
      %v1322 = vunpack.c.l.s4 1935823168
      %v1323 = vunpack.c.0.s8 %v1322
      %v1324 = vlaneseq
      %v1325 = vshrl.u32 %v1324, 7
      %v1326 = vsub.s32 %v1323, %v1325
      %v1327 = vrot.slane %v1320, %v1326
      %v1328 = vcombine.low %v704, %v712
      %v1329 = vcombine.low %v711, %v713
      %v1331 = vunpack.c.l.s4 1935823168
      %v1332 = vunpack.c.0.s8 %v1331
      %v1333 = vlaneseq
      %v1334 = vshrl.u32 %v1333, 7
      %v1335 = vsub.s32 %v1332, %v1334
      %v1336 = vrot.slane %v1328, %v1335
      %v1338 = vunpack.c.l.s4 1935823168
      %v1339 = vunpack.c.0.s8 %v1338
      %v1340 = vlaneseq
      %v1341 = vshrl.u32 %v1340, 7
      %v1342 = vsub.s32 %v1339, %v1341
      %v1343 = vrot.slane %v1329, %v1342
      %v1344 = vcombine.low %v1336, %v1343
      %v1346 = vunpack.c.l.s4 1935823168
      %v1347 = vunpack.c.0.s8 %v1346
      %v1348 = vlaneseq
      %v1349 = vshrl.u32 %v1348, 7
      %v1350 = vsub.s32 %v1347, %v1349
      %v1351 = vrot.slane %v1344, %v1350
      %v1352 = vcombine.low %v728, %v736
      %v1353 = vcombine.low %v735, %v751
      %v1355 = vunpack.c.l.s4 1935823168
      %v1356 = vunpack.c.0.s8 %v1355
      %v1357 = vlaneseq
      %v1358 = vshrl.u32 %v1357, 7
      %v1359 = vsub.s32 %v1356, %v1358
      %v1360 = vrot.slane %v1352, %v1359
      %v1362 = vunpack.c.l.s4 1935823168
      %v1363 = vunpack.c.0.s8 %v1362
      %v1364 = vlaneseq
      %v1365 = vshrl.u32 %v1364, 7
      %v1366 = vsub.s32 %v1363, %v1365
      %v1367 = vrot.slane %v1353, %v1366
      %v1368 = vcombine.low %v1360, %v1367
      %v1370 = vunpack.c.l.s4 1935823168
      %v1371 = vunpack.c.0.s8 %v1370
      %v1372 = vlaneseq
      %v1373 = vshrl.u32 %v1372, 7
      %v1374 = vsub.s32 %v1371, %v1373
      %v1375 = vrot.slane %v1368, %v1374
      %v1376 = vcombine.low %v758, %v760
      %v1377 = vcombine.low %v759, %v775
      %v1379 = vunpack.c.l.s4 1935823168
      %v1380 = vunpack.c.0.s8 %v1379
      %v1381 = vlaneseq
      %v1382 = vshrl.u32 %v1381, 7
      %v1383 = vsub.s32 %v1380, %v1382
      %v1384 = vrot.slane %v1376, %v1383
      %v1386 = vunpack.c.l.s4 1935823168
      %v1387 = vunpack.c.0.s8 %v1386
      %v1388 = vlaneseq
      %v1389 = vshrl.u32 %v1388, 7
      %v1390 = vsub.s32 %v1387, %v1389
      %v1391 = vrot.slane %v1377, %v1390
      %v1392 = vcombine.low %v1384, %v1391
      %v1394 = vunpack.c.l.s4 1935823168
      %v1395 = vunpack.c.0.s8 %v1394
      %v1396 = vlaneseq
      %v1397 = vshrl.u32 %v1396, 7
      %v1398 = vsub.s32 %v1395, %v1397
      %v1399 = vrot.slane %v1392, %v1398
      %v1400 = vcombine.low %v782, %v798
      %v1401 = vcombine.low %v783, %v805
      %v1403 = vunpack.c.l.s4 1935823168
      %v1404 = vunpack.c.0.s8 %v1403
      %v1405 = vlaneseq
      %v1406 = vshrl.u32 %v1405, 7
      %v1407 = vsub.s32 %v1404, %v1406
      %v1408 = vrot.slane %v1400, %v1407
      %v1410 = vunpack.c.l.s4 1935823168
      %v1411 = vunpack.c.0.s8 %v1410
      %v1412 = vlaneseq
      %v1413 = vshrl.u32 %v1412, 7
      %v1414 = vsub.s32 %v1411, %v1413
      %v1415 = vrot.slane %v1401, %v1414
      %v1416 = vcombine.low %v1408, %v1415
      %v1418 = vunpack.c.l.s4 1935823168
      %v1419 = vunpack.c.0.s8 %v1418
      %v1420 = vlaneseq
      %v1421 = vshrl.u32 %v1420, 7
      %v1422 = vsub.s32 %v1419, %v1421
      %v1423 = vrot.slane %v1416, %v1422
      %v1424 = vcombine.low %v806, %v822
      %v1425 = vcombine.low %v807, %v829
      %v1427 = vunpack.c.l.s4 1935823168
      %v1428 = vunpack.c.0.s8 %v1427
      %v1429 = vlaneseq
      %v1430 = vshrl.u32 %v1429, 7
      %v1431 = vsub.s32 %v1428, %v1430
      %v1432 = vrot.slane %v1424, %v1431
      %v1434 = vunpack.c.l.s4 1935823168
      %v1435 = vunpack.c.0.s8 %v1434
      %v1436 = vlaneseq
      %v1437 = vshrl.u32 %v1436, 7
      %v1438 = vsub.s32 %v1435, %v1437
      %v1439 = vrot.slane %v1425, %v1438
      %v1440 = vcombine.low %v1432, %v1439
      %v1442 = vunpack.c.l.s4 1935823168
      %v1443 = vunpack.c.0.s8 %v1442
      %v1444 = vlaneseq
      %v1445 = vshrl.u32 %v1444, 7
      %v1446 = vsub.s32 %v1443, %v1445
      %v1447 = vrot.slane %v1440, %v1446
      %v1448 = vcombine.low %v830, %v852
      %v1449 = vcombine.low %v845, %v853
      %v1451 = vunpack.c.l.s4 1935823168
      %v1452 = vunpack.c.0.s8 %v1451
      %v1453 = vlaneseq
      %v1454 = vshrl.u32 %v1453, 7
      %v1455 = vsub.s32 %v1452, %v1454
      %v1456 = vrot.slane %v1448, %v1455
      %v1458 = vunpack.c.l.s4 1935823168
      %v1459 = vunpack.c.0.s8 %v1458
      %v1460 = vlaneseq
      %v1461 = vshrl.u32 %v1460, 7
      %v1462 = vsub.s32 %v1459, %v1461
      %v1463 = vrot.slane %v1449, %v1462
      %v1464 = vcombine.low %v1456, %v1463
      %v1466 = vunpack.c.l.s4 1935823168
      %v1467 = vunpack.c.0.s8 %v1466
      %v1468 = vlaneseq
      %v1469 = vshrl.u32 %v1468, 7
      %v1470 = vsub.s32 %v1467, %v1469
      %v1471 = vrot.slane %v1464, %v1470
      %v1472 = vcombine.low %v854, %v876
      %v1473 = vcombine.low %v869, %v877
      %v1475 = vunpack.c.l.s4 1935823168
      %v1476 = vunpack.c.0.s8 %v1475
      %v1477 = vlaneseq
      %v1478 = vshrl.u32 %v1477, 7
      %v1479 = vsub.s32 %v1476, %v1478
      %v1480 = vrot.slane %v1472, %v1479
      %v1482 = vunpack.c.l.s4 1935823168
      %v1483 = vunpack.c.0.s8 %v1482
      %v1484 = vlaneseq
      %v1485 = vshrl.u32 %v1484, 7
      %v1486 = vsub.s32 %v1483, %v1485
      %v1487 = vrot.slane %v1473, %v1486
      %v1488 = vcombine.low %v1480, %v1487
      %v1490 = vunpack.c.l.s4 1935823168
      %v1491 = vunpack.c.0.s8 %v1490
      %v1492 = vlaneseq
      %v1493 = vshrl.u32 %v1492, 7
      %v1494 = vsub.s32 %v1491, %v1493
      %v1495 = vrot.slane %v1488, %v1494
      %v1496 = vcombine.low %v892, %v900
      %v1497 = vcombine.low %v899, %v901
      %v1499 = vunpack.c.l.s4 1935823168
      %v1500 = vunpack.c.0.s8 %v1499
      %v1501 = vlaneseq
      %v1502 = vshrl.u32 %v1501, 7
      %v1503 = vsub.s32 %v1500, %v1502
      %v1504 = vrot.slane %v1496, %v1503
      %v1506 = vunpack.c.l.s4 1935823168
      %v1507 = vunpack.c.0.s8 %v1506
      %v1508 = vlaneseq
      %v1509 = vshrl.u32 %v1508, 7
      %v1510 = vsub.s32 %v1507, %v1509
      %v1511 = vrot.slane %v1497, %v1510
      %v1512 = vcombine.low %v1504, %v1511
      %v1514 = vunpack.c.l.s4 1935823168
      %v1515 = vunpack.c.0.s8 %v1514
      %v1516 = vlaneseq
      %v1517 = vshrl.u32 %v1516, 7
      %v1518 = vsub.s32 %v1515, %v1517
      %v1519 = vrot.slane %v1512, %v1518
      %v1520 = vcombine.low %v916, %v924
      %v1521 = vcombine.low %v923, %v939
      %v1523 = vunpack.c.l.s4 1935823168
      %v1524 = vunpack.c.0.s8 %v1523
      %v1525 = vlaneseq
      %v1526 = vshrl.u32 %v1525, 7
      %v1527 = vsub.s32 %v1524, %v1526
      %v1528 = vrot.slane %v1520, %v1527
      %v1530 = vunpack.c.l.s4 1935823168
      %v1531 = vunpack.c.0.s8 %v1530
      %v1532 = vlaneseq
      %v1533 = vshrl.u32 %v1532, 7
      %v1534 = vsub.s32 %v1531, %v1533
      %v1535 = vrot.slane %v1521, %v1534
      %v1536 = vcombine.low %v1528, %v1535
      %v1538 = vunpack.c.l.s4 1935823168
      %v1539 = vunpack.c.0.s8 %v1538
      %v1540 = vlaneseq
      %v1541 = vshrl.u32 %v1540, 7
      %v1542 = vsub.s32 %v1539, %v1541
      %v1543 = vrot.slane %v1536, %v1542
      %v1544 = vcombine.low %v946, %v948
      %v1545 = vcombine.low %v947, %v963
      %v1547 = vunpack.c.l.s4 1935823168
      %v1548 = vunpack.c.0.s8 %v1547
      %v1549 = vlaneseq
      %v1550 = vshrl.u32 %v1549, 7
      %v1551 = vsub.s32 %v1548, %v1550
      %v1552 = vrot.slane %v1544, %v1551
      %v1554 = vunpack.c.l.s4 1935823168
      %v1555 = vunpack.c.0.s8 %v1554
      %v1556 = vlaneseq
      %v1557 = vshrl.u32 %v1556, 7
      %v1558 = vsub.s32 %v1555, %v1557
      %v1559 = vrot.slane %v1545, %v1558
      %v1560 = vcombine.low %v1552, %v1559
      %v1562 = vunpack.c.l.s4 1935823168
      %v1563 = vunpack.c.0.s8 %v1562
      %v1564 = vlaneseq
      %v1565 = vshrl.u32 %v1564, 7
      %v1566 = vsub.s32 %v1563, %v1565
      %v1567 = vrot.slane %v1560, %v1566
      %v1568 = vcombine.low %v970, %v986
      %v1569 = vcombine.low %v971, %v993
      %v1571 = vunpack.c.l.s4 1935823168
      %v1572 = vunpack.c.0.s8 %v1571
      %v1573 = vlaneseq
      %v1574 = vshrl.u32 %v1573, 7
      %v1575 = vsub.s32 %v1572, %v1574
      %v1576 = vrot.slane %v1568, %v1575
      %v1578 = vunpack.c.l.s4 1935823168
      %v1579 = vunpack.c.0.s8 %v1578
      %v1580 = vlaneseq
      %v1581 = vshrl.u32 %v1580, 7
      %v1582 = vsub.s32 %v1579, %v1581
      %v1583 = vrot.slane %v1569, %v1582
      %v1584 = vcombine.low %v1576, %v1583
      %v1586 = vunpack.c.l.s4 1935823168
      %v1587 = vunpack.c.0.s8 %v1586
      %v1588 = vlaneseq
      %v1589 = vshrl.u32 %v1588, 7
      %v1590 = vsub.s32 %v1587, %v1589
      %v1591 = vrot.slane %v1584, %v1590
      %v1592 = vcombine.low %v994, %v1010
      %v1593 = vcombine.low %v995, %v1017
      %v1595 = vunpack.c.l.s4 1935823168
      %v1596 = vunpack.c.0.s8 %v1595
      %v1597 = vlaneseq
      %v1598 = vshrl.u32 %v1597, 7
      %v1599 = vsub.s32 %v1596, %v1598
      %v1600 = vrot.slane %v1592, %v1599
      %v1602 = vunpack.c.l.s4 1935823168
      %v1603 = vunpack.c.0.s8 %v1602
      %v1604 = vlaneseq
      %v1605 = vshrl.u32 %v1604, 7
      %v1606 = vsub.s32 %v1603, %v1605
      %v1607 = vrot.slane %v1593, %v1606
      %v1608 = vcombine.low %v1600, %v1607
      %v1610 = vunpack.c.l.s4 1935823168
      %v1611 = vunpack.c.0.s8 %v1610
      %v1612 = vlaneseq
      %v1613 = vshrl.u32 %v1612, 7
      %v1614 = vsub.s32 %v1611, %v1613
      %v1615 = vrot.slane %v1608, %v1614
      %v1616 = vcombine.low %v1018, %v1040
      %v1617 = vcombine.low %v1033, %v1041
      %v1619 = vunpack.c.l.s4 1935823168
      %v1620 = vunpack.c.0.s8 %v1619
      %v1621 = vlaneseq
      %v1622 = vshrl.u32 %v1621, 7
      %v1623 = vsub.s32 %v1620, %v1622
      %v1624 = vrot.slane %v1616, %v1623
      %v1626 = vunpack.c.l.s4 1935823168
      %v1627 = vunpack.c.0.s8 %v1626
      %v1628 = vlaneseq
      %v1629 = vshrl.u32 %v1628, 7
      %v1630 = vsub.s32 %v1627, %v1629
      %v1631 = vrot.slane %v1617, %v1630
      %v1632 = vcombine.low %v1624, %v1631
      %v1634 = vunpack.c.l.s4 1935823168
      %v1635 = vunpack.c.0.s8 %v1634
      %v1636 = vlaneseq
      %v1637 = vshrl.u32 %v1636, 7
      %v1638 = vsub.s32 %v1635, %v1637
      %v1639 = vrot.slane %v1632, %v1638
      %v1640 = vcombine.low %v1042, %v1064
      %v1641 = vcombine.low %v1057, %v1065
      %v1643 = vunpack.c.l.s4 1935823168
      %v1644 = vunpack.c.0.s8 %v1643
      %v1645 = vlaneseq
      %v1646 = vshrl.u32 %v1645, 7
      %v1647 = vsub.s32 %v1644, %v1646
      %v1648 = vrot.slane %v1640, %v1647
      %v1650 = vunpack.c.l.s4 1935823168
      %v1651 = vunpack.c.0.s8 %v1650
      %v1652 = vlaneseq
      %v1653 = vshrl.u32 %v1652, 7
      %v1654 = vsub.s32 %v1651, %v1653
      %v1655 = vrot.slane %v1641, %v1654
      %v1656 = vcombine.low %v1648, %v1655
      %v1658 = vunpack.c.l.s4 1935823168
      %v1659 = vunpack.c.0.s8 %v1658
      %v1660 = vlaneseq
      %v1661 = vshrl.u32 %v1660, 7
      %v1662 = vsub.s32 %v1659, %v1661
      %v1663 = vrot.slane %v1656, %v1662
      %v1664 = vcombine.low %v1080, %v1088
      %v1665 = vcombine.low %v1087, %v1089
      %v1667 = vunpack.c.l.s4 1935823168
      %v1668 = vunpack.c.0.s8 %v1667
      %v1669 = vlaneseq
      %v1670 = vshrl.u32 %v1669, 7
      %v1671 = vsub.s32 %v1668, %v1670
      %v1672 = vrot.slane %v1664, %v1671
      %v1674 = vunpack.c.l.s4 1935823168
      %v1675 = vunpack.c.0.s8 %v1674
      %v1676 = vlaneseq
      %v1677 = vshrl.u32 %v1676, 7
      %v1678 = vsub.s32 %v1675, %v1677
      %v1679 = vrot.slane %v1665, %v1678
      %v1680 = vcombine.low %v1672, %v1679
      %v1682 = vunpack.c.l.s4 1935823168
      %v1683 = vunpack.c.0.s8 %v1682
      %v1684 = vlaneseq
      %v1685 = vshrl.u32 %v1684, 7
      %v1686 = vsub.s32 %v1683, %v1685
      %v1687 = vrot.slane %v1680, %v1686
      %v1688 = vcombine.low %v1104, %v1112
      %v1689 = vcombine.low %v1111, %v1127
      %v1691 = vunpack.c.l.s4 1935823168
      %v1692 = vunpack.c.0.s8 %v1691
      %v1693 = vlaneseq
      %v1694 = vshrl.u32 %v1693, 7
      %v1695 = vsub.s32 %v1692, %v1694
      %v1696 = vrot.slane %v1688, %v1695
      %v1698 = vunpack.c.l.s4 1935823168
      %v1699 = vunpack.c.0.s8 %v1698
      %v1700 = vlaneseq
      %v1701 = vshrl.u32 %v1700, 7
      %v1702 = vsub.s32 %v1699, %v1701
      %v1703 = vrot.slane %v1689, %v1702
      %v1704 = vcombine.low %v1696, %v1703
      %v1706 = vunpack.c.l.s4 1935823168
      %v1707 = vunpack.c.0.s8 %v1706
      %v1708 = vlaneseq
      %v1709 = vshrl.u32 %v1708, 7
      %v1710 = vsub.s32 %v1707, %v1709
      %v1711 = vrot.slane %v1704, %v1710
      %v1712 = vcombine.low %v1134, %v1136
      %v1713 = vcombine.low %v1135, %v1151
      %v1715 = vunpack.c.l.s4 1935823168
      %v1716 = vunpack.c.0.s8 %v1715
      %v1717 = vlaneseq
      %v1718 = vshrl.u32 %v1717, 7
      %v1719 = vsub.s32 %v1716, %v1718
      %v1720 = vrot.slane %v1712, %v1719
      %v1722 = vunpack.c.l.s4 1935823168
      %v1723 = vunpack.c.0.s8 %v1722
      %v1724 = vlaneseq
      %v1725 = vshrl.u32 %v1724, 7
      %v1726 = vsub.s32 %v1723, %v1725
      %v1727 = vrot.slane %v1713, %v1726
      %v1728 = vcombine.low %v1720, %v1727
      %v1730 = vunpack.c.l.s4 1935823168
      %v1731 = vunpack.c.0.s8 %v1730
      %v1732 = vlaneseq
      %v1733 = vshrl.u32 %v1732, 7
      %v1734 = vsub.s32 %v1731, %v1733
      %v1735 = vrot.slane %v1728, %v1734
      %v1737 = vunpack.c.l.s4 1935823168
      %v1738 = vunpack.c.0.s8 %v1737
      %v1739 = vlaneseq
      %v1740 = vshrl.u32 %v1739, 7
      %v1741 = vsub.s32 %v1738, %v1740
      %v1742 = vrot.slane %v1158, %v1741
      %v1744 = vunpack.c.l.s4 1935823168
      %v1745 = vunpack.c.0.s8 %v1744
      %v1746 = vlaneseq
      %v1747 = vshrl.u32 %v1746, 7
      %v1748 = vsub.s32 %v1745, %v1747
      %v1749 = vrot.slane %v1159, %v1748
      %v1750 = vcombine.low %v1742, %v1749
      %v1752 = vunpack.c.l.s4 1935823168
      %v1753 = vunpack.c.0.s8 %v1752
      %v1754 = vlaneseq
      %v1755 = vshrl.u32 %v1754, 7
      %v1756 = vsub.s32 %v1753, %v1755
      %v1757 = vrot.slane %v1750, %v1756
      %vm1783 = vcmask 19456
      %1784 = vst.msk [vmem:[#allocation2] sm:$0xf] %vm1783, %v1183
      %1785 = vst.msk [vmem:[#allocation2 + $0x4] sm:$0xf] %vm1783, %v1207
      %1786 = vst.msk [vmem:[#allocation2 + $0x8] sm:$0xf] %vm1783, %v1231
      %1787 = vst.msk [vmem:[#allocation2 + $0xc] sm:$0xf] %vm1783, %v1255
      %1788 = vst.msk [vmem:[#allocation2 + $0x10] sm:$0xf] %vm1783, %v1279
      %1789 = vst.msk [vmem:[#allocation2 + $0x14] sm:$0xf] %vm1783, %v1303
      %1790 = vst.msk [vmem:[#allocation2 + $0x18] sm:$0xf] %vm1783, %v1327
      %1791 = vst.msk [vmem:[#allocation2 + $0x1c] sm:$0xf] %vm1783, %v1351
      %1792 = vst.msk [vmem:[#allocation2 + $0x20] sm:$0xf] %vm1783, %v1375
      %1793 = vst.msk [vmem:[#allocation2 + $0x24] sm:$0xf] %vm1783, %v1399
      %1794 = vst.msk [vmem:[#allocation2 + $0x28] sm:$0xf] %vm1783, %v1423
      %1795 = vst.msk [vmem:[#allocation2 + $0x2c] sm:$0xf] %vm1783, %v1447
      %1796 = vst.msk [vmem:[#allocation2 + $0x30] sm:$0xf] %vm1783, %v1471
      %1797 = vst.msk [vmem:[#allocation2 + $0x34] sm:$0xf] %vm1783, %v1495
      %1798 = vst.msk [vmem:[#allocation2 + $0x38] sm:$0xf] %vm1783, %v1519
      %1799 = vst.msk [vmem:[#allocation2 + $0x3c] sm:$0xf] %vm1783, %v1543
      %1800 = vst.msk [vmem:[#allocation2 + $0x40] sm:$0xf] %vm1783, %v1567
      %1801 = vst.msk [vmem:[#allocation2 + $0x44] sm:$0xf] %vm1783, %v1591
      %1802 = vst.msk [vmem:[#allocation2 + $0x48] sm:$0xf] %vm1783, %v1615
      %1803 = vst.msk [vmem:[#allocation2 + $0x4c] sm:$0xf] %vm1783, %v1639
      %1804 = vst.msk [vmem:[#allocation2 + $0x50] sm:$0xf] %vm1783, %v1663
      %1805 = vst.msk [vmem:[#allocation2 + $0x54] sm:$0xf] %vm1783, %v1687
      %1806 = vst.msk [vmem:[#allocation2 + $0x58] sm:$0xf] %vm1783, %v1711
      %1807 = vst.msk [vmem:[#allocation2 + $0x5c] sm:$0xf] %vm1783, %v1735
      %vm1808 = vcmask 17408
      %1809 = vst.msk [vmem:[#allocation2 + $0x60] sm:$0x3] %vm1808, %v1757
      %v1810 = vcombine.high %v547, %v547
      %v1811 = vcombine.high %v594, %v594
      %v1812 = vcombine.high %v641, %v641
      %v1813 = vcombine.high %v688, %v688
      %v1814 = vcombine.high %v735, %v735
      %v1815 = vcombine.high %v782, %v782
      %v1816 = vcombine.high %v829, %v829
      %v1817 = vcombine.high %v876, %v876
      %v1818 = vcombine.high %v923, %v923
      %v1819 = vcombine.high %v970, %v970
      %v1820 = vcombine.high %v1017, %v1017
      %v1821 = vcombine.high %v1064, %v1064
      %v1822 = vcombine.high %v1111, %v1111
      %v1823 = vcombine.high %v1158, %v1158
      %vm1824 = vsmask.f32 256
      %vm1825 = vsmask.f32 1284
      %vm1826 = vmor %vm1824, %vm1825
      %vm1827 = vsmask.f32 2312
      %vm1828 = vmor %vm1826, %vm1827
      %vm1829 = vsmask.f32 3340
      %vm1830 = vmor %vm1828, %vm1829
      %vm1831 = vsmask.f32 4368
      %vm1832 = vmor %vm1830, %vm1831
      %vm1833 = vsmask.f32 5396
      %vm1834 = vmor %vm1832, %vm1833
      %vm1835 = vsmask.f32 6424
      %vm1836 = vmor %vm1834, %vm1835
      %vm1837 = vsmask.f32 7452
      %vm1838 = vmor %vm1836, %vm1837
      %v1840 = vshrl.u32 %v516, 16
      %v1842 = vrot.slane %v1840, 7
      %v1843 = vrot.slane %v1842, 1
      %v1845 = vshll.u32 %v523, 16
      %v1847 = vsel %vm1838, %v1843, %v1845
      %v1848 = vshrl.u32 %v523, 16
      %v1850 = vrot.slane %v1848, 7
      %v1851 = vrot.slane %v1850, 1
      %v1853 = vshll.u32 %v524, 16
      %v1855 = vsel %vm1838, %v1851, %v1853
      %v1856 = vshrl.u32 %v524, 16
      %v1858 = vrot.slane %v1856, 7
      %v1859 = vrot.slane %v1858, 1
      %v1861 = vshll.u32 %v525, 16
      %v1863 = vsel %vm1838, %v1859, %v1861
      %v1864 = vshrl.u32 %v525, 16
      %v1866 = vrot.slane %v1864, 7
      %v1867 = vrot.slane %v1866, 1
      %v1869 = vshll.u32 %v540, 16
      %v1871 = vsel %vm1838, %v1867, %v1869
      %v1872 = vshrl.u32 %v540, 16
      %v1874 = vrot.slane %v1872, 7
      %v1875 = vrot.slane %v1874, 1
      %v1877 = vshll.u32 %v547, 16
      %v1879 = vsel %vm1838, %v1875, %v1877
      %v1880 = vshrl.u32 %v547, 16
      %v1882 = vrot.slane %v1880, 7
      %v1883 = vrot.slane %v1882, 1
      %v1885 = vshll.u32 %v548, 16
      %v1887 = vsel %vm1838, %v1883, %v1885
      %v1888 = vshrl.u32 %v548, 16
      %v1890 = vrot.slane %v1888, 7
      %v1891 = vrot.slane %v1890, 1
      %v1893 = vshll.u32 %v1810, 16
      %v1895 = vsel %vm1838, %v1891, %v1893
      %v1897 = vshrl.u32 %v563, 16
      %v1899 = vrot.slane %v1897, 7
      %v1900 = vrot.slane %v1899, 1
      %v1902 = vshll.u32 %v570, 16
      %v1904 = vsel %vm1838, %v1900, %v1902
      %v1905 = vshrl.u32 %v570, 16
      %v1907 = vrot.slane %v1905, 7
      %v1908 = vrot.slane %v1907, 1
      %v1910 = vshll.u32 %v571, 16
      %v1912 = vsel %vm1838, %v1908, %v1910
      %v1913 = vshrl.u32 %v571, 16
      %v1915 = vrot.slane %v1913, 7
      %v1916 = vrot.slane %v1915, 1
      %v1918 = vshll.u32 %v572, 16
      %v1920 = vsel %vm1838, %v1916, %v1918
      %v1921 = vshrl.u32 %v572, 16
      %v1923 = vrot.slane %v1921, 7
      %v1924 = vrot.slane %v1923, 1
      %v1926 = vshll.u32 %v587, 16
      %v1928 = vsel %vm1838, %v1924, %v1926
      %v1929 = vshrl.u32 %v587, 16
      %v1931 = vrot.slane %v1929, 7
      %v1932 = vrot.slane %v1931, 1
      %v1934 = vshll.u32 %v594, 16
      %v1936 = vsel %vm1838, %v1932, %v1934
      %v1937 = vshrl.u32 %v594, 16
      %v1939 = vrot.slane %v1937, 7
      %v1940 = vrot.slane %v1939, 1
      %v1942 = vshll.u32 %v595, 16
      %v1944 = vsel %vm1838, %v1940, %v1942
      %v1945 = vshrl.u32 %v595, 16
      %v1947 = vrot.slane %v1945, 7
      %v1948 = vrot.slane %v1947, 1
      %v1950 = vshll.u32 %v1811, 16
      %v1952 = vsel %vm1838, %v1948, %v1950
      %v1954 = vshrl.u32 %v610, 16
      %v1956 = vrot.slane %v1954, 7
      %v1957 = vrot.slane %v1956, 1
      %v1959 = vshll.u32 %v617, 16
      %v1961 = vsel %vm1838, %v1957, %v1959
      %v1962 = vshrl.u32 %v617, 16
      %v1964 = vrot.slane %v1962, 7
      %v1965 = vrot.slane %v1964, 1
      %v1967 = vshll.u32 %v618, 16
      %v1969 = vsel %vm1838, %v1965, %v1967
      %v1970 = vshrl.u32 %v618, 16
      %v1972 = vrot.slane %v1970, 7
      %v1973 = vrot.slane %v1972, 1
      %v1975 = vshll.u32 %v619, 16
      %v1977 = vsel %vm1838, %v1973, %v1975
      %v1978 = vshrl.u32 %v619, 16
      %v1980 = vrot.slane %v1978, 7
      %v1981 = vrot.slane %v1980, 1
      %v1983 = vshll.u32 %v634, 16
      %v1985 = vsel %vm1838, %v1981, %v1983
      %v1986 = vshrl.u32 %v634, 16
      %v1988 = vrot.slane %v1986, 7
      %v1989 = vrot.slane %v1988, 1
      %v1991 = vshll.u32 %v641, 16
      %v1993 = vsel %vm1838, %v1989, %v1991
      %v1994 = vshrl.u32 %v641, 16
      %v1996 = vrot.slane %v1994, 7
      %v1997 = vrot.slane %v1996, 1
      %v1999 = vshll.u32 %v642, 16
      %v2001 = vsel %vm1838, %v1997, %v1999
      %v2002 = vshrl.u32 %v642, 16
      %v2004 = vrot.slane %v2002, 7
      %v2005 = vrot.slane %v2004, 1
      %v2007 = vshll.u32 %v1812, 16
      %v2009 = vsel %vm1838, %v2005, %v2007
      %v2011 = vshrl.u32 %v657, 16
      %v2013 = vrot.slane %v2011, 7
      %v2014 = vrot.slane %v2013, 1
      %v2016 = vshll.u32 %v664, 16
      %v2018 = vsel %vm1838, %v2014, %v2016
      %v2019 = vshrl.u32 %v664, 16
      %v2021 = vrot.slane %v2019, 7
      %v2022 = vrot.slane %v2021, 1
      %v2024 = vshll.u32 %v665, 16
      %v2026 = vsel %vm1838, %v2022, %v2024
      %v2027 = vshrl.u32 %v665, 16
      %v2029 = vrot.slane %v2027, 7
      %v2030 = vrot.slane %v2029, 1
      %v2032 = vshll.u32 %v666, 16
      %v2034 = vsel %vm1838, %v2030, %v2032
      %v2035 = vshrl.u32 %v666, 16
      %v2037 = vrot.slane %v2035, 7
      %v2038 = vrot.slane %v2037, 1
      %v2040 = vshll.u32 %v681, 16
      %v2042 = vsel %vm1838, %v2038, %v2040
      %v2043 = vshrl.u32 %v681, 16
      %v2045 = vrot.slane %v2043, 7
      %v2046 = vrot.slane %v2045, 1
      %v2048 = vshll.u32 %v688, 16
      %v2050 = vsel %vm1838, %v2046, %v2048
      %v2051 = vshrl.u32 %v688, 16
      %v2053 = vrot.slane %v2051, 7
      %v2054 = vrot.slane %v2053, 1
      %v2056 = vshll.u32 %v689, 16
      %v2058 = vsel %vm1838, %v2054, %v2056
      %v2059 = vshrl.u32 %v689, 16
      %v2061 = vrot.slane %v2059, 7
      %v2062 = vrot.slane %v2061, 1
      %v2064 = vshll.u32 %v1813, 16
      %v2066 = vsel %vm1838, %v2062, %v2064
      %v2068 = vshrl.u32 %v704, 16
      %v2070 = vrot.slane %v2068, 7
      %v2071 = vrot.slane %v2070, 1
      %v2073 = vshll.u32 %v711, 16
      %v2075 = vsel %vm1838, %v2071, %v2073
      %v2076 = vshrl.u32 %v711, 16
      %v2078 = vrot.slane %v2076, 7
      %v2079 = vrot.slane %v2078, 1
      %v2081 = vshll.u32 %v712, 16
      %v2083 = vsel %vm1838, %v2079, %v2081
      %v2084 = vshrl.u32 %v712, 16
      %v2086 = vrot.slane %v2084, 7
      %v2087 = vrot.slane %v2086, 1
      %v2089 = vshll.u32 %v713, 16
      %v2091 = vsel %vm1838, %v2087, %v2089
      %v2092 = vshrl.u32 %v713, 16
      %v2094 = vrot.slane %v2092, 7
      %v2095 = vrot.slane %v2094, 1
      %v2097 = vshll.u32 %v728, 16
      %v2099 = vsel %vm1838, %v2095, %v2097
      %v2100 = vshrl.u32 %v728, 16
      %v2102 = vrot.slane %v2100, 7
      %v2103 = vrot.slane %v2102, 1
      %v2105 = vshll.u32 %v735, 16
      %v2107 = vsel %vm1838, %v2103, %v2105
      %v2108 = vshrl.u32 %v735, 16
      %v2110 = vrot.slane %v2108, 7
      %v2111 = vrot.slane %v2110, 1
      %v2113 = vshll.u32 %v736, 16
      %v2115 = vsel %vm1838, %v2111, %v2113
      %v2116 = vshrl.u32 %v736, 16
      %v2118 = vrot.slane %v2116, 7
      %v2119 = vrot.slane %v2118, 1
      %v2121 = vshll.u32 %v1814, 16
      %v2123 = vsel %vm1838, %v2119, %v2121
      %v2125 = vshrl.u32 %v751, 16
      %v2127 = vrot.slane %v2125, 7
      %v2128 = vrot.slane %v2127, 1
      %v2130 = vshll.u32 %v758, 16
      %v2132 = vsel %vm1838, %v2128, %v2130
      %v2133 = vshrl.u32 %v758, 16
      %v2135 = vrot.slane %v2133, 7
      %v2136 = vrot.slane %v2135, 1
      %v2138 = vshll.u32 %v759, 16
      %v2140 = vsel %vm1838, %v2136, %v2138
      %v2141 = vshrl.u32 %v759, 16
      %v2143 = vrot.slane %v2141, 7
      %v2144 = vrot.slane %v2143, 1
      %v2146 = vshll.u32 %v760, 16
      %v2148 = vsel %vm1838, %v2144, %v2146
      %v2149 = vshrl.u32 %v760, 16
      %v2151 = vrot.slane %v2149, 7
      %v2152 = vrot.slane %v2151, 1
      %v2154 = vshll.u32 %v775, 16
      %v2156 = vsel %vm1838, %v2152, %v2154
      %v2157 = vshrl.u32 %v775, 16
      %v2159 = vrot.slane %v2157, 7
      %v2160 = vrot.slane %v2159, 1
      %v2162 = vshll.u32 %v782, 16
      %v2164 = vsel %vm1838, %v2160, %v2162
      %v2165 = vshrl.u32 %v782, 16
      %v2167 = vrot.slane %v2165, 7
      %v2168 = vrot.slane %v2167, 1
      %v2170 = vshll.u32 %v783, 16
      %v2172 = vsel %vm1838, %v2168, %v2170
      %v2173 = vshrl.u32 %v783, 16
      %v2175 = vrot.slane %v2173, 7
      %v2176 = vrot.slane %v2175, 1
      %v2178 = vshll.u32 %v1815, 16
      %v2180 = vsel %vm1838, %v2176, %v2178
      %v2182 = vshrl.u32 %v798, 16
      %v2184 = vrot.slane %v2182, 7
      %v2185 = vrot.slane %v2184, 1
      %v2187 = vshll.u32 %v805, 16
      %v2189 = vsel %vm1838, %v2185, %v2187
      %v2190 = vshrl.u32 %v805, 16
      %v2192 = vrot.slane %v2190, 7
      %v2193 = vrot.slane %v2192, 1
      %v2195 = vshll.u32 %v806, 16
      %v2197 = vsel %vm1838, %v2193, %v2195
      %v2198 = vshrl.u32 %v806, 16
      %v2200 = vrot.slane %v2198, 7
      %v2201 = vrot.slane %v2200, 1
      %v2203 = vshll.u32 %v807, 16
      %v2205 = vsel %vm1838, %v2201, %v2203
      %v2206 = vshrl.u32 %v807, 16
      %v2208 = vrot.slane %v2206, 7
      %v2209 = vrot.slane %v2208, 1
      %v2211 = vshll.u32 %v822, 16
      %v2213 = vsel %vm1838, %v2209, %v2211
      %v2214 = vshrl.u32 %v822, 16
      %v2216 = vrot.slane %v2214, 7
      %v2217 = vrot.slane %v2216, 1
      %v2219 = vshll.u32 %v829, 16
      %v2221 = vsel %vm1838, %v2217, %v2219
      %v2222 = vshrl.u32 %v829, 16
      %v2224 = vrot.slane %v2222, 7
      %v2225 = vrot.slane %v2224, 1
      %v2227 = vshll.u32 %v830, 16
      %v2229 = vsel %vm1838, %v2225, %v2227
      %v2230 = vshrl.u32 %v830, 16
      %v2232 = vrot.slane %v2230, 7
      %v2233 = vrot.slane %v2232, 1
      %v2235 = vshll.u32 %v1816, 16
      %v2237 = vsel %vm1838, %v2233, %v2235
      %v2239 = vshrl.u32 %v845, 16
      %v2241 = vrot.slane %v2239, 7
      %v2242 = vrot.slane %v2241, 1
      %v2244 = vshll.u32 %v852, 16
      %v2246 = vsel %vm1838, %v2242, %v2244
      %v2247 = vshrl.u32 %v852, 16
      %v2249 = vrot.slane %v2247, 7
      %v2250 = vrot.slane %v2249, 1
      %v2252 = vshll.u32 %v853, 16
      %v2254 = vsel %vm1838, %v2250, %v2252
      %v2255 = vshrl.u32 %v853, 16
      %v2257 = vrot.slane %v2255, 7
      %v2258 = vrot.slane %v2257, 1
      %v2260 = vshll.u32 %v854, 16
      %v2262 = vsel %vm1838, %v2258, %v2260
      %v2263 = vshrl.u32 %v854, 16
      %v2265 = vrot.slane %v2263, 7
      %v2266 = vrot.slane %v2265, 1
      %v2268 = vshll.u32 %v869, 16
      %v2270 = vsel %vm1838, %v2266, %v2268
      %v2271 = vshrl.u32 %v869, 16
      %v2273 = vrot.slane %v2271, 7
      %v2274 = vrot.slane %v2273, 1
      %v2276 = vshll.u32 %v876, 16
      %v2278 = vsel %vm1838, %v2274, %v2276
      %v2279 = vshrl.u32 %v876, 16
      %v2281 = vrot.slane %v2279, 7
      %v2282 = vrot.slane %v2281, 1
      %v2284 = vshll.u32 %v877, 16
      %v2286 = vsel %vm1838, %v2282, %v2284
      %v2287 = vshrl.u32 %v877, 16
      %v2289 = vrot.slane %v2287, 7
      %v2290 = vrot.slane %v2289, 1
      %v2292 = vshll.u32 %v1817, 16
      %v2294 = vsel %vm1838, %v2290, %v2292
      %v2296 = vshrl.u32 %v892, 16
      %v2298 = vrot.slane %v2296, 7
      %v2299 = vrot.slane %v2298, 1
      %v2301 = vshll.u32 %v899, 16
      %v2303 = vsel %vm1838, %v2299, %v2301
      %v2304 = vshrl.u32 %v899, 16
      %v2306 = vrot.slane %v2304, 7
      %v2307 = vrot.slane %v2306, 1
      %v2309 = vshll.u32 %v900, 16
      %v2311 = vsel %vm1838, %v2307, %v2309
      %v2312 = vshrl.u32 %v900, 16
      %v2314 = vrot.slane %v2312, 7
      %v2315 = vrot.slane %v2314, 1
      %v2317 = vshll.u32 %v901, 16
      %v2319 = vsel %vm1838, %v2315, %v2317
      %v2320 = vshrl.u32 %v901, 16
      %v2322 = vrot.slane %v2320, 7
      %v2323 = vrot.slane %v2322, 1
      %v2325 = vshll.u32 %v916, 16
      %v2327 = vsel %vm1838, %v2323, %v2325
      %v2328 = vshrl.u32 %v916, 16
      %v2330 = vrot.slane %v2328, 7
      %v2331 = vrot.slane %v2330, 1
      %v2333 = vshll.u32 %v923, 16
      %v2335 = vsel %vm1838, %v2331, %v2333
      %v2336 = vshrl.u32 %v923, 16
      %v2338 = vrot.slane %v2336, 7
      %v2339 = vrot.slane %v2338, 1
      %v2341 = vshll.u32 %v924, 16
      %v2343 = vsel %vm1838, %v2339, %v2341
      %v2344 = vshrl.u32 %v924, 16
      %v2346 = vrot.slane %v2344, 7
      %v2347 = vrot.slane %v2346, 1
      %v2349 = vshll.u32 %v1818, 16
      %v2351 = vsel %vm1838, %v2347, %v2349
      %v2353 = vshrl.u32 %v939, 16
      %v2355 = vrot.slane %v2353, 7
      %v2356 = vrot.slane %v2355, 1
      %v2358 = vshll.u32 %v946, 16
      %v2360 = vsel %vm1838, %v2356, %v2358
      %v2361 = vshrl.u32 %v946, 16
      %v2363 = vrot.slane %v2361, 7
      %v2364 = vrot.slane %v2363, 1
      %v2366 = vshll.u32 %v947, 16
      %v2368 = vsel %vm1838, %v2364, %v2366
      %v2369 = vshrl.u32 %v947, 16
      %v2371 = vrot.slane %v2369, 7
      %v2372 = vrot.slane %v2371, 1
      %v2374 = vshll.u32 %v948, 16
      %v2376 = vsel %vm1838, %v2372, %v2374
      %v2377 = vshrl.u32 %v948, 16
      %v2379 = vrot.slane %v2377, 7
      %v2380 = vrot.slane %v2379, 1
      %v2382 = vshll.u32 %v963, 16
      %v2384 = vsel %vm1838, %v2380, %v2382
      %v2385 = vshrl.u32 %v963, 16
      %v2387 = vrot.slane %v2385, 7
      %v2388 = vrot.slane %v2387, 1
      %v2390 = vshll.u32 %v970, 16
      %v2392 = vsel %vm1838, %v2388, %v2390
      %v2393 = vshrl.u32 %v970, 16
      %v2395 = vrot.slane %v2393, 7
      %v2396 = vrot.slane %v2395, 1
      %v2398 = vshll.u32 %v971, 16
      %v2400 = vsel %vm1838, %v2396, %v2398
      %v2401 = vshrl.u32 %v971, 16
      %v2403 = vrot.slane %v2401, 7
      %v2404 = vrot.slane %v2403, 1
      %v2406 = vshll.u32 %v1819, 16
      %v2408 = vsel %vm1838, %v2404, %v2406
      %v2410 = vshrl.u32 %v986, 16
      %v2412 = vrot.slane %v2410, 7
      %v2413 = vrot.slane %v2412, 1
      %v2415 = vshll.u32 %v993, 16
      %v2417 = vsel %vm1838, %v2413, %v2415
      %v2418 = vshrl.u32 %v993, 16
      %v2420 = vrot.slane %v2418, 7
      %v2421 = vrot.slane %v2420, 1
      %v2423 = vshll.u32 %v994, 16
      %v2425 = vsel %vm1838, %v2421, %v2423
      %v2426 = vshrl.u32 %v994, 16
      %v2428 = vrot.slane %v2426, 7
      %v2429 = vrot.slane %v2428, 1
      %v2431 = vshll.u32 %v995, 16
      %v2433 = vsel %vm1838, %v2429, %v2431
      %v2434 = vshrl.u32 %v995, 16
      %v2436 = vrot.slane %v2434, 7
      %v2437 = vrot.slane %v2436, 1
      %v2439 = vshll.u32 %v1010, 16
      %v2441 = vsel %vm1838, %v2437, %v2439
      %v2442 = vshrl.u32 %v1010, 16
      %v2444 = vrot.slane %v2442, 7
      %v2445 = vrot.slane %v2444, 1
      %v2447 = vshll.u32 %v1017, 16
      %v2449 = vsel %vm1838, %v2445, %v2447
      %v2450 = vshrl.u32 %v1017, 16
      %v2452 = vrot.slane %v2450, 7
      %v2453 = vrot.slane %v2452, 1
      %v2455 = vshll.u32 %v1018, 16
      %v2457 = vsel %vm1838, %v2453, %v2455
      %v2458 = vshrl.u32 %v1018, 16
      %v2460 = vrot.slane %v2458, 7
      %v2461 = vrot.slane %v2460, 1
      %v2463 = vshll.u32 %v1820, 16
      %v2465 = vsel %vm1838, %v2461, %v2463
      %v2467 = vshrl.u32 %v1033, 16
      %v2469 = vrot.slane %v2467, 7
      %v2470 = vrot.slane %v2469, 1
      %v2472 = vshll.u32 %v1040, 16
      %v2474 = vsel %vm1838, %v2470, %v2472
      %v2475 = vshrl.u32 %v1040, 16
      %v2477 = vrot.slane %v2475, 7
      %v2478 = vrot.slane %v2477, 1
      %v2480 = vshll.u32 %v1041, 16
      %v2482 = vsel %vm1838, %v2478, %v2480
      %v2483 = vshrl.u32 %v1041, 16
      %v2485 = vrot.slane %v2483, 7
      %v2486 = vrot.slane %v2485, 1
      %v2488 = vshll.u32 %v1042, 16
      %v2490 = vsel %vm1838, %v2486, %v2488
      %v2491 = vshrl.u32 %v1042, 16
      %v2493 = vrot.slane %v2491, 7
      %v2494 = vrot.slane %v2493, 1
      %v2496 = vshll.u32 %v1057, 16
      %v2498 = vsel %vm1838, %v2494, %v2496
      %v2499 = vshrl.u32 %v1057, 16
      %v2501 = vrot.slane %v2499, 7
      %v2502 = vrot.slane %v2501, 1
      %v2504 = vshll.u32 %v1064, 16
      %v2506 = vsel %vm1838, %v2502, %v2504
      %v2507 = vshrl.u32 %v1064, 16
      %v2509 = vrot.slane %v2507, 7
      %v2510 = vrot.slane %v2509, 1
      %v2512 = vshll.u32 %v1065, 16
      %v2514 = vsel %vm1838, %v2510, %v2512
      %v2515 = vshrl.u32 %v1065, 16
      %v2517 = vrot.slane %v2515, 7
      %v2518 = vrot.slane %v2517, 1
      %v2520 = vshll.u32 %v1821, 16
      %v2522 = vsel %vm1838, %v2518, %v2520
      %v2524 = vshrl.u32 %v1080, 16
      %v2526 = vrot.slane %v2524, 7
      %v2527 = vrot.slane %v2526, 1
      %v2529 = vshll.u32 %v1087, 16
      %v2531 = vsel %vm1838, %v2527, %v2529
      %v2532 = vshrl.u32 %v1087, 16
      %v2534 = vrot.slane %v2532, 7
      %v2535 = vrot.slane %v2534, 1
      %v2537 = vshll.u32 %v1088, 16
      %v2539 = vsel %vm1838, %v2535, %v2537
      %v2540 = vshrl.u32 %v1088, 16
      %v2542 = vrot.slane %v2540, 7
      %v2543 = vrot.slane %v2542, 1
      %v2545 = vshll.u32 %v1089, 16
      %v2547 = vsel %vm1838, %v2543, %v2545
      %v2548 = vshrl.u32 %v1089, 16
      %v2550 = vrot.slane %v2548, 7
      %v2551 = vrot.slane %v2550, 1
      %v2553 = vshll.u32 %v1104, 16
      %v2555 = vsel %vm1838, %v2551, %v2553
      %v2556 = vshrl.u32 %v1104, 16
      %v2558 = vrot.slane %v2556, 7
      %v2559 = vrot.slane %v2558, 1
      %v2561 = vshll.u32 %v1111, 16
      %v2563 = vsel %vm1838, %v2559, %v2561
      %v2564 = vshrl.u32 %v1111, 16
      %v2566 = vrot.slane %v2564, 7
      %v2567 = vrot.slane %v2566, 1
      %v2569 = vshll.u32 %v1112, 16
      %v2571 = vsel %vm1838, %v2567, %v2569
      %v2572 = vshrl.u32 %v1112, 16
      %v2574 = vrot.slane %v2572, 7
      %v2575 = vrot.slane %v2574, 1
      %v2577 = vshll.u32 %v1822, 16
      %v2579 = vsel %vm1838, %v2575, %v2577
      %v2581 = vshrl.u32 %v1127, 16
      %v2583 = vrot.slane %v2581, 7
      %v2584 = vrot.slane %v2583, 1
      %v2586 = vshll.u32 %v1134, 16
      %v2588 = vsel %vm1838, %v2584, %v2586
      %v2589 = vshrl.u32 %v1134, 16
      %v2591 = vrot.slane %v2589, 7
      %v2592 = vrot.slane %v2591, 1
      %v2594 = vshll.u32 %v1135, 16
      %v2596 = vsel %vm1838, %v2592, %v2594
      %v2597 = vshrl.u32 %v1135, 16
      %v2599 = vrot.slane %v2597, 7
      %v2600 = vrot.slane %v2599, 1
      %v2602 = vshll.u32 %v1136, 16
      %v2604 = vsel %vm1838, %v2600, %v2602
      %v2605 = vshrl.u32 %v1136, 16
      %v2607 = vrot.slane %v2605, 7
      %v2608 = vrot.slane %v2607, 1
      %v2610 = vshll.u32 %v1151, 16
      %v2612 = vsel %vm1838, %v2608, %v2610
      %v2613 = vshrl.u32 %v1151, 16
      %v2615 = vrot.slane %v2613, 7
      %v2616 = vrot.slane %v2615, 1
      %v2618 = vshll.u32 %v1158, 16
      %v2620 = vsel %vm1838, %v2616, %v2618
      %v2621 = vshrl.u32 %v1158, 16
      %v2623 = vrot.slane %v2621, 7
      %v2624 = vrot.slane %v2623, 1
      %v2626 = vshll.u32 %v1159, 16
      %v2628 = vsel %vm1838, %v2624, %v2626
      %v2629 = vshrl.u32 %v1159, 16
      %v2631 = vrot.slane %v2629, 7
      %v2632 = vrot.slane %v2631, 1
      %v2634 = vshll.u32 %v1823, 16
      %v2636 = vsel %vm1838, %v2632, %v2634
      %v2637 = vcombine.low %v1847, %v1863
      %v2638 = vcombine.low %v1855, %v1871
      %v2640 = vunpack.c.l.s4 1935823168
      %v2641 = vunpack.c.0.s8 %v2640
      %v2642 = vlaneseq
      %v2643 = vshrl.u32 %v2642, 7
      %v2644 = vsub.s32 %v2641, %v2643
      %v2645 = vrot.slane %v2637, %v2644
      %v2647 = vunpack.c.l.s4 1935823168
      %v2648 = vunpack.c.0.s8 %v2647
      %v2649 = vlaneseq
      %v2650 = vshrl.u32 %v2649, 7
      %v2651 = vsub.s32 %v2648, %v2650
      %v2652 = vrot.slane %v2638, %v2651
      %v2653 = vcombine.low %v2645, %v2652
      %v2655 = vunpack.c.l.s4 1935823168
      %v2656 = vunpack.c.0.s8 %v2655
      %v2657 = vlaneseq
      %v2658 = vshrl.u32 %v2657, 7
      %v2659 = vsub.s32 %v2656, %v2658
      %v2660 = vrot.slane %v2653, %v2659
      %v2661 = vcombine.low %v1879, %v1895
      %v2662 = vcombine.low %v1887, %v1904
      %v2664 = vunpack.c.l.s4 1935823168
      %v2665 = vunpack.c.0.s8 %v2664
      %v2666 = vlaneseq
      %v2667 = vshrl.u32 %v2666, 7
      %v2668 = vsub.s32 %v2665, %v2667
      %v2669 = vrot.slane %v2661, %v2668
      %v2671 = vunpack.c.l.s4 1935823168
      %v2672 = vunpack.c.0.s8 %v2671
      %v2673 = vlaneseq
      %v2674 = vshrl.u32 %v2673, 7
      %v2675 = vsub.s32 %v2672, %v2674
      %v2676 = vrot.slane %v2662, %v2675
      %v2677 = vcombine.low %v2669, %v2676
      %v2679 = vunpack.c.l.s4 1935823168
      %v2680 = vunpack.c.0.s8 %v2679
      %v2681 = vlaneseq
      %v2682 = vshrl.u32 %v2681, 7
      %v2683 = vsub.s32 %v2680, %v2682
      %v2684 = vrot.slane %v2677, %v2683
      %v2685 = vcombine.low %v1912, %v1928
      %v2686 = vcombine.low %v1920, %v1936
      %v2688 = vunpack.c.l.s4 1935823168
      %v2689 = vunpack.c.0.s8 %v2688
      %v2690 = vlaneseq
      %v2691 = vshrl.u32 %v2690, 7
      %v2692 = vsub.s32 %v2689, %v2691
      %v2693 = vrot.slane %v2685, %v2692
      %v2695 = vunpack.c.l.s4 1935823168
      %v2696 = vunpack.c.0.s8 %v2695
      %v2697 = vlaneseq
      %v2698 = vshrl.u32 %v2697, 7
      %v2699 = vsub.s32 %v2696, %v2698
      %v2700 = vrot.slane %v2686, %v2699
      %v2701 = vcombine.low %v2693, %v2700
      %v2703 = vunpack.c.l.s4 1935823168
      %v2704 = vunpack.c.0.s8 %v2703
      %v2705 = vlaneseq
      %v2706 = vshrl.u32 %v2705, 7
      %v2707 = vsub.s32 %v2704, %v2706
      %v2708 = vrot.slane %v2701, %v2707
      %v2709 = vcombine.low %v1944, %v1961
      %v2710 = vcombine.low %v1952, %v1969
      %v2712 = vunpack.c.l.s4 1935823168
      %v2713 = vunpack.c.0.s8 %v2712
      %v2714 = vlaneseq
      %v2715 = vshrl.u32 %v2714, 7
      %v2716 = vsub.s32 %v2713, %v2715
      %v2717 = vrot.slane %v2709, %v2716
      %v2719 = vunpack.c.l.s4 1935823168
      %v2720 = vunpack.c.0.s8 %v2719
      %v2721 = vlaneseq
      %v2722 = vshrl.u32 %v2721, 7
      %v2723 = vsub.s32 %v2720, %v2722
      %v2724 = vrot.slane %v2710, %v2723
      %v2725 = vcombine.low %v2717, %v2724
      %v2727 = vunpack.c.l.s4 1935823168
      %v2728 = vunpack.c.0.s8 %v2727
      %v2729 = vlaneseq
      %v2730 = vshrl.u32 %v2729, 7
      %v2731 = vsub.s32 %v2728, %v2730
      %v2732 = vrot.slane %v2725, %v2731
      %v2733 = vcombine.low %v1977, %v1993
      %v2734 = vcombine.low %v1985, %v2001
      %v2736 = vunpack.c.l.s4 1935823168
      %v2737 = vunpack.c.0.s8 %v2736
      %v2738 = vlaneseq
      %v2739 = vshrl.u32 %v2738, 7
      %v2740 = vsub.s32 %v2737, %v2739
      %v2741 = vrot.slane %v2733, %v2740
      %v2743 = vunpack.c.l.s4 1935823168
      %v2744 = vunpack.c.0.s8 %v2743
      %v2745 = vlaneseq
      %v2746 = vshrl.u32 %v2745, 7
      %v2747 = vsub.s32 %v2744, %v2746
      %v2748 = vrot.slane %v2734, %v2747
      %v2749 = vcombine.low %v2741, %v2748
      %v2751 = vunpack.c.l.s4 1935823168
      %v2752 = vunpack.c.0.s8 %v2751
      %v2753 = vlaneseq
      %v2754 = vshrl.u32 %v2753, 7
      %v2755 = vsub.s32 %v2752, %v2754
      %v2756 = vrot.slane %v2749, %v2755
      %v2757 = vcombine.low %v2009, %v2026
      %v2758 = vcombine.low %v2018, %v2034
      %v2760 = vunpack.c.l.s4 1935823168
      %v2761 = vunpack.c.0.s8 %v2760
      %v2762 = vlaneseq
      %v2763 = vshrl.u32 %v2762, 7
      %v2764 = vsub.s32 %v2761, %v2763
      %v2765 = vrot.slane %v2757, %v2764
      %v2767 = vunpack.c.l.s4 1935823168
      %v2768 = vunpack.c.0.s8 %v2767
      %v2769 = vlaneseq
      %v2770 = vshrl.u32 %v2769, 7
      %v2771 = vsub.s32 %v2768, %v2770
      %v2772 = vrot.slane %v2758, %v2771
      %v2773 = vcombine.low %v2765, %v2772
      %v2775 = vunpack.c.l.s4 1935823168
      %v2776 = vunpack.c.0.s8 %v2775
      %v2777 = vlaneseq
      %v2778 = vshrl.u32 %v2777, 7
      %v2779 = vsub.s32 %v2776, %v2778
      %v2780 = vrot.slane %v2773, %v2779
      %v2781 = vcombine.low %v2042, %v2058
      %v2782 = vcombine.low %v2050, %v2066
      %v2784 = vunpack.c.l.s4 1935823168
      %v2785 = vunpack.c.0.s8 %v2784
      %v2786 = vlaneseq
      %v2787 = vshrl.u32 %v2786, 7
      %v2788 = vsub.s32 %v2785, %v2787
      %v2789 = vrot.slane %v2781, %v2788
      %v2791 = vunpack.c.l.s4 1935823168
      %v2792 = vunpack.c.0.s8 %v2791
      %v2793 = vlaneseq
      %v2794 = vshrl.u32 %v2793, 7
      %v2795 = vsub.s32 %v2792, %v2794
      %v2796 = vrot.slane %v2782, %v2795
      %v2797 = vcombine.low %v2789, %v2796
      %v2799 = vunpack.c.l.s4 1935823168
      %v2800 = vunpack.c.0.s8 %v2799
      %v2801 = vlaneseq
      %v2802 = vshrl.u32 %v2801, 7
      %v2803 = vsub.s32 %v2800, %v2802
      %v2804 = vrot.slane %v2797, %v2803
      %v2805 = vcombine.low %v2075, %v2091
      %v2806 = vcombine.low %v2083, %v2099
      %v2808 = vunpack.c.l.s4 1935823168
      %v2809 = vunpack.c.0.s8 %v2808
      %v2810 = vlaneseq
      %v2811 = vshrl.u32 %v2810, 7
      %v2812 = vsub.s32 %v2809, %v2811
      %v2813 = vrot.slane %v2805, %v2812
      %v2815 = vunpack.c.l.s4 1935823168
      %v2816 = vunpack.c.0.s8 %v2815
      %v2817 = vlaneseq
      %v2818 = vshrl.u32 %v2817, 7
      %v2819 = vsub.s32 %v2816, %v2818
      %v2820 = vrot.slane %v2806, %v2819
      %v2821 = vcombine.low %v2813, %v2820
      %v2823 = vunpack.c.l.s4 1935823168
      %v2824 = vunpack.c.0.s8 %v2823
      %v2825 = vlaneseq
      %v2826 = vshrl.u32 %v2825, 7
      %v2827 = vsub.s32 %v2824, %v2826
      %v2828 = vrot.slane %v2821, %v2827
      %v2829 = vcombine.low %v2107, %v2123
      %v2830 = vcombine.low %v2115, %v2132
      %v2832 = vunpack.c.l.s4 1935823168
      %v2833 = vunpack.c.0.s8 %v2832
      %v2834 = vlaneseq
      %v2835 = vshrl.u32 %v2834, 7
      %v2836 = vsub.s32 %v2833, %v2835
      %v2837 = vrot.slane %v2829, %v2836
      %v2839 = vunpack.c.l.s4 1935823168
      %v2840 = vunpack.c.0.s8 %v2839
      %v2841 = vlaneseq
      %v2842 = vshrl.u32 %v2841, 7
      %v2843 = vsub.s32 %v2840, %v2842
      %v2844 = vrot.slane %v2830, %v2843
      %v2845 = vcombine.low %v2837, %v2844
      %v2847 = vunpack.c.l.s4 1935823168
      %v2848 = vunpack.c.0.s8 %v2847
      %v2849 = vlaneseq
      %v2850 = vshrl.u32 %v2849, 7
      %v2851 = vsub.s32 %v2848, %v2850
      %v2852 = vrot.slane %v2845, %v2851
      %v2853 = vcombine.low %v2140, %v2156
      %v2854 = vcombine.low %v2148, %v2164
      %v2856 = vunpack.c.l.s4 1935823168
      %v2857 = vunpack.c.0.s8 %v2856
      %v2858 = vlaneseq
      %v2859 = vshrl.u32 %v2858, 7
      %v2860 = vsub.s32 %v2857, %v2859
      %v2861 = vrot.slane %v2853, %v2860
      %v2863 = vunpack.c.l.s4 1935823168
      %v2864 = vunpack.c.0.s8 %v2863
      %v2865 = vlaneseq
      %v2866 = vshrl.u32 %v2865, 7
      %v2867 = vsub.s32 %v2864, %v2866
      %v2868 = vrot.slane %v2854, %v2867
      %v2869 = vcombine.low %v2861, %v2868
      %v2871 = vunpack.c.l.s4 1935823168
      %v2872 = vunpack.c.0.s8 %v2871
      %v2873 = vlaneseq
      %v2874 = vshrl.u32 %v2873, 7
      %v2875 = vsub.s32 %v2872, %v2874
      %v2876 = vrot.slane %v2869, %v2875
      %v2877 = vcombine.low %v2172, %v2189
      %v2878 = vcombine.low %v2180, %v2197
      %v2880 = vunpack.c.l.s4 1935823168
      %v2881 = vunpack.c.0.s8 %v2880
      %v2882 = vlaneseq
      %v2883 = vshrl.u32 %v2882, 7
      %v2884 = vsub.s32 %v2881, %v2883
      %v2885 = vrot.slane %v2877, %v2884
      %v2887 = vunpack.c.l.s4 1935823168
      %v2888 = vunpack.c.0.s8 %v2887
      %v2889 = vlaneseq
      %v2890 = vshrl.u32 %v2889, 7
      %v2891 = vsub.s32 %v2888, %v2890
      %v2892 = vrot.slane %v2878, %v2891
      %v2893 = vcombine.low %v2885, %v2892
      %v2895 = vunpack.c.l.s4 1935823168
      %v2896 = vunpack.c.0.s8 %v2895
      %v2897 = vlaneseq
      %v2898 = vshrl.u32 %v2897, 7
      %v2899 = vsub.s32 %v2896, %v2898
      %v2900 = vrot.slane %v2893, %v2899
      %v2901 = vcombine.low %v2205, %v2221
      %v2902 = vcombine.low %v2213, %v2229
      %v2904 = vunpack.c.l.s4 1935823168
      %v2905 = vunpack.c.0.s8 %v2904
      %v2906 = vlaneseq
      %v2907 = vshrl.u32 %v2906, 7
      %v2908 = vsub.s32 %v2905, %v2907
      %v2909 = vrot.slane %v2901, %v2908
      %v2911 = vunpack.c.l.s4 1935823168
      %v2912 = vunpack.c.0.s8 %v2911
      %v2913 = vlaneseq
      %v2914 = vshrl.u32 %v2913, 7
      %v2915 = vsub.s32 %v2912, %v2914
      %v2916 = vrot.slane %v2902, %v2915
      %v2917 = vcombine.low %v2909, %v2916
      %v2919 = vunpack.c.l.s4 1935823168
      %v2920 = vunpack.c.0.s8 %v2919
      %v2921 = vlaneseq
      %v2922 = vshrl.u32 %v2921, 7
      %v2923 = vsub.s32 %v2920, %v2922
      %v2924 = vrot.slane %v2917, %v2923
      %v2925 = vcombine.low %v2237, %v2254
      %v2926 = vcombine.low %v2246, %v2262
      %v2928 = vunpack.c.l.s4 1935823168
      %v2929 = vunpack.c.0.s8 %v2928
      %v2930 = vlaneseq
      %v2931 = vshrl.u32 %v2930, 7
      %v2932 = vsub.s32 %v2929, %v2931
      %v2933 = vrot.slane %v2925, %v2932
      %v2935 = vunpack.c.l.s4 1935823168
      %v2936 = vunpack.c.0.s8 %v2935
      %v2937 = vlaneseq
      %v2938 = vshrl.u32 %v2937, 7
      %v2939 = vsub.s32 %v2936, %v2938
      %v2940 = vrot.slane %v2926, %v2939
      %v2941 = vcombine.low %v2933, %v2940
      %v2943 = vunpack.c.l.s4 1935823168
      %v2944 = vunpack.c.0.s8 %v2943
      %v2945 = vlaneseq
      %v2946 = vshrl.u32 %v2945, 7
      %v2947 = vsub.s32 %v2944, %v2946
      %v2948 = vrot.slane %v2941, %v2947
      %v2949 = vcombine.low %v2270, %v2286
      %v2950 = vcombine.low %v2278, %v2294
      %v2952 = vunpack.c.l.s4 1935823168
      %v2953 = vunpack.c.0.s8 %v2952
      %v2954 = vlaneseq
      %v2955 = vshrl.u32 %v2954, 7
      %v2956 = vsub.s32 %v2953, %v2955
      %v2957 = vrot.slane %v2949, %v2956
      %v2959 = vunpack.c.l.s4 1935823168
      %v2960 = vunpack.c.0.s8 %v2959
      %v2961 = vlaneseq
      %v2962 = vshrl.u32 %v2961, 7
      %v2963 = vsub.s32 %v2960, %v2962
      %v2964 = vrot.slane %v2950, %v2963
      %v2965 = vcombine.low %v2957, %v2964
      %v2967 = vunpack.c.l.s4 1935823168
      %v2968 = vunpack.c.0.s8 %v2967
      %v2969 = vlaneseq
      %v2970 = vshrl.u32 %v2969, 7
      %v2971 = vsub.s32 %v2968, %v2970
      %v2972 = vrot.slane %v2965, %v2971
      %v2973 = vcombine.low %v2303, %v2319
      %v2974 = vcombine.low %v2311, %v2327
      %v2976 = vunpack.c.l.s4 1935823168
      %v2977 = vunpack.c.0.s8 %v2976
      %v2978 = vlaneseq
      %v2979 = vshrl.u32 %v2978, 7
      %v2980 = vsub.s32 %v2977, %v2979
      %v2981 = vrot.slane %v2973, %v2980
      %v2983 = vunpack.c.l.s4 1935823168
      %v2984 = vunpack.c.0.s8 %v2983
      %v2985 = vlaneseq
      %v2986 = vshrl.u32 %v2985, 7
      %v2987 = vsub.s32 %v2984, %v2986
      %v2988 = vrot.slane %v2974, %v2987
      %v2989 = vcombine.low %v2981, %v2988
      %v2991 = vunpack.c.l.s4 1935823168
      %v2992 = vunpack.c.0.s8 %v2991
      %v2993 = vlaneseq
      %v2994 = vshrl.u32 %v2993, 7
      %v2995 = vsub.s32 %v2992, %v2994
      %v2996 = vrot.slane %v2989, %v2995
      %v2997 = vcombine.low %v2335, %v2351
      %v2998 = vcombine.low %v2343, %v2360
      %v3000 = vunpack.c.l.s4 1935823168
      %v3001 = vunpack.c.0.s8 %v3000
      %v3002 = vlaneseq
      %v3003 = vshrl.u32 %v3002, 7
      %v3004 = vsub.s32 %v3001, %v3003
      %v3005 = vrot.slane %v2997, %v3004
      %v3007 = vunpack.c.l.s4 1935823168
      %v3008 = vunpack.c.0.s8 %v3007
      %v3009 = vlaneseq
      %v3010 = vshrl.u32 %v3009, 7
      %v3011 = vsub.s32 %v3008, %v3010
      %v3012 = vrot.slane %v2998, %v3011
      %v3013 = vcombine.low %v3005, %v3012
      %v3015 = vunpack.c.l.s4 1935823168
      %v3016 = vunpack.c.0.s8 %v3015
      %v3017 = vlaneseq
      %v3018 = vshrl.u32 %v3017, 7
      %v3019 = vsub.s32 %v3016, %v3018
      %v3020 = vrot.slane %v3013, %v3019
      %v3021 = vcombine.low %v2368, %v2384
      %v3022 = vcombine.low %v2376, %v2392
      %v3024 = vunpack.c.l.s4 1935823168
      %v3025 = vunpack.c.0.s8 %v3024
      %v3026 = vlaneseq
      %v3027 = vshrl.u32 %v3026, 7
      %v3028 = vsub.s32 %v3025, %v3027
      %v3029 = vrot.slane %v3021, %v3028
      %v3031 = vunpack.c.l.s4 1935823168
      %v3032 = vunpack.c.0.s8 %v3031
      %v3033 = vlaneseq
      %v3034 = vshrl.u32 %v3033, 7
      %v3035 = vsub.s32 %v3032, %v3034
      %v3036 = vrot.slane %v3022, %v3035
      %v3037 = vcombine.low %v3029, %v3036
      %v3039 = vunpack.c.l.s4 1935823168
      %v3040 = vunpack.c.0.s8 %v3039
      %v3041 = vlaneseq
      %v3042 = vshrl.u32 %v3041, 7
      %v3043 = vsub.s32 %v3040, %v3042
      %v3044 = vrot.slane %v3037, %v3043
      %v3045 = vcombine.low %v2400, %v2417
      %v3046 = vcombine.low %v2408, %v2425
      %v3048 = vunpack.c.l.s4 1935823168
      %v3049 = vunpack.c.0.s8 %v3048
      %v3050 = vlaneseq
      %v3051 = vshrl.u32 %v3050, 7
      %v3052 = vsub.s32 %v3049, %v3051
      %v3053 = vrot.slane %v3045, %v3052
      %v3055 = vunpack.c.l.s4 1935823168
      %v3056 = vunpack.c.0.s8 %v3055
      %v3057 = vlaneseq
      %v3058 = vshrl.u32 %v3057, 7
      %v3059 = vsub.s32 %v3056, %v3058
      %v3060 = vrot.slane %v3046, %v3059
      %v3061 = vcombine.low %v3053, %v3060
      %v3063 = vunpack.c.l.s4 1935823168
      %v3064 = vunpack.c.0.s8 %v3063
      %v3065 = vlaneseq
      %v3066 = vshrl.u32 %v3065, 7
      %v3067 = vsub.s32 %v3064, %v3066
      %v3068 = vrot.slane %v3061, %v3067
      %v3069 = vcombine.low %v2433, %v2449
      %v3070 = vcombine.low %v2441, %v2457
      %v3072 = vunpack.c.l.s4 1935823168
      %v3073 = vunpack.c.0.s8 %v3072
      %v3074 = vlaneseq
      %v3075 = vshrl.u32 %v3074, 7
      %v3076 = vsub.s32 %v3073, %v3075
      %v3077 = vrot.slane %v3069, %v3076
      %v3079 = vunpack.c.l.s4 1935823168
      %v3080 = vunpack.c.0.s8 %v3079
      %v3081 = vlaneseq
      %v3082 = vshrl.u32 %v3081, 7
      %v3083 = vsub.s32 %v3080, %v3082
      %v3084 = vrot.slane %v3070, %v3083
      %v3085 = vcombine.low %v3077, %v3084
      %v3087 = vunpack.c.l.s4 1935823168
      %v3088 = vunpack.c.0.s8 %v3087
      %v3089 = vlaneseq
      %v3090 = vshrl.u32 %v3089, 7
      %v3091 = vsub.s32 %v3088, %v3090
      %v3092 = vrot.slane %v3085, %v3091
      %v3093 = vcombine.low %v2465, %v2482
      %v3094 = vcombine.low %v2474, %v2490
      %v3096 = vunpack.c.l.s4 1935823168
      %v3097 = vunpack.c.0.s8 %v3096
      %v3098 = vlaneseq
      %v3099 = vshrl.u32 %v3098, 7
      %v3100 = vsub.s32 %v3097, %v3099
      %v3101 = vrot.slane %v3093, %v3100
      %v3103 = vunpack.c.l.s4 1935823168
      %v3104 = vunpack.c.0.s8 %v3103
      %v3105 = vlaneseq
      %v3106 = vshrl.u32 %v3105, 7
      %v3107 = vsub.s32 %v3104, %v3106
      %v3108 = vrot.slane %v3094, %v3107
      %v3109 = vcombine.low %v3101, %v3108
      %v3111 = vunpack.c.l.s4 1935823168
      %v3112 = vunpack.c.0.s8 %v3111
      %v3113 = vlaneseq
      %v3114 = vshrl.u32 %v3113, 7
      %v3115 = vsub.s32 %v3112, %v3114
      %v3116 = vrot.slane %v3109, %v3115
      %v3117 = vcombine.low %v2498, %v2514
      %v3118 = vcombine.low %v2506, %v2522
      %v3120 = vunpack.c.l.s4 1935823168
      %v3121 = vunpack.c.0.s8 %v3120
      %v3122 = vlaneseq
      %v3123 = vshrl.u32 %v3122, 7
      %v3124 = vsub.s32 %v3121, %v3123
      %v3125 = vrot.slane %v3117, %v3124
      %v3127 = vunpack.c.l.s4 1935823168
      %v3128 = vunpack.c.0.s8 %v3127
      %v3129 = vlaneseq
      %v3130 = vshrl.u32 %v3129, 7
      %v3131 = vsub.s32 %v3128, %v3130
      %v3132 = vrot.slane %v3118, %v3131
      %v3133 = vcombine.low %v3125, %v3132
      %v3135 = vunpack.c.l.s4 1935823168
      %v3136 = vunpack.c.0.s8 %v3135
      %v3137 = vlaneseq
      %v3138 = vshrl.u32 %v3137, 7
      %v3139 = vsub.s32 %v3136, %v3138
      %v3140 = vrot.slane %v3133, %v3139
      %v3141 = vcombine.low %v2531, %v2547
      %v3142 = vcombine.low %v2539, %v2555
      %v3144 = vunpack.c.l.s4 1935823168
      %v3145 = vunpack.c.0.s8 %v3144
      %v3146 = vlaneseq
      %v3147 = vshrl.u32 %v3146, 7
      %v3148 = vsub.s32 %v3145, %v3147
      %v3149 = vrot.slane %v3141, %v3148
      %v3151 = vunpack.c.l.s4 1935823168
      %v3152 = vunpack.c.0.s8 %v3151
      %v3153 = vlaneseq
      %v3154 = vshrl.u32 %v3153, 7
      %v3155 = vsub.s32 %v3152, %v3154
      %v3156 = vrot.slane %v3142, %v3155
      %v3157 = vcombine.low %v3149, %v3156
      %v3159 = vunpack.c.l.s4 1935823168
      %v3160 = vunpack.c.0.s8 %v3159
      %v3161 = vlaneseq
      %v3162 = vshrl.u32 %v3161, 7
      %v3163 = vsub.s32 %v3160, %v3162
      %v3164 = vrot.slane %v3157, %v3163
      %v3165 = vcombine.low %v2563, %v2579
      %v3166 = vcombine.low %v2571, %v2588
      %v3168 = vunpack.c.l.s4 1935823168
      %v3169 = vunpack.c.0.s8 %v3168
      %v3170 = vlaneseq
      %v3171 = vshrl.u32 %v3170, 7
      %v3172 = vsub.s32 %v3169, %v3171
      %v3173 = vrot.slane %v3165, %v3172
      %v3175 = vunpack.c.l.s4 1935823168
      %v3176 = vunpack.c.0.s8 %v3175
      %v3177 = vlaneseq
      %v3178 = vshrl.u32 %v3177, 7
      %v3179 = vsub.s32 %v3176, %v3178
      %v3180 = vrot.slane %v3166, %v3179
      %v3181 = vcombine.low %v3173, %v3180
      %v3183 = vunpack.c.l.s4 1935823168
      %v3184 = vunpack.c.0.s8 %v3183
      %v3185 = vlaneseq
      %v3186 = vshrl.u32 %v3185, 7
      %v3187 = vsub.s32 %v3184, %v3186
      %v3188 = vrot.slane %v3181, %v3187
      %v3189 = vcombine.low %v2596, %v2612
      %v3190 = vcombine.low %v2604, %v2620
      %v3192 = vunpack.c.l.s4 1935823168
      %v3193 = vunpack.c.0.s8 %v3192
      %v3194 = vlaneseq
      %v3195 = vshrl.u32 %v3194, 7
      %v3196 = vsub.s32 %v3193, %v3195
      %v3197 = vrot.slane %v3189, %v3196
      %v3199 = vunpack.c.l.s4 1935823168
      %v3200 = vunpack.c.0.s8 %v3199
      %v3201 = vlaneseq
      %v3202 = vshrl.u32 %v3201, 7
      %v3203 = vsub.s32 %v3200, %v3202
      %v3204 = vrot.slane %v3190, %v3203
      %v3205 = vcombine.low %v3197, %v3204
      %v3207 = vunpack.c.l.s4 1935823168
      %v3208 = vunpack.c.0.s8 %v3207
      %v3209 = vlaneseq
      %v3210 = vshrl.u32 %v3209, 7
      %v3211 = vsub.s32 %v3208, %v3210
      %v3212 = vrot.slane %v3205, %v3211
      %v3214 = vunpack.c.l.s4 1935823168
      %v3215 = vunpack.c.0.s8 %v3214
      %v3216 = vlaneseq
      %v3217 = vshrl.u32 %v3216, 7
      %v3218 = vsub.s32 %v3215, %v3217
      %v3219 = vrot.slane %v2628, %v3218
      %v3221 = vunpack.c.l.s4 1935823168
      %v3222 = vunpack.c.0.s8 %v3221
      %v3223 = vlaneseq
      %v3224 = vshrl.u32 %v3223, 7
      %v3225 = vsub.s32 %v3222, %v3224
      %v3226 = vrot.slane %v2636, %v3225
      %v3227 = vcombine.low %v3219, %v3226
      %v3229 = vunpack.c.l.s4 1935823168
      %v3230 = vunpack.c.0.s8 %v3229
      %v3231 = vlaneseq
      %v3232 = vshrl.u32 %v3231, 7
      %v3233 = vsub.s32 %v3230, %v3232
      %v3234 = vrot.slane %v3227, %v3233
      %3235 = vrot.lane.b32.xlu0 %v2660, 3
      %v3236 = vpop.permute.xlu0 %3235
      %3237 = vrot.lane.b32.xlu0 %v2684, 3
      %v3238 = vpop.permute.xlu0 %3237
      %3239 = vrot.lane.b32.xlu0 %v2708, 3
      %v3240 = vpop.permute.xlu0 %3239
      %3241 = vrot.lane.b32.xlu0 %v2732, 3
      %v3242 = vpop.permute.xlu0 %3241
      %3243 = vrot.lane.b32.xlu0 %v2756, 3
      %v3244 = vpop.permute.xlu0 %3243
      %3245 = vrot.lane.b32.xlu0 %v2780, 3
      %v3246 = vpop.permute.xlu0 %3245
      %3247 = vrot.lane.b32.xlu0 %v2804, 3
      %v3248 = vpop.permute.xlu0 %3247
      %3249 = vrot.lane.b32.xlu0 %v2828, 3
      %v3250 = vpop.permute.xlu0 %3249
      %3251 = vrot.lane.b32.xlu0 %v2852, 3
      %v3252 = vpop.permute.xlu0 %3251
      %3253 = vrot.lane.b32.xlu0 %v2876, 3
      %v3254 = vpop.permute.xlu0 %3253
      %3255 = vrot.lane.b32.xlu0 %v2900, 3
      %v3256 = vpop.permute.xlu0 %3255
      %3257 = vrot.lane.b32.xlu0 %v2924, 3
      %v3258 = vpop.permute.xlu0 %3257
      %3259 = vrot.lane.b32.xlu0 %v2948, 3
      %v3260 = vpop.permute.xlu0 %3259
      %3261 = vrot.lane.b32.xlu0 %v2972, 3
      %v3262 = vpop.permute.xlu0 %3261
      %3263 = vrot.lane.b32.xlu0 %v2996, 3
      %v3264 = vpop.permute.xlu0 %3263
      %3265 = vrot.lane.b32.xlu0 %v3020, 3
      %v3266 = vpop.permute.xlu0 %3265
      %3267 = vrot.lane.b32.xlu0 %v3044, 3
      %v3268 = vpop.permute.xlu0 %3267
      %3269 = vrot.lane.b32.xlu0 %v3068, 3
      %v3270 = vpop.permute.xlu0 %3269
      %3271 = vrot.lane.b32.xlu0 %v3092, 3
      %v3272 = vpop.permute.xlu0 %3271
      %3273 = vrot.lane.b32.xlu0 %v3116, 3
      %v3274 = vpop.permute.xlu0 %3273
      %3275 = vrot.lane.b32.xlu0 %v3140, 3
      %v3276 = vpop.permute.xlu0 %3275
      %3277 = vrot.lane.b32.xlu0 %v3164, 3
      %v3278 = vpop.permute.xlu0 %3277
      %3279 = vrot.lane.b32.xlu0 %v3188, 3
      %v3280 = vpop.permute.xlu0 %3279
      %3281 = vrot.lane.b32.xlu0 %v3212, 3
      %v3282 = vpop.permute.xlu0 %3281
      %3283 = vrot.lane.b32.xlu0 %v3234, 3
      %v3284 = vpop.permute.xlu0 %3283
      %vm3310 = vcmask 44056
      %3311 = vst.msk [vmem:[#allocation2] sm:$0xf] %vm3310, %v3236
      %3312 = vst.msk [vmem:[#allocation2 + $0x4] sm:$0xf] %vm3310, %v3238
      %3313 = vst.msk [vmem:[#allocation2 + $0x8] sm:$0xf] %vm3310, %v3240
      %3314 = vst.msk [vmem:[#allocation2 + $0xc] sm:$0xf] %vm3310, %v3242
      %3315 = vst.msk [vmem:[#allocation2 + $0x10] sm:$0xf] %vm3310, %v3244
      %3316 = vst.msk [vmem:[#allocation2 + $0x14] sm:$0xf] %vm3310, %v3246
      %3317 = vst.msk [vmem:[#allocation2 + $0x18] sm:$0xf] %vm3310, %v3248
      %3318 = vst.msk [vmem:[#allocation2 + $0x1c] sm:$0xf] %vm3310, %v3250
      %3319 = vst.msk [vmem:[#allocation2 + $0x20] sm:$0xf] %vm3310, %v3252
      %3320 = vst.msk [vmem:[#allocation2 + $0x24] sm:$0xf] %vm3310, %v3254
      %3321 = vst.msk [vmem:[#allocation2 + $0x28] sm:$0xf] %vm3310, %v3256
      %3322 = vst.msk [vmem:[#allocation2 + $0x2c] sm:$0xf] %vm3310, %v3258
      %3323 = vst.msk [vmem:[#allocation2 + $0x30] sm:$0xf] %vm3310, %v3260
      %3324 = vst.msk [vmem:[#allocation2 + $0x34] sm:$0xf] %vm3310, %v3262
      %3325 = vst.msk [vmem:[#allocation2 + $0x38] sm:$0xf] %vm3310, %v3264
      %3326 = vst.msk [vmem:[#allocation2 + $0x3c] sm:$0xf] %vm3310, %v3266
      %3327 = vst.msk [vmem:[#allocation2 + $0x40] sm:$0xf] %vm3310, %v3268
      %3328 = vst.msk [vmem:[#allocation2 + $0x44] sm:$0xf] %vm3310, %v3270
      %3329 = vst.msk [vmem:[#allocation2 + $0x48] sm:$0xf] %vm3310, %v3272
      %3330 = vst.msk [vmem:[#allocation2 + $0x4c] sm:$0xf] %vm3310, %v3274
      %3331 = vst.msk [vmem:[#allocation2 + $0x50] sm:$0xf] %vm3310, %v3276
      %3332 = vst.msk [vmem:[#allocation2 + $0x54] sm:$0xf] %vm3310, %v3278
      %3333 = vst.msk [vmem:[#allocation2 + $0x58] sm:$0xf] %vm3310, %v3280
      %3334 = vst.msk [vmem:[#allocation2 + $0x5c] sm:$0xf] %vm3310, %v3282
      %vm3335 = vcmask 42008
      %3336 = vst.msk [vmem:[#allocation2 + $0x60] sm:$0x3] %vm3335, %v3284
      %v3337 = vcombine.low %v524, %v540
      %v3339 = vunpack.c.l.s4 1935823168
      %v3340 = vunpack.c.0.s8 %v3339
      %v3341 = vlaneseq
      %v3342 = vshrl.u32 %v3341, 7
      %v3343 = vsub.s32 %v3340, %v3342
      %v3344 = vrot.slane %v3337, %v3343
      %v3345 = vcombine.low %v1175, %v3344
      %v3347 = vunpack.c.l.s4 1935823168
      %v3348 = vunpack.c.0.s8 %v3347
      %v3349 = vlaneseq
      %v3350 = vshrl.u32 %v3349, 7
      %v3351 = vsub.s32 %v3348, %v3350
      %v3352 = vrot.slane %v3345, %v3351
      %v3353 = vcombine.low %v547, %v1810
      %v3354 = vcombine.low %v548, %v570
      %v3356 = vunpack.c.l.s4 1935823168
      %v3357 = vunpack.c.0.s8 %v3356
      %v3358 = vlaneseq
      %v3359 = vshrl.u32 %v3358, 7
      %v3360 = vsub.s32 %v3357, %v3359
      %v3361 = vrot.slane %v3353, %v3360
      %v3363 = vunpack.c.l.s4 1935823168
      %v3364 = vunpack.c.0.s8 %v3363
      %v3365 = vlaneseq
      %v3366 = vshrl.u32 %v3365, 7
      %v3367 = vsub.s32 %v3364, %v3366
      %v3368 = vrot.slane %v3354, %v3367
      %v3369 = vcombine.low %v3361, %v3368
      %v3371 = vunpack.c.l.s4 1935823168
      %v3372 = vunpack.c.0.s8 %v3371
      %v3373 = vlaneseq
      %v3374 = vshrl.u32 %v3373, 7
      %v3375 = vsub.s32 %v3372, %v3374
      %v3376 = vrot.slane %v3369, %v3375
      %v3377 = vcombine.low %v572, %v594
      %v3379 = vunpack.c.l.s4 1935823168
      %v3380 = vunpack.c.0.s8 %v3379
      %v3381 = vlaneseq
      %v3382 = vshrl.u32 %v3381, 7
      %v3383 = vsub.s32 %v3380, %v3382
      %v3384 = vrot.slane %v3377, %v3383
      %v3385 = vcombine.low %v1223, %v3384
      %v3387 = vunpack.c.l.s4 1935823168
      %v3388 = vunpack.c.0.s8 %v3387
      %v3389 = vlaneseq
      %v3390 = vshrl.u32 %v3389, 7
      %v3391 = vsub.s32 %v3388, %v3390
      %v3392 = vrot.slane %v3385, %v3391
      %v3393 = vcombine.low %v1811, %v618
      %v3395 = vunpack.c.l.s4 1935823168
      %v3396 = vunpack.c.0.s8 %v3395
      %v3397 = vlaneseq
      %v3398 = vshrl.u32 %v3397, 7
      %v3399 = vsub.s32 %v3396, %v3398
      %v3400 = vrot.slane %v3393, %v3399
      %v3401 = vcombine.low %v1247, %v3400
      %v3403 = vunpack.c.l.s4 1935823168
      %v3404 = vunpack.c.0.s8 %v3403
      %v3405 = vlaneseq
      %v3406 = vshrl.u32 %v3405, 7
      %v3407 = vsub.s32 %v3404, %v3406
      %v3408 = vrot.slane %v3401, %v3407
      %v3409 = vcombine.low %v634, %v642
      %v3411 = vunpack.c.l.s4 1935823168
      %v3412 = vunpack.c.0.s8 %v3411
      %v3413 = vlaneseq
      %v3414 = vshrl.u32 %v3413, 7
      %v3415 = vsub.s32 %v3412, %v3414
      %v3416 = vrot.slane %v3409, %v3415
      %v3417 = vcombine.low %v1271, %v3416
      %v3419 = vunpack.c.l.s4 1935823168
      %v3420 = vunpack.c.0.s8 %v3419
      %v3421 = vlaneseq
      %v3422 = vshrl.u32 %v3421, 7
      %v3423 = vsub.s32 %v3420, %v3422
      %v3424 = vrot.slane %v3417, %v3423
      %v3425 = vcombine.low %v1812, %v665
      %v3426 = vcombine.low %v664, %v666
      %v3428 = vunpack.c.l.s4 1935823168
      %v3429 = vunpack.c.0.s8 %v3428
      %v3430 = vlaneseq
      %v3431 = vshrl.u32 %v3430, 7
      %v3432 = vsub.s32 %v3429, %v3431
      %v3433 = vrot.slane %v3425, %v3432
      %v3435 = vunpack.c.l.s4 1935823168
      %v3436 = vunpack.c.0.s8 %v3435
      %v3437 = vlaneseq
      %v3438 = vshrl.u32 %v3437, 7
      %v3439 = vsub.s32 %v3436, %v3438
      %v3440 = vrot.slane %v3426, %v3439
      %v3441 = vcombine.low %v3433, %v3440
      %v3443 = vunpack.c.l.s4 1935823168
      %v3444 = vunpack.c.0.s8 %v3443
      %v3445 = vlaneseq
      %v3446 = vshrl.u32 %v3445, 7
      %v3447 = vsub.s32 %v3444, %v3446
      %v3448 = vrot.slane %v3441, %v3447
      %v3449 = vcombine.low %v688, %v1813
      %v3451 = vunpack.c.l.s4 1935823168
      %v3452 = vunpack.c.0.s8 %v3451
      %v3453 = vlaneseq
      %v3454 = vshrl.u32 %v3453, 7
      %v3455 = vsub.s32 %v3452, %v3454
      %v3456 = vrot.slane %v3449, %v3455
      %v3457 = vcombine.low %v1319, %v3456
      %v3459 = vunpack.c.l.s4 1935823168
      %v3460 = vunpack.c.0.s8 %v3459
      %v3461 = vlaneseq
      %v3462 = vshrl.u32 %v3461, 7
      %v3463 = vsub.s32 %v3460, %v3462
      %v3464 = vrot.slane %v3457, %v3463
      %v3465 = vcombine.low %v712, %v728
      %v3467 = vunpack.c.l.s4 1935823168
      %v3468 = vunpack.c.0.s8 %v3467
      %v3469 = vlaneseq
      %v3470 = vshrl.u32 %v3469, 7
      %v3471 = vsub.s32 %v3468, %v3470
      %v3472 = vrot.slane %v3465, %v3471
      %v3473 = vcombine.low %v1343, %v3472
      %v3475 = vunpack.c.l.s4 1935823168
      %v3476 = vunpack.c.0.s8 %v3475
      %v3477 = vlaneseq
      %v3478 = vshrl.u32 %v3477, 7
      %v3479 = vsub.s32 %v3476, %v3478
      %v3480 = vrot.slane %v3473, %v3479
      %v3481 = vcombine.low %v735, %v1814
      %v3482 = vcombine.low %v736, %v758
      %v3484 = vunpack.c.l.s4 1935823168
      %v3485 = vunpack.c.0.s8 %v3484
      %v3486 = vlaneseq
      %v3487 = vshrl.u32 %v3486, 7
      %v3488 = vsub.s32 %v3485, %v3487
      %v3489 = vrot.slane %v3481, %v3488
      %v3491 = vunpack.c.l.s4 1935823168
      %v3492 = vunpack.c.0.s8 %v3491
      %v3493 = vlaneseq
      %v3494 = vshrl.u32 %v3493, 7
      %v3495 = vsub.s32 %v3492, %v3494
      %v3496 = vrot.slane %v3482, %v3495
      %v3497 = vcombine.low %v3489, %v3496
      %v3499 = vunpack.c.l.s4 1935823168
      %v3500 = vunpack.c.0.s8 %v3499
      %v3501 = vlaneseq
      %v3502 = vshrl.u32 %v3501, 7
      %v3503 = vsub.s32 %v3500, %v3502
      %v3504 = vrot.slane %v3497, %v3503
      %v3505 = vcombine.low %v760, %v782
      %v3507 = vunpack.c.l.s4 1935823168
      %v3508 = vunpack.c.0.s8 %v3507
      %v3509 = vlaneseq
      %v3510 = vshrl.u32 %v3509, 7
      %v3511 = vsub.s32 %v3508, %v3510
      %v3512 = vrot.slane %v3505, %v3511
      %v3513 = vcombine.low %v1391, %v3512
      %v3515 = vunpack.c.l.s4 1935823168
      %v3516 = vunpack.c.0.s8 %v3515
      %v3517 = vlaneseq
      %v3518 = vshrl.u32 %v3517, 7
      %v3519 = vsub.s32 %v3516, %v3518
      %v3520 = vrot.slane %v3513, %v3519
      %v3521 = vcombine.low %v1815, %v806
      %v3523 = vunpack.c.l.s4 1935823168
      %v3524 = vunpack.c.0.s8 %v3523
      %v3525 = vlaneseq
      %v3526 = vshrl.u32 %v3525, 7
      %v3527 = vsub.s32 %v3524, %v3526
      %v3528 = vrot.slane %v3521, %v3527
      %v3529 = vcombine.low %v1415, %v3528
      %v3531 = vunpack.c.l.s4 1935823168
      %v3532 = vunpack.c.0.s8 %v3531
      %v3533 = vlaneseq
      %v3534 = vshrl.u32 %v3533, 7
      %v3535 = vsub.s32 %v3532, %v3534
      %v3536 = vrot.slane %v3529, %v3535
      %v3537 = vcombine.low %v822, %v830
      %v3539 = vunpack.c.l.s4 1935823168
      %v3540 = vunpack.c.0.s8 %v3539
      %v3541 = vlaneseq
      %v3542 = vshrl.u32 %v3541, 7
      %v3543 = vsub.s32 %v3540, %v3542
      %v3544 = vrot.slane %v3537, %v3543
      %v3545 = vcombine.low %v1439, %v3544
      %v3547 = vunpack.c.l.s4 1935823168
      %v3548 = vunpack.c.0.s8 %v3547
      %v3549 = vlaneseq
      %v3550 = vshrl.u32 %v3549, 7
      %v3551 = vsub.s32 %v3548, %v3550
      %v3552 = vrot.slane %v3545, %v3551
      %v3553 = vcombine.low %v1816, %v853
      %v3554 = vcombine.low %v852, %v854
      %v3556 = vunpack.c.l.s4 1935823168
      %v3557 = vunpack.c.0.s8 %v3556
      %v3558 = vlaneseq
      %v3559 = vshrl.u32 %v3558, 7
      %v3560 = vsub.s32 %v3557, %v3559
      %v3561 = vrot.slane %v3553, %v3560
      %v3563 = vunpack.c.l.s4 1935823168
      %v3564 = vunpack.c.0.s8 %v3563
      %v3565 = vlaneseq
      %v3566 = vshrl.u32 %v3565, 7
      %v3567 = vsub.s32 %v3564, %v3566
      %v3568 = vrot.slane %v3554, %v3567
      %v3569 = vcombine.low %v3561, %v3568
      %v3571 = vunpack.c.l.s4 1935823168
      %v3572 = vunpack.c.0.s8 %v3571
      %v3573 = vlaneseq
      %v3574 = vshrl.u32 %v3573, 7
      %v3575 = vsub.s32 %v3572, %v3574
      %v3576 = vrot.slane %v3569, %v3575
      %v3577 = vcombine.low %v876, %v1817
      %v3579 = vunpack.c.l.s4 1935823168
      %v3580 = vunpack.c.0.s8 %v3579
      %v3581 = vlaneseq
      %v3582 = vshrl.u32 %v3581, 7
      %v3583 = vsub.s32 %v3580, %v3582
      %v3584 = vrot.slane %v3577, %v3583
      %v3585 = vcombine.low %v1487, %v3584
      %v3587 = vunpack.c.l.s4 1935823168
      %v3588 = vunpack.c.0.s8 %v3587
      %v3589 = vlaneseq
      %v3590 = vshrl.u32 %v3589, 7
      %v3591 = vsub.s32 %v3588, %v3590
      %v3592 = vrot.slane %v3585, %v3591
      %v3593 = vcombine.low %v900, %v916
      %v3595 = vunpack.c.l.s4 1935823168
      %v3596 = vunpack.c.0.s8 %v3595
      %v3597 = vlaneseq
      %v3598 = vshrl.u32 %v3597, 7
      %v3599 = vsub.s32 %v3596, %v3598
      %v3600 = vrot.slane %v3593, %v3599
      %v3601 = vcombine.low %v1511, %v3600
      %v3603 = vunpack.c.l.s4 1935823168
      %v3604 = vunpack.c.0.s8 %v3603
      %v3605 = vlaneseq
      %v3606 = vshrl.u32 %v3605, 7
      %v3607 = vsub.s32 %v3604, %v3606
      %v3608 = vrot.slane %v3601, %v3607
      %v3609 = vcombine.low %v923, %v1818
      %v3610 = vcombine.low %v924, %v946
      %v3612 = vunpack.c.l.s4 1935823168
      %v3613 = vunpack.c.0.s8 %v3612
      %v3614 = vlaneseq
      %v3615 = vshrl.u32 %v3614, 7
      %v3616 = vsub.s32 %v3613, %v3615
      %v3617 = vrot.slane %v3609, %v3616
      %v3619 = vunpack.c.l.s4 1935823168
      %v3620 = vunpack.c.0.s8 %v3619
      %v3621 = vlaneseq
      %v3622 = vshrl.u32 %v3621, 7
      %v3623 = vsub.s32 %v3620, %v3622
      %v3624 = vrot.slane %v3610, %v3623
      %v3625 = vcombine.low %v3617, %v3624
      %v3627 = vunpack.c.l.s4 1935823168
      %v3628 = vunpack.c.0.s8 %v3627
      %v3629 = vlaneseq
      %v3630 = vshrl.u32 %v3629, 7
      %v3631 = vsub.s32 %v3628, %v3630
      %v3632 = vrot.slane %v3625, %v3631
      %v3633 = vcombine.low %v948, %v970
      %v3635 = vunpack.c.l.s4 1935823168
      %v3636 = vunpack.c.0.s8 %v3635
      %v3637 = vlaneseq
      %v3638 = vshrl.u32 %v3637, 7
      %v3639 = vsub.s32 %v3636, %v3638
      %v3640 = vrot.slane %v3633, %v3639
      %v3641 = vcombine.low %v1559, %v3640
      %v3643 = vunpack.c.l.s4 1935823168
      %v3644 = vunpack.c.0.s8 %v3643
      %v3645 = vlaneseq
      %v3646 = vshrl.u32 %v3645, 7
      %v3647 = vsub.s32 %v3644, %v3646
      %v3648 = vrot.slane %v3641, %v3647
      %v3649 = vcombine.low %v1819, %v994
      %v3651 = vunpack.c.l.s4 1935823168
      %v3652 = vunpack.c.0.s8 %v3651
      %v3653 = vlaneseq
      %v3654 = vshrl.u32 %v3653, 7
      %v3655 = vsub.s32 %v3652, %v3654
      %v3656 = vrot.slane %v3649, %v3655
      %v3657 = vcombine.low %v1583, %v3656
      %v3659 = vunpack.c.l.s4 1935823168
      %v3660 = vunpack.c.0.s8 %v3659
      %v3661 = vlaneseq
      %v3662 = vshrl.u32 %v3661, 7
      %v3663 = vsub.s32 %v3660, %v3662
      %v3664 = vrot.slane %v3657, %v3663
      %v3665 = vcombine.low %v1010, %v1018
      %v3667 = vunpack.c.l.s4 1935823168
      %v3668 = vunpack.c.0.s8 %v3667
      %v3669 = vlaneseq
      %v3670 = vshrl.u32 %v3669, 7
      %v3671 = vsub.s32 %v3668, %v3670
      %v3672 = vrot.slane %v3665, %v3671
      %v3673 = vcombine.low %v1607, %v3672
      %v3675 = vunpack.c.l.s4 1935823168
      %v3676 = vunpack.c.0.s8 %v3675
      %v3677 = vlaneseq
      %v3678 = vshrl.u32 %v3677, 7
      %v3679 = vsub.s32 %v3676, %v3678
      %v3680 = vrot.slane %v3673, %v3679
      %v3681 = vcombine.low %v1820, %v1041
      %v3682 = vcombine.low %v1040, %v1042
      %v3684 = vunpack.c.l.s4 1935823168
      %v3685 = vunpack.c.0.s8 %v3684
      %v3686 = vlaneseq
      %v3687 = vshrl.u32 %v3686, 7
      %v3688 = vsub.s32 %v3685, %v3687
      %v3689 = vrot.slane %v3681, %v3688
      %v3691 = vunpack.c.l.s4 1935823168
      %v3692 = vunpack.c.0.s8 %v3691
      %v3693 = vlaneseq
      %v3694 = vshrl.u32 %v3693, 7
      %v3695 = vsub.s32 %v3692, %v3694
      %v3696 = vrot.slane %v3682, %v3695
      %v3697 = vcombine.low %v3689, %v3696
      %v3699 = vunpack.c.l.s4 1935823168
      %v3700 = vunpack.c.0.s8 %v3699
      %v3701 = vlaneseq
      %v3702 = vshrl.u32 %v3701, 7
      %v3703 = vsub.s32 %v3700, %v3702
      %v3704 = vrot.slane %v3697, %v3703
      %v3705 = vcombine.low %v1064, %v1821
      %v3707 = vunpack.c.l.s4 1935823168
      %v3708 = vunpack.c.0.s8 %v3707
      %v3709 = vlaneseq
      %v3710 = vshrl.u32 %v3709, 7
      %v3711 = vsub.s32 %v3708, %v3710
      %v3712 = vrot.slane %v3705, %v3711
      %v3713 = vcombine.low %v1655, %v3712
      %v3715 = vunpack.c.l.s4 1935823168
      %v3716 = vunpack.c.0.s8 %v3715
      %v3717 = vlaneseq
      %v3718 = vshrl.u32 %v3717, 7
      %v3719 = vsub.s32 %v3716, %v3718
      %v3720 = vrot.slane %v3713, %v3719
      %v3721 = vcombine.low %v1088, %v1104
      %v3723 = vunpack.c.l.s4 1935823168
      %v3724 = vunpack.c.0.s8 %v3723
      %v3725 = vlaneseq
      %v3726 = vshrl.u32 %v3725, 7
      %v3727 = vsub.s32 %v3724, %v3726
      %v3728 = vrot.slane %v3721, %v3727
      %v3729 = vcombine.low %v1679, %v3728
      %v3731 = vunpack.c.l.s4 1935823168
      %v3732 = vunpack.c.0.s8 %v3731
      %v3733 = vlaneseq
      %v3734 = vshrl.u32 %v3733, 7
      %v3735 = vsub.s32 %v3732, %v3734
      %v3736 = vrot.slane %v3729, %v3735
      %v3737 = vcombine.low %v1111, %v1822
      %v3738 = vcombine.low %v1112, %v1134
      %v3740 = vunpack.c.l.s4 1935823168
      %v3741 = vunpack.c.0.s8 %v3740
      %v3742 = vlaneseq
      %v3743 = vshrl.u32 %v3742, 7
      %v3744 = vsub.s32 %v3741, %v3743
      %v3745 = vrot.slane %v3737, %v3744
      %v3747 = vunpack.c.l.s4 1935823168
      %v3748 = vunpack.c.0.s8 %v3747
      %v3749 = vlaneseq
      %v3750 = vshrl.u32 %v3749, 7
      %v3751 = vsub.s32 %v3748, %v3750
      %v3752 = vrot.slane %v3738, %v3751
      %v3753 = vcombine.low %v3745, %v3752
      %v3755 = vunpack.c.l.s4 1935823168
      %v3756 = vunpack.c.0.s8 %v3755
      %v3757 = vlaneseq
      %v3758 = vshrl.u32 %v3757, 7
      %v3759 = vsub.s32 %v3756, %v3758
      %v3760 = vrot.slane %v3753, %v3759
      %v3761 = vcombine.low %v1136, %v1158
      %v3763 = vunpack.c.l.s4 1935823168
      %v3764 = vunpack.c.0.s8 %v3763
      %v3765 = vlaneseq
      %v3766 = vshrl.u32 %v3765, 7
      %v3767 = vsub.s32 %v3764, %v3766
      %v3768 = vrot.slane %v3761, %v3767
      %v3769 = vcombine.low %v1727, %v3768
      %v3771 = vunpack.c.l.s4 1935823168
      %v3772 = vunpack.c.0.s8 %v3771
      %v3773 = vlaneseq
      %v3774 = vshrl.u32 %v3773, 7
      %v3775 = vsub.s32 %v3772, %v3774
      %v3776 = vrot.slane %v3769, %v3775
      %v3778 = vunpack.c.l.s4 1935823168
      %v3779 = vunpack.c.0.s8 %v3778
      %v3780 = vlaneseq
      %v3781 = vshrl.u32 %v3780, 7
      %v3782 = vsub.s32 %v3779, %v3781
      %v3783 = vrot.slane %v1823, %v3782
      %v3784 = vcombine.low %v1749, %v3783
      %v3786 = vunpack.c.l.s4 1935823168
      %v3787 = vunpack.c.0.s8 %v3786
      %v3788 = vlaneseq
      %v3789 = vshrl.u32 %v3788, 7
      %v3790 = vsub.s32 %v3787, %v3789
      %v3791 = vrot.slane %v3784, %v3790
      %3792 = vrot.lane.b32.xlu0 %v3352, 6
      %v3793 = vpop.permute.xlu0 %3792
      %3794 = vrot.lane.b32.xlu0 %v3376, 6
      %v3795 = vpop.permute.xlu0 %3794
      %3796 = vrot.lane.b32.xlu0 %v3392, 6
      %v3797 = vpop.permute.xlu0 %3796
      %3798 = vrot.lane.b32.xlu0 %v3408, 6
      %v3799 = vpop.permute.xlu0 %3798
      %3800 = vrot.lane.b32.xlu0 %v3424, 6
      %v3801 = vpop.permute.xlu0 %3800
      %3802 = vrot.lane.b32.xlu0 %v3448, 6
      %v3803 = vpop.permute.xlu0 %3802
      %3804 = vrot.lane.b32.xlu0 %v3464, 6
      %v3805 = vpop.permute.xlu0 %3804
      %3806 = vrot.lane.b32.xlu0 %v3480, 6
      %v3807 = vpop.permute.xlu0 %3806
      %3808 = vrot.lane.b32.xlu0 %v3504, 6
      %v3809 = vpop.permute.xlu0 %3808
      %3810 = vrot.lane.b32.xlu0 %v3520, 6
      %v3811 = vpop.permute.xlu0 %3810
      %3812 = vrot.lane.b32.xlu0 %v3536, 6
      %v3813 = vpop.permute.xlu0 %3812
      %3814 = vrot.lane.b32.xlu0 %v3552, 6
      %v3815 = vpop.permute.xlu0 %3814
      %3816 = vrot.lane.b32.xlu0 %v3576, 6
      %v3817 = vpop.permute.xlu0 %3816
      %3818 = vrot.lane.b32.xlu0 %v3592, 6
      %v3819 = vpop.permute.xlu0 %3818
      %3820 = vrot.lane.b32.xlu0 %v3608, 6
      %v3821 = vpop.permute.xlu0 %3820
      %3822 = vrot.lane.b32.xlu0 %v3632, 6
      %v3823 = vpop.permute.xlu0 %3822
      %3824 = vrot.lane.b32.xlu0 %v3648, 6
      %v3825 = vpop.permute.xlu0 %3824
      %3826 = vrot.lane.b32.xlu0 %v3664, 6
      %v3827 = vpop.permute.xlu0 %3826
      %3828 = vrot.lane.b32.xlu0 %v3680, 6
      %v3829 = vpop.permute.xlu0 %3828
      %3830 = vrot.lane.b32.xlu0 %v3704, 6
      %v3831 = vpop.permute.xlu0 %3830
      %3832 = vrot.lane.b32.xlu0 %v3720, 6
      %v3833 = vpop.permute.xlu0 %3832
      %3834 = vrot.lane.b32.xlu0 %v3736, 6
      %v3835 = vpop.permute.xlu0 %3834
      %3836 = vrot.lane.b32.xlu0 %v3760, 6
      %v3837 = vpop.permute.xlu0 %3836
      %3838 = vrot.lane.b32.xlu0 %v3776, 6
      %v3839 = vpop.permute.xlu0 %3838
      %3840 = vrot.lane.b32.xlu0 %v3791, 6
      %v3841 = vpop.permute.xlu0 %3840
      %vm3867 = vcmask 68656
      %3868 = vst.msk [vmem:[#allocation2] sm:$0xf] %vm3867, %v3793
      %3869 = vst.msk [vmem:[#allocation2 + $0x4] sm:$0xf] %vm3867, %v3795
      %3870 = vst.msk [vmem:[#allocation2 + $0x8] sm:$0xf] %vm3867, %v3797
      %3871 = vst.msk [vmem:[#allocation2 + $0xc] sm:$0xf] %vm3867, %v3799
      %3872 = vst.msk [vmem:[#allocation2 + $0x10] sm:$0xf] %vm3867, %v3801
      %3873 = vst.msk [vmem:[#allocation2 + $0x14] sm:$0xf] %vm3867, %v3803
      %3874 = vst.msk [vmem:[#allocation2 + $0x18] sm:$0xf] %vm3867, %v3805
      %3875 = vst.msk [vmem:[#allocation2 + $0x1c] sm:$0xf] %vm3867, %v3807
      %3876 = vst.msk [vmem:[#allocation2 + $0x20] sm:$0xf] %vm3867, %v3809
      %3877 = vst.msk [vmem:[#allocation2 + $0x24] sm:$0xf] %vm3867, %v3811
      %3878 = vst.msk [vmem:[#allocation2 + $0x28] sm:$0xf] %vm3867, %v3813
      %3879 = vst.msk [vmem:[#allocation2 + $0x2c] sm:$0xf] %vm3867, %v3815
      %3880 = vst.msk [vmem:[#allocation2 + $0x30] sm:$0xf] %vm3867, %v3817
      %3881 = vst.msk [vmem:[#allocation2 + $0x34] sm:$0xf] %vm3867, %v3819
      %3882 = vst.msk [vmem:[#allocation2 + $0x38] sm:$0xf] %vm3867, %v3821
      %3883 = vst.msk [vmem:[#allocation2 + $0x3c] sm:$0xf] %vm3867, %v3823
      %3884 = vst.msk [vmem:[#allocation2 + $0x40] sm:$0xf] %vm3867, %v3825
      %3885 = vst.msk [vmem:[#allocation2 + $0x44] sm:$0xf] %vm3867, %v3827
      %3886 = vst.msk [vmem:[#allocation2 + $0x48] sm:$0xf] %vm3867, %v3829
      %3887 = vst.msk [vmem:[#allocation2 + $0x4c] sm:$0xf] %vm3867, %v3831
      %3888 = vst.msk [vmem:[#allocation2 + $0x50] sm:$0xf] %vm3867, %v3833
      %3889 = vst.msk [vmem:[#allocation2 + $0x54] sm:$0xf] %vm3867, %v3835
      %3890 = vst.msk [vmem:[#allocation2 + $0x58] sm:$0xf] %vm3867, %v3837
      %3891 = vst.msk [vmem:[#allocation2 + $0x5c] sm:$0xf] %vm3867, %v3839
      %vm3892 = vcmask 66608
      %3893 = vst.msk [vmem:[#allocation2 + $0x60] sm:$0x3] %vm3892, %v3841
      %v3897 = vunpack.c.l.s4 1966171168
      %v3898 = vunpack.c.0.s8 %v3897
      %v3899 = vlaneseq
      %v3900 = vshrl.u32 %v3899, 7
      %v3901 = vsub.s32 %v3898, %v3900
      %v3902 = vrot.slane %v443, %v3901
      %v3903 = vcombine.high %v3902, %v3902
      %v3905 = vunpack.c.l.s4 1966171168
      %v3906 = vunpack.c.0.s8 %v3905
      %v3907 = vlaneseq
      %v3908 = vshrl.u32 %v3907, 7
      %v3909 = vsub.s32 %v3906, %v3908
      %v3910 = vrot.slane %v3902, %v3909
      %v3912 = vunpack.c.l.s4 1966171168
      %v3913 = vunpack.c.0.s8 %v3912
      %v3914 = vlaneseq
      %v3915 = vshrl.u32 %v3914, 7
      %v3916 = vsub.s32 %v3913, %v3915
      %v3917 = vrot.slane %v3903, %v3916
      %v3918 = vcombine.high %v3910, %v3910
      %v3919 = vcombine.high %v3917, %v3917
      %v3921 = vunpack.c.l.s4 1966171168
      %v3922 = vunpack.c.0.s8 %v3921
      %v3923 = vlaneseq
      %v3924 = vshrl.u32 %v3923, 7
      %v3925 = vsub.s32 %v3922, %v3924
      %v3926 = vrot.slane %v444, %v3925
      %v3927 = vcombine.high %v3926, %v3926
      %v3929 = vunpack.c.l.s4 1966171168
      %v3930 = vunpack.c.0.s8 %v3929
      %v3931 = vlaneseq
      %v3932 = vshrl.u32 %v3931, 7
      %v3933 = vsub.s32 %v3930, %v3932
      %v3934 = vrot.slane %v3926, %v3933
      %v3936 = vunpack.c.l.s4 1966171168
      %v3937 = vunpack.c.0.s8 %v3936
      %v3938 = vlaneseq
      %v3939 = vshrl.u32 %v3938, 7
      %v3940 = vsub.s32 %v3937, %v3939
      %v3941 = vrot.slane %v3927, %v3940
      %v3942 = vcombine.high %v3934, %v3934
      %v3943 = vcombine.low %v563, %v571
      %v3945 = vunpack.c.l.s4 1935823168
      %v3946 = vunpack.c.0.s8 %v3945
      %v3947 = vlaneseq
      %v3948 = vshrl.u32 %v3947, 7
      %v3949 = vsub.s32 %v3946, %v3948
      %v3950 = vrot.slane %v3943, %v3949
      %v3951 = vcombine.low %v3950, %v1216
      %v3953 = vunpack.c.l.s4 1935823168
      %v3954 = vunpack.c.0.s8 %v3953
      %v3955 = vlaneseq
      %v3956 = vshrl.u32 %v3955, 7
      %v3957 = vsub.s32 %v3954, %v3956
      %v3958 = vrot.slane %v3951, %v3957
      %v3959 = vcombine.low %v587, %v595
      %v3961 = vunpack.c.l.s4 1935823168
      %v3962 = vunpack.c.0.s8 %v3961
      %v3963 = vlaneseq
      %v3964 = vshrl.u32 %v3963, 7
      %v3965 = vsub.s32 %v3962, %v3964
      %v3966 = vrot.slane %v3959, %v3965
      %v3967 = vcombine.low %v3966, %v1240
      %v3969 = vunpack.c.l.s4 1935823168
      %v3970 = vunpack.c.0.s8 %v3969
      %v3971 = vlaneseq
      %v3972 = vshrl.u32 %v3971, 7
      %v3973 = vsub.s32 %v3970, %v3972
      %v3974 = vrot.slane %v3967, %v3973
      %v3975 = vcombine.low %v617, %v619
      %v3977 = vunpack.c.l.s4 1935823168
      %v3978 = vunpack.c.0.s8 %v3977
      %v3979 = vlaneseq
      %v3980 = vshrl.u32 %v3979, 7
      %v3981 = vsub.s32 %v3978, %v3980
      %v3982 = vrot.slane %v3975, %v3981
      %v3983 = vcombine.low %v3982, %v1264
      %v3985 = vunpack.c.l.s4 1935823168
      %v3986 = vunpack.c.0.s8 %v3985
      %v3987 = vlaneseq
      %v3988 = vshrl.u32 %v3987, 7
      %v3989 = vsub.s32 %v3986, %v3988
      %v3990 = vrot.slane %v3983, %v3989
      %v3991 = vcombine.low %v641, %v657
      %v3993 = vunpack.c.l.s4 1935823168
      %v3994 = vunpack.c.0.s8 %v3993
      %v3995 = vlaneseq
      %v3996 = vshrl.u32 %v3995, 7
      %v3997 = vsub.s32 %v3994, %v3996
      %v3998 = vrot.slane %v3991, %v3997
      %v3999 = vcombine.low %v3998, %v1288
      %v4001 = vunpack.c.l.s4 1935823168
      %v4002 = vunpack.c.0.s8 %v4001
      %v4003 = vlaneseq
      %v4004 = vshrl.u32 %v4003, 7
      %v4005 = vsub.s32 %v4002, %v4004
      %v4006 = vrot.slane %v3999, %v4005
      %v4007 = vcombine.low %v665, %v681
      %v4009 = vunpack.c.l.s4 1935823168
      %v4010 = vunpack.c.0.s8 %v4009
      %v4011 = vlaneseq
      %v4012 = vshrl.u32 %v4011, 7
      %v4013 = vsub.s32 %v4010, %v4012
      %v4014 = vrot.slane %v4007, %v4013
      %v4015 = vcombine.low %v4014, %v1312
      %v4017 = vunpack.c.l.s4 1935823168
      %v4018 = vunpack.c.0.s8 %v4017
      %v4019 = vlaneseq
      %v4020 = vshrl.u32 %v4019, 7
      %v4021 = vsub.s32 %v4018, %v4020
      %v4022 = vrot.slane %v4015, %v4021
      %v4023 = vcombine.low %v689, %v711
      %v4025 = vunpack.c.l.s4 1935823168
      %v4026 = vunpack.c.0.s8 %v4025
      %v4027 = vlaneseq
      %v4028 = vshrl.u32 %v4027, 7
      %v4029 = vsub.s32 %v4026, %v4028
      %v4030 = vrot.slane %v4023, %v4029
      %v4031 = vcombine.low %v4030, %v1336
      %v4033 = vunpack.c.l.s4 1935823168
      %v4034 = vunpack.c.0.s8 %v4033
      %v4035 = vlaneseq
      %v4036 = vshrl.u32 %v4035, 7
      %v4037 = vsub.s32 %v4034, %v4036
      %v4038 = vrot.slane %v4031, %v4037
      %v4039 = vcombine.low %v713, %v735
      %v4041 = vunpack.c.l.s4 1935823168
      %v4042 = vunpack.c.0.s8 %v4041
      %v4043 = vlaneseq
      %v4044 = vshrl.u32 %v4043, 7
      %v4045 = vsub.s32 %v4042, %v4044
      %v4046 = vrot.slane %v4039, %v4045
      %v4047 = vcombine.low %v4046, %v1360
      %v4049 = vunpack.c.l.s4 1935823168
      %v4050 = vunpack.c.0.s8 %v4049
      %v4051 = vlaneseq
      %v4052 = vshrl.u32 %v4051, 7
      %v4053 = vsub.s32 %v4050, %v4052
      %v4054 = vrot.slane %v4047, %v4053
      %v4055 = vcombine.low %v751, %v759
      %v4057 = vunpack.c.l.s4 1935823168
      %v4058 = vunpack.c.0.s8 %v4057
      %v4059 = vlaneseq
      %v4060 = vshrl.u32 %v4059, 7
      %v4061 = vsub.s32 %v4058, %v4060
      %v4062 = vrot.slane %v4055, %v4061
      %v4063 = vcombine.low %v4062, %v1384
      %v4065 = vunpack.c.l.s4 1935823168
      %v4066 = vunpack.c.0.s8 %v4065
      %v4067 = vlaneseq
      %v4068 = vshrl.u32 %v4067, 7
      %v4069 = vsub.s32 %v4066, %v4068
      %v4070 = vrot.slane %v4063, %v4069
      %v4071 = vcombine.low %v775, %v783
      %v4073 = vunpack.c.l.s4 1935823168
      %v4074 = vunpack.c.0.s8 %v4073
      %v4075 = vlaneseq
      %v4076 = vshrl.u32 %v4075, 7
      %v4077 = vsub.s32 %v4074, %v4076
      %v4078 = vrot.slane %v4071, %v4077
      %v4079 = vcombine.low %v4078, %v1408
      %v4081 = vunpack.c.l.s4 1935823168
      %v4082 = vunpack.c.0.s8 %v4081
      %v4083 = vlaneseq
      %v4084 = vshrl.u32 %v4083, 7
      %v4085 = vsub.s32 %v4082, %v4084
      %v4086 = vrot.slane %v4079, %v4085
      %v4087 = vcombine.low %v805, %v807
      %v4089 = vunpack.c.l.s4 1935823168
      %v4090 = vunpack.c.0.s8 %v4089
      %v4091 = vlaneseq
      %v4092 = vshrl.u32 %v4091, 7
      %v4093 = vsub.s32 %v4090, %v4092
      %v4094 = vrot.slane %v4087, %v4093
      %v4095 = vcombine.low %v4094, %v1432
      %v4097 = vunpack.c.l.s4 1935823168
      %v4098 = vunpack.c.0.s8 %v4097
      %v4099 = vlaneseq
      %v4100 = vshrl.u32 %v4099, 7
      %v4101 = vsub.s32 %v4098, %v4100
      %v4102 = vrot.slane %v4095, %v4101
      %v4103 = vcombine.low %v829, %v845
      %v4105 = vunpack.c.l.s4 1935823168
      %v4106 = vunpack.c.0.s8 %v4105
      %v4107 = vlaneseq
      %v4108 = vshrl.u32 %v4107, 7
      %v4109 = vsub.s32 %v4106, %v4108
      %v4110 = vrot.slane %v4103, %v4109
      %v4111 = vcombine.low %v4110, %v1456
      %v4113 = vunpack.c.l.s4 1935823168
      %v4114 = vunpack.c.0.s8 %v4113
      %v4115 = vlaneseq
      %v4116 = vshrl.u32 %v4115, 7
      %v4117 = vsub.s32 %v4114, %v4116
      %v4118 = vrot.slane %v4111, %v4117
      %v4119 = vcombine.low %v853, %v869
      %v4121 = vunpack.c.l.s4 1935823168
      %v4122 = vunpack.c.0.s8 %v4121
      %v4123 = vlaneseq
      %v4124 = vshrl.u32 %v4123, 7
      %v4125 = vsub.s32 %v4122, %v4124
      %v4126 = vrot.slane %v4119, %v4125
      %v4127 = vcombine.low %v4126, %v1480
      %v4129 = vunpack.c.l.s4 1935823168
      %v4130 = vunpack.c.0.s8 %v4129
      %v4131 = vlaneseq
      %v4132 = vshrl.u32 %v4131, 7
      %v4133 = vsub.s32 %v4130, %v4132
      %v4134 = vrot.slane %v4127, %v4133
      %v4135 = vcombine.low %v877, %v899
      %v4137 = vunpack.c.l.s4 1935823168
      %v4138 = vunpack.c.0.s8 %v4137
      %v4139 = vlaneseq
      %v4140 = vshrl.u32 %v4139, 7
      %v4141 = vsub.s32 %v4138, %v4140
      %v4142 = vrot.slane %v4135, %v4141
      %v4143 = vcombine.low %v4142, %v1504
      %v4145 = vunpack.c.l.s4 1935823168
      %v4146 = vunpack.c.0.s8 %v4145
      %v4147 = vlaneseq
      %v4148 = vshrl.u32 %v4147, 7
      %v4149 = vsub.s32 %v4146, %v4148
      %v4150 = vrot.slane %v4143, %v4149
      %v4151 = vcombine.low %v901, %v923
      %v4153 = vunpack.c.l.s4 1935823168
      %v4154 = vunpack.c.0.s8 %v4153
      %v4155 = vlaneseq
      %v4156 = vshrl.u32 %v4155, 7
      %v4157 = vsub.s32 %v4154, %v4156
      %v4158 = vrot.slane %v4151, %v4157
      %v4159 = vcombine.low %v4158, %v1528
      %v4161 = vunpack.c.l.s4 1935823168
      %v4162 = vunpack.c.0.s8 %v4161
      %v4163 = vlaneseq
      %v4164 = vshrl.u32 %v4163, 7
      %v4165 = vsub.s32 %v4162, %v4164
      %v4166 = vrot.slane %v4159, %v4165
      %v4167 = vcombine.low %v939, %v947
      %v4169 = vunpack.c.l.s4 1935823168
      %v4170 = vunpack.c.0.s8 %v4169
      %v4171 = vlaneseq
      %v4172 = vshrl.u32 %v4171, 7
      %v4173 = vsub.s32 %v4170, %v4172
      %v4174 = vrot.slane %v4167, %v4173
      %v4175 = vcombine.low %v4174, %v1552
      %v4177 = vunpack.c.l.s4 1935823168
      %v4178 = vunpack.c.0.s8 %v4177
      %v4179 = vlaneseq
      %v4180 = vshrl.u32 %v4179, 7
      %v4181 = vsub.s32 %v4178, %v4180
      %v4182 = vrot.slane %v4175, %v4181
      %v4183 = vcombine.low %v963, %v971
      %v4185 = vunpack.c.l.s4 1935823168
      %v4186 = vunpack.c.0.s8 %v4185
      %v4187 = vlaneseq
      %v4188 = vshrl.u32 %v4187, 7
      %v4189 = vsub.s32 %v4186, %v4188
      %v4190 = vrot.slane %v4183, %v4189
      %v4191 = vcombine.low %v4190, %v1576
      %v4193 = vunpack.c.l.s4 1935823168
      %v4194 = vunpack.c.0.s8 %v4193
      %v4195 = vlaneseq
      %v4196 = vshrl.u32 %v4195, 7
      %v4197 = vsub.s32 %v4194, %v4196
      %v4198 = vrot.slane %v4191, %v4197
      %v4199 = vcombine.low %v993, %v995
      %v4201 = vunpack.c.l.s4 1935823168
      %v4202 = vunpack.c.0.s8 %v4201
      %v4203 = vlaneseq
      %v4204 = vshrl.u32 %v4203, 7
      %v4205 = vsub.s32 %v4202, %v4204
      %v4206 = vrot.slane %v4199, %v4205
      %v4207 = vcombine.low %v4206, %v1600
      %v4209 = vunpack.c.l.s4 1935823168
      %v4210 = vunpack.c.0.s8 %v4209
      %v4211 = vlaneseq
      %v4212 = vshrl.u32 %v4211, 7
      %v4213 = vsub.s32 %v4210, %v4212
      %v4214 = vrot.slane %v4207, %v4213
      %v4215 = vcombine.low %v1017, %v1033
      %v4217 = vunpack.c.l.s4 1935823168
      %v4218 = vunpack.c.0.s8 %v4217
      %v4219 = vlaneseq
      %v4220 = vshrl.u32 %v4219, 7
      %v4221 = vsub.s32 %v4218, %v4220
      %v4222 = vrot.slane %v4215, %v4221
      %v4223 = vcombine.low %v4222, %v1624
      %v4225 = vunpack.c.l.s4 1935823168
      %v4226 = vunpack.c.0.s8 %v4225
      %v4227 = vlaneseq
      %v4228 = vshrl.u32 %v4227, 7
      %v4229 = vsub.s32 %v4226, %v4228
      %v4230 = vrot.slane %v4223, %v4229
      %v4231 = vcombine.low %v1041, %v1057
      %v4233 = vunpack.c.l.s4 1935823168
      %v4234 = vunpack.c.0.s8 %v4233
      %v4235 = vlaneseq
      %v4236 = vshrl.u32 %v4235, 7
      %v4237 = vsub.s32 %v4234, %v4236
      %v4238 = vrot.slane %v4231, %v4237
      %v4239 = vcombine.low %v4238, %v1648
      %v4241 = vunpack.c.l.s4 1935823168
      %v4242 = vunpack.c.0.s8 %v4241
      %v4243 = vlaneseq
      %v4244 = vshrl.u32 %v4243, 7
      %v4245 = vsub.s32 %v4242, %v4244
      %v4246 = vrot.slane %v4239, %v4245
      %v4247 = vcombine.low %v1065, %v1087
      %v4249 = vunpack.c.l.s4 1935823168
      %v4250 = vunpack.c.0.s8 %v4249
      %v4251 = vlaneseq
      %v4252 = vshrl.u32 %v4251, 7
      %v4253 = vsub.s32 %v4250, %v4252
      %v4254 = vrot.slane %v4247, %v4253
      %v4255 = vcombine.low %v4254, %v1672
      %v4257 = vunpack.c.l.s4 1935823168
      %v4258 = vunpack.c.0.s8 %v4257
      %v4259 = vlaneseq
      %v4260 = vshrl.u32 %v4259, 7
      %v4261 = vsub.s32 %v4258, %v4260
      %v4262 = vrot.slane %v4255, %v4261
      %v4263 = vcombine.low %v1089, %v1111
      %v4265 = vunpack.c.l.s4 1935823168
      %v4266 = vunpack.c.0.s8 %v4265
      %v4267 = vlaneseq
      %v4268 = vshrl.u32 %v4267, 7
      %v4269 = vsub.s32 %v4266, %v4268
      %v4270 = vrot.slane %v4263, %v4269
      %v4271 = vcombine.low %v4270, %v1696
      %v4273 = vunpack.c.l.s4 1935823168
      %v4274 = vunpack.c.0.s8 %v4273
      %v4275 = vlaneseq
      %v4276 = vshrl.u32 %v4275, 7
      %v4277 = vsub.s32 %v4274, %v4276
      %v4278 = vrot.slane %v4271, %v4277
      %v4279 = vcombine.low %v1127, %v1135
      %v4281 = vunpack.c.l.s4 1935823168
      %v4282 = vunpack.c.0.s8 %v4281
      %v4283 = vlaneseq
      %v4284 = vshrl.u32 %v4283, 7
      %v4285 = vsub.s32 %v4282, %v4284
      %v4286 = vrot.slane %v4279, %v4285
      %v4287 = vcombine.low %v4286, %v1720
      %v4289 = vunpack.c.l.s4 1935823168
      %v4290 = vunpack.c.0.s8 %v4289
      %v4291 = vlaneseq
      %v4292 = vshrl.u32 %v4291, 7
      %v4293 = vsub.s32 %v4290, %v4292
      %v4294 = vrot.slane %v4287, %v4293
      %v4295 = vcombine.low %v1151, %v1159
      %v4296 = vcombine.low %v1158, %v3910
      %v4298 = vunpack.c.l.s4 1935823168
      %v4299 = vunpack.c.0.s8 %v4298
      %v4300 = vlaneseq
      %v4301 = vshrl.u32 %v4300, 7
      %v4302 = vsub.s32 %v4299, %v4301
      %v4303 = vrot.slane %v4295, %v4302
      %v4305 = vunpack.c.l.s4 1935823168
      %v4306 = vunpack.c.0.s8 %v4305
      %v4307 = vlaneseq
      %v4308 = vshrl.u32 %v4307, 7
      %v4309 = vsub.s32 %v4306, %v4308
      %v4310 = vrot.slane %v4296, %v4309
      %v4311 = vcombine.low %v4303, %v4310
      %v4313 = vunpack.c.l.s4 1935823168
      %v4314 = vunpack.c.0.s8 %v4313
      %v4315 = vlaneseq
      %v4316 = vshrl.u32 %v4315, 7
      %v4317 = vsub.s32 %v4314, %v4316
      %v4318 = vrot.slane %v4311, %v4317
      %v4319 = vcombine.low %v3917, %v3919
      %v4320 = vcombine.low %v3918, %v3934
      %v4322 = vunpack.c.l.s4 1935823168
      %v4323 = vunpack.c.0.s8 %v4322
      %v4324 = vlaneseq
      %v4325 = vshrl.u32 %v4324, 7
      %v4326 = vsub.s32 %v4323, %v4325
      %v4327 = vrot.slane %v4319, %v4326
      %v4329 = vunpack.c.l.s4 1935823168
      %v4330 = vunpack.c.0.s8 %v4329
      %v4331 = vlaneseq
      %v4332 = vshrl.u32 %v4331, 7
      %v4333 = vsub.s32 %v4330, %v4332
      %v4334 = vrot.slane %v4320, %v4333
      %v4335 = vcombine.low %v4327, %v4334
      %v4337 = vunpack.c.l.s4 1935823168
      %v4338 = vunpack.c.0.s8 %v4337
      %v4339 = vlaneseq
      %v4340 = vshrl.u32 %v4339, 7
      %v4341 = vsub.s32 %v4338, %v4340
      %v4342 = vrot.slane %v4335, %v4341
      %v4344 = vunpack.c.l.s4 1935823168
      %v4345 = vunpack.c.0.s8 %v4344
      %v4346 = vlaneseq
      %v4347 = vshrl.u32 %v4346, 7
      %v4348 = vsub.s32 %v4345, %v4347
      %v4349 = vrot.slane %v3941, %v4348
      %v4351 = vunpack.c.l.s4 1935823168
      %v4352 = vunpack.c.0.s8 %v4351
      %v4353 = vlaneseq
      %v4354 = vshrl.u32 %v4353, 7
      %v4355 = vsub.s32 %v4352, %v4354
      %v4356 = vrot.slane %v3942, %v4355
      %v4357 = vcombine.low %v4349, %v4356
      %v4359 = vunpack.c.l.s4 1935823168
      %v4360 = vunpack.c.0.s8 %v4359
      %v4361 = vlaneseq
      %v4362 = vshrl.u32 %v4361, 7
      %v4363 = vsub.s32 %v4360, %v4362
      %v4364 = vrot.slane %v4357, %v4363
      %4365 = vrot.lane.b32.xlu0 %v3958, 9
      %v4366 = vpop.permute.xlu0 %4365
      %4367 = vrot.lane.b32.xlu0 %v3974, 9
      %v4368 = vpop.permute.xlu0 %4367
      %4369 = vrot.lane.b32.xlu0 %v3990, 9
      %v4370 = vpop.permute.xlu0 %4369
      %4371 = vrot.lane.b32.xlu0 %v4006, 9
      %v4372 = vpop.permute.xlu0 %4371
      %4373 = vrot.lane.b32.xlu0 %v4022, 9
      %v4374 = vpop.permute.xlu0 %4373
      %4375 = vrot.lane.b32.xlu0 %v4038, 9
      %v4376 = vpop.permute.xlu0 %4375
      %4377 = vrot.lane.b32.xlu0 %v4054, 9
      %v4378 = vpop.permute.xlu0 %4377
      %4379 = vrot.lane.b32.xlu0 %v4070, 9
      %v4380 = vpop.permute.xlu0 %4379
      %4381 = vrot.lane.b32.xlu0 %v4086, 9
      %v4382 = vpop.permute.xlu0 %4381
      %4383 = vrot.lane.b32.xlu0 %v4102, 9
      %v4384 = vpop.permute.xlu0 %4383
      %4385 = vrot.lane.b32.xlu0 %v4118, 9
      %v4386 = vpop.permute.xlu0 %4385
      %4387 = vrot.lane.b32.xlu0 %v4134, 9
      %v4388 = vpop.permute.xlu0 %4387
      %4389 = vrot.lane.b32.xlu0 %v4150, 9
      %v4390 = vpop.permute.xlu0 %4389
      %4391 = vrot.lane.b32.xlu0 %v4166, 9
      %v4392 = vpop.permute.xlu0 %4391
      %4393 = vrot.lane.b32.xlu0 %v4182, 9
      %v4394 = vpop.permute.xlu0 %4393
      %4395 = vrot.lane.b32.xlu0 %v4198, 9
      %v4396 = vpop.permute.xlu0 %4395
      %4397 = vrot.lane.b32.xlu0 %v4214, 9
      %v4398 = vpop.permute.xlu0 %4397
      %4399 = vrot.lane.b32.xlu0 %v4230, 9
      %v4400 = vpop.permute.xlu0 %4399
      %4401 = vrot.lane.b32.xlu0 %v4246, 9
      %v4402 = vpop.permute.xlu0 %4401
      %4403 = vrot.lane.b32.xlu0 %v4262, 9
      %v4404 = vpop.permute.xlu0 %4403
      %4405 = vrot.lane.b32.xlu0 %v4278, 9
      %v4406 = vpop.permute.xlu0 %4405
      %4407 = vrot.lane.b32.xlu0 %v4294, 9
      %v4408 = vpop.permute.xlu0 %4407
      %4409 = vrot.lane.b32.xlu0 %v4318, 9
      %v4410 = vpop.permute.xlu0 %4409
      %4411 = vrot.lane.b32.xlu0 %v4342, 9
      %v4412 = vpop.permute.xlu0 %4411
      %4413 = vrot.lane.b32.xlu0 %v4364, 9
      %v4414 = vpop.permute.xlu0 %4413
      %vm4440 = vcmask 93256
      %4441 = vst.msk [vmem:[#allocation2] sm:$0xf] %vm4440, %v4366
      %4442 = vst.msk [vmem:[#allocation2 + $0x4] sm:$0xf] %vm4440, %v4368
      %4443 = vst.msk [vmem:[#allocation2 + $0x8] sm:$0xf] %vm4440, %v4370
      %4444 = vst.msk [vmem:[#allocation2 + $0xc] sm:$0xf] %vm4440, %v4372
      %4445 = vst.msk [vmem:[#allocation2 + $0x10] sm:$0xf] %vm4440, %v4374
      %4446 = vst.msk [vmem:[#allocation2 + $0x14] sm:$0xf] %vm4440, %v4376
      %4447 = vst.msk [vmem:[#allocation2 + $0x18] sm:$0xf] %vm4440, %v4378
      %4448 = vst.msk [vmem:[#allocation2 + $0x1c] sm:$0xf] %vm4440, %v4380
      %4449 = vst.msk [vmem:[#allocation2 + $0x20] sm:$0xf] %vm4440, %v4382
      %4450 = vst.msk [vmem:[#allocation2 + $0x24] sm:$0xf] %vm4440, %v4384
      %4451 = vst.msk [vmem:[#allocation2 + $0x28] sm:$0xf] %vm4440, %v4386
      %4452 = vst.msk [vmem:[#allocation2 + $0x2c] sm:$0xf] %vm4440, %v4388
      %4453 = vst.msk [vmem:[#allocation2 + $0x30] sm:$0xf] %vm4440, %v4390
      %4454 = vst.msk [vmem:[#allocation2 + $0x34] sm:$0xf] %vm4440, %v4392
      %4455 = vst.msk [vmem:[#allocation2 + $0x38] sm:$0xf] %vm4440, %v4394
      %4456 = vst.msk [vmem:[#allocation2 + $0x3c] sm:$0xf] %vm4440, %v4396
      %4457 = vst.msk [vmem:[#allocation2 + $0x40] sm:$0xf] %vm4440, %v4398
      %4458 = vst.msk [vmem:[#allocation2 + $0x44] sm:$0xf] %vm4440, %v4400
      %4459 = vst.msk [vmem:[#allocation2 + $0x48] sm:$0xf] %vm4440, %v4402
      %4460 = vst.msk [vmem:[#allocation2 + $0x4c] sm:$0xf] %vm4440, %v4404
      %4461 = vst.msk [vmem:[#allocation2 + $0x50] sm:$0xf] %vm4440, %v4406
      %4462 = vst.msk [vmem:[#allocation2 + $0x54] sm:$0xf] %vm4440, %v4408
      %4463 = vst.msk [vmem:[#allocation2 + $0x58] sm:$0xf] %vm4440, %v4410
      %4464 = vst.msk [vmem:[#allocation2 + $0x5c] sm:$0xf] %vm4440, %v4412
      %vm4465 = vcmask 91208
      %4466 = vst.msk [vmem:[#allocation2 + $0x60] sm:$0x3] %vm4465, %v4414
      %v4467 = vcombine.high %v3941, %v3941
      %v4469 = vshrl.u32 %v3910, 16
      %v4471 = vrot.slane %v4469, 7
      %v4472 = vrot.slane %v4471, 1
      %v4474 = vshll.u32 %v3917, 16
      %v4476 = vsel %vm1838, %v4472, %v4474
      %v4477 = vshrl.u32 %v3917, 16
      %v4479 = vrot.slane %v4477, 7
      %v4480 = vrot.slane %v4479, 1
      %v4482 = vshll.u32 %v3918, 16
      %v4484 = vsel %vm1838, %v4480, %v4482
      %v4485 = vshrl.u32 %v3918, 16
      %v4487 = vrot.slane %v4485, 7
      %v4488 = vrot.slane %v4487, 1
      %v4490 = vshll.u32 %v3919, 16
      %v4492 = vsel %vm1838, %v4488, %v4490
      %v4493 = vshrl.u32 %v3919, 16
      %v4495 = vrot.slane %v4493, 7
      %v4496 = vrot.slane %v4495, 1
      %v4498 = vshll.u32 %v3934, 16
      %v4500 = vsel %vm1838, %v4496, %v4498
      %v4501 = vshrl.u32 %v3934, 16
      %v4503 = vrot.slane %v4501, 7
      %v4504 = vrot.slane %v4503, 1
      %v4506 = vshll.u32 %v3941, 16
      %v4508 = vsel %vm1838, %v4504, %v4506
      %v4509 = vshrl.u32 %v3941, 16
      %v4511 = vrot.slane %v4509, 7
      %v4512 = vrot.slane %v4511, 1
      %v4514 = vshll.u32 %v3942, 16
      %v4516 = vsel %vm1838, %v4512, %v4514
      %v4517 = vshrl.u32 %v3942, 16
      %v4519 = vrot.slane %v4517, 7
      %v4520 = vrot.slane %v4519, 1
      %v4522 = vshll.u32 %v4467, 16
      %v4524 = vsel %vm1838, %v4520, %v4522
      %v4525 = vcombine.low %v1904, %v1920
      %v4527 = vunpack.c.l.s4 1935823168
      %v4528 = vunpack.c.0.s8 %v4527
      %v4529 = vlaneseq
      %v4530 = vshrl.u32 %v4529, 7
      %v4531 = vsub.s32 %v4528, %v4530
      %v4532 = vrot.slane %v4525, %v4531
      %v4533 = vcombine.low %v4532, %v2693
      %v4535 = vunpack.c.l.s4 1935823168
      %v4536 = vunpack.c.0.s8 %v4535
      %v4537 = vlaneseq
      %v4538 = vshrl.u32 %v4537, 7
      %v4539 = vsub.s32 %v4536, %v4538
      %v4540 = vrot.slane %v4533, %v4539
      %v4541 = vcombine.low %v1936, %v1952
      %v4543 = vunpack.c.l.s4 1935823168
      %v4544 = vunpack.c.0.s8 %v4543
      %v4545 = vlaneseq
      %v4546 = vshrl.u32 %v4545, 7
      %v4547 = vsub.s32 %v4544, %v4546
      %v4548 = vrot.slane %v4541, %v4547
      %v4549 = vcombine.low %v4548, %v2717
      %v4551 = vunpack.c.l.s4 1935823168
      %v4552 = vunpack.c.0.s8 %v4551
      %v4553 = vlaneseq
      %v4554 = vshrl.u32 %v4553, 7
      %v4555 = vsub.s32 %v4552, %v4554
      %v4556 = vrot.slane %v4549, %v4555
      %v4557 = vcombine.low %v1969, %v1985
      %v4559 = vunpack.c.l.s4 1935823168
      %v4560 = vunpack.c.0.s8 %v4559
      %v4561 = vlaneseq
      %v4562 = vshrl.u32 %v4561, 7
      %v4563 = vsub.s32 %v4560, %v4562
      %v4564 = vrot.slane %v4557, %v4563
      %v4565 = vcombine.low %v4564, %v2741
      %v4567 = vunpack.c.l.s4 1935823168
      %v4568 = vunpack.c.0.s8 %v4567
      %v4569 = vlaneseq
      %v4570 = vshrl.u32 %v4569, 7
      %v4571 = vsub.s32 %v4568, %v4570
      %v4572 = vrot.slane %v4565, %v4571
      %v4573 = vcombine.low %v2001, %v2018
      %v4575 = vunpack.c.l.s4 1935823168
      %v4576 = vunpack.c.0.s8 %v4575
      %v4577 = vlaneseq
      %v4578 = vshrl.u32 %v4577, 7
      %v4579 = vsub.s32 %v4576, %v4578
      %v4580 = vrot.slane %v4573, %v4579
      %v4581 = vcombine.low %v4580, %v2765
      %v4583 = vunpack.c.l.s4 1935823168
      %v4584 = vunpack.c.0.s8 %v4583
      %v4585 = vlaneseq
      %v4586 = vshrl.u32 %v4585, 7
      %v4587 = vsub.s32 %v4584, %v4586
      %v4588 = vrot.slane %v4581, %v4587
      %v4589 = vcombine.low %v2034, %v2050
      %v4591 = vunpack.c.l.s4 1935823168
      %v4592 = vunpack.c.0.s8 %v4591
      %v4593 = vlaneseq
      %v4594 = vshrl.u32 %v4593, 7
      %v4595 = vsub.s32 %v4592, %v4594
      %v4596 = vrot.slane %v4589, %v4595
      %v4597 = vcombine.low %v4596, %v2789
      %v4599 = vunpack.c.l.s4 1935823168
      %v4600 = vunpack.c.0.s8 %v4599
      %v4601 = vlaneseq
      %v4602 = vshrl.u32 %v4601, 7
      %v4603 = vsub.s32 %v4600, %v4602
      %v4604 = vrot.slane %v4597, %v4603
      %v4605 = vcombine.low %v2066, %v2083
      %v4607 = vunpack.c.l.s4 1935823168
      %v4608 = vunpack.c.0.s8 %v4607
      %v4609 = vlaneseq
      %v4610 = vshrl.u32 %v4609, 7
      %v4611 = vsub.s32 %v4608, %v4610
      %v4612 = vrot.slane %v4605, %v4611
      %v4613 = vcombine.low %v4612, %v2813
      %v4615 = vunpack.c.l.s4 1935823168
      %v4616 = vunpack.c.0.s8 %v4615
      %v4617 = vlaneseq
      %v4618 = vshrl.u32 %v4617, 7
      %v4619 = vsub.s32 %v4616, %v4618
      %v4620 = vrot.slane %v4613, %v4619
      %v4621 = vcombine.low %v2099, %v2115
      %v4623 = vunpack.c.l.s4 1935823168
      %v4624 = vunpack.c.0.s8 %v4623
      %v4625 = vlaneseq
      %v4626 = vshrl.u32 %v4625, 7
      %v4627 = vsub.s32 %v4624, %v4626
      %v4628 = vrot.slane %v4621, %v4627
      %v4629 = vcombine.low %v4628, %v2837
      %v4631 = vunpack.c.l.s4 1935823168
      %v4632 = vunpack.c.0.s8 %v4631
      %v4633 = vlaneseq
      %v4634 = vshrl.u32 %v4633, 7
      %v4635 = vsub.s32 %v4632, %v4634
      %v4636 = vrot.slane %v4629, %v4635
      %v4637 = vcombine.low %v2132, %v2148
      %v4639 = vunpack.c.l.s4 1935823168
      %v4640 = vunpack.c.0.s8 %v4639
      %v4641 = vlaneseq
      %v4642 = vshrl.u32 %v4641, 7
      %v4643 = vsub.s32 %v4640, %v4642
      %v4644 = vrot.slane %v4637, %v4643
      %v4645 = vcombine.low %v4644, %v2861
      %v4647 = vunpack.c.l.s4 1935823168
      %v4648 = vunpack.c.0.s8 %v4647
      %v4649 = vlaneseq
      %v4650 = vshrl.u32 %v4649, 7
      %v4651 = vsub.s32 %v4648, %v4650
      %v4652 = vrot.slane %v4645, %v4651
      %v4653 = vcombine.low %v2164, %v2180
      %v4655 = vunpack.c.l.s4 1935823168
      %v4656 = vunpack.c.0.s8 %v4655
      %v4657 = vlaneseq
      %v4658 = vshrl.u32 %v4657, 7
      %v4659 = vsub.s32 %v4656, %v4658
      %v4660 = vrot.slane %v4653, %v4659
      %v4661 = vcombine.low %v4660, %v2885
      %v4663 = vunpack.c.l.s4 1935823168
      %v4664 = vunpack.c.0.s8 %v4663
      %v4665 = vlaneseq
      %v4666 = vshrl.u32 %v4665, 7
      %v4667 = vsub.s32 %v4664, %v4666
      %v4668 = vrot.slane %v4661, %v4667
      %v4669 = vcombine.low %v2197, %v2213
      %v4671 = vunpack.c.l.s4 1935823168
      %v4672 = vunpack.c.0.s8 %v4671
      %v4673 = vlaneseq
      %v4674 = vshrl.u32 %v4673, 7
      %v4675 = vsub.s32 %v4672, %v4674
      %v4676 = vrot.slane %v4669, %v4675
      %v4677 = vcombine.low %v4676, %v2909
      %v4679 = vunpack.c.l.s4 1935823168
      %v4680 = vunpack.c.0.s8 %v4679
      %v4681 = vlaneseq
      %v4682 = vshrl.u32 %v4681, 7
      %v4683 = vsub.s32 %v4680, %v4682
      %v4684 = vrot.slane %v4677, %v4683
      %v4685 = vcombine.low %v2229, %v2246
      %v4687 = vunpack.c.l.s4 1935823168
      %v4688 = vunpack.c.0.s8 %v4687
      %v4689 = vlaneseq
      %v4690 = vshrl.u32 %v4689, 7
      %v4691 = vsub.s32 %v4688, %v4690
      %v4692 = vrot.slane %v4685, %v4691
      %v4693 = vcombine.low %v4692, %v2933
      %v4695 = vunpack.c.l.s4 1935823168
      %v4696 = vunpack.c.0.s8 %v4695
      %v4697 = vlaneseq
      %v4698 = vshrl.u32 %v4697, 7
      %v4699 = vsub.s32 %v4696, %v4698
      %v4700 = vrot.slane %v4693, %v4699
      %v4701 = vcombine.low %v2262, %v2278
      %v4703 = vunpack.c.l.s4 1935823168
      %v4704 = vunpack.c.0.s8 %v4703
      %v4705 = vlaneseq
      %v4706 = vshrl.u32 %v4705, 7
      %v4707 = vsub.s32 %v4704, %v4706
      %v4708 = vrot.slane %v4701, %v4707
      %v4709 = vcombine.low %v4708, %v2957
      %v4711 = vunpack.c.l.s4 1935823168
      %v4712 = vunpack.c.0.s8 %v4711
      %v4713 = vlaneseq
      %v4714 = vshrl.u32 %v4713, 7
      %v4715 = vsub.s32 %v4712, %v4714
      %v4716 = vrot.slane %v4709, %v4715
      %v4717 = vcombine.low %v2294, %v2311
      %v4719 = vunpack.c.l.s4 1935823168
      %v4720 = vunpack.c.0.s8 %v4719
      %v4721 = vlaneseq
      %v4722 = vshrl.u32 %v4721, 7
      %v4723 = vsub.s32 %v4720, %v4722
      %v4724 = vrot.slane %v4717, %v4723
      %v4725 = vcombine.low %v4724, %v2981
      %v4727 = vunpack.c.l.s4 1935823168
      %v4728 = vunpack.c.0.s8 %v4727
      %v4729 = vlaneseq
      %v4730 = vshrl.u32 %v4729, 7
      %v4731 = vsub.s32 %v4728, %v4730
      %v4732 = vrot.slane %v4725, %v4731
      %v4733 = vcombine.low %v2327, %v2343
      %v4735 = vunpack.c.l.s4 1935823168
      %v4736 = vunpack.c.0.s8 %v4735
      %v4737 = vlaneseq
      %v4738 = vshrl.u32 %v4737, 7
      %v4739 = vsub.s32 %v4736, %v4738
      %v4740 = vrot.slane %v4733, %v4739
      %v4741 = vcombine.low %v4740, %v3005
      %v4743 = vunpack.c.l.s4 1935823168
      %v4744 = vunpack.c.0.s8 %v4743
      %v4745 = vlaneseq
      %v4746 = vshrl.u32 %v4745, 7
      %v4747 = vsub.s32 %v4744, %v4746
      %v4748 = vrot.slane %v4741, %v4747
      %v4749 = vcombine.low %v2360, %v2376
      %v4751 = vunpack.c.l.s4 1935823168
      %v4752 = vunpack.c.0.s8 %v4751
      %v4753 = vlaneseq
      %v4754 = vshrl.u32 %v4753, 7
      %v4755 = vsub.s32 %v4752, %v4754
      %v4756 = vrot.slane %v4749, %v4755
      %v4757 = vcombine.low %v4756, %v3029
      %v4759 = vunpack.c.l.s4 1935823168
      %v4760 = vunpack.c.0.s8 %v4759
      %v4761 = vlaneseq
      %v4762 = vshrl.u32 %v4761, 7
      %v4763 = vsub.s32 %v4760, %v4762
      %v4764 = vrot.slane %v4757, %v4763
      %v4765 = vcombine.low %v2392, %v2408
      %v4767 = vunpack.c.l.s4 1935823168
      %v4768 = vunpack.c.0.s8 %v4767
      %v4769 = vlaneseq
      %v4770 = vshrl.u32 %v4769, 7
      %v4771 = vsub.s32 %v4768, %v4770
      %v4772 = vrot.slane %v4765, %v4771
      %v4773 = vcombine.low %v4772, %v3053
      %v4775 = vunpack.c.l.s4 1935823168
      %v4776 = vunpack.c.0.s8 %v4775
      %v4777 = vlaneseq
      %v4778 = vshrl.u32 %v4777, 7
      %v4779 = vsub.s32 %v4776, %v4778
      %v4780 = vrot.slane %v4773, %v4779
      %v4781 = vcombine.low %v2425, %v2441
      %v4783 = vunpack.c.l.s4 1935823168
      %v4784 = vunpack.c.0.s8 %v4783
      %v4785 = vlaneseq
      %v4786 = vshrl.u32 %v4785, 7
      %v4787 = vsub.s32 %v4784, %v4786
      %v4788 = vrot.slane %v4781, %v4787
      %v4789 = vcombine.low %v4788, %v3077
      %v4791 = vunpack.c.l.s4 1935823168
      %v4792 = vunpack.c.0.s8 %v4791
      %v4793 = vlaneseq
      %v4794 = vshrl.u32 %v4793, 7
      %v4795 = vsub.s32 %v4792, %v4794
      %v4796 = vrot.slane %v4789, %v4795
      %v4797 = vcombine.low %v2457, %v2474
      %v4799 = vunpack.c.l.s4 1935823168
      %v4800 = vunpack.c.0.s8 %v4799
      %v4801 = vlaneseq
      %v4802 = vshrl.u32 %v4801, 7
      %v4803 = vsub.s32 %v4800, %v4802
      %v4804 = vrot.slane %v4797, %v4803
      %v4805 = vcombine.low %v4804, %v3101
      %v4807 = vunpack.c.l.s4 1935823168
      %v4808 = vunpack.c.0.s8 %v4807
      %v4809 = vlaneseq
      %v4810 = vshrl.u32 %v4809, 7
      %v4811 = vsub.s32 %v4808, %v4810
      %v4812 = vrot.slane %v4805, %v4811
      %v4813 = vcombine.low %v2490, %v2506
      %v4815 = vunpack.c.l.s4 1935823168
      %v4816 = vunpack.c.0.s8 %v4815
      %v4817 = vlaneseq
      %v4818 = vshrl.u32 %v4817, 7
      %v4819 = vsub.s32 %v4816, %v4818
      %v4820 = vrot.slane %v4813, %v4819
      %v4821 = vcombine.low %v4820, %v3125
      %v4823 = vunpack.c.l.s4 1935823168
      %v4824 = vunpack.c.0.s8 %v4823
      %v4825 = vlaneseq
      %v4826 = vshrl.u32 %v4825, 7
      %v4827 = vsub.s32 %v4824, %v4826
      %v4828 = vrot.slane %v4821, %v4827
      %v4829 = vcombine.low %v2522, %v2539
      %v4831 = vunpack.c.l.s4 1935823168
      %v4832 = vunpack.c.0.s8 %v4831
      %v4833 = vlaneseq
      %v4834 = vshrl.u32 %v4833, 7
      %v4835 = vsub.s32 %v4832, %v4834
      %v4836 = vrot.slane %v4829, %v4835
      %v4837 = vcombine.low %v4836, %v3149
      %v4839 = vunpack.c.l.s4 1935823168
      %v4840 = vunpack.c.0.s8 %v4839
      %v4841 = vlaneseq
      %v4842 = vshrl.u32 %v4841, 7
      %v4843 = vsub.s32 %v4840, %v4842
      %v4844 = vrot.slane %v4837, %v4843
      %v4845 = vcombine.low %v2555, %v2571
      %v4847 = vunpack.c.l.s4 1935823168
      %v4848 = vunpack.c.0.s8 %v4847
      %v4849 = vlaneseq
      %v4850 = vshrl.u32 %v4849, 7
      %v4851 = vsub.s32 %v4848, %v4850
      %v4852 = vrot.slane %v4845, %v4851
      %v4853 = vcombine.low %v4852, %v3173
      %v4855 = vunpack.c.l.s4 1935823168
      %v4856 = vunpack.c.0.s8 %v4855
      %v4857 = vlaneseq
      %v4858 = vshrl.u32 %v4857, 7
      %v4859 = vsub.s32 %v4856, %v4858
      %v4860 = vrot.slane %v4853, %v4859
      %v4861 = vcombine.low %v2588, %v2604
      %v4863 = vunpack.c.l.s4 1935823168
      %v4864 = vunpack.c.0.s8 %v4863
      %v4865 = vlaneseq
      %v4866 = vshrl.u32 %v4865, 7
      %v4867 = vsub.s32 %v4864, %v4866
      %v4868 = vrot.slane %v4861, %v4867
      %v4869 = vcombine.low %v4868, %v3197
      %v4871 = vunpack.c.l.s4 1935823168
      %v4872 = vunpack.c.0.s8 %v4871
      %v4873 = vlaneseq
      %v4874 = vshrl.u32 %v4873, 7
      %v4875 = vsub.s32 %v4872, %v4874
      %v4876 = vrot.slane %v4869, %v4875
      %v4877 = vcombine.low %v2620, %v2636
      %v4878 = vcombine.low %v2628, %v4476
      %v4880 = vunpack.c.l.s4 1935823168
      %v4881 = vunpack.c.0.s8 %v4880
      %v4882 = vlaneseq
      %v4883 = vshrl.u32 %v4882, 7
      %v4884 = vsub.s32 %v4881, %v4883
      %v4885 = vrot.slane %v4877, %v4884
      %v4887 = vunpack.c.l.s4 1935823168
      %v4888 = vunpack.c.0.s8 %v4887
      %v4889 = vlaneseq
      %v4890 = vshrl.u32 %v4889, 7
      %v4891 = vsub.s32 %v4888, %v4890
      %v4892 = vrot.slane %v4878, %v4891
      %v4893 = vcombine.low %v4885, %v4892
      %v4895 = vunpack.c.l.s4 1935823168
      %v4896 = vunpack.c.0.s8 %v4895
      %v4897 = vlaneseq
      %v4898 = vshrl.u32 %v4897, 7
      %v4899 = vsub.s32 %v4896, %v4898
      %v4900 = vrot.slane %v4893, %v4899
      %v4901 = vcombine.low %v4484, %v4500
      %v4902 = vcombine.low %v4492, %v4508
      %v4904 = vunpack.c.l.s4 1935823168
      %v4905 = vunpack.c.0.s8 %v4904
      %v4906 = vlaneseq
      %v4907 = vshrl.u32 %v4906, 7
      %v4908 = vsub.s32 %v4905, %v4907
      %v4909 = vrot.slane %v4901, %v4908
      %v4911 = vunpack.c.l.s4 1935823168
      %v4912 = vunpack.c.0.s8 %v4911
      %v4913 = vlaneseq
      %v4914 = vshrl.u32 %v4913, 7
      %v4915 = vsub.s32 %v4912, %v4914
      %v4916 = vrot.slane %v4902, %v4915
      %v4917 = vcombine.low %v4909, %v4916
      %v4919 = vunpack.c.l.s4 1935823168
      %v4920 = vunpack.c.0.s8 %v4919
      %v4921 = vlaneseq
      %v4922 = vshrl.u32 %v4921, 7
      %v4923 = vsub.s32 %v4920, %v4922
      %v4924 = vrot.slane %v4917, %v4923
      %v4926 = vunpack.c.l.s4 1935823168
      %v4927 = vunpack.c.0.s8 %v4926
      %v4928 = vlaneseq
      %v4929 = vshrl.u32 %v4928, 7
      %v4930 = vsub.s32 %v4927, %v4929
      %v4931 = vrot.slane %v4516, %v4930
      %v4933 = vunpack.c.l.s4 1935823168
      %v4934 = vunpack.c.0.s8 %v4933
      %v4935 = vlaneseq
      %v4936 = vshrl.u32 %v4935, 7
      %v4937 = vsub.s32 %v4934, %v4936
      %v4938 = vrot.slane %v4524, %v4937
      %v4939 = vcombine.low %v4931, %v4938
      %v4941 = vunpack.c.l.s4 1935823168
      %v4942 = vunpack.c.0.s8 %v4941
      %v4943 = vlaneseq
      %v4944 = vshrl.u32 %v4943, 7
      %v4945 = vsub.s32 %v4942, %v4944
      %v4946 = vrot.slane %v4939, %v4945
      %4947 = vrot.lane.b32.xlu0 %v4540, 12
      %v4948 = vpop.permute.xlu0 %4947
      %4949 = vrot.lane.b32.xlu0 %v4556, 12
      %v4950 = vpop.permute.xlu0 %4949
      %4951 = vrot.lane.b32.xlu0 %v4572, 12
      %v4952 = vpop.permute.xlu0 %4951
      %4953 = vrot.lane.b32.xlu0 %v4588, 12
      %v4954 = vpop.permute.xlu0 %4953
      %4955 = vrot.lane.b32.xlu0 %v4604, 12
      %v4956 = vpop.permute.xlu0 %4955
      %4957 = vrot.lane.b32.xlu0 %v4620, 12
      %v4958 = vpop.permute.xlu0 %4957
      %4959 = vrot.lane.b32.xlu0 %v4636, 12
      %v4960 = vpop.permute.xlu0 %4959
      %4961 = vrot.lane.b32.xlu0 %v4652, 12
      %v4962 = vpop.permute.xlu0 %4961
      %4963 = vrot.lane.b32.xlu0 %v4668, 12
      %v4964 = vpop.permute.xlu0 %4963
      %4965 = vrot.lane.b32.xlu0 %v4684, 12
      %v4966 = vpop.permute.xlu0 %4965
      %4967 = vrot.lane.b32.xlu0 %v4700, 12
      %v4968 = vpop.permute.xlu0 %4967
      %4969 = vrot.lane.b32.xlu0 %v4716, 12
      %v4970 = vpop.permute.xlu0 %4969
      %4971 = vrot.lane.b32.xlu0 %v4732, 12
      %v4972 = vpop.permute.xlu0 %4971
      %4973 = vrot.lane.b32.xlu0 %v4748, 12
      %v4974 = vpop.permute.xlu0 %4973
      %4975 = vrot.lane.b32.xlu0 %v4764, 12
      %v4976 = vpop.permute.xlu0 %4975
      %4977 = vrot.lane.b32.xlu0 %v4780, 12
      %v4978 = vpop.permute.xlu0 %4977
      %4979 = vrot.lane.b32.xlu0 %v4796, 12
      %v4980 = vpop.permute.xlu0 %4979
      %4981 = vrot.lane.b32.xlu0 %v4812, 12
      %v4982 = vpop.permute.xlu0 %4981
      %4983 = vrot.lane.b32.xlu0 %v4828, 12
      %v4984 = vpop.permute.xlu0 %4983
      %4985 = vrot.lane.b32.xlu0 %v4844, 12
      %v4986 = vpop.permute.xlu0 %4985
      %4987 = vrot.lane.b32.xlu0 %v4860, 12
      %v4988 = vpop.permute.xlu0 %4987
      %4989 = vrot.lane.b32.xlu0 %v4876, 12
      %v4990 = vpop.permute.xlu0 %4989
      %4991 = vrot.lane.b32.xlu0 %v4900, 12
      %v4992 = vpop.permute.xlu0 %4991
      %4993 = vrot.lane.b32.xlu0 %v4924, 12
      %v4994 = vpop.permute.xlu0 %4993
      %4995 = vrot.lane.b32.xlu0 %v4946, 12
      %v4996 = vpop.permute.xlu0 %4995
      %vm5022 = vcmask 117856
      %5023 = vst.msk [vmem:[#allocation2] sm:$0xf] %vm5022, %v4948
      %5024 = vst.msk [vmem:[#allocation2 + $0x4] sm:$0xf] %vm5022, %v4950
      %5025 = vst.msk [vmem:[#allocation2 + $0x8] sm:$0xf] %vm5022, %v4952
      %5026 = vst.msk [vmem:[#allocation2 + $0xc] sm:$0xf] %vm5022, %v4954
      %5027 = vst.msk [vmem:[#allocation2 + $0x10] sm:$0xf] %vm5022, %v4956
      %5028 = vst.msk [vmem:[#allocation2 + $0x14] sm:$0xf] %vm5022, %v4958
      %5029 = vst.msk [vmem:[#allocation2 + $0x18] sm:$0xf] %vm5022, %v4960
      %5030 = vst.msk [vmem:[#allocation2 + $0x1c] sm:$0xf] %vm5022, %v4962
      %5031 = vst.msk [vmem:[#allocation2 + $0x20] sm:$0xf] %vm5022, %v4964
      %5032 = vst.msk [vmem:[#allocation2 + $0x24] sm:$0xf] %vm5022, %v4966
      %5033 = vst.msk [vmem:[#allocation2 + $0x28] sm:$0xf] %vm5022, %v4968
      %5034 = vst.msk [vmem:[#allocation2 + $0x2c] sm:$0xf] %vm5022, %v4970
      %5035 = vst.msk [vmem:[#allocation2 + $0x30] sm:$0xf] %vm5022, %v4972
      %5036 = vst.msk [vmem:[#allocation2 + $0x34] sm:$0xf] %vm5022, %v4974
      %5037 = vst.msk [vmem:[#allocation2 + $0x38] sm:$0xf] %vm5022, %v4976
      %5038 = vst.msk [vmem:[#allocation2 + $0x3c] sm:$0xf] %vm5022, %v4978
      %5039 = vst.msk [vmem:[#allocation2 + $0x40] sm:$0xf] %vm5022, %v4980
      %5040 = vst.msk [vmem:[#allocation2 + $0x44] sm:$0xf] %vm5022, %v4982
      %5041 = vst.msk [vmem:[#allocation2 + $0x48] sm:$0xf] %vm5022, %v4984
      %5042 = vst.msk [vmem:[#allocation2 + $0x4c] sm:$0xf] %vm5022, %v4986
      %5043 = vst.msk [vmem:[#allocation2 + $0x50] sm:$0xf] %vm5022, %v4988
      %5044 = vst.msk [vmem:[#allocation2 + $0x54] sm:$0xf] %vm5022, %v4990
      %5045 = vst.msk [vmem:[#allocation2 + $0x58] sm:$0xf] %vm5022, %v4992
      %5046 = vst.msk [vmem:[#allocation2 + $0x5c] sm:$0xf] %vm5022, %v4994
      %vm5047 = vcmask 115808
      %5048 = vst.msk [vmem:[#allocation2 + $0x60] sm:$0x3] %vm5047, %v4996
      %v5049 = vcombine.low %v594, %v1811
      %v5051 = vunpack.c.l.s4 1935823168
      %v5052 = vunpack.c.0.s8 %v5051
      %v5053 = vlaneseq
      %v5054 = vshrl.u32 %v5053, 7
      %v5055 = vsub.s32 %v5052, %v5054
      %v5056 = vrot.slane %v5049, %v5055
      %v5057 = vcombine.low %v5056, %v1247
      %v5059 = vunpack.c.l.s4 1935823168
      %v5060 = vunpack.c.0.s8 %v5059
      %v5061 = vlaneseq
      %v5062 = vshrl.u32 %v5061, 7
      %v5063 = vsub.s32 %v5060, %v5062
      %v5064 = vrot.slane %v5057, %v5063
      %v5065 = vcombine.low %v1288, %v3433
      %v5067 = vunpack.c.l.s4 1935823168
      %v5068 = vunpack.c.0.s8 %v5067
      %v5069 = vlaneseq
      %v5070 = vshrl.u32 %v5069, 7
      %v5071 = vsub.s32 %v5068, %v5070
      %v5072 = vrot.slane %v5065, %v5071
      %v5073 = vcombine.low %v1813, %v712
      %v5075 = vunpack.c.l.s4 1935823168
      %v5076 = vunpack.c.0.s8 %v5075
      %v5077 = vlaneseq
      %v5078 = vshrl.u32 %v5077, 7
      %v5079 = vsub.s32 %v5076, %v5078
      %v5080 = vrot.slane %v5073, %v5079
      %v5081 = vcombine.low %v5080, %v1343
      %v5083 = vunpack.c.l.s4 1935823168
      %v5084 = vunpack.c.0.s8 %v5083
      %v5085 = vlaneseq
      %v5086 = vshrl.u32 %v5085, 7
      %v5087 = vsub.s32 %v5084, %v5086
      %v5088 = vrot.slane %v5081, %v5087
      %v5089 = vcombine.low %v1360, %v3489
      %v5091 = vunpack.c.l.s4 1935823168
      %v5092 = vunpack.c.0.s8 %v5091
      %v5093 = vlaneseq
      %v5094 = vshrl.u32 %v5093, 7
      %v5095 = vsub.s32 %v5092, %v5094
      %v5096 = vrot.slane %v5089, %v5095
      %v5097 = vcombine.low %v782, %v1815
      %v5099 = vunpack.c.l.s4 1935823168
      %v5100 = vunpack.c.0.s8 %v5099
      %v5101 = vlaneseq
      %v5102 = vshrl.u32 %v5101, 7
      %v5103 = vsub.s32 %v5100, %v5102
      %v5104 = vrot.slane %v5097, %v5103
      %v5105 = vcombine.low %v5104, %v1415
      %v5107 = vunpack.c.l.s4 1935823168
      %v5108 = vunpack.c.0.s8 %v5107
      %v5109 = vlaneseq
      %v5110 = vshrl.u32 %v5109, 7
      %v5111 = vsub.s32 %v5108, %v5110
      %v5112 = vrot.slane %v5105, %v5111
      %v5113 = vcombine.low %v1456, %v3561
      %v5115 = vunpack.c.l.s4 1935823168
      %v5116 = vunpack.c.0.s8 %v5115
      %v5117 = vlaneseq
      %v5118 = vshrl.u32 %v5117, 7
      %v5119 = vsub.s32 %v5116, %v5118
      %v5120 = vrot.slane %v5113, %v5119
      %v5121 = vcombine.low %v1817, %v900
      %v5123 = vunpack.c.l.s4 1935823168
      %v5124 = vunpack.c.0.s8 %v5123
      %v5125 = vlaneseq
      %v5126 = vshrl.u32 %v5125, 7
      %v5127 = vsub.s32 %v5124, %v5126
      %v5128 = vrot.slane %v5121, %v5127
      %v5129 = vcombine.low %v5128, %v1511
      %v5131 = vunpack.c.l.s4 1935823168
      %v5132 = vunpack.c.0.s8 %v5131
      %v5133 = vlaneseq
      %v5134 = vshrl.u32 %v5133, 7
      %v5135 = vsub.s32 %v5132, %v5134
      %v5136 = vrot.slane %v5129, %v5135
      %v5137 = vcombine.low %v1528, %v3617
      %v5139 = vunpack.c.l.s4 1935823168
      %v5140 = vunpack.c.0.s8 %v5139
      %v5141 = vlaneseq
      %v5142 = vshrl.u32 %v5141, 7
      %v5143 = vsub.s32 %v5140, %v5142
      %v5144 = vrot.slane %v5137, %v5143
      %v5145 = vcombine.low %v970, %v1819
      %v5147 = vunpack.c.l.s4 1935823168
      %v5148 = vunpack.c.0.s8 %v5147
      %v5149 = vlaneseq
      %v5150 = vshrl.u32 %v5149, 7
      %v5151 = vsub.s32 %v5148, %v5150
      %v5152 = vrot.slane %v5145, %v5151
      %v5153 = vcombine.low %v5152, %v1583
      %v5155 = vunpack.c.l.s4 1935823168
      %v5156 = vunpack.c.0.s8 %v5155
      %v5157 = vlaneseq
      %v5158 = vshrl.u32 %v5157, 7
      %v5159 = vsub.s32 %v5156, %v5158
      %v5160 = vrot.slane %v5153, %v5159
      %v5161 = vcombine.low %v1624, %v3689
      %v5163 = vunpack.c.l.s4 1935823168
      %v5164 = vunpack.c.0.s8 %v5163
      %v5165 = vlaneseq
      %v5166 = vshrl.u32 %v5165, 7
      %v5167 = vsub.s32 %v5164, %v5166
      %v5168 = vrot.slane %v5161, %v5167
      %v5169 = vcombine.low %v1821, %v1088
      %v5171 = vunpack.c.l.s4 1935823168
      %v5172 = vunpack.c.0.s8 %v5171
      %v5173 = vlaneseq
      %v5174 = vshrl.u32 %v5173, 7
      %v5175 = vsub.s32 %v5172, %v5174
      %v5176 = vrot.slane %v5169, %v5175
      %v5177 = vcombine.low %v5176, %v1679
      %v5179 = vunpack.c.l.s4 1935823168
      %v5180 = vunpack.c.0.s8 %v5179
      %v5181 = vlaneseq
      %v5182 = vshrl.u32 %v5181, 7
      %v5183 = vsub.s32 %v5180, %v5182
      %v5184 = vrot.slane %v5177, %v5183
      %v5185 = vcombine.low %v1696, %v3745
      %v5187 = vunpack.c.l.s4 1935823168
      %v5188 = vunpack.c.0.s8 %v5187
      %v5189 = vlaneseq
      %v5190 = vshrl.u32 %v5189, 7
      %v5191 = vsub.s32 %v5188, %v5190
      %v5192 = vrot.slane %v5185, %v5191
      %v5193 = vcombine.low %v1158, %v1823
      %v5194 = vcombine.low %v1159, %v3917
      %v5196 = vunpack.c.l.s4 1935823168
      %v5197 = vunpack.c.0.s8 %v5196
      %v5198 = vlaneseq
      %v5199 = vshrl.u32 %v5198, 7
      %v5200 = vsub.s32 %v5197, %v5199
      %v5201 = vrot.slane %v5193, %v5200
      %v5203 = vunpack.c.l.s4 1935823168
      %v5204 = vunpack.c.0.s8 %v5203
      %v5205 = vlaneseq
      %v5206 = vshrl.u32 %v5205, 7
      %v5207 = vsub.s32 %v5204, %v5206
      %v5208 = vrot.slane %v5194, %v5207
      %v5209 = vcombine.low %v5201, %v5208
      %v5211 = vunpack.c.l.s4 1935823168
      %v5212 = vunpack.c.0.s8 %v5211
      %v5213 = vlaneseq
      %v5214 = vshrl.u32 %v5213, 7
      %v5215 = vsub.s32 %v5212, %v5214
      %v5216 = vrot.slane %v5209, %v5215
      %v5217 = vcombine.low %v3919, %v3941
      %v5219 = vunpack.c.l.s4 1935823168
      %v5220 = vunpack.c.0.s8 %v5219
      %v5221 = vlaneseq
      %v5222 = vshrl.u32 %v5221, 7
      %v5223 = vsub.s32 %v5220, %v5222
      %v5224 = vrot.slane %v5217, %v5223
      %v5225 = vcombine.low %v4334, %v5224
      %v5227 = vunpack.c.l.s4 1935823168
      %v5228 = vunpack.c.0.s8 %v5227
      %v5229 = vlaneseq
      %v5230 = vshrl.u32 %v5229, 7
      %v5231 = vsub.s32 %v5228, %v5230
      %v5232 = vrot.slane %v5225, %v5231
      %v5234 = vunpack.c.l.s4 1935823168
      %v5235 = vunpack.c.0.s8 %v5234
      %v5236 = vlaneseq
      %v5237 = vshrl.u32 %v5236, 7
      %v5238 = vsub.s32 %v5235, %v5237
      %v5239 = vrot.slane %v4467, %v5238
      %v5240 = vcombine.low %v4356, %v5239
      %v5242 = vunpack.c.l.s4 1935823168
      %v5243 = vunpack.c.0.s8 %v5242
      %v5244 = vlaneseq
      %v5245 = vshrl.u32 %v5244, 7
      %v5246 = vsub.s32 %v5243, %v5245
      %v5247 = vrot.slane %v5240, %v5246
      %5248 = vrot.lane.b32.xlu0 %v1231, 15
      %v5249 = vpop.permute.xlu0 %5248
      %5250 = vrot.lane.b32.xlu0 %v5064, 15
      %v5251 = vpop.permute.xlu0 %5250
      %5252 = vrot.lane.b32.xlu0 %v1279, 15
      %v5253 = vpop.permute.xlu0 %5252
      %5254 = vrot.lane.b32.xlu0 %v5072, 15
      %v5255 = vpop.permute.xlu0 %5254
      %5256 = vrot.lane.b32.xlu0 %v1327, 15
      %v5257 = vpop.permute.xlu0 %5256
      %5258 = vrot.lane.b32.xlu0 %v5088, 15
      %v5259 = vpop.permute.xlu0 %5258
      %5260 = vrot.lane.b32.xlu0 %v5096, 15
      %v5261 = vpop.permute.xlu0 %5260
      %5262 = vrot.lane.b32.xlu0 %v1399, 15
      %v5263 = vpop.permute.xlu0 %5262
      %5264 = vrot.lane.b32.xlu0 %v5112, 15
      %v5265 = vpop.permute.xlu0 %5264
      %5266 = vrot.lane.b32.xlu0 %v1447, 15
      %v5267 = vpop.permute.xlu0 %5266
      %5268 = vrot.lane.b32.xlu0 %v5120, 15
      %v5269 = vpop.permute.xlu0 %5268
      %5270 = vrot.lane.b32.xlu0 %v1495, 15
      %v5271 = vpop.permute.xlu0 %5270
      %5272 = vrot.lane.b32.xlu0 %v5136, 15
      %v5273 = vpop.permute.xlu0 %5272
      %5274 = vrot.lane.b32.xlu0 %v5144, 15
      %v5275 = vpop.permute.xlu0 %5274
      %5276 = vrot.lane.b32.xlu0 %v1567, 15
      %v5277 = vpop.permute.xlu0 %5276
      %5278 = vrot.lane.b32.xlu0 %v5160, 15
      %v5279 = vpop.permute.xlu0 %5278
      %5280 = vrot.lane.b32.xlu0 %v1615, 15
      %v5281 = vpop.permute.xlu0 %5280
      %5282 = vrot.lane.b32.xlu0 %v5168, 15
      %v5283 = vpop.permute.xlu0 %5282
      %5284 = vrot.lane.b32.xlu0 %v1663, 15
      %v5285 = vpop.permute.xlu0 %5284
      %5286 = vrot.lane.b32.xlu0 %v5184, 15
      %v5287 = vpop.permute.xlu0 %5286
      %5288 = vrot.lane.b32.xlu0 %v5192, 15
      %v5289 = vpop.permute.xlu0 %5288
      %5290 = vrot.lane.b32.xlu0 %v1735, 15
      %v5291 = vpop.permute.xlu0 %5290
      %5292 = vrot.lane.b32.xlu0 %v5216, 15
      %v5293 = vpop.permute.xlu0 %5292
      %5294 = vrot.lane.b32.xlu0 %v5232, 15
      %v5295 = vpop.permute.xlu0 %5294
      %5296 = vrot.lane.b32.xlu0 %v5247, 15
      %v5297 = vpop.permute.xlu0 %5296
      %vm5323 = vcmask 142456
      %5324 = vst.msk [vmem:[#allocation2] sm:$0xf] %vm5323, %v5249
      %5325 = vst.msk [vmem:[#allocation2 + $0x4] sm:$0xf] %vm5323, %v5251
      %5326 = vst.msk [vmem:[#allocation2 + $0x8] sm:$0xf] %vm5323, %v5253
      %5327 = vst.msk [vmem:[#allocation2 + $0xc] sm:$0xf] %vm5323, %v5255
      %5328 = vst.msk [vmem:[#allocation2 + $0x10] sm:$0xf] %vm5323, %v5257
      %5329 = vst.msk [vmem:[#allocation2 + $0x14] sm:$0xf] %vm5323, %v5259
      %5330 = vst.msk [vmem:[#allocation2 + $0x18] sm:$0xf] %vm5323, %v5261
      %5331 = vst.msk [vmem:[#allocation2 + $0x1c] sm:$0xf] %vm5323, %v5263
      %5332 = vst.msk [vmem:[#allocation2 + $0x20] sm:$0xf] %vm5323, %v5265
      %5333 = vst.msk [vmem:[#allocation2 + $0x24] sm:$0xf] %vm5323, %v5267
      %5334 = vst.msk [vmem:[#allocation2 + $0x28] sm:$0xf] %vm5323, %v5269
      %5335 = vst.msk [vmem:[#allocation2 + $0x2c] sm:$0xf] %vm5323, %v5271
      %5336 = vst.msk [vmem:[#allocation2 + $0x30] sm:$0xf] %vm5323, %v5273
      %5337 = vst.msk [vmem:[#allocation2 + $0x34] sm:$0xf] %vm5323, %v5275
      %5338 = vst.msk [vmem:[#allocation2 + $0x38] sm:$0xf] %vm5323, %v5277
      %5339 = vst.msk [vmem:[#allocation2 + $0x3c] sm:$0xf] %vm5323, %v5279
      %5340 = vst.msk [vmem:[#allocation2 + $0x40] sm:$0xf] %vm5323, %v5281
      %5341 = vst.msk [vmem:[#allocation2 + $0x44] sm:$0xf] %vm5323, %v5283
      %5342 = vst.msk [vmem:[#allocation2 + $0x48] sm:$0xf] %vm5323, %v5285
      %5343 = vst.msk [vmem:[#allocation2 + $0x4c] sm:$0xf] %vm5323, %v5287
      %5344 = vst.msk [vmem:[#allocation2 + $0x50] sm:$0xf] %vm5323, %v5289
      %5345 = vst.msk [vmem:[#allocation2 + $0x54] sm:$0xf] %vm5323, %v5291
      %5346 = vst.msk [vmem:[#allocation2 + $0x58] sm:$0xf] %vm5323, %v5293
      %5347 = vst.msk [vmem:[#allocation2 + $0x5c] sm:$0xf] %vm5323, %v5295
      %vm5348 = vcmask 140408
      %5349 = vst.msk [vmem:[#allocation2 + $0x60] sm:$0x3] %vm5348, %v5297
      %v5353 = vunpack.c.l.s4 1966171168
      %v5354 = vunpack.c.0.s8 %v5353
      %v5355 = vlaneseq
      %v5356 = vshrl.u32 %v5355, 7
      %v5357 = vsub.s32 %v5354, %v5356
      %v5358 = vrot.slane %v445, %v5357
      %v5359 = vcombine.high %v5358, %v5358
      %v5361 = vunpack.c.l.s4 1966171168
      %v5362 = vunpack.c.0.s8 %v5361
      %v5363 = vlaneseq
      %v5364 = vshrl.u32 %v5363, 7
      %v5365 = vsub.s32 %v5362, %v5364
      %v5366 = vrot.slane %v5358, %v5365
      %v5368 = vunpack.c.l.s4 1966171168
      %v5369 = vunpack.c.0.s8 %v5368
      %v5370 = vlaneseq
      %v5371 = vshrl.u32 %v5370, 7
      %v5372 = vsub.s32 %v5369, %v5371
      %v5373 = vrot.slane %v5359, %v5372
      %v5374 = vcombine.high %v5366, %v5366
      %v5375 = vcombine.high %v5373, %v5373
      %v5377 = vunpack.c.l.s4 1966171168
      %v5378 = vunpack.c.0.s8 %v5377
      %v5379 = vlaneseq
      %v5380 = vshrl.u32 %v5379, 7
      %v5381 = vsub.s32 %v5378, %v5380
      %v5382 = vrot.slane %v446, %v5381
      %v5383 = vcombine.high %v5382, %v5382
      %v5385 = vunpack.c.l.s4 1966171168
      %v5386 = vunpack.c.0.s8 %v5385
      %v5387 = vlaneseq
      %v5388 = vshrl.u32 %v5387, 7
      %v5389 = vsub.s32 %v5386, %v5388
      %v5390 = vrot.slane %v5382, %v5389
      %v5392 = vunpack.c.l.s4 1966171168
      %v5393 = vunpack.c.0.s8 %v5392
      %v5394 = vlaneseq
      %v5395 = vshrl.u32 %v5394, 7
      %v5396 = vsub.s32 %v5393, %v5395
      %v5397 = vrot.slane %v5383, %v5396
      %v5398 = vcombine.high %v5390, %v5390
      %v5399 = vcombine.low %v610, %v618
      %v5401 = vunpack.c.l.s4 1935823168
      %v5402 = vunpack.c.0.s8 %v5401
      %v5403 = vlaneseq
      %v5404 = vshrl.u32 %v5403, 7
      %v5405 = vsub.s32 %v5402, %v5404
      %v5406 = vrot.slane %v5399, %v5405
      %v5407 = vcombine.low %v5406, %v3982
      %v5409 = vunpack.c.l.s4 1935823168
      %v5410 = vunpack.c.0.s8 %v5409
      %v5411 = vlaneseq
      %v5412 = vshrl.u32 %v5411, 7
      %v5413 = vsub.s32 %v5410, %v5412
      %v5414 = vrot.slane %v5407, %v5413
      %v5415 = vcombine.low %v3416, %v3998
      %v5417 = vunpack.c.l.s4 1935823168
      %v5418 = vunpack.c.0.s8 %v5417
      %v5419 = vlaneseq
      %v5420 = vshrl.u32 %v5419, 7
      %v5421 = vsub.s32 %v5418, %v5420
      %v5422 = vrot.slane %v5415, %v5421
      %v5423 = vcombine.low %v3440, %v4014
      %v5425 = vunpack.c.l.s4 1935823168
      %v5426 = vunpack.c.0.s8 %v5425
      %v5427 = vlaneseq
      %v5428 = vshrl.u32 %v5427, 7
      %v5429 = vsub.s32 %v5426, %v5428
      %v5430 = vrot.slane %v5423, %v5429
      %v5431 = vcombine.low %v688, %v704
      %v5433 = vunpack.c.l.s4 1935823168
      %v5434 = vunpack.c.0.s8 %v5433
      %v5435 = vlaneseq
      %v5436 = vshrl.u32 %v5435, 7
      %v5437 = vsub.s32 %v5434, %v5436
      %v5438 = vrot.slane %v5431, %v5437
      %v5439 = vcombine.low %v5438, %v4030
      %v5441 = vunpack.c.l.s4 1935823168
      %v5442 = vunpack.c.0.s8 %v5441
      %v5443 = vlaneseq
      %v5444 = vshrl.u32 %v5443, 7
      %v5445 = vsub.s32 %v5442, %v5444
      %v5446 = vrot.slane %v5439, %v5445
      %v5447 = vcombine.low %v3472, %v4046
      %v5449 = vunpack.c.l.s4 1935823168
      %v5450 = vunpack.c.0.s8 %v5449
      %v5451 = vlaneseq
      %v5452 = vshrl.u32 %v5451, 7
      %v5453 = vsub.s32 %v5450, %v5452
      %v5454 = vrot.slane %v5447, %v5453
      %v5455 = vcombine.low %v3496, %v4062
      %v5457 = vunpack.c.l.s4 1935823168
      %v5458 = vunpack.c.0.s8 %v5457
      %v5459 = vlaneseq
      %v5460 = vshrl.u32 %v5459, 7
      %v5461 = vsub.s32 %v5458, %v5460
      %v5462 = vrot.slane %v5455, %v5461
      %v5463 = vcombine.low %v3512, %v4078
      %v5465 = vunpack.c.l.s4 1935823168
      %v5466 = vunpack.c.0.s8 %v5465
      %v5467 = vlaneseq
      %v5468 = vshrl.u32 %v5467, 7
      %v5469 = vsub.s32 %v5466, %v5468
      %v5470 = vrot.slane %v5463, %v5469
      %v5471 = vcombine.low %v798, %v806
      %v5473 = vunpack.c.l.s4 1935823168
      %v5474 = vunpack.c.0.s8 %v5473
      %v5475 = vlaneseq
      %v5476 = vshrl.u32 %v5475, 7
      %v5477 = vsub.s32 %v5474, %v5476
      %v5478 = vrot.slane %v5471, %v5477
      %v5479 = vcombine.low %v5478, %v4094
      %v5481 = vunpack.c.l.s4 1935823168
      %v5482 = vunpack.c.0.s8 %v5481
      %v5483 = vlaneseq
      %v5484 = vshrl.u32 %v5483, 7
      %v5485 = vsub.s32 %v5482, %v5484
      %v5486 = vrot.slane %v5479, %v5485
      %v5487 = vcombine.low %v3544, %v4110
      %v5489 = vunpack.c.l.s4 1935823168
      %v5490 = vunpack.c.0.s8 %v5489
      %v5491 = vlaneseq
      %v5492 = vshrl.u32 %v5491, 7
      %v5493 = vsub.s32 %v5490, %v5492
      %v5494 = vrot.slane %v5487, %v5493
      %v5495 = vcombine.low %v3568, %v4126
      %v5497 = vunpack.c.l.s4 1935823168
      %v5498 = vunpack.c.0.s8 %v5497
      %v5499 = vlaneseq
      %v5500 = vshrl.u32 %v5499, 7
      %v5501 = vsub.s32 %v5498, %v5500
      %v5502 = vrot.slane %v5495, %v5501
      %v5503 = vcombine.low %v876, %v892
      %v5505 = vunpack.c.l.s4 1935823168
      %v5506 = vunpack.c.0.s8 %v5505
      %v5507 = vlaneseq
      %v5508 = vshrl.u32 %v5507, 7
      %v5509 = vsub.s32 %v5506, %v5508
      %v5510 = vrot.slane %v5503, %v5509
      %v5511 = vcombine.low %v5510, %v4142
      %v5513 = vunpack.c.l.s4 1935823168
      %v5514 = vunpack.c.0.s8 %v5513
      %v5515 = vlaneseq
      %v5516 = vshrl.u32 %v5515, 7
      %v5517 = vsub.s32 %v5514, %v5516
      %v5518 = vrot.slane %v5511, %v5517
      %v5519 = vcombine.low %v3600, %v4158
      %v5521 = vunpack.c.l.s4 1935823168
      %v5522 = vunpack.c.0.s8 %v5521
      %v5523 = vlaneseq
      %v5524 = vshrl.u32 %v5523, 7
      %v5525 = vsub.s32 %v5522, %v5524
      %v5526 = vrot.slane %v5519, %v5525
      %v5527 = vcombine.low %v3624, %v4174
      %v5529 = vunpack.c.l.s4 1935823168
      %v5530 = vunpack.c.0.s8 %v5529
      %v5531 = vlaneseq
      %v5532 = vshrl.u32 %v5531, 7
      %v5533 = vsub.s32 %v5530, %v5532
      %v5534 = vrot.slane %v5527, %v5533
      %v5535 = vcombine.low %v3640, %v4190
      %v5537 = vunpack.c.l.s4 1935823168
      %v5538 = vunpack.c.0.s8 %v5537
      %v5539 = vlaneseq
      %v5540 = vshrl.u32 %v5539, 7
      %v5541 = vsub.s32 %v5538, %v5540
      %v5542 = vrot.slane %v5535, %v5541
      %v5543 = vcombine.low %v986, %v994
      %v5545 = vunpack.c.l.s4 1935823168
      %v5546 = vunpack.c.0.s8 %v5545
      %v5547 = vlaneseq
      %v5548 = vshrl.u32 %v5547, 7
      %v5549 = vsub.s32 %v5546, %v5548
      %v5550 = vrot.slane %v5543, %v5549
      %v5551 = vcombine.low %v5550, %v4206
      %v5553 = vunpack.c.l.s4 1935823168
      %v5554 = vunpack.c.0.s8 %v5553
      %v5555 = vlaneseq
      %v5556 = vshrl.u32 %v5555, 7
      %v5557 = vsub.s32 %v5554, %v5556
      %v5558 = vrot.slane %v5551, %v5557
      %v5559 = vcombine.low %v3672, %v4222
      %v5561 = vunpack.c.l.s4 1935823168
      %v5562 = vunpack.c.0.s8 %v5561
      %v5563 = vlaneseq
      %v5564 = vshrl.u32 %v5563, 7
      %v5565 = vsub.s32 %v5562, %v5564
      %v5566 = vrot.slane %v5559, %v5565
      %v5567 = vcombine.low %v3696, %v4238
      %v5569 = vunpack.c.l.s4 1935823168
      %v5570 = vunpack.c.0.s8 %v5569
      %v5571 = vlaneseq
      %v5572 = vshrl.u32 %v5571, 7
      %v5573 = vsub.s32 %v5570, %v5572
      %v5574 = vrot.slane %v5567, %v5573
      %v5575 = vcombine.low %v1064, %v1080
      %v5577 = vunpack.c.l.s4 1935823168
      %v5578 = vunpack.c.0.s8 %v5577
      %v5579 = vlaneseq
      %v5580 = vshrl.u32 %v5579, 7
      %v5581 = vsub.s32 %v5578, %v5580
      %v5582 = vrot.slane %v5575, %v5581
      %v5583 = vcombine.low %v5582, %v4254
      %v5585 = vunpack.c.l.s4 1935823168
      %v5586 = vunpack.c.0.s8 %v5585
      %v5587 = vlaneseq
      %v5588 = vshrl.u32 %v5587, 7
      %v5589 = vsub.s32 %v5586, %v5588
      %v5590 = vrot.slane %v5583, %v5589
      %v5591 = vcombine.low %v3728, %v4270
      %v5593 = vunpack.c.l.s4 1935823168
      %v5594 = vunpack.c.0.s8 %v5593
      %v5595 = vlaneseq
      %v5596 = vshrl.u32 %v5595, 7
      %v5597 = vsub.s32 %v5594, %v5596
      %v5598 = vrot.slane %v5591, %v5597
      %v5599 = vcombine.low %v3752, %v4286
      %v5601 = vunpack.c.l.s4 1935823168
      %v5602 = vunpack.c.0.s8 %v5601
      %v5603 = vlaneseq
      %v5604 = vshrl.u32 %v5603, 7
      %v5605 = vsub.s32 %v5602, %v5604
      %v5606 = vrot.slane %v5599, %v5605
      %v5607 = vcombine.low %v3768, %v4303
      %v5609 = vunpack.c.l.s4 1935823168
      %v5610 = vunpack.c.0.s8 %v5609
      %v5611 = vlaneseq
      %v5612 = vshrl.u32 %v5611, 7
      %v5613 = vsub.s32 %v5610, %v5612
      %v5614 = vrot.slane %v5607, %v5613
      %v5615 = vcombine.low %v3910, %v3918
      %v5617 = vunpack.c.l.s4 1935823168
      %v5618 = vunpack.c.0.s8 %v5617
      %v5619 = vlaneseq
      %v5620 = vshrl.u32 %v5619, 7
      %v5621 = vsub.s32 %v5618, %v5620
      %v5622 = vrot.slane %v5615, %v5621
      %v5623 = vcombine.low %v5622, %v4327
      %v5625 = vunpack.c.l.s4 1935823168
      %v5626 = vunpack.c.0.s8 %v5625
      %v5627 = vlaneseq
      %v5628 = vshrl.u32 %v5627, 7
      %v5629 = vsub.s32 %v5626, %v5628
      %v5630 = vrot.slane %v5623, %v5629
      %v5631 = vcombine.low %v3934, %v3942
      %v5632 = vcombine.low %v3941, %v5366
      %v5634 = vunpack.c.l.s4 1935823168
      %v5635 = vunpack.c.0.s8 %v5634
      %v5636 = vlaneseq
      %v5637 = vshrl.u32 %v5636, 7
      %v5638 = vsub.s32 %v5635, %v5637
      %v5639 = vrot.slane %v5631, %v5638
      %v5641 = vunpack.c.l.s4 1935823168
      %v5642 = vunpack.c.0.s8 %v5641
      %v5643 = vlaneseq
      %v5644 = vshrl.u32 %v5643, 7
      %v5645 = vsub.s32 %v5642, %v5644
      %v5646 = vrot.slane %v5632, %v5645
      %v5647 = vcombine.low %v5639, %v5646
      %v5649 = vunpack.c.l.s4 1935823168
      %v5650 = vunpack.c.0.s8 %v5649
      %v5651 = vlaneseq
      %v5652 = vshrl.u32 %v5651, 7
      %v5653 = vsub.s32 %v5650, %v5652
      %v5654 = vrot.slane %v5647, %v5653
      %v5655 = vcombine.low %v5373, %v5375
      %v5656 = vcombine.low %v5374, %v5390
      %v5658 = vunpack.c.l.s4 1935823168
      %v5659 = vunpack.c.0.s8 %v5658
      %v5660 = vlaneseq
      %v5661 = vshrl.u32 %v5660, 7
      %v5662 = vsub.s32 %v5659, %v5661
      %v5663 = vrot.slane %v5655, %v5662
      %v5665 = vunpack.c.l.s4 1935823168
      %v5666 = vunpack.c.0.s8 %v5665
      %v5667 = vlaneseq
      %v5668 = vshrl.u32 %v5667, 7
      %v5669 = vsub.s32 %v5666, %v5668
      %v5670 = vrot.slane %v5656, %v5669
      %v5671 = vcombine.low %v5663, %v5670
      %v5673 = vunpack.c.l.s4 1935823168
      %v5674 = vunpack.c.0.s8 %v5673
      %v5675 = vlaneseq
      %v5676 = vshrl.u32 %v5675, 7
      %v5677 = vsub.s32 %v5674, %v5676
      %v5678 = vrot.slane %v5671, %v5677
      %v5680 = vunpack.c.l.s4 1935823168
      %v5681 = vunpack.c.0.s8 %v5680
      %v5682 = vlaneseq
      %v5683 = vshrl.u32 %v5682, 7
      %v5684 = vsub.s32 %v5681, %v5683
      %v5685 = vrot.slane %v5397, %v5684
      %v5687 = vunpack.c.l.s4 1935823168
      %v5688 = vunpack.c.0.s8 %v5687
      %v5689 = vlaneseq
      %v5690 = vshrl.u32 %v5689, 7
      %v5691 = vsub.s32 %v5688, %v5690
      %v5692 = vrot.slane %v5398, %v5691
      %v5693 = vcombine.low %v5685, %v5692
      %v5695 = vunpack.c.l.s4 1935823168
      %v5696 = vunpack.c.0.s8 %v5695
      %v5697 = vlaneseq
      %v5698 = vshrl.u32 %v5697, 7
      %v5699 = vsub.s32 %v5696, %v5698
      %v5700 = vrot.slane %v5693, %v5699
      %5701 = vrot.lane.b32.xlu0 %v5414, 18
      %v5702 = vpop.permute.xlu0 %5701
      %5703 = vrot.lane.b32.xlu0 %v5422, 18
      %v5704 = vpop.permute.xlu0 %5703
      %5705 = vrot.lane.b32.xlu0 %v5430, 18
      %v5706 = vpop.permute.xlu0 %5705
      %5707 = vrot.lane.b32.xlu0 %v5446, 18
      %v5708 = vpop.permute.xlu0 %5707
      %5709 = vrot.lane.b32.xlu0 %v5454, 18
      %v5710 = vpop.permute.xlu0 %5709
      %5711 = vrot.lane.b32.xlu0 %v5462, 18
      %v5712 = vpop.permute.xlu0 %5711
      %5713 = vrot.lane.b32.xlu0 %v5470, 18
      %v5714 = vpop.permute.xlu0 %5713
      %5715 = vrot.lane.b32.xlu0 %v5486, 18
      %v5716 = vpop.permute.xlu0 %5715
      %5717 = vrot.lane.b32.xlu0 %v5494, 18
      %v5718 = vpop.permute.xlu0 %5717
      %5719 = vrot.lane.b32.xlu0 %v5502, 18
      %v5720 = vpop.permute.xlu0 %5719
      %5721 = vrot.lane.b32.xlu0 %v5518, 18
      %v5722 = vpop.permute.xlu0 %5721
      %5723 = vrot.lane.b32.xlu0 %v5526, 18
      %v5724 = vpop.permute.xlu0 %5723
      %5725 = vrot.lane.b32.xlu0 %v5534, 18
      %v5726 = vpop.permute.xlu0 %5725
      %5727 = vrot.lane.b32.xlu0 %v5542, 18
      %v5728 = vpop.permute.xlu0 %5727
      %5729 = vrot.lane.b32.xlu0 %v5558, 18
      %v5730 = vpop.permute.xlu0 %5729
      %5731 = vrot.lane.b32.xlu0 %v5566, 18
      %v5732 = vpop.permute.xlu0 %5731
      %5733 = vrot.lane.b32.xlu0 %v5574, 18
      %v5734 = vpop.permute.xlu0 %5733
      %5735 = vrot.lane.b32.xlu0 %v5590, 18
      %v5736 = vpop.permute.xlu0 %5735
      %5737 = vrot.lane.b32.xlu0 %v5598, 18
      %v5738 = vpop.permute.xlu0 %5737
      %5739 = vrot.lane.b32.xlu0 %v5606, 18
      %v5740 = vpop.permute.xlu0 %5739
      %5741 = vrot.lane.b32.xlu0 %v5614, 18
      %v5742 = vpop.permute.xlu0 %5741
      %5743 = vrot.lane.b32.xlu0 %v5630, 18
      %v5744 = vpop.permute.xlu0 %5743
      %5745 = vrot.lane.b32.xlu0 %v5654, 18
      %v5746 = vpop.permute.xlu0 %5745
      %5747 = vrot.lane.b32.xlu0 %v5678, 18
      %v5748 = vpop.permute.xlu0 %5747
      %5749 = vrot.lane.b32.xlu0 %v5700, 18
      %v5750 = vpop.permute.xlu0 %5749
      %vm5776 = vcmask 167056
      %5777 = vst.msk [vmem:[#allocation2] sm:$0xf] %vm5776, %v5702
      %5778 = vst.msk [vmem:[#allocation2 + $0x4] sm:$0xf] %vm5776, %v5704
      %5779 = vst.msk [vmem:[#allocation2 + $0x8] sm:$0xf] %vm5776, %v5706
      %5780 = vst.msk [vmem:[#allocation2 + $0xc] sm:$0xf] %vm5776, %v5708
      %5781 = vst.msk [vmem:[#allocation2 + $0x10] sm:$0xf] %vm5776, %v5710
      %5782 = vst.msk [vmem:[#allocation2 + $0x14] sm:$0xf] %vm5776, %v5712
      %5783 = vst.msk [vmem:[#allocation2 + $0x18] sm:$0xf] %vm5776, %v5714
      %5784 = vst.msk [vmem:[#allocation2 + $0x1c] sm:$0xf] %vm5776, %v5716
      %5785 = vst.msk [vmem:[#allocation2 + $0x20] sm:$0xf] %vm5776, %v5718
      %5786 = vst.msk [vmem:[#allocation2 + $0x24] sm:$0xf] %vm5776, %v5720
      %5787 = vst.msk [vmem:[#allocation2 + $0x28] sm:$0xf] %vm5776, %v5722
      %5788 = vst.msk [vmem:[#allocation2 + $0x2c] sm:$0xf] %vm5776, %v5724
      %5789 = vst.msk [vmem:[#allocation2 + $0x30] sm:$0xf] %vm5776, %v5726
      %5790 = vst.msk [vmem:[#allocation2 + $0x34] sm:$0xf] %vm5776, %v5728
      %5791 = vst.msk [vmem:[#allocation2 + $0x38] sm:$0xf] %vm5776, %v5730
      %5792 = vst.msk [vmem:[#allocation2 + $0x3c] sm:$0xf] %vm5776, %v5732
      %5793 = vst.msk [vmem:[#allocation2 + $0x40] sm:$0xf] %vm5776, %v5734
      %5794 = vst.msk [vmem:[#allocation2 + $0x44] sm:$0xf] %vm5776, %v5736
      %5795 = vst.msk [vmem:[#allocation2 + $0x48] sm:$0xf] %vm5776, %v5738
      %5796 = vst.msk [vmem:[#allocation2 + $0x4c] sm:$0xf] %vm5776, %v5740
      %5797 = vst.msk [vmem:[#allocation2 + $0x50] sm:$0xf] %vm5776, %v5742
      %5798 = vst.msk [vmem:[#allocation2 + $0x54] sm:$0xf] %vm5776, %v5744
      %5799 = vst.msk [vmem:[#allocation2 + $0x58] sm:$0xf] %vm5776, %v5746
      %5800 = vst.msk [vmem:[#allocation2 + $0x5c] sm:$0xf] %vm5776, %v5748
      %vm5801 = vcmask 165008
      %5802 = vst.msk [vmem:[#allocation2 + $0x60] sm:$0x3] %vm5801, %v5750
      %v5803 = vcombine.high %v5397, %v5397
      %v5805 = vshrl.u32 %v5366, 16
      %v5807 = vrot.slane %v5805, 7
      %v5808 = vrot.slane %v5807, 1
      %v5810 = vshll.u32 %v5373, 16
      %v5812 = vsel %vm1838, %v5808, %v5810
      %v5813 = vshrl.u32 %v5373, 16
      %v5815 = vrot.slane %v5813, 7
      %v5816 = vrot.slane %v5815, 1
      %v5818 = vshll.u32 %v5374, 16
      %v5820 = vsel %vm1838, %v5816, %v5818
      %v5821 = vshrl.u32 %v5374, 16
      %v5823 = vrot.slane %v5821, 7
      %v5824 = vrot.slane %v5823, 1
      %v5826 = vshll.u32 %v5375, 16
      %v5828 = vsel %vm1838, %v5824, %v5826
      %v5829 = vshrl.u32 %v5375, 16
      %v5831 = vrot.slane %v5829, 7
      %v5832 = vrot.slane %v5831, 1
      %v5834 = vshll.u32 %v5390, 16
      %v5836 = vsel %vm1838, %v5832, %v5834
      %v5837 = vshrl.u32 %v5390, 16
      %v5839 = vrot.slane %v5837, 7
      %v5840 = vrot.slane %v5839, 1
      %v5842 = vshll.u32 %v5397, 16
      %v5844 = vsel %vm1838, %v5840, %v5842
      %v5845 = vshrl.u32 %v5397, 16
      %v5847 = vrot.slane %v5845, 7
      %v5848 = vrot.slane %v5847, 1
      %v5850 = vshll.u32 %v5398, 16
      %v5852 = vsel %vm1838, %v5848, %v5850
      %v5853 = vshrl.u32 %v5398, 16
      %v5855 = vrot.slane %v5853, 7
      %v5856 = vrot.slane %v5855, 1
      %v5858 = vshll.u32 %v5803, 16
      %v5860 = vsel %vm1838, %v5856, %v5858
      %v5861 = vcombine.low %v1961, %v1977
      %v5863 = vunpack.c.l.s4 1935823168
      %v5864 = vunpack.c.0.s8 %v5863
      %v5865 = vlaneseq
      %v5866 = vshrl.u32 %v5865, 7
      %v5867 = vsub.s32 %v5864, %v5866
      %v5868 = vrot.slane %v5861, %v5867
      %v5869 = vcombine.low %v5868, %v4564
      %v5871 = vunpack.c.l.s4 1935823168
      %v5872 = vunpack.c.0.s8 %v5871
      %v5873 = vlaneseq
      %v5874 = vshrl.u32 %v5873, 7
      %v5875 = vsub.s32 %v5872, %v5874
      %v5876 = vrot.slane %v5869, %v5875
      %v5877 = vcombine.low %v1993, %v2009
      %v5879 = vunpack.c.l.s4 1935823168
      %v5880 = vunpack.c.0.s8 %v5879
      %v5881 = vlaneseq
      %v5882 = vshrl.u32 %v5881, 7
      %v5883 = vsub.s32 %v5880, %v5882
      %v5884 = vrot.slane %v5877, %v5883
      %v5885 = vcombine.low %v5884, %v4580
      %v5887 = vunpack.c.l.s4 1935823168
      %v5888 = vunpack.c.0.s8 %v5887
      %v5889 = vlaneseq
      %v5890 = vshrl.u32 %v5889, 7
      %v5891 = vsub.s32 %v5888, %v5890
      %v5892 = vrot.slane %v5885, %v5891
      %v5893 = vcombine.low %v2026, %v2042
      %v5895 = vunpack.c.l.s4 1935823168
      %v5896 = vunpack.c.0.s8 %v5895
      %v5897 = vlaneseq
      %v5898 = vshrl.u32 %v5897, 7
      %v5899 = vsub.s32 %v5896, %v5898
      %v5900 = vrot.slane %v5893, %v5899
      %v5901 = vcombine.low %v5900, %v4596
      %v5903 = vunpack.c.l.s4 1935823168
      %v5904 = vunpack.c.0.s8 %v5903
      %v5905 = vlaneseq
      %v5906 = vshrl.u32 %v5905, 7
      %v5907 = vsub.s32 %v5904, %v5906
      %v5908 = vrot.slane %v5901, %v5907
      %v5909 = vcombine.low %v2058, %v2075
      %v5911 = vunpack.c.l.s4 1935823168
      %v5912 = vunpack.c.0.s8 %v5911
      %v5913 = vlaneseq
      %v5914 = vshrl.u32 %v5913, 7
      %v5915 = vsub.s32 %v5912, %v5914
      %v5916 = vrot.slane %v5909, %v5915
      %v5917 = vcombine.low %v5916, %v4612
      %v5919 = vunpack.c.l.s4 1935823168
      %v5920 = vunpack.c.0.s8 %v5919
      %v5921 = vlaneseq
      %v5922 = vshrl.u32 %v5921, 7
      %v5923 = vsub.s32 %v5920, %v5922
      %v5924 = vrot.slane %v5917, %v5923
      %v5925 = vcombine.low %v2091, %v2107
      %v5927 = vunpack.c.l.s4 1935823168
      %v5928 = vunpack.c.0.s8 %v5927
      %v5929 = vlaneseq
      %v5930 = vshrl.u32 %v5929, 7
      %v5931 = vsub.s32 %v5928, %v5930
      %v5932 = vrot.slane %v5925, %v5931
      %v5933 = vcombine.low %v5932, %v4628
      %v5935 = vunpack.c.l.s4 1935823168
      %v5936 = vunpack.c.0.s8 %v5935
      %v5937 = vlaneseq
      %v5938 = vshrl.u32 %v5937, 7
      %v5939 = vsub.s32 %v5936, %v5938
      %v5940 = vrot.slane %v5933, %v5939
      %v5941 = vcombine.low %v2123, %v2140
      %v5943 = vunpack.c.l.s4 1935823168
      %v5944 = vunpack.c.0.s8 %v5943
      %v5945 = vlaneseq
      %v5946 = vshrl.u32 %v5945, 7
      %v5947 = vsub.s32 %v5944, %v5946
      %v5948 = vrot.slane %v5941, %v5947
      %v5949 = vcombine.low %v5948, %v4644
      %v5951 = vunpack.c.l.s4 1935823168
      %v5952 = vunpack.c.0.s8 %v5951
      %v5953 = vlaneseq
      %v5954 = vshrl.u32 %v5953, 7
      %v5955 = vsub.s32 %v5952, %v5954
      %v5956 = vrot.slane %v5949, %v5955
      %v5957 = vcombine.low %v2156, %v2172
      %v5959 = vunpack.c.l.s4 1935823168
      %v5960 = vunpack.c.0.s8 %v5959
      %v5961 = vlaneseq
      %v5962 = vshrl.u32 %v5961, 7
      %v5963 = vsub.s32 %v5960, %v5962
      %v5964 = vrot.slane %v5957, %v5963
      %v5965 = vcombine.low %v5964, %v4660
      %v5967 = vunpack.c.l.s4 1935823168
      %v5968 = vunpack.c.0.s8 %v5967
      %v5969 = vlaneseq
      %v5970 = vshrl.u32 %v5969, 7
      %v5971 = vsub.s32 %v5968, %v5970
      %v5972 = vrot.slane %v5965, %v5971
      %v5973 = vcombine.low %v2189, %v2205
      %v5975 = vunpack.c.l.s4 1935823168
      %v5976 = vunpack.c.0.s8 %v5975
      %v5977 = vlaneseq
      %v5978 = vshrl.u32 %v5977, 7
      %v5979 = vsub.s32 %v5976, %v5978
      %v5980 = vrot.slane %v5973, %v5979
      %v5981 = vcombine.low %v5980, %v4676
      %v5983 = vunpack.c.l.s4 1935823168
      %v5984 = vunpack.c.0.s8 %v5983
      %v5985 = vlaneseq
      %v5986 = vshrl.u32 %v5985, 7
      %v5987 = vsub.s32 %v5984, %v5986
      %v5988 = vrot.slane %v5981, %v5987
      %v5989 = vcombine.low %v2221, %v2237
      %v5991 = vunpack.c.l.s4 1935823168
      %v5992 = vunpack.c.0.s8 %v5991
      %v5993 = vlaneseq
      %v5994 = vshrl.u32 %v5993, 7
      %v5995 = vsub.s32 %v5992, %v5994
      %v5996 = vrot.slane %v5989, %v5995
      %v5997 = vcombine.low %v5996, %v4692
      %v5999 = vunpack.c.l.s4 1935823168
      %v6000 = vunpack.c.0.s8 %v5999
      %v6001 = vlaneseq
      %v6002 = vshrl.u32 %v6001, 7
      %v6003 = vsub.s32 %v6000, %v6002
      %v6004 = vrot.slane %v5997, %v6003
      %v6005 = vcombine.low %v2254, %v2270
      %v6007 = vunpack.c.l.s4 1935823168
      %v6008 = vunpack.c.0.s8 %v6007
      %v6009 = vlaneseq
      %v6010 = vshrl.u32 %v6009, 7
      %v6011 = vsub.s32 %v6008, %v6010
      %v6012 = vrot.slane %v6005, %v6011
      %v6013 = vcombine.low %v6012, %v4708
      %v6015 = vunpack.c.l.s4 1935823168
      %v6016 = vunpack.c.0.s8 %v6015
      %v6017 = vlaneseq
      %v6018 = vshrl.u32 %v6017, 7
      %v6019 = vsub.s32 %v6016, %v6018
      %v6020 = vrot.slane %v6013, %v6019
      %v6021 = vcombine.low %v2286, %v2303
      %v6023 = vunpack.c.l.s4 1935823168
      %v6024 = vunpack.c.0.s8 %v6023
      %v6025 = vlaneseq
      %v6026 = vshrl.u32 %v6025, 7
      %v6027 = vsub.s32 %v6024, %v6026
      %v6028 = vrot.slane %v6021, %v6027
      %v6029 = vcombine.low %v6028, %v4724
      %v6031 = vunpack.c.l.s4 1935823168
      %v6032 = vunpack.c.0.s8 %v6031
      %v6033 = vlaneseq
      %v6034 = vshrl.u32 %v6033, 7
      %v6035 = vsub.s32 %v6032, %v6034
      %v6036 = vrot.slane %v6029, %v6035
      %v6037 = vcombine.low %v2319, %v2335
      %v6039 = vunpack.c.l.s4 1935823168
      %v6040 = vunpack.c.0.s8 %v6039
      %v6041 = vlaneseq
      %v6042 = vshrl.u32 %v6041, 7
      %v6043 = vsub.s32 %v6040, %v6042
      %v6044 = vrot.slane %v6037, %v6043
      %v6045 = vcombine.low %v6044, %v4740
      %v6047 = vunpack.c.l.s4 1935823168
      %v6048 = vunpack.c.0.s8 %v6047
      %v6049 = vlaneseq
      %v6050 = vshrl.u32 %v6049, 7
      %v6051 = vsub.s32 %v6048, %v6050
      %v6052 = vrot.slane %v6045, %v6051
      %v6053 = vcombine.low %v2351, %v2368
      %v6055 = vunpack.c.l.s4 1935823168
      %v6056 = vunpack.c.0.s8 %v6055
      %v6057 = vlaneseq
      %v6058 = vshrl.u32 %v6057, 7
      %v6059 = vsub.s32 %v6056, %v6058
      %v6060 = vrot.slane %v6053, %v6059
      %v6061 = vcombine.low %v6060, %v4756
      %v6063 = vunpack.c.l.s4 1935823168
      %v6064 = vunpack.c.0.s8 %v6063
      %v6065 = vlaneseq
      %v6066 = vshrl.u32 %v6065, 7
      %v6067 = vsub.s32 %v6064, %v6066
      %v6068 = vrot.slane %v6061, %v6067
      %v6069 = vcombine.low %v2384, %v2400
      %v6071 = vunpack.c.l.s4 1935823168
      %v6072 = vunpack.c.0.s8 %v6071
      %v6073 = vlaneseq
      %v6074 = vshrl.u32 %v6073, 7
      %v6075 = vsub.s32 %v6072, %v6074
      %v6076 = vrot.slane %v6069, %v6075
      %v6077 = vcombine.low %v6076, %v4772
      %v6079 = vunpack.c.l.s4 1935823168
      %v6080 = vunpack.c.0.s8 %v6079
      %v6081 = vlaneseq
      %v6082 = vshrl.u32 %v6081, 7
      %v6083 = vsub.s32 %v6080, %v6082
      %v6084 = vrot.slane %v6077, %v6083
      %v6085 = vcombine.low %v2417, %v2433
      %v6087 = vunpack.c.l.s4 1935823168
      %v6088 = vunpack.c.0.s8 %v6087
      %v6089 = vlaneseq
      %v6090 = vshrl.u32 %v6089, 7
      %v6091 = vsub.s32 %v6088, %v6090
      %v6092 = vrot.slane %v6085, %v6091
      %v6093 = vcombine.low %v6092, %v4788
      %v6095 = vunpack.c.l.s4 1935823168
      %v6096 = vunpack.c.0.s8 %v6095
      %v6097 = vlaneseq
      %v6098 = vshrl.u32 %v6097, 7
      %v6099 = vsub.s32 %v6096, %v6098
      %v6100 = vrot.slane %v6093, %v6099
      %v6101 = vcombine.low %v2449, %v2465
      %v6103 = vunpack.c.l.s4 1935823168
      %v6104 = vunpack.c.0.s8 %v6103
      %v6105 = vlaneseq
      %v6106 = vshrl.u32 %v6105, 7
      %v6107 = vsub.s32 %v6104, %v6106
      %v6108 = vrot.slane %v6101, %v6107
      %v6109 = vcombine.low %v6108, %v4804
      %v6111 = vunpack.c.l.s4 1935823168
      %v6112 = vunpack.c.0.s8 %v6111
      %v6113 = vlaneseq
      %v6114 = vshrl.u32 %v6113, 7
      %v6115 = vsub.s32 %v6112, %v6114
      %v6116 = vrot.slane %v6109, %v6115
      %v6117 = vcombine.low %v2482, %v2498
      %v6119 = vunpack.c.l.s4 1935823168
      %v6120 = vunpack.c.0.s8 %v6119
      %v6121 = vlaneseq
      %v6122 = vshrl.u32 %v6121, 7
      %v6123 = vsub.s32 %v6120, %v6122
      %v6124 = vrot.slane %v6117, %v6123
      %v6125 = vcombine.low %v6124, %v4820
      %v6127 = vunpack.c.l.s4 1935823168
      %v6128 = vunpack.c.0.s8 %v6127
      %v6129 = vlaneseq
      %v6130 = vshrl.u32 %v6129, 7
      %v6131 = vsub.s32 %v6128, %v6130
      %v6132 = vrot.slane %v6125, %v6131
      %v6133 = vcombine.low %v2514, %v2531
      %v6135 = vunpack.c.l.s4 1935823168
      %v6136 = vunpack.c.0.s8 %v6135
      %v6137 = vlaneseq
      %v6138 = vshrl.u32 %v6137, 7
      %v6139 = vsub.s32 %v6136, %v6138
      %v6140 = vrot.slane %v6133, %v6139
      %v6141 = vcombine.low %v6140, %v4836
      %v6143 = vunpack.c.l.s4 1935823168
      %v6144 = vunpack.c.0.s8 %v6143
      %v6145 = vlaneseq
      %v6146 = vshrl.u32 %v6145, 7
      %v6147 = vsub.s32 %v6144, %v6146
      %v6148 = vrot.slane %v6141, %v6147
      %v6149 = vcombine.low %v2547, %v2563
      %v6151 = vunpack.c.l.s4 1935823168
      %v6152 = vunpack.c.0.s8 %v6151
      %v6153 = vlaneseq
      %v6154 = vshrl.u32 %v6153, 7
      %v6155 = vsub.s32 %v6152, %v6154
      %v6156 = vrot.slane %v6149, %v6155
      %v6157 = vcombine.low %v6156, %v4852
      %v6159 = vunpack.c.l.s4 1935823168
      %v6160 = vunpack.c.0.s8 %v6159
      %v6161 = vlaneseq
      %v6162 = vshrl.u32 %v6161, 7
      %v6163 = vsub.s32 %v6160, %v6162
      %v6164 = vrot.slane %v6157, %v6163
      %v6165 = vcombine.low %v2579, %v2596
      %v6167 = vunpack.c.l.s4 1935823168
      %v6168 = vunpack.c.0.s8 %v6167
      %v6169 = vlaneseq
      %v6170 = vshrl.u32 %v6169, 7
      %v6171 = vsub.s32 %v6168, %v6170
      %v6172 = vrot.slane %v6165, %v6171
      %v6173 = vcombine.low %v6172, %v4868
      %v6175 = vunpack.c.l.s4 1935823168
      %v6176 = vunpack.c.0.s8 %v6175
      %v6177 = vlaneseq
      %v6178 = vshrl.u32 %v6177, 7
      %v6179 = vsub.s32 %v6176, %v6178
      %v6180 = vrot.slane %v6173, %v6179
      %v6181 = vcombine.low %v2612, %v2628
      %v6183 = vunpack.c.l.s4 1935823168
      %v6184 = vunpack.c.0.s8 %v6183
      %v6185 = vlaneseq
      %v6186 = vshrl.u32 %v6185, 7
      %v6187 = vsub.s32 %v6184, %v6186
      %v6188 = vrot.slane %v6181, %v6187
      %v6189 = vcombine.low %v6188, %v4885
      %v6191 = vunpack.c.l.s4 1935823168
      %v6192 = vunpack.c.0.s8 %v6191
      %v6193 = vlaneseq
      %v6194 = vshrl.u32 %v6193, 7
      %v6195 = vsub.s32 %v6192, %v6194
      %v6196 = vrot.slane %v6189, %v6195
      %v6197 = vcombine.low %v4476, %v4492
      %v6199 = vunpack.c.l.s4 1935823168
      %v6200 = vunpack.c.0.s8 %v6199
      %v6201 = vlaneseq
      %v6202 = vshrl.u32 %v6201, 7
      %v6203 = vsub.s32 %v6200, %v6202
      %v6204 = vrot.slane %v6197, %v6203
      %v6205 = vcombine.low %v6204, %v4909
      %v6207 = vunpack.c.l.s4 1935823168
      %v6208 = vunpack.c.0.s8 %v6207
      %v6209 = vlaneseq
      %v6210 = vshrl.u32 %v6209, 7
      %v6211 = vsub.s32 %v6208, %v6210
      %v6212 = vrot.slane %v6205, %v6211
      %v6213 = vcombine.low %v4508, %v4524
      %v6214 = vcombine.low %v4516, %v5812
      %v6216 = vunpack.c.l.s4 1935823168
      %v6217 = vunpack.c.0.s8 %v6216
      %v6218 = vlaneseq
      %v6219 = vshrl.u32 %v6218, 7
      %v6220 = vsub.s32 %v6217, %v6219
      %v6221 = vrot.slane %v6213, %v6220
      %v6223 = vunpack.c.l.s4 1935823168
      %v6224 = vunpack.c.0.s8 %v6223
      %v6225 = vlaneseq
      %v6226 = vshrl.u32 %v6225, 7
      %v6227 = vsub.s32 %v6224, %v6226
      %v6228 = vrot.slane %v6214, %v6227
      %v6229 = vcombine.low %v6221, %v6228
      %v6231 = vunpack.c.l.s4 1935823168
      %v6232 = vunpack.c.0.s8 %v6231
      %v6233 = vlaneseq
      %v6234 = vshrl.u32 %v6233, 7
      %v6235 = vsub.s32 %v6232, %v6234
      %v6236 = vrot.slane %v6229, %v6235
      %v6237 = vcombine.low %v5820, %v5836
      %v6238 = vcombine.low %v5828, %v5844
      %v6240 = vunpack.c.l.s4 1935823168
      %v6241 = vunpack.c.0.s8 %v6240
      %v6242 = vlaneseq
      %v6243 = vshrl.u32 %v6242, 7
      %v6244 = vsub.s32 %v6241, %v6243
      %v6245 = vrot.slane %v6237, %v6244
      %v6247 = vunpack.c.l.s4 1935823168
      %v6248 = vunpack.c.0.s8 %v6247
      %v6249 = vlaneseq
      %v6250 = vshrl.u32 %v6249, 7
      %v6251 = vsub.s32 %v6248, %v6250
      %v6252 = vrot.slane %v6238, %v6251
      %v6253 = vcombine.low %v6245, %v6252
      %v6255 = vunpack.c.l.s4 1935823168
      %v6256 = vunpack.c.0.s8 %v6255
      %v6257 = vlaneseq
      %v6258 = vshrl.u32 %v6257, 7
      %v6259 = vsub.s32 %v6256, %v6258
      %v6260 = vrot.slane %v6253, %v6259
      %v6262 = vunpack.c.l.s4 1935823168
      %v6263 = vunpack.c.0.s8 %v6262
      %v6264 = vlaneseq
      %v6265 = vshrl.u32 %v6264, 7
      %v6266 = vsub.s32 %v6263, %v6265
      %v6267 = vrot.slane %v5852, %v6266
      %v6269 = vunpack.c.l.s4 1935823168
      %v6270 = vunpack.c.0.s8 %v6269
      %v6271 = vlaneseq
      %v6272 = vshrl.u32 %v6271, 7
      %v6273 = vsub.s32 %v6270, %v6272
      %v6274 = vrot.slane %v5860, %v6273
      %v6275 = vcombine.low %v6267, %v6274
      %v6277 = vunpack.c.l.s4 1935823168
      %v6278 = vunpack.c.0.s8 %v6277
      %v6279 = vlaneseq
      %v6280 = vshrl.u32 %v6279, 7
      %v6281 = vsub.s32 %v6278, %v6280
      %v6282 = vrot.slane %v6275, %v6281
      %6283 = vrot.lane.b32.xlu0 %v5876, 21
      %v6284 = vpop.permute.xlu0 %6283
      %6285 = vrot.lane.b32.xlu0 %v5892, 21
      %v6286 = vpop.permute.xlu0 %6285
      %6287 = vrot.lane.b32.xlu0 %v5908, 21
      %v6288 = vpop.permute.xlu0 %6287
      %6289 = vrot.lane.b32.xlu0 %v5924, 21
      %v6290 = vpop.permute.xlu0 %6289
      %6291 = vrot.lane.b32.xlu0 %v5940, 21
      %v6292 = vpop.permute.xlu0 %6291
      %6293 = vrot.lane.b32.xlu0 %v5956, 21
      %v6294 = vpop.permute.xlu0 %6293
      %6295 = vrot.lane.b32.xlu0 %v5972, 21
      %v6296 = vpop.permute.xlu0 %6295
      %6297 = vrot.lane.b32.xlu0 %v5988, 21
      %v6298 = vpop.permute.xlu0 %6297
      %6299 = vrot.lane.b32.xlu0 %v6004, 21
      %v6300 = vpop.permute.xlu0 %6299
      %6301 = vrot.lane.b32.xlu0 %v6020, 21
      %v6302 = vpop.permute.xlu0 %6301
      %6303 = vrot.lane.b32.xlu0 %v6036, 21
      %v6304 = vpop.permute.xlu0 %6303
      %6305 = vrot.lane.b32.xlu0 %v6052, 21
      %v6306 = vpop.permute.xlu0 %6305
      %6307 = vrot.lane.b32.xlu0 %v6068, 21
      %v6308 = vpop.permute.xlu0 %6307
      %6309 = vrot.lane.b32.xlu0 %v6084, 21
      %v6310 = vpop.permute.xlu0 %6309
      %6311 = vrot.lane.b32.xlu0 %v6100, 21
      %v6312 = vpop.permute.xlu0 %6311
      %6313 = vrot.lane.b32.xlu0 %v6116, 21
      %v6314 = vpop.permute.xlu0 %6313
      %6315 = vrot.lane.b32.xlu0 %v6132, 21
      %v6316 = vpop.permute.xlu0 %6315
      %6317 = vrot.lane.b32.xlu0 %v6148, 21
      %v6318 = vpop.permute.xlu0 %6317
      %6319 = vrot.lane.b32.xlu0 %v6164, 21
      %v6320 = vpop.permute.xlu0 %6319
      %6321 = vrot.lane.b32.xlu0 %v6180, 21
      %v6322 = vpop.permute.xlu0 %6321
      %6323 = vrot.lane.b32.xlu0 %v6196, 21
      %v6324 = vpop.permute.xlu0 %6323
      %6325 = vrot.lane.b32.xlu0 %v6212, 21
      %v6326 = vpop.permute.xlu0 %6325
      %6327 = vrot.lane.b32.xlu0 %v6236, 21
      %v6328 = vpop.permute.xlu0 %6327
      %6329 = vrot.lane.b32.xlu0 %v6260, 21
      %v6330 = vpop.permute.xlu0 %6329
      %6331 = vrot.lane.b32.xlu0 %v6282, 21
      %v6332 = vpop.permute.xlu0 %6331
      %vm6358 = vcmask 191656
      %6359 = vst.msk [vmem:[#allocation2] sm:$0xf] %vm6358, %v6284
      %6360 = vst.msk [vmem:[#allocation2 + $0x4] sm:$0xf] %vm6358, %v6286
      %6361 = vst.msk [vmem:[#allocation2 + $0x8] sm:$0xf] %vm6358, %v6288
      %6362 = vst.msk [vmem:[#allocation2 + $0xc] sm:$0xf] %vm6358, %v6290
      %6363 = vst.msk [vmem:[#allocation2 + $0x10] sm:$0xf] %vm6358, %v6292
      %6364 = vst.msk [vmem:[#allocation2 + $0x14] sm:$0xf] %vm6358, %v6294
      %6365 = vst.msk [vmem:[#allocation2 + $0x18] sm:$0xf] %vm6358, %v6296
      %6366 = vst.msk [vmem:[#allocation2 + $0x1c] sm:$0xf] %vm6358, %v6298
      %6367 = vst.msk [vmem:[#allocation2 + $0x20] sm:$0xf] %vm6358, %v6300
      %6368 = vst.msk [vmem:[#allocation2 + $0x24] sm:$0xf] %vm6358, %v6302
      %6369 = vst.msk [vmem:[#allocation2 + $0x28] sm:$0xf] %vm6358, %v6304
      %6370 = vst.msk [vmem:[#allocation2 + $0x2c] sm:$0xf] %vm6358, %v6306
      %6371 = vst.msk [vmem:[#allocation2 + $0x30] sm:$0xf] %vm6358, %v6308
      %6372 = vst.msk [vmem:[#allocation2 + $0x34] sm:$0xf] %vm6358, %v6310
      %6373 = vst.msk [vmem:[#allocation2 + $0x38] sm:$0xf] %vm6358, %v6312
      %6374 = vst.msk [vmem:[#allocation2 + $0x3c] sm:$0xf] %vm6358, %v6314
      %6375 = vst.msk [vmem:[#allocation2 + $0x40] sm:$0xf] %vm6358, %v6316
      %6376 = vst.msk [vmem:[#allocation2 + $0x44] sm:$0xf] %vm6358, %v6318
      %6377 = vst.msk [vmem:[#allocation2 + $0x48] sm:$0xf] %vm6358, %v6320
      %6378 = vst.msk [vmem:[#allocation2 + $0x4c] sm:$0xf] %vm6358, %v6322
      %6379 = vst.msk [vmem:[#allocation2 + $0x50] sm:$0xf] %vm6358, %v6324
      %6380 = vst.msk [vmem:[#allocation2 + $0x54] sm:$0xf] %vm6358, %v6326
      %6381 = vst.msk [vmem:[#allocation2 + $0x58] sm:$0xf] %vm6358, %v6328
      %6382 = vst.msk [vmem:[#allocation2 + $0x5c] sm:$0xf] %vm6358, %v6330
      %vm6383 = vcmask 189608
      %6384 = vst.msk [vmem:[#allocation2 + $0x60] sm:$0x3] %vm6383, %v6332
      %v6385 = vcombine.low %v641, %v1812
      %v6387 = vunpack.c.l.s4 1935823168
      %v6388 = vunpack.c.0.s8 %v6387
      %v6389 = vlaneseq
      %v6390 = vshrl.u32 %v6389, 7
      %v6391 = vsub.s32 %v6388, %v6390
      %v6392 = vrot.slane %v6385, %v6391
      %v6393 = vcombine.low %v6392, %v1288
      %v6395 = vunpack.c.l.s4 1935823168
      %v6396 = vunpack.c.0.s8 %v6395
      %v6397 = vlaneseq
      %v6398 = vshrl.u32 %v6397, 7
      %v6399 = vsub.s32 %v6396, %v6398
      %v6400 = vrot.slane %v6393, %v6399
      %v6401 = vcombine.low %v4030, %v5080
      %v6403 = vunpack.c.l.s4 1935823168
      %v6404 = vunpack.c.0.s8 %v6403
      %v6405 = vlaneseq
      %v6406 = vshrl.u32 %v6405, 7
      %v6407 = vsub.s32 %v6404, %v6406
      %v6408 = vrot.slane %v6401, %v6407
      %v6409 = vcombine.low %v1814, %v759
      %v6411 = vunpack.c.l.s4 1935823168
      %v6412 = vunpack.c.0.s8 %v6411
      %v6413 = vlaneseq
      %v6414 = vshrl.u32 %v6413, 7
      %v6415 = vsub.s32 %v6412, %v6414
      %v6416 = vrot.slane %v6409, %v6415
      %v6417 = vcombine.low %v6416, %v1384
      %v6419 = vunpack.c.l.s4 1935823168
      %v6420 = vunpack.c.0.s8 %v6419
      %v6421 = vlaneseq
      %v6422 = vshrl.u32 %v6421, 7
      %v6423 = vsub.s32 %v6420, %v6422
      %v6424 = vrot.slane %v6417, %v6423
      %v6425 = vcombine.low %v4078, %v5104
      %v6427 = vunpack.c.l.s4 1935823168
      %v6428 = vunpack.c.0.s8 %v6427
      %v6429 = vlaneseq
      %v6430 = vshrl.u32 %v6429, 7
      %v6431 = vsub.s32 %v6428, %v6430
      %v6432 = vrot.slane %v6425, %v6431
      %v6433 = vcombine.low %v829, %v1816
      %v6435 = vunpack.c.l.s4 1935823168
      %v6436 = vunpack.c.0.s8 %v6435
      %v6437 = vlaneseq
      %v6438 = vshrl.u32 %v6437, 7
      %v6439 = vsub.s32 %v6436, %v6438
      %v6440 = vrot.slane %v6433, %v6439
      %v6441 = vcombine.low %v6440, %v1456
      %v6443 = vunpack.c.l.s4 1935823168
      %v6444 = vunpack.c.0.s8 %v6443
      %v6445 = vlaneseq
      %v6446 = vshrl.u32 %v6445, 7
      %v6447 = vsub.s32 %v6444, %v6446
      %v6448 = vrot.slane %v6441, %v6447
      %v6449 = vcombine.low %v4142, %v5128
      %v6451 = vunpack.c.l.s4 1935823168
      %v6452 = vunpack.c.0.s8 %v6451
      %v6453 = vlaneseq
      %v6454 = vshrl.u32 %v6453, 7
      %v6455 = vsub.s32 %v6452, %v6454
      %v6456 = vrot.slane %v6449, %v6455
      %v6457 = vcombine.low %v1818, %v947
      %v6459 = vunpack.c.l.s4 1935823168
      %v6460 = vunpack.c.0.s8 %v6459
      %v6461 = vlaneseq
      %v6462 = vshrl.u32 %v6461, 7
      %v6463 = vsub.s32 %v6460, %v6462
      %v6464 = vrot.slane %v6457, %v6463
      %v6465 = vcombine.low %v6464, %v1552
      %v6467 = vunpack.c.l.s4 1935823168
      %v6468 = vunpack.c.0.s8 %v6467
      %v6469 = vlaneseq
      %v6470 = vshrl.u32 %v6469, 7
      %v6471 = vsub.s32 %v6468, %v6470
      %v6472 = vrot.slane %v6465, %v6471
      %v6473 = vcombine.low %v4190, %v5152
      %v6475 = vunpack.c.l.s4 1935823168
      %v6476 = vunpack.c.0.s8 %v6475
      %v6477 = vlaneseq
      %v6478 = vshrl.u32 %v6477, 7
      %v6479 = vsub.s32 %v6476, %v6478
      %v6480 = vrot.slane %v6473, %v6479
      %v6481 = vcombine.low %v1017, %v1820
      %v6483 = vunpack.c.l.s4 1935823168
      %v6484 = vunpack.c.0.s8 %v6483
      %v6485 = vlaneseq
      %v6486 = vshrl.u32 %v6485, 7
      %v6487 = vsub.s32 %v6484, %v6486
      %v6488 = vrot.slane %v6481, %v6487
      %v6489 = vcombine.low %v6488, %v1624
      %v6491 = vunpack.c.l.s4 1935823168
      %v6492 = vunpack.c.0.s8 %v6491
      %v6493 = vlaneseq
      %v6494 = vshrl.u32 %v6493, 7
      %v6495 = vsub.s32 %v6492, %v6494
      %v6496 = vrot.slane %v6489, %v6495
      %v6497 = vcombine.low %v4254, %v5176
      %v6499 = vunpack.c.l.s4 1935823168
      %v6500 = vunpack.c.0.s8 %v6499
      %v6501 = vlaneseq
      %v6502 = vshrl.u32 %v6501, 7
      %v6503 = vsub.s32 %v6500, %v6502
      %v6504 = vrot.slane %v6497, %v6503
      %v6505 = vcombine.low %v1822, %v1135
      %v6507 = vunpack.c.l.s4 1935823168
      %v6508 = vunpack.c.0.s8 %v6507
      %v6509 = vlaneseq
      %v6510 = vshrl.u32 %v6509, 7
      %v6511 = vsub.s32 %v6508, %v6510
      %v6512 = vrot.slane %v6505, %v6511
      %v6513 = vcombine.low %v6512, %v1720
      %v6515 = vunpack.c.l.s4 1935823168
      %v6516 = vunpack.c.0.s8 %v6515
      %v6517 = vlaneseq
      %v6518 = vshrl.u32 %v6517, 7
      %v6519 = vsub.s32 %v6516, %v6518
      %v6520 = vrot.slane %v6513, %v6519
      %v6521 = vcombine.low %v4303, %v5201
      %v6523 = vunpack.c.l.s4 1935823168
      %v6524 = vunpack.c.0.s8 %v6523
      %v6525 = vlaneseq
      %v6526 = vshrl.u32 %v6525, 7
      %v6527 = vsub.s32 %v6524, %v6526
      %v6528 = vrot.slane %v6521, %v6527
      %v6529 = vcombine.low %v3941, %v4467
      %v6530 = vcombine.low %v3942, %v5373
      %v6532 = vunpack.c.l.s4 1935823168
      %v6533 = vunpack.c.0.s8 %v6532
      %v6534 = vlaneseq
      %v6535 = vshrl.u32 %v6534, 7
      %v6536 = vsub.s32 %v6533, %v6535
      %v6537 = vrot.slane %v6529, %v6536
      %v6539 = vunpack.c.l.s4 1935823168
      %v6540 = vunpack.c.0.s8 %v6539
      %v6541 = vlaneseq
      %v6542 = vshrl.u32 %v6541, 7
      %v6543 = vsub.s32 %v6540, %v6542
      %v6544 = vrot.slane %v6530, %v6543
      %v6545 = vcombine.low %v6537, %v6544
      %v6547 = vunpack.c.l.s4 1935823168
      %v6548 = vunpack.c.0.s8 %v6547
      %v6549 = vlaneseq
      %v6550 = vshrl.u32 %v6549, 7
      %v6551 = vsub.s32 %v6548, %v6550
      %v6552 = vrot.slane %v6545, %v6551
      %v6553 = vcombine.low %v5375, %v5397
      %v6555 = vunpack.c.l.s4 1935823168
      %v6556 = vunpack.c.0.s8 %v6555
      %v6557 = vlaneseq
      %v6558 = vshrl.u32 %v6557, 7
      %v6559 = vsub.s32 %v6556, %v6558
      %v6560 = vrot.slane %v6553, %v6559
      %v6561 = vcombine.low %v5670, %v6560
      %v6563 = vunpack.c.l.s4 1935823168
      %v6564 = vunpack.c.0.s8 %v6563
      %v6565 = vlaneseq
      %v6566 = vshrl.u32 %v6565, 7
      %v6567 = vsub.s32 %v6564, %v6566
      %v6568 = vrot.slane %v6561, %v6567
      %v6570 = vunpack.c.l.s4 1935823168
      %v6571 = vunpack.c.0.s8 %v6570
      %v6572 = vlaneseq
      %v6573 = vshrl.u32 %v6572, 7
      %v6574 = vsub.s32 %v6571, %v6573
      %v6575 = vrot.slane %v5803, %v6574
      %v6576 = vcombine.low %v5692, %v6575
      %v6578 = vunpack.c.l.s4 1935823168
      %v6579 = vunpack.c.0.s8 %v6578
      %v6580 = vlaneseq
      %v6581 = vshrl.u32 %v6580, 7
      %v6582 = vsub.s32 %v6579, %v6581
      %v6583 = vrot.slane %v6576, %v6582
      %6584 = vrot.lane.b32.xlu0 %v3990, 24
      %v6585 = vpop.permute.xlu0 %6584
      %6586 = vrot.lane.b32.xlu0 %v6400, 24
      %v6587 = vpop.permute.xlu0 %6586
      %6588 = vrot.lane.b32.xlu0 %v4022, 24
      %v6589 = vpop.permute.xlu0 %6588
      %6590 = vrot.lane.b32.xlu0 %v6408, 24
      %v6591 = vpop.permute.xlu0 %6590
      %6592 = vrot.lane.b32.xlu0 %v4054, 24
      %v6593 = vpop.permute.xlu0 %6592
      %6594 = vrot.lane.b32.xlu0 %v6424, 24
      %v6595 = vpop.permute.xlu0 %6594
      %6596 = vrot.lane.b32.xlu0 %v6432, 24
      %v6597 = vpop.permute.xlu0 %6596
      %6598 = vrot.lane.b32.xlu0 %v4102, 24
      %v6599 = vpop.permute.xlu0 %6598
      %6600 = vrot.lane.b32.xlu0 %v6448, 24
      %v6601 = vpop.permute.xlu0 %6600
      %6602 = vrot.lane.b32.xlu0 %v4134, 24
      %v6603 = vpop.permute.xlu0 %6602
      %6604 = vrot.lane.b32.xlu0 %v6456, 24
      %v6605 = vpop.permute.xlu0 %6604
      %6606 = vrot.lane.b32.xlu0 %v4166, 24
      %v6607 = vpop.permute.xlu0 %6606
      %6608 = vrot.lane.b32.xlu0 %v6472, 24
      %v6609 = vpop.permute.xlu0 %6608
      %6610 = vrot.lane.b32.xlu0 %v6480, 24
      %v6611 = vpop.permute.xlu0 %6610
      %6612 = vrot.lane.b32.xlu0 %v4214, 24
      %v6613 = vpop.permute.xlu0 %6612
      %6614 = vrot.lane.b32.xlu0 %v6496, 24
      %v6615 = vpop.permute.xlu0 %6614
      %6616 = vrot.lane.b32.xlu0 %v4246, 24
      %v6617 = vpop.permute.xlu0 %6616
      %6618 = vrot.lane.b32.xlu0 %v6504, 24
      %v6619 = vpop.permute.xlu0 %6618
      %6620 = vrot.lane.b32.xlu0 %v4278, 24
      %v6621 = vpop.permute.xlu0 %6620
      %6622 = vrot.lane.b32.xlu0 %v6520, 24
      %v6623 = vpop.permute.xlu0 %6622
      %6624 = vrot.lane.b32.xlu0 %v6528, 24
      %v6625 = vpop.permute.xlu0 %6624
      %6626 = vrot.lane.b32.xlu0 %v4342, 24
      %v6627 = vpop.permute.xlu0 %6626
      %6628 = vrot.lane.b32.xlu0 %v6552, 24
      %v6629 = vpop.permute.xlu0 %6628
      %6630 = vrot.lane.b32.xlu0 %v6568, 24
      %v6631 = vpop.permute.xlu0 %6630
      %6632 = vrot.lane.b32.xlu0 %v6583, 24
      %v6633 = vpop.permute.xlu0 %6632
      %vm6659 = vcmask 216256
      %6660 = vst.msk [vmem:[#allocation2] sm:$0xf] %vm6659, %v6585
      %6661 = vst.msk [vmem:[#allocation2 + $0x4] sm:$0xf] %vm6659, %v6587
      %6662 = vst.msk [vmem:[#allocation2 + $0x8] sm:$0xf] %vm6659, %v6589
      %6663 = vst.msk [vmem:[#allocation2 + $0xc] sm:$0xf] %vm6659, %v6591
      %6664 = vst.msk [vmem:[#allocation2 + $0x10] sm:$0xf] %vm6659, %v6593
      %6665 = vst.msk [vmem:[#allocation2 + $0x14] sm:$0xf] %vm6659, %v6595
      %6666 = vst.msk [vmem:[#allocation2 + $0x18] sm:$0xf] %vm6659, %v6597
      %6667 = vst.msk [vmem:[#allocation2 + $0x1c] sm:$0xf] %vm6659, %v6599
      %6668 = vst.msk [vmem:[#allocation2 + $0x20] sm:$0xf] %vm6659, %v6601
      %6669 = vst.msk [vmem:[#allocation2 + $0x24] sm:$0xf] %vm6659, %v6603
      %6670 = vst.msk [vmem:[#allocation2 + $0x28] sm:$0xf] %vm6659, %v6605
      %6671 = vst.msk [vmem:[#allocation2 + $0x2c] sm:$0xf] %vm6659, %v6607
      %6672 = vst.msk [vmem:[#allocation2 + $0x30] sm:$0xf] %vm6659, %v6609
      %6673 = vst.msk [vmem:[#allocation2 + $0x34] sm:$0xf] %vm6659, %v6611
      %6674 = vst.msk [vmem:[#allocation2 + $0x38] sm:$0xf] %vm6659, %v6613
      %6675 = vst.msk [vmem:[#allocation2 + $0x3c] sm:$0xf] %vm6659, %v6615
      %6676 = vst.msk [vmem:[#allocation2 + $0x40] sm:$0xf] %vm6659, %v6617
      %6677 = vst.msk [vmem:[#allocation2 + $0x44] sm:$0xf] %vm6659, %v6619
      %6678 = vst.msk [vmem:[#allocation2 + $0x48] sm:$0xf] %vm6659, %v6621
      %6679 = vst.msk [vmem:[#allocation2 + $0x4c] sm:$0xf] %vm6659, %v6623
      %6680 = vst.msk [vmem:[#allocation2 + $0x50] sm:$0xf] %vm6659, %v6625
      %6681 = vst.msk [vmem:[#allocation2 + $0x54] sm:$0xf] %vm6659, %v6627
      %6682 = vst.msk [vmem:[#allocation2 + $0x58] sm:$0xf] %vm6659, %v6629
      %6683 = vst.msk [vmem:[#allocation2 + $0x5c] sm:$0xf] %vm6659, %v6631
      %vm6684 = vcmask 214208
      %6685 = vst.msk [vmem:[#allocation2 + $0x60] sm:$0x3] %vm6684, %v6633
      %v6686 = vld [vmem:[#allocation2] sm:$0xf]
      %v6687 = vld [vmem:[#allocation2 + $0x4] sm:$0xf]
      %v6688 = vld [vmem:[#allocation2 + $0x8] sm:$0xf]
      %v6689 = vld [vmem:[#allocation2 + $0xc] sm:$0xf]
      %v6690 = vld [vmem:[#allocation2 + $0x10] sm:$0xf]
      %v6691 = vld [vmem:[#allocation2 + $0x14] sm:$0xf]
      %v6692 = vld [vmem:[#allocation2 + $0x18] sm:$0xf]
      %v6693 = vld [vmem:[#allocation2 + $0x1c] sm:$0xf]
      %v6694 = vld [vmem:[#allocation2 + $0x20] sm:$0xf]
      %v6695 = vld [vmem:[#allocation2 + $0x24] sm:$0xf]
      %v6696 = vld [vmem:[#allocation2 + $0x28] sm:$0xf]
      %v6697 = vld [vmem:[#allocation2 + $0x2c] sm:$0xf]
      %v6698 = vld [vmem:[#allocation2 + $0x30] sm:$0xf]
      %v6699 = vld [vmem:[#allocation2 + $0x34] sm:$0xf]
      %v6700 = vld [vmem:[#allocation2 + $0x38] sm:$0xf]
      %v6701 = vld [vmem:[#allocation2 + $0x3c] sm:$0xf]
      %v6702 = vld [vmem:[#allocation2 + $0x40] sm:$0xf]
      %v6703 = vld [vmem:[#allocation2 + $0x44] sm:$0xf]
      %v6704 = vld [vmem:[#allocation2 + $0x48] sm:$0xf]
      %v6705 = vld [vmem:[#allocation2 + $0x4c] sm:$0xf]
      %v6706 = vld [vmem:[#allocation2 + $0x50] sm:$0xf]
      %v6707 = vld [vmem:[#allocation2 + $0x54] sm:$0xf]
      %v6708 = vld [vmem:[#allocation2 + $0x58] sm:$0xf]
      %v6709 = vld [vmem:[#allocation2 + $0x5c] sm:$0xf]
      %v6710 = vld [vmem:[#allocation2 + $0x60] sm:$0x3]
      %v6711 = vld [vmem:[%s1] sm:$0xf]
      %v6712 = vld [vmem:[%s1 + $0x4] sm:$0xf]
      %v6713 = vld [vmem:[%s1 + $0x8] sm:$0xf]
      %v6714 = vld [vmem:[%s1 + $0xc] sm:$0xf]
      %v6715 = vld [vmem:[%s2] sm:$0x1]
      %v6717 = vlaneseq
      %v6718 = vshrl.u32 %v6717, 7
      %v6719 = vsub.s32 0, %v6718
      %v6720 = vrot.slane %v6715, %v6719
      %v6747 = vunpack.c.l.b16 %v6686
      %v6748 = vunpack.c.l.b16 %v6687
      %v6749 = vunpack.c.l.b16 %v6688
      %v6750 = vunpack.c.l.b16 %v6689
      %v6751 = vunpack.c.l.b16 %v6690
      %v6752 = vunpack.c.l.b16 %v6691
      %v6753 = vunpack.c.l.b16 %v6692
      %v6754 = vunpack.c.l.b16 %v6693
      %v6755 = vunpack.c.l.b16 %v6694
      %v6756 = vunpack.c.l.b16 %v6695
      %v6757 = vunpack.c.l.b16 %v6696
      %v6758 = vunpack.c.l.b16 %v6697
      %v6759 = vunpack.c.l.b16 %v6698
      %v6760 = vunpack.c.l.b16 %v6699
      %v6761 = vunpack.c.l.b16 %v6700
      %v6762 = vunpack.c.l.b16 %v6701
      %v6763 = vunpack.c.l.b16 %v6702
      %v6764 = vunpack.c.l.b16 %v6703
      %v6765 = vunpack.c.l.b16 %v6704
      %v6766 = vunpack.c.l.b16 %v6705
      %v6767 = vunpack.c.l.b16 %v6706
      %v6768 = vunpack.c.l.b16 %v6707
      %v6769 = vunpack.c.l.b16 %v6708
      %v6770 = vunpack.c.l.b16 %v6709
      %v6771 = vunpack.c.l.b16 %v6710
      %v6772 = vpack.c.b16 %v6748, %v6747
      %v6773 = vpack.c.b16 %v6750, %v6749
      %v6774 = vpack.c.b16 %v6752, %v6751
      %v6775 = vpack.c.b16 %v6754, %v6753
      %v6776 = vpack.c.b16 %v6756, %v6755
      %v6777 = vpack.c.b16 %v6758, %v6757
      %v6778 = vpack.c.b16 %v6760, %v6759
      %v6779 = vpack.c.b16 %v6762, %v6761
      %v6780 = vpack.c.b16 %v6764, %v6763
      %v6781 = vpack.c.b16 %v6766, %v6765
      %v6782 = vpack.c.b16 %v6768, %v6767
      %v6783 = vpack.c.b16 %v6770, %v6769
      %v6784 = vpack.c.b16 %v6771, %v6771
      %v6789 = vunpack.c.l.b16 %v6711
      %v6790 = vunpack.c.l.b16 %v6712
      %v6791 = vunpack.c.l.b16 %v6713
      %v6792 = vunpack.c.l.b16 %v6714
      %v6793 = vpack.c.b16 %v6790, %v6789
      %v6794 = vpack.c.b16 %v6792, %v6791
      %vm6797 = vcmask 261120
      %v6799 = vsel %vm6797, %v6772, 0
      %v6802 = vsel %vm6797, %v6773, 0
      %v6805 = vsel %vm6797, %v6774, 0
      %v6808 = vsel %vm6797, %v6775, 0
      %v6811 = vsel %vm6797, %v6776, 0
      %v6814 = vsel %vm6797, %v6777, 0
      %v6817 = vsel %vm6797, %v6778, 0
      %v6820 = vsel %vm6797, %v6779, 0
      %v6823 = vsel %vm6797, %v6780, 0
      %v6826 = vsel %vm6797, %v6781, 0
      %v6829 = vsel %vm6797, %v6782, 0
      %v6832 = vsel %vm6797, %v6783, 0
      %v6835 = vsel %vm6797, %v6784, 0
      %6837 = vmatprep.subr.bf16.mxu0 0
      %6838 = vmatpush1.bf16.msra.mxu0 %v6793
      %6839 = vmatprep.subr.bf16.mxu0 0
      %6840 = vmatpush1.bf16.msra.mxu0 %v6794
      %6841 = vmatprep.subr.bf16.mxu0 0
      %6842 = vmatpush1.bf16.msra.mxu0 0
      %6843 = vmatprep.subr.bf16.mxu0 0
      %6844 = vmatpush1.bf16.msra.mxu0 0
      %6845 = vmatprep.subr.bf16.mxu0 0
      %6846 = vmatpush1.bf16.msra.mxu0 0
      %6847 = vmatprep.subr.bf16.mxu0 0
      %6848 = vmatpush1.bf16.msra.mxu0 0
      %6849 = vmatprep.subr.bf16.mxu0 0
      %6850 = vmatpush1.bf16.msra.mxu0 0
      %6851 = vmatprep.subr.bf16.mxu0 0
      %6852 = vmatpush1.bf16.msra.mxu0 0
      %6853 = vmatprep.subr.bf16.mxu0 0
      %6854 = vmatpush1.bf16.msra.mxu0 0
      %6855 = vmatprep.subr.bf16.mxu0 0
      %6856 = vmatpush1.bf16.msra.mxu0 0
      %6857 = vmatprep.subr.bf16.mxu0 0
      %6858 = vmatpush1.bf16.msra.mxu0 0
      %6859 = vmatprep.subr.bf16.mxu0 0
      %6860 = vmatpush1.bf16.msra.mxu0 0
      %6861 = vmatprep.subr.bf16.mxu0 0
      %6862 = vmatpush1.bf16.msra.mxu0 0
      %6863 = vmatprep.subr.bf16.mxu0 0
      %6864 = vmatpush1.bf16.msra.mxu0 0
      %6865 = vmatprep.subr.bf16.mxu0 0
      %6866 = vmatpush1.bf16.msra.mxu0 0
      %6867 = vmatprep.subr.bf16.mxu0 0
      %6868 = vmatpush1.bf16.msra.mxu0 0
      %6869 = vmatprep.mubr.bf16.mxu0 0
      %6870 = vmatmul.mubr.bf16.gmra.mrb[0].mxu0 %v6799
      %v6871 = vpop.f32.mrb[0].mxu0
      %v6872 = vadd.f32 %v6720, %v6871
      %v6873 = vpop.f32.mrb[0].mxu0
      %v6874 = vpop.f32.mrb[0].mxu0
      %v6875 = vadd.f32 %v6720, %v6874
      %v6876 = vpop.f32.mrb[0].mxu0
      %6877 = vmatprep.mubr.bf16.mxu0 0
      %6878 = vmatmul.mubr.bf16.gmra.mrb[0].mxu0 %v6802
      %v6879 = vpop.f32.mrb[0].mxu0
      %v6880 = vadd.f32 %v6720, %v6879
      %v6881 = vpop.f32.mrb[0].mxu0
      %v6882 = vpop.f32.mrb[0].mxu0
      %v6883 = vadd.f32 %v6720, %v6882
      %v6884 = vpop.f32.mrb[0].mxu0
      %6885 = vmatprep.mubr.bf16.mxu0 0
      %6886 = vmatmul.mubr.bf16.gmra.mrb[0].mxu0 %v6805
      %v6887 = vpop.f32.mrb[0].mxu0
      %v6888 = vadd.f32 %v6720, %v6887
      %v6889 = vpop.f32.mrb[0].mxu0
      %v6890 = vpop.f32.mrb[0].mxu0
      %v6891 = vadd.f32 %v6720, %v6890
      %v6892 = vpop.f32.mrb[0].mxu0
      %6893 = vmatprep.mubr.bf16.mxu0 0
      %6894 = vmatmul.mubr.bf16.gmra.mrb[0].mxu0 %v6808
      %v6895 = vpop.f32.mrb[0].mxu0
      %v6896 = vadd.f32 %v6720, %v6895
      %v6897 = vpop.f32.mrb[0].mxu0
      %v6898 = vpop.f32.mrb[0].mxu0
      %v6899 = vadd.f32 %v6720, %v6898
      %v6900 = vpop.f32.mrb[0].mxu0
      %6901 = vmatprep.mubr.bf16.mxu0 0
      %6902 = vmatmul.mubr.bf16.gmra.mrb[0].mxu0 %v6811
      %v6903 = vpop.f32.mrb[0].mxu0
      %v6904 = vadd.f32 %v6720, %v6903
      %v6905 = vpop.f32.mrb[0].mxu0
      %v6906 = vpop.f32.mrb[0].mxu0
      %v6907 = vadd.f32 %v6720, %v6906
      %v6908 = vpop.f32.mrb[0].mxu0
      %6909 = vmatprep.mubr.bf16.mxu0 0
      %6910 = vmatmul.mubr.bf16.gmra.mrb[0].mxu0 %v6814
      %v6911 = vpop.f32.mrb[0].mxu0
      %v6912 = vadd.f32 %v6720, %v6911
      %v6913 = vpop.f32.mrb[0].mxu0
      %v6914 = vpop.f32.mrb[0].mxu0
      %v6915 = vadd.f32 %v6720, %v6914
      %v6916 = vpop.f32.mrb[0].mxu0
      %6917 = vmatprep.mubr.bf16.mxu0 0
      %6918 = vmatmul.mubr.bf16.gmra.mrb[0].mxu0 %v6817
      %v6919 = vpop.f32.mrb[0].mxu0
      %v6920 = vadd.f32 %v6720, %v6919
      %v6921 = vpop.f32.mrb[0].mxu0
      %v6922 = vpop.f32.mrb[0].mxu0
      %v6923 = vadd.f32 %v6720, %v6922
      %v6924 = vpop.f32.mrb[0].mxu0
      %6925 = vmatprep.mubr.bf16.mxu0 0
      %6926 = vmatmul.mubr.bf16.gmra.mrb[0].mxu0 %v6820
      %v6927 = vpop.f32.mrb[0].mxu0
      %v6928 = vadd.f32 %v6720, %v6927
      %v6929 = vpop.f32.mrb[0].mxu0
      %v6930 = vpop.f32.mrb[0].mxu0
      %v6931 = vadd.f32 %v6720, %v6930
      %v6932 = vpop.f32.mrb[0].mxu0
      %6933 = vmatprep.mubr.bf16.mxu0 0
      %6934 = vmatmul.mubr.bf16.gmra.mrb[0].mxu0 %v6823
      %v6935 = vpop.f32.mrb[0].mxu0
      %v6936 = vadd.f32 %v6720, %v6935
      %v6937 = vpop.f32.mrb[0].mxu0
      %v6938 = vpop.f32.mrb[0].mxu0
      %v6939 = vadd.f32 %v6720, %v6938
      %v6940 = vpop.f32.mrb[0].mxu0
      %6941 = vmatprep.mubr.bf16.mxu0 0
      %6942 = vmatmul.mubr.bf16.gmra.mrb[0].mxu0 %v6826
      %v6943 = vpop.f32.mrb[0].mxu0
      %v6944 = vadd.f32 %v6720, %v6943
      %v6945 = vpop.f32.mrb[0].mxu0
      %v6946 = vpop.f32.mrb[0].mxu0
      %v6947 = vadd.f32 %v6720, %v6946
      %v6948 = vpop.f32.mrb[0].mxu0
      %6949 = vmatprep.mubr.bf16.mxu0 0
      %6950 = vmatmul.mubr.bf16.gmra.mrb[0].mxu0 %v6829
      %v6951 = vpop.f32.mrb[0].mxu0
      %v6952 = vadd.f32 %v6720, %v6951
      %v6953 = vpop.f32.mrb[0].mxu0
      %v6954 = vpop.f32.mrb[0].mxu0
      %v6955 = vadd.f32 %v6720, %v6954
      %v6956 = vpop.f32.mrb[0].mxu0
      %6957 = vmatprep.mubr.bf16.mxu0 0
      %6958 = vmatmul.mubr.bf16.gmra.mrb[0].mxu0 %v6832
      %v6959 = vpop.f32.mrb[0].mxu0
      %v6960 = vadd.f32 %v6720, %v6959
      %v6961 = vpop.f32.mrb[0].mxu0
      %v6962 = vpop.f32.mrb[0].mxu0
      %v6963 = vadd.f32 %v6720, %v6962
      %v6964 = vpop.f32.mrb[0].mxu0
      %6965 = vmatprep.mubr.bf16.mxu0 0
      %6966 = vmatmul.mubr.bf16.gmra.mrb[0].mxu0 %v6835
      %v6967 = vpop.f32.mrb[0].mxu0
      %v6968 = vadd.f32 %v6720, %v6967
      %v6969 = vpop.f32.mrb[0].mxu0
      %v6970 = vpop.f32.mrb[0].mxu0
      %v6971 = vpop.f32.mrb[0].mxu0
      %6972 = vdwg.mxu0
      %v6973 = vld [vmem:[%s3] sm:$0x1]
      %vm6974 = vcmp.gt.f32.partialorder %v6872, 0.0
      %vm6975 = vcmp.gt.f32.partialorder %v6875, 0.0
      %vm6976 = vcmp.gt.f32.partialorder %v6880, 0.0
      %vm6977 = vcmp.gt.f32.partialorder %v6883, 0.0
      %vm6978 = vcmp.gt.f32.partialorder %v6888, 0.0
      %vm6979 = vcmp.gt.f32.partialorder %v6891, 0.0
      %vm6980 = vcmp.gt.f32.partialorder %v6896, 0.0
      %vm6981 = vcmp.gt.f32.partialorder %v6899, 0.0
      %vm6982 = vcmp.gt.f32.partialorder %v6904, 0.0
      %vm6983 = vcmp.gt.f32.partialorder %v6907, 0.0
      %vm6984 = vcmp.gt.f32.partialorder %v6912, 0.0
      %vm6985 = vcmp.gt.f32.partialorder %v6915, 0.0
      %vm6986 = vcmp.gt.f32.partialorder %v6920, 0.0
      %vm6987 = vcmp.gt.f32.partialorder %v6923, 0.0
      %vm6988 = vcmp.gt.f32.partialorder %v6928, 0.0
      %vm6989 = vcmp.gt.f32.partialorder %v6931, 0.0
      %vm6990 = vcmp.gt.f32.partialorder %v6936, 0.0
      %vm6991 = vcmp.gt.f32.partialorder %v6939, 0.0
      %vm6992 = vcmp.gt.f32.partialorder %v6944, 0.0
      %vm6993 = vcmp.gt.f32.partialorder %v6947, 0.0
      %vm6994 = vcmp.gt.f32.partialorder %v6952, 0.0
      %vm6995 = vcmp.gt.f32.partialorder %v6955, 0.0
      %vm6996 = vcmp.gt.f32.partialorder %v6960, 0.0
      %vm6997 = vcmp.gt.f32.partialorder %v6963, 0.0
      %vm6998 = vcmp.gt.f32.partialorder %v6968, 0.0
      %v7000 = vlaneseq
      %v7001 = vshrl.u32 %v7000, 7
      %v7002 = vsub.s32 0, %v7001
      %v7003 = vrot.slane %v6973, %v7002
      %v7005 = vmul.f32 %v6872, %v7003
      %v7006 = vmul.f32 %v6875, %v7003
      %v7007 = vmul.f32 %v6880, %v7003
      %v7008 = vmul.f32 %v6883, %v7003
      %v7009 = vmul.f32 %v6888, %v7003
      %v7010 = vmul.f32 %v6891, %v7003
      %v7011 = vmul.f32 %v6896, %v7003
      %v7012 = vmul.f32 %v6899, %v7003
      %v7013 = vmul.f32 %v6904, %v7003
      %v7014 = vmul.f32 %v6907, %v7003
      %v7015 = vmul.f32 %v6912, %v7003
      %v7016 = vmul.f32 %v6915, %v7003
      %v7017 = vmul.f32 %v6920, %v7003
      %v7018 = vmul.f32 %v6923, %v7003
      %v7019 = vmul.f32 %v6928, %v7003
      %v7020 = vmul.f32 %v6931, %v7003
      %v7021 = vmul.f32 %v6936, %v7003
      %v7022 = vmul.f32 %v6939, %v7003
      %v7023 = vmul.f32 %v6944, %v7003
      %v7024 = vmul.f32 %v6947, %v7003
      %v7025 = vmul.f32 %v6952, %v7003
      %v7026 = vmul.f32 %v6955, %v7003
      %v7027 = vmul.f32 %v6960, %v7003
      %v7028 = vmul.f32 %v6963, %v7003
      %v7029 = vmul.f32 %v6968, %v7003
      %v7030 = vsel %vm6974, %v6872, %v7005
      %v7031 = vsel %vm6975, %v6875, %v7006
      %v7032 = vsel %vm6976, %v6880, %v7007
      %v7033 = vsel %vm6977, %v6883, %v7008
      %v7034 = vsel %vm6978, %v6888, %v7009
      %v7035 = vsel %vm6979, %v6891, %v7010
      %v7036 = vsel %vm6980, %v6896, %v7011
      %v7037 = vsel %vm6981, %v6899, %v7012
      %v7038 = vsel %vm6982, %v6904, %v7013
      %v7039 = vsel %vm6983, %v6907, %v7014
      %v7040 = vsel %vm6984, %v6912, %v7015
      %v7041 = vsel %vm6985, %v6915, %v7016
      %v7042 = vsel %vm6986, %v6920, %v7017
      %v7043 = vsel %vm6987, %v6923, %v7018
      %v7044 = vsel %vm6988, %v6928, %v7019
      %v7045 = vsel %vm6989, %v6931, %v7020
      %v7046 = vsel %vm6990, %v6936, %v7021
      %v7047 = vsel %vm6991, %v6939, %v7022
      %v7048 = vsel %vm6992, %v6944, %v7023
      %v7049 = vsel %vm6993, %v6947, %v7024
      %v7050 = vsel %vm6994, %v6952, %v7025
      %v7051 = vsel %vm6995, %v6955, %v7026
      %v7052 = vsel %vm6996, %v6960, %v7027
      %v7053 = vsel %vm6997, %v6963, %v7028
      %v7054 = vsel %vm6998, %v6968, %v7029
      %v7080 = vcombine.high %v7030, %v7030
      %v7082 = vunpack.c.l.s4 1983009808
      %v7083 = vunpack.c.0.s8 %v7082
      %v7084 = vlaneseq
      %v7085 = vshrl.u32 %v7084, 7
      %v7086 = vsub.s32 %v7083, %v7085
      %v7087 = vrot.slane %v7030, %v7086
      %v7089 = vunpack.c.l.s4 1983009808
      %v7090 = vunpack.c.0.s8 %v7089
      %v7091 = vlaneseq
      %v7092 = vshrl.u32 %v7091, 7
      %v7093 = vsub.s32 %v7090, %v7092
      %v7094 = vrot.slane %v7080, %v7093
      %v7095 = vcombine.high %v7087, %v7087
      %v7096 = vcombine.high %v7094, %v7094
      %v7097 = vcombine.high %v7031, %v7031
      %v7099 = vunpack.c.l.s4 1983009808
      %v7100 = vunpack.c.0.s8 %v7099
      %v7101 = vlaneseq
      %v7102 = vshrl.u32 %v7101, 7
      %v7103 = vsub.s32 %v7100, %v7102
      %v7104 = vrot.slane %v7031, %v7103
      %v7106 = vunpack.c.l.s4 1983009808
      %v7107 = vunpack.c.0.s8 %v7106
      %v7108 = vlaneseq
      %v7109 = vshrl.u32 %v7108, 7
      %v7110 = vsub.s32 %v7107, %v7109
      %v7111 = vrot.slane %v7097, %v7110
      %v7112 = vcombine.high %v7104, %v7104
      %v7113 = vcombine.high %v7111, %v7111
      %v7114 = vcombine.high %v7032, %v7032
      %v7116 = vunpack.c.l.s4 1983009808
      %v7117 = vunpack.c.0.s8 %v7116
      %v7118 = vlaneseq
      %v7119 = vshrl.u32 %v7118, 7
      %v7120 = vsub.s32 %v7117, %v7119
      %v7121 = vrot.slane %v7032, %v7120
      %v7123 = vunpack.c.l.s4 1983009808
      %v7124 = vunpack.c.0.s8 %v7123
      %v7125 = vlaneseq
      %v7126 = vshrl.u32 %v7125, 7
      %v7127 = vsub.s32 %v7124, %v7126
      %v7128 = vrot.slane %v7114, %v7127
      %v7129 = vcombine.high %v7121, %v7121
      %v7130 = vcombine.high %v7128, %v7128
      %v7131 = vcombine.high %v7033, %v7033
      %v7133 = vunpack.c.l.s4 1983009808
      %v7134 = vunpack.c.0.s8 %v7133
      %v7135 = vlaneseq
      %v7136 = vshrl.u32 %v7135, 7
      %v7137 = vsub.s32 %v7134, %v7136
      %v7138 = vrot.slane %v7033, %v7137
      %v7140 = vunpack.c.l.s4 1983009808
      %v7141 = vunpack.c.0.s8 %v7140
      %v7142 = vlaneseq
      %v7143 = vshrl.u32 %v7142, 7
      %v7144 = vsub.s32 %v7141, %v7143
      %v7145 = vrot.slane %v7131, %v7144
      %v7146 = vcombine.high %v7138, %v7138
      %v7147 = vcombine.high %v7145, %v7145
      %v7148 = vcombine.high %v7034, %v7034
      %v7150 = vunpack.c.l.s4 1983009808
      %v7151 = vunpack.c.0.s8 %v7150
      %v7152 = vlaneseq
      %v7153 = vshrl.u32 %v7152, 7
      %v7154 = vsub.s32 %v7151, %v7153
      %v7155 = vrot.slane %v7034, %v7154
      %v7157 = vunpack.c.l.s4 1983009808
      %v7158 = vunpack.c.0.s8 %v7157
      %v7159 = vlaneseq
      %v7160 = vshrl.u32 %v7159, 7
      %v7161 = vsub.s32 %v7158, %v7160
      %v7162 = vrot.slane %v7148, %v7161
      %v7163 = vcombine.high %v7155, %v7155
      %v7164 = vcombine.high %v7162, %v7162
      %v7165 = vcombine.high %v7035, %v7035
      %v7167 = vunpack.c.l.s4 1983009808
      %v7168 = vunpack.c.0.s8 %v7167
      %v7169 = vlaneseq
      %v7170 = vshrl.u32 %v7169, 7
      %v7171 = vsub.s32 %v7168, %v7170
      %v7172 = vrot.slane %v7035, %v7171
      %v7174 = vunpack.c.l.s4 1983009808
      %v7175 = vunpack.c.0.s8 %v7174
      %v7176 = vlaneseq
      %v7177 = vshrl.u32 %v7176, 7
      %v7178 = vsub.s32 %v7175, %v7177
      %v7179 = vrot.slane %v7165, %v7178
      %v7180 = vcombine.high %v7172, %v7172
      %v7181 = vcombine.high %v7179, %v7179
      %v7182 = vcombine.high %v7036, %v7036
      %v7184 = vunpack.c.l.s4 1983009808
      %v7185 = vunpack.c.0.s8 %v7184
      %v7186 = vlaneseq
      %v7187 = vshrl.u32 %v7186, 7
      %v7188 = vsub.s32 %v7185, %v7187
      %v7189 = vrot.slane %v7036, %v7188
      %v7191 = vunpack.c.l.s4 1983009808
      %v7192 = vunpack.c.0.s8 %v7191
      %v7193 = vlaneseq
      %v7194 = vshrl.u32 %v7193, 7
      %v7195 = vsub.s32 %v7192, %v7194
      %v7196 = vrot.slane %v7182, %v7195
      %v7197 = vcombine.high %v7189, %v7189
      %v7198 = vcombine.high %v7196, %v7196
      %v7199 = vcombine.high %v7037, %v7037
      %v7201 = vunpack.c.l.s4 1983009808
      %v7202 = vunpack.c.0.s8 %v7201
      %v7203 = vlaneseq
      %v7204 = vshrl.u32 %v7203, 7
      %v7205 = vsub.s32 %v7202, %v7204
      %v7206 = vrot.slane %v7037, %v7205
      %v7208 = vunpack.c.l.s4 1983009808
      %v7209 = vunpack.c.0.s8 %v7208
      %v7210 = vlaneseq
      %v7211 = vshrl.u32 %v7210, 7
      %v7212 = vsub.s32 %v7209, %v7211
      %v7213 = vrot.slane %v7199, %v7212
      %v7214 = vcombine.high %v7206, %v7206
      %v7215 = vcombine.high %v7213, %v7213
      %v7216 = vcombine.high %v7038, %v7038
      %v7218 = vunpack.c.l.s4 1983009808
      %v7219 = vunpack.c.0.s8 %v7218
      %v7220 = vlaneseq
      %v7221 = vshrl.u32 %v7220, 7
      %v7222 = vsub.s32 %v7219, %v7221
      %v7223 = vrot.slane %v7038, %v7222
      %v7225 = vunpack.c.l.s4 1983009808
      %v7226 = vunpack.c.0.s8 %v7225
      %v7227 = vlaneseq
      %v7228 = vshrl.u32 %v7227, 7
      %v7229 = vsub.s32 %v7226, %v7228
      %v7230 = vrot.slane %v7216, %v7229
      %v7231 = vcombine.high %v7223, %v7223
      %v7232 = vcombine.high %v7230, %v7230
      %v7233 = vcombine.high %v7039, %v7039
      %v7235 = vunpack.c.l.s4 1983009808
      %v7236 = vunpack.c.0.s8 %v7235
      %v7237 = vlaneseq
      %v7238 = vshrl.u32 %v7237, 7
      %v7239 = vsub.s32 %v7236, %v7238
      %v7240 = vrot.slane %v7039, %v7239
      %v7242 = vunpack.c.l.s4 1983009808
      %v7243 = vunpack.c.0.s8 %v7242
      %v7244 = vlaneseq
      %v7245 = vshrl.u32 %v7244, 7
      %v7246 = vsub.s32 %v7243, %v7245
      %v7247 = vrot.slane %v7233, %v7246
      %v7248 = vcombine.high %v7240, %v7240
      %v7249 = vcombine.high %v7247, %v7247
      %v7250 = vcombine.high %v7040, %v7040
      %v7252 = vunpack.c.l.s4 1983009808
      %v7253 = vunpack.c.0.s8 %v7252
      %v7254 = vlaneseq
      %v7255 = vshrl.u32 %v7254, 7
      %v7256 = vsub.s32 %v7253, %v7255
      %v7257 = vrot.slane %v7040, %v7256
      %v7259 = vunpack.c.l.s4 1983009808
      %v7260 = vunpack.c.0.s8 %v7259
      %v7261 = vlaneseq
      %v7262 = vshrl.u32 %v7261, 7
      %v7263 = vsub.s32 %v7260, %v7262
      %v7264 = vrot.slane %v7250, %v7263
      %v7265 = vcombine.high %v7257, %v7257
      %v7266 = vcombine.high %v7264, %v7264
      %v7267 = vcombine.high %v7041, %v7041
      %v7269 = vunpack.c.l.s4 1983009808
      %v7270 = vunpack.c.0.s8 %v7269
      %v7271 = vlaneseq
      %v7272 = vshrl.u32 %v7271, 7
      %v7273 = vsub.s32 %v7270, %v7272
      %v7274 = vrot.slane %v7041, %v7273
      %v7276 = vunpack.c.l.s4 1983009808
      %v7277 = vunpack.c.0.s8 %v7276
      %v7278 = vlaneseq
      %v7279 = vshrl.u32 %v7278, 7
      %v7280 = vsub.s32 %v7277, %v7279
      %v7281 = vrot.slane %v7267, %v7280
      %v7282 = vcombine.high %v7274, %v7274
      %v7283 = vcombine.high %v7281, %v7281
      %v7284 = vcombine.high %v7042, %v7042
      %v7286 = vunpack.c.l.s4 1983009808
      %v7287 = vunpack.c.0.s8 %v7286
      %v7288 = vlaneseq
      %v7289 = vshrl.u32 %v7288, 7
      %v7290 = vsub.s32 %v7287, %v7289
      %v7291 = vrot.slane %v7042, %v7290
      %v7293 = vunpack.c.l.s4 1983009808
      %v7294 = vunpack.c.0.s8 %v7293
      %v7295 = vlaneseq
      %v7296 = vshrl.u32 %v7295, 7
      %v7297 = vsub.s32 %v7294, %v7296
      %v7298 = vrot.slane %v7284, %v7297
      %v7299 = vcombine.high %v7291, %v7291
      %v7300 = vcombine.high %v7298, %v7298
      %v7301 = vcombine.high %v7043, %v7043
      %v7303 = vunpack.c.l.s4 1983009808
      %v7304 = vunpack.c.0.s8 %v7303
      %v7305 = vlaneseq
      %v7306 = vshrl.u32 %v7305, 7
      %v7307 = vsub.s32 %v7304, %v7306
      %v7308 = vrot.slane %v7043, %v7307
      %v7310 = vunpack.c.l.s4 1983009808
      %v7311 = vunpack.c.0.s8 %v7310
      %v7312 = vlaneseq
      %v7313 = vshrl.u32 %v7312, 7
      %v7314 = vsub.s32 %v7311, %v7313
      %v7315 = vrot.slane %v7301, %v7314
      %v7316 = vcombine.high %v7308, %v7308
      %v7317 = vcombine.high %v7315, %v7315
      %v7318 = vcombine.high %v7044, %v7044
      %v7320 = vunpack.c.l.s4 1983009808
      %v7321 = vunpack.c.0.s8 %v7320
      %v7322 = vlaneseq
      %v7323 = vshrl.u32 %v7322, 7
      %v7324 = vsub.s32 %v7321, %v7323
      %v7325 = vrot.slane %v7044, %v7324
      %v7327 = vunpack.c.l.s4 1983009808
      %v7328 = vunpack.c.0.s8 %v7327
      %v7329 = vlaneseq
      %v7330 = vshrl.u32 %v7329, 7
      %v7331 = vsub.s32 %v7328, %v7330
      %v7332 = vrot.slane %v7318, %v7331
      %v7333 = vcombine.high %v7325, %v7325
      %v7334 = vcombine.high %v7332, %v7332
      %v7335 = vcombine.high %v7045, %v7045
      %v7337 = vunpack.c.l.s4 1983009808
      %v7338 = vunpack.c.0.s8 %v7337
      %v7339 = vlaneseq
      %v7340 = vshrl.u32 %v7339, 7
      %v7341 = vsub.s32 %v7338, %v7340
      %v7342 = vrot.slane %v7045, %v7341
      %v7344 = vunpack.c.l.s4 1983009808
      %v7345 = vunpack.c.0.s8 %v7344
      %v7346 = vlaneseq
      %v7347 = vshrl.u32 %v7346, 7
      %v7348 = vsub.s32 %v7345, %v7347
      %v7349 = vrot.slane %v7335, %v7348
      %v7350 = vcombine.high %v7342, %v7342
      %v7351 = vcombine.high %v7349, %v7349
      %v7352 = vcombine.high %v7046, %v7046
      %v7354 = vunpack.c.l.s4 1983009808
      %v7355 = vunpack.c.0.s8 %v7354
      %v7356 = vlaneseq
      %v7357 = vshrl.u32 %v7356, 7
      %v7358 = vsub.s32 %v7355, %v7357
      %v7359 = vrot.slane %v7046, %v7358
      %v7361 = vunpack.c.l.s4 1983009808
      %v7362 = vunpack.c.0.s8 %v7361
      %v7363 = vlaneseq
      %v7364 = vshrl.u32 %v7363, 7
      %v7365 = vsub.s32 %v7362, %v7364
      %v7366 = vrot.slane %v7352, %v7365
      %v7367 = vcombine.high %v7359, %v7359
      %v7368 = vcombine.high %v7366, %v7366
      %v7369 = vcombine.high %v7047, %v7047
      %v7371 = vunpack.c.l.s4 1983009808
      %v7372 = vunpack.c.0.s8 %v7371
      %v7373 = vlaneseq
      %v7374 = vshrl.u32 %v7373, 7
      %v7375 = vsub.s32 %v7372, %v7374
      %v7376 = vrot.slane %v7047, %v7375
      %v7378 = vunpack.c.l.s4 1983009808
      %v7379 = vunpack.c.0.s8 %v7378
      %v7380 = vlaneseq
      %v7381 = vshrl.u32 %v7380, 7
      %v7382 = vsub.s32 %v7379, %v7381
      %v7383 = vrot.slane %v7369, %v7382
      %v7384 = vcombine.high %v7376, %v7376
      %v7385 = vcombine.high %v7383, %v7383
      %v7386 = vcombine.high %v7048, %v7048
      %v7388 = vunpack.c.l.s4 1983009808
      %v7389 = vunpack.c.0.s8 %v7388
      %v7390 = vlaneseq
      %v7391 = vshrl.u32 %v7390, 7
      %v7392 = vsub.s32 %v7389, %v7391
      %v7393 = vrot.slane %v7048, %v7392
      %v7395 = vunpack.c.l.s4 1983009808
      %v7396 = vunpack.c.0.s8 %v7395
      %v7397 = vlaneseq
      %v7398 = vshrl.u32 %v7397, 7
      %v7399 = vsub.s32 %v7396, %v7398
      %v7400 = vrot.slane %v7386, %v7399
      %v7401 = vcombine.high %v7393, %v7393
      %v7402 = vcombine.high %v7400, %v7400
      %v7403 = vcombine.high %v7049, %v7049
      %v7405 = vunpack.c.l.s4 1983009808
      %v7406 = vunpack.c.0.s8 %v7405
      %v7407 = vlaneseq
      %v7408 = vshrl.u32 %v7407, 7
      %v7409 = vsub.s32 %v7406, %v7408
      %v7410 = vrot.slane %v7049, %v7409
      %v7412 = vunpack.c.l.s4 1983009808
      %v7413 = vunpack.c.0.s8 %v7412
      %v7414 = vlaneseq
      %v7415 = vshrl.u32 %v7414, 7
      %v7416 = vsub.s32 %v7413, %v7415
      %v7417 = vrot.slane %v7403, %v7416
      %v7418 = vcombine.high %v7410, %v7410
      %v7419 = vcombine.high %v7417, %v7417
      %v7420 = vcombine.high %v7050, %v7050
      %v7422 = vunpack.c.l.s4 1983009808
      %v7423 = vunpack.c.0.s8 %v7422
      %v7424 = vlaneseq
      %v7425 = vshrl.u32 %v7424, 7
      %v7426 = vsub.s32 %v7423, %v7425
      %v7427 = vrot.slane %v7050, %v7426
      %v7429 = vunpack.c.l.s4 1983009808
      %v7430 = vunpack.c.0.s8 %v7429
      %v7431 = vlaneseq
      %v7432 = vshrl.u32 %v7431, 7
      %v7433 = vsub.s32 %v7430, %v7432
      %v7434 = vrot.slane %v7420, %v7433
      %v7435 = vcombine.high %v7427, %v7427
      %v7436 = vcombine.high %v7434, %v7434
      %v7437 = vcombine.high %v7051, %v7051
      %v7439 = vunpack.c.l.s4 1983009808
      %v7440 = vunpack.c.0.s8 %v7439
      %v7441 = vlaneseq
      %v7442 = vshrl.u32 %v7441, 7
      %v7443 = vsub.s32 %v7440, %v7442
      %v7444 = vrot.slane %v7051, %v7443
      %v7446 = vunpack.c.l.s4 1983009808
      %v7447 = vunpack.c.0.s8 %v7446
      %v7448 = vlaneseq
      %v7449 = vshrl.u32 %v7448, 7
      %v7450 = vsub.s32 %v7447, %v7449
      %v7451 = vrot.slane %v7437, %v7450
      %v7452 = vcombine.high %v7444, %v7444
      %v7453 = vcombine.high %v7451, %v7451
      %v7454 = vcombine.high %v7052, %v7052
      %v7456 = vunpack.c.l.s4 1983009808
      %v7457 = vunpack.c.0.s8 %v7456
      %v7458 = vlaneseq
      %v7459 = vshrl.u32 %v7458, 7
      %v7460 = vsub.s32 %v7457, %v7459
      %v7461 = vrot.slane %v7052, %v7460
      %v7463 = vunpack.c.l.s4 1983009808
      %v7464 = vunpack.c.0.s8 %v7463
      %v7465 = vlaneseq
      %v7466 = vshrl.u32 %v7465, 7
      %v7467 = vsub.s32 %v7464, %v7466
      %v7468 = vrot.slane %v7454, %v7467
      %v7469 = vcombine.high %v7461, %v7461
      %v7470 = vcombine.high %v7468, %v7468
      %v7471 = vcombine.high %v7053, %v7053
      %v7473 = vunpack.c.l.s4 1983009808
      %v7474 = vunpack.c.0.s8 %v7473
      %v7475 = vlaneseq
      %v7476 = vshrl.u32 %v7475, 7
      %v7477 = vsub.s32 %v7474, %v7476
      %v7478 = vrot.slane %v7053, %v7477
      %v7480 = vunpack.c.l.s4 1983009808
      %v7481 = vunpack.c.0.s8 %v7480
      %v7482 = vlaneseq
      %v7483 = vshrl.u32 %v7482, 7
      %v7484 = vsub.s32 %v7481, %v7483
      %v7485 = vrot.slane %v7471, %v7484
      %v7486 = vcombine.high %v7478, %v7478
      %v7487 = vcombine.high %v7485, %v7485
      %v7489 = vunpack.c.l.s4 1983009808
      %v7490 = vunpack.c.0.s8 %v7489
      %v7491 = vlaneseq
      %v7492 = vshrl.u32 %v7491, 7
      %v7493 = vsub.s32 %v7490, %v7492
      %v7494 = vrot.slane %v7054, %v7493
      %v7495 = vcombine.high %v7494, %v7494
      %vm7594 = vcmask 74752
      %v7595 = vsel %vm7594, %v7087, -inf
      %v7596 = vsel %vm7594, %v7113, -inf
      %v7597 = vmax.f32 %v7595, %v7596
      %v7598 = vsel %vm7594, %v7095, -inf
      %v7599 = vsel %vm7594, %v7121, -inf
      %v7600 = vmax.f32 %v7598, %v7599
      %v7601 = vsel %vm7594, %v7094, -inf
      %v7602 = vsel %vm7594, %v7129, -inf
      %v7603 = vmax.f32 %v7601, %v7602
      %v7604 = vsel %vm7594, %v7096, -inf
      %v7605 = vsel %vm7594, %v7128, -inf
      %v7606 = vmax.f32 %v7604, %v7605
      %v7607 = vsel %vm7594, %v7104, -inf
      %v7608 = vsel %vm7594, %v7130, -inf
      %v7609 = vmax.f32 %v7607, %v7608
      %v7610 = vsel %vm7594, %v7112, -inf
      %v7611 = vsel %vm7594, %v7138, -inf
      %v7612 = vmax.f32 %v7610, %v7611
      %v7613 = vsel %vm7594, %v7111, -inf
      %v7614 = vsel %vm7594, %v7146, -inf
      %v7615 = vmax.f32 %v7613, %v7614
      %v7616 = vsel %vm7594, %v7145, -inf
      %v7617 = vsel %vm7594, %v7180, -inf
      %v7618 = vmax.f32 %v7616, %v7617
      %v7619 = vsel %vm7594, %v7147, -inf
      %v7620 = vsel %vm7594, %v7179, -inf
      %v7621 = vmax.f32 %v7619, %v7620
      %v7622 = vsel %vm7594, %v7155, -inf
      %v7623 = vsel %vm7594, %v7181, -inf
      %v7624 = vmax.f32 %v7622, %v7623
      %v7625 = vsel %vm7594, %v7163, -inf
      %v7626 = vsel %vm7594, %v7189, -inf
      %v7627 = vmax.f32 %v7625, %v7626
      %v7628 = vsel %vm7594, %v7162, -inf
      %v7629 = vsel %vm7594, %v7197, -inf
      %v7630 = vmax.f32 %v7628, %v7629
      %v7631 = vsel %vm7594, %v7164, -inf
      %v7632 = vsel %vm7594, %v7196, -inf
      %v7633 = vmax.f32 %v7631, %v7632
      %v7634 = vsel %vm7594, %v7172, -inf
      %v7635 = vsel %vm7594, %v7198, -inf
      %v7636 = vmax.f32 %v7634, %v7635
      %v7637 = vsel %vm7594, %v7206, -inf
      %v7638 = vsel %vm7594, %v7232, -inf
      %v7639 = vmax.f32 %v7637, %v7638
      %v7640 = vsel %vm7594, %v7214, -inf
      %v7641 = vsel %vm7594, %v7240, -inf
      %v7642 = vmax.f32 %v7640, %v7641
      %v7643 = vsel %vm7594, %v7213, -inf
      %v7644 = vsel %vm7594, %v7248, -inf
      %v7645 = vmax.f32 %v7643, %v7644
      %v7646 = vsel %vm7594, %v7215, -inf
      %v7647 = vsel %vm7594, %v7247, -inf
      %v7648 = vmax.f32 %v7646, %v7647
      %v7649 = vsel %vm7594, %v7223, -inf
      %v7650 = vsel %vm7594, %v7249, -inf
      %v7651 = vmax.f32 %v7649, %v7650
      %v7652 = vsel %vm7594, %v7231, -inf
      %v7653 = vsel %vm7594, %v7257, -inf
      %v7654 = vmax.f32 %v7652, %v7653
      %v7655 = vsel %vm7594, %v7230, -inf
      %v7656 = vsel %vm7594, %v7265, -inf
      %v7657 = vmax.f32 %v7655, %v7656
      %v7658 = vsel %vm7594, %v7264, -inf
      %v7659 = vsel %vm7594, %v7299, -inf
      %v7660 = vmax.f32 %v7658, %v7659
      %v7661 = vsel %vm7594, %v7266, -inf
      %v7662 = vsel %vm7594, %v7298, -inf
      %v7663 = vmax.f32 %v7661, %v7662
      %v7664 = vsel %vm7594, %v7274, -inf
      %v7665 = vsel %vm7594, %v7300, -inf
      %v7666 = vmax.f32 %v7664, %v7665
      %v7667 = vsel %vm7594, %v7282, -inf
      %v7668 = vsel %vm7594, %v7308, -inf
      %v7669 = vmax.f32 %v7667, %v7668
      %v7670 = vsel %vm7594, %v7281, -inf
      %v7671 = vsel %vm7594, %v7316, -inf
      %v7672 = vmax.f32 %v7670, %v7671
      %v7673 = vsel %vm7594, %v7283, -inf
      %v7674 = vsel %vm7594, %v7315, -inf
      %v7675 = vmax.f32 %v7673, %v7674
      %v7676 = vsel %vm7594, %v7291, -inf
      %v7677 = vsel %vm7594, %v7317, -inf
      %v7678 = vmax.f32 %v7676, %v7677
      %v7679 = vsel %vm7594, %v7325, -inf
      %v7680 = vsel %vm7594, %v7351, -inf
      %v7681 = vmax.f32 %v7679, %v7680
      %v7682 = vsel %vm7594, %v7333, -inf
      %v7683 = vsel %vm7594, %v7359, -inf
      %v7684 = vmax.f32 %v7682, %v7683
      %v7685 = vsel %vm7594, %v7332, -inf
      %v7686 = vsel %vm7594, %v7367, -inf
      %v7687 = vmax.f32 %v7685, %v7686
      %v7688 = vsel %vm7594, %v7334, -inf
      %v7689 = vsel %vm7594, %v7366, -inf
      %v7690 = vmax.f32 %v7688, %v7689
      %v7691 = vsel %vm7594, %v7342, -inf
      %v7692 = vsel %vm7594, %v7368, -inf
      %v7693 = vmax.f32 %v7691, %v7692
      %v7694 = vsel %vm7594, %v7350, -inf
      %v7695 = vsel %vm7594, %v7376, -inf
      %v7696 = vmax.f32 %v7694, %v7695
      %v7697 = vsel %vm7594, %v7349, -inf
      %v7698 = vsel %vm7594, %v7384, -inf
      %v7699 = vmax.f32 %v7697, %v7698
      %v7700 = vsel %vm7594, %v7383, -inf
      %v7701 = vsel %vm7594, %v7418, -inf
      %v7702 = vmax.f32 %v7700, %v7701
      %v7703 = vsel %vm7594, %v7385, -inf
      %v7704 = vsel %vm7594, %v7417, -inf
      %v7705 = vmax.f32 %v7703, %v7704
      %v7706 = vsel %vm7594, %v7393, -inf
      %v7707 = vsel %vm7594, %v7419, -inf
      %v7708 = vmax.f32 %v7706, %v7707
      %v7709 = vsel %vm7594, %v7401, -inf
      %v7710 = vsel %vm7594, %v7427, -inf
      %v7711 = vmax.f32 %v7709, %v7710
      %v7712 = vsel %vm7594, %v7400, -inf
      %v7713 = vsel %vm7594, %v7435, -inf
      %v7714 = vmax.f32 %v7712, %v7713
      %v7715 = vsel %vm7594, %v7402, -inf
      %v7716 = vsel %vm7594, %v7434, -inf
      %v7717 = vmax.f32 %v7715, %v7716
      %v7718 = vsel %vm7594, %v7410, -inf
      %v7719 = vsel %vm7594, %v7436, -inf
      %v7720 = vmax.f32 %v7718, %v7719
      %v7721 = vsel %vm7594, %v7444, -inf
      %v7722 = vsel %vm7594, %v7470, -inf
      %v7723 = vmax.f32 %v7721, %v7722
      %v7724 = vsel %vm7594, %v7452, -inf
      %v7725 = vsel %vm7594, %v7478, -inf
      %v7726 = vmax.f32 %v7724, %v7725
      %v7727 = vsel %vm7594, %v7451, -inf
      %v7728 = vsel %vm7594, %v7486, -inf
      %v7729 = vmax.f32 %v7727, %v7728
      %v7730 = vsel %vm7594, %v7453, -inf
      %v7731 = vsel %vm7594, %v7485, -inf
      %v7732 = vmax.f32 %v7730, %v7731
      %v7733 = vsel %vm7594, %v7461, -inf
      %v7734 = vsel %vm7594, %v7487, -inf
      %v7735 = vmax.f32 %v7733, %v7734
      %v7736 = vsel %vm7594, %v7469, -inf
      %v7737 = vsel %vm7594, %v7494, -inf
      %v7738 = vmax.f32 %v7736, %v7737
      %v7739 = vsel %vm7594, %v7468, -inf
      %v7740 = vsel %vm7594, %v7495, -inf
      %v7741 = vmax.f32 %v7739, %v7740
      %v7742 = vsel %vm7594, %v7597, -inf
      %v7743 = vrot.slane %v7742, 4
      %v7744 = vmax.f32 %v7742, %v7743
      %v7745 = vrot.slane %v7744, 2
      %v7746 = vmax.f32 %v7744, %v7745
      %v7747 = vrot.slane %v7746, 1
      %v7748 = vmax.f32 %v7746, %v7747
      %v7749 = vsel %vm7594, %v7600, -inf
      %v7750 = vrot.slane %v7749, 4
      %v7751 = vmax.f32 %v7749, %v7750
      %v7752 = vrot.slane %v7751, 2
      %v7753 = vmax.f32 %v7751, %v7752
      %v7754 = vrot.slane %v7753, 1
      %v7755 = vmax.f32 %v7753, %v7754
      %v7756 = vsel %vm7594, %v7603, -inf
      %v7757 = vrot.slane %v7756, 4
      %v7758 = vmax.f32 %v7756, %v7757
      %v7759 = vrot.slane %v7758, 2
      %v7760 = vmax.f32 %v7758, %v7759
      %v7761 = vrot.slane %v7760, 1
      %v7762 = vmax.f32 %v7760, %v7761
      %v7763 = vsel %vm7594, %v7606, -inf
      %v7764 = vrot.slane %v7763, 4
      %v7765 = vmax.f32 %v7763, %v7764
      %v7766 = vrot.slane %v7765, 2
      %v7767 = vmax.f32 %v7765, %v7766
      %v7768 = vrot.slane %v7767, 1
      %v7769 = vmax.f32 %v7767, %v7768
      %v7770 = vsel %vm7594, %v7609, -inf
      %v7771 = vrot.slane %v7770, 4
      %v7772 = vmax.f32 %v7770, %v7771
      %v7773 = vrot.slane %v7772, 2
      %v7774 = vmax.f32 %v7772, %v7773
      %v7775 = vrot.slane %v7774, 1
      %v7776 = vmax.f32 %v7774, %v7775
      %v7777 = vsel %vm7594, %v7612, -inf
      %v7778 = vrot.slane %v7777, 4
      %v7779 = vmax.f32 %v7777, %v7778
      %v7780 = vrot.slane %v7779, 2
      %v7781 = vmax.f32 %v7779, %v7780
      %v7782 = vrot.slane %v7781, 1
      %v7783 = vmax.f32 %v7781, %v7782
      %v7784 = vsel %vm7594, %v7615, -inf
      %v7785 = vrot.slane %v7784, 4
      %v7786 = vmax.f32 %v7784, %v7785
      %v7787 = vrot.slane %v7786, 2
      %v7788 = vmax.f32 %v7786, %v7787
      %v7789 = vrot.slane %v7788, 1
      %v7790 = vmax.f32 %v7788, %v7789
      %v7791 = vsel %vm7594, %v7618, -inf
      %v7792 = vrot.slane %v7791, 4
      %v7793 = vmax.f32 %v7791, %v7792
      %v7794 = vrot.slane %v7793, 2
      %v7795 = vmax.f32 %v7793, %v7794
      %v7796 = vrot.slane %v7795, 1
      %v7797 = vmax.f32 %v7795, %v7796
      %v7798 = vsel %vm7594, %v7621, -inf
      %v7799 = vrot.slane %v7798, 4
      %v7800 = vmax.f32 %v7798, %v7799
      %v7801 = vrot.slane %v7800, 2
      %v7802 = vmax.f32 %v7800, %v7801
      %v7803 = vrot.slane %v7802, 1
      %v7804 = vmax.f32 %v7802, %v7803
      %v7805 = vsel %vm7594, %v7624, -inf
      %v7806 = vrot.slane %v7805, 4
      %v7807 = vmax.f32 %v7805, %v7806
      %v7808 = vrot.slane %v7807, 2
      %v7809 = vmax.f32 %v7807, %v7808
      %v7810 = vrot.slane %v7809, 1
      %v7811 = vmax.f32 %v7809, %v7810
      %v7812 = vsel %vm7594, %v7627, -inf
      %v7813 = vrot.slane %v7812, 4
      %v7814 = vmax.f32 %v7812, %v7813
      %v7815 = vrot.slane %v7814, 2
      %v7816 = vmax.f32 %v7814, %v7815
      %v7817 = vrot.slane %v7816, 1
      %v7818 = vmax.f32 %v7816, %v7817
      %v7819 = vsel %vm7594, %v7630, -inf
      %v7820 = vrot.slane %v7819, 4
      %v7821 = vmax.f32 %v7819, %v7820
      %v7822 = vrot.slane %v7821, 2
      %v7823 = vmax.f32 %v7821, %v7822
      %v7824 = vrot.slane %v7823, 1
      %v7825 = vmax.f32 %v7823, %v7824
      %v7826 = vsel %vm7594, %v7633, -inf
      %v7827 = vrot.slane %v7826, 4
      %v7828 = vmax.f32 %v7826, %v7827
      %v7829 = vrot.slane %v7828, 2
      %v7830 = vmax.f32 %v7828, %v7829
      %v7831 = vrot.slane %v7830, 1
      %v7832 = vmax.f32 %v7830, %v7831
      %v7833 = vsel %vm7594, %v7636, -inf
      %v7834 = vrot.slane %v7833, 4
      %v7835 = vmax.f32 %v7833, %v7834
      %v7836 = vrot.slane %v7835, 2
      %v7837 = vmax.f32 %v7835, %v7836
      %v7838 = vrot.slane %v7837, 1
      %v7839 = vmax.f32 %v7837, %v7838
      %v7840 = vsel %vm7594, %v7639, -inf
      %v7841 = vrot.slane %v7840, 4
      %v7842 = vmax.f32 %v7840, %v7841
      %v7843 = vrot.slane %v7842, 2
      %v7844 = vmax.f32 %v7842, %v7843
      %v7845 = vrot.slane %v7844, 1
      %v7846 = vmax.f32 %v7844, %v7845
      %v7847 = vsel %vm7594, %v7642, -inf
      %v7848 = vrot.slane %v7847, 4
      %v7849 = vmax.f32 %v7847, %v7848
      %v7850 = vrot.slane %v7849, 2
      %v7851 = vmax.f32 %v7849, %v7850
      %v7852 = vrot.slane %v7851, 1
      %v7853 = vmax.f32 %v7851, %v7852
      %v7854 = vsel %vm7594, %v7645, -inf
      %v7855 = vrot.slane %v7854, 4
      %v7856 = vmax.f32 %v7854, %v7855
      %v7857 = vrot.slane %v7856, 2
      %v7858 = vmax.f32 %v7856, %v7857
      %v7859 = vrot.slane %v7858, 1
      %v7860 = vmax.f32 %v7858, %v7859
      %v7861 = vsel %vm7594, %v7648, -inf
      %v7862 = vrot.slane %v7861, 4
      %v7863 = vmax.f32 %v7861, %v7862
      %v7864 = vrot.slane %v7863, 2
      %v7865 = vmax.f32 %v7863, %v7864
      %v7866 = vrot.slane %v7865, 1
      %v7867 = vmax.f32 %v7865, %v7866
      %v7868 = vsel %vm7594, %v7651, -inf
      %v7869 = vrot.slane %v7868, 4
      %v7870 = vmax.f32 %v7868, %v7869
      %v7871 = vrot.slane %v7870, 2
      %v7872 = vmax.f32 %v7870, %v7871
      %v7873 = vrot.slane %v7872, 1
      %v7874 = vmax.f32 %v7872, %v7873
      %v7875 = vsel %vm7594, %v7654, -inf
      %v7876 = vrot.slane %v7875, 4
      %v7877 = vmax.f32 %v7875, %v7876
      %v7878 = vrot.slane %v7877, 2
      %v7879 = vmax.f32 %v7877, %v7878
      %v7880 = vrot.slane %v7879, 1
      %v7881 = vmax.f32 %v7879, %v7880
      %v7882 = vsel %vm7594, %v7657, -inf
      %v7883 = vrot.slane %v7882, 4
      %v7884 = vmax.f32 %v7882, %v7883
      %v7885 = vrot.slane %v7884, 2
      %v7886 = vmax.f32 %v7884, %v7885
      %v7887 = vrot.slane %v7886, 1
      %v7888 = vmax.f32 %v7886, %v7887
      %v7889 = vsel %vm7594, %v7660, -inf
      %v7890 = vrot.slane %v7889, 4
      %v7891 = vmax.f32 %v7889, %v7890
      %v7892 = vrot.slane %v7891, 2
      %v7893 = vmax.f32 %v7891, %v7892
      %v7894 = vrot.slane %v7893, 1
      %v7895 = vmax.f32 %v7893, %v7894
      %v7896 = vsel %vm7594, %v7663, -inf
      %v7897 = vrot.slane %v7896, 4
      %v7898 = vmax.f32 %v7896, %v7897
      %v7899 = vrot.slane %v7898, 2
      %v7900 = vmax.f32 %v7898, %v7899
      %v7901 = vrot.slane %v7900, 1
      %v7902 = vmax.f32 %v7900, %v7901
      %v7903 = vsel %vm7594, %v7666, -inf
      %v7904 = vrot.slane %v7903, 4
      %v7905 = vmax.f32 %v7903, %v7904
      %v7906 = vrot.slane %v7905, 2
      %v7907 = vmax.f32 %v7905, %v7906
      %v7908 = vrot.slane %v7907, 1
      %v7909 = vmax.f32 %v7907, %v7908
      %v7910 = vsel %vm7594, %v7669, -inf
      %v7911 = vrot.slane %v7910, 4
      %v7912 = vmax.f32 %v7910, %v7911
      %v7913 = vrot.slane %v7912, 2
      %v7914 = vmax.f32 %v7912, %v7913
      %v7915 = vrot.slane %v7914, 1
      %v7916 = vmax.f32 %v7914, %v7915
      %v7917 = vsel %vm7594, %v7672, -inf
      %v7918 = vrot.slane %v7917, 4
      %v7919 = vmax.f32 %v7917, %v7918
      %v7920 = vrot.slane %v7919, 2
      %v7921 = vmax.f32 %v7919, %v7920
      %v7922 = vrot.slane %v7921, 1
      %v7923 = vmax.f32 %v7921, %v7922
      %v7924 = vsel %vm7594, %v7675, -inf
      %v7925 = vrot.slane %v7924, 4
      %v7926 = vmax.f32 %v7924, %v7925
      %v7927 = vrot.slane %v7926, 2
      %v7928 = vmax.f32 %v7926, %v7927
      %v7929 = vrot.slane %v7928, 1
      %v7930 = vmax.f32 %v7928, %v7929
      %v7931 = vsel %vm7594, %v7678, -inf
      %v7932 = vrot.slane %v7931, 4
      %v7933 = vmax.f32 %v7931, %v7932
      %v7934 = vrot.slane %v7933, 2
      %v7935 = vmax.f32 %v7933, %v7934
      %v7936 = vrot.slane %v7935, 1
      %v7937 = vmax.f32 %v7935, %v7936
      %v7938 = vsel %vm7594, %v7681, -inf
      %v7939 = vrot.slane %v7938, 4
      %v7940 = vmax.f32 %v7938, %v7939
      %v7941 = vrot.slane %v7940, 2
      %v7942 = vmax.f32 %v7940, %v7941
      %v7943 = vrot.slane %v7942, 1
      %v7944 = vmax.f32 %v7942, %v7943
      %v7945 = vsel %vm7594, %v7684, -inf
      %v7946 = vrot.slane %v7945, 4
      %v7947 = vmax.f32 %v7945, %v7946
      %v7948 = vrot.slane %v7947, 2
      %v7949 = vmax.f32 %v7947, %v7948
      %v7950 = vrot.slane %v7949, 1
      %v7951 = vmax.f32 %v7949, %v7950
      %v7952 = vsel %vm7594, %v7687, -inf
      %v7953 = vrot.slane %v7952, 4
      %v7954 = vmax.f32 %v7952, %v7953
      %v7955 = vrot.slane %v7954, 2
      %v7956 = vmax.f32 %v7954, %v7955
      %v7957 = vrot.slane %v7956, 1
      %v7958 = vmax.f32 %v7956, %v7957
      %v7959 = vsel %vm7594, %v7690, -inf
      %v7960 = vrot.slane %v7959, 4
      %v7961 = vmax.f32 %v7959, %v7960
      %v7962 = vrot.slane %v7961, 2
      %v7963 = vmax.f32 %v7961, %v7962
      %v7964 = vrot.slane %v7963, 1
      %v7965 = vmax.f32 %v7963, %v7964
      %v7966 = vsel %vm7594, %v7693, -inf
      %v7967 = vrot.slane %v7966, 4
      %v7968 = vmax.f32 %v7966, %v7967
      %v7969 = vrot.slane %v7968, 2
      %v7970 = vmax.f32 %v7968, %v7969
      %v7971 = vrot.slane %v7970, 1
      %v7972 = vmax.f32 %v7970, %v7971
      %v7973 = vsel %vm7594, %v7696, -inf
      %v7974 = vrot.slane %v7973, 4
      %v7975 = vmax.f32 %v7973, %v7974
      %v7976 = vrot.slane %v7975, 2
      %v7977 = vmax.f32 %v7975, %v7976
      %v7978 = vrot.slane %v7977, 1
      %v7979 = vmax.f32 %v7977, %v7978
      %v7980 = vsel %vm7594, %v7699, -inf
      %v7981 = vrot.slane %v7980, 4
      %v7982 = vmax.f32 %v7980, %v7981
      %v7983 = vrot.slane %v7982, 2
      %v7984 = vmax.f32 %v7982, %v7983
      %v7985 = vrot.slane %v7984, 1
      %v7986 = vmax.f32 %v7984, %v7985
      %v7987 = vsel %vm7594, %v7702, -inf
      %v7988 = vrot.slane %v7987, 4
      %v7989 = vmax.f32 %v7987, %v7988
      %v7990 = vrot.slane %v7989, 2
      %v7991 = vmax.f32 %v7989, %v7990
      %v7992 = vrot.slane %v7991, 1
      %v7993 = vmax.f32 %v7991, %v7992
      %v7994 = vsel %vm7594, %v7705, -inf
      %v7995 = vrot.slane %v7994, 4
      %v7996 = vmax.f32 %v7994, %v7995
      %v7997 = vrot.slane %v7996, 2
      %v7998 = vmax.f32 %v7996, %v7997
      %v7999 = vrot.slane %v7998, 1
      %v8000 = vmax.f32 %v7998, %v7999
      %v8001 = vsel %vm7594, %v7708, -inf
      %v8002 = vrot.slane %v8001, 4
      %v8003 = vmax.f32 %v8001, %v8002
      %v8004 = vrot.slane %v8003, 2
      %v8005 = vmax.f32 %v8003, %v8004
      %v8006 = vrot.slane %v8005, 1
      %v8007 = vmax.f32 %v8005, %v8006
      %v8008 = vsel %vm7594, %v7711, -inf
      %v8009 = vrot.slane %v8008, 4
      %v8010 = vmax.f32 %v8008, %v8009
      %v8011 = vrot.slane %v8010, 2
      %v8012 = vmax.f32 %v8010, %v8011
      %v8013 = vrot.slane %v8012, 1
      %v8014 = vmax.f32 %v8012, %v8013
      %v8015 = vsel %vm7594, %v7714, -inf
      %v8016 = vrot.slane %v8015, 4
      %v8017 = vmax.f32 %v8015, %v8016
      %v8018 = vrot.slane %v8017, 2
      %v8019 = vmax.f32 %v8017, %v8018
      %v8020 = vrot.slane %v8019, 1
      %v8021 = vmax.f32 %v8019, %v8020
      %v8022 = vsel %vm7594, %v7717, -inf
      %v8023 = vrot.slane %v8022, 4
      %v8024 = vmax.f32 %v8022, %v8023
      %v8025 = vrot.slane %v8024, 2
      %v8026 = vmax.f32 %v8024, %v8025
      %v8027 = vrot.slane %v8026, 1
      %v8028 = vmax.f32 %v8026, %v8027
      %v8029 = vsel %vm7594, %v7720, -inf
      %v8030 = vrot.slane %v8029, 4
      %v8031 = vmax.f32 %v8029, %v8030
      %v8032 = vrot.slane %v8031, 2
      %v8033 = vmax.f32 %v8031, %v8032
      %v8034 = vrot.slane %v8033, 1
      %v8035 = vmax.f32 %v8033, %v8034
      %v8036 = vsel %vm7594, %v7723, -inf
      %v8037 = vrot.slane %v8036, 4
      %v8038 = vmax.f32 %v8036, %v8037
      %v8039 = vrot.slane %v8038, 2
      %v8040 = vmax.f32 %v8038, %v8039
      %v8041 = vrot.slane %v8040, 1
      %v8042 = vmax.f32 %v8040, %v8041
      %v8043 = vsel %vm7594, %v7726, -inf
      %v8044 = vrot.slane %v8043, 4
      %v8045 = vmax.f32 %v8043, %v8044
      %v8046 = vrot.slane %v8045, 2
      %v8047 = vmax.f32 %v8045, %v8046
      %v8048 = vrot.slane %v8047, 1
      %v8049 = vmax.f32 %v8047, %v8048
      %v8050 = vsel %vm7594, %v7729, -inf
      %v8051 = vrot.slane %v8050, 4
      %v8052 = vmax.f32 %v8050, %v8051
      %v8053 = vrot.slane %v8052, 2
      %v8054 = vmax.f32 %v8052, %v8053
      %v8055 = vrot.slane %v8054, 1
      %v8056 = vmax.f32 %v8054, %v8055
      %v8057 = vsel %vm7594, %v7732, -inf
      %v8058 = vrot.slane %v8057, 4
      %v8059 = vmax.f32 %v8057, %v8058
      %v8060 = vrot.slane %v8059, 2
      %v8061 = vmax.f32 %v8059, %v8060
      %v8062 = vrot.slane %v8061, 1
      %v8063 = vmax.f32 %v8061, %v8062
      %v8064 = vsel %vm7594, %v7735, -inf
      %v8065 = vrot.slane %v8064, 4
      %v8066 = vmax.f32 %v8064, %v8065
      %v8067 = vrot.slane %v8066, 2
      %v8068 = vmax.f32 %v8066, %v8067
      %v8069 = vrot.slane %v8068, 1
      %v8070 = vmax.f32 %v8068, %v8069
      %v8071 = vsel %vm7594, %v7738, -inf
      %v8072 = vrot.slane %v8071, 4
      %v8073 = vmax.f32 %v8071, %v8072
      %v8074 = vrot.slane %v8073, 2
      %v8075 = vmax.f32 %v8073, %v8074
      %v8076 = vrot.slane %v8075, 1
      %v8077 = vmax.f32 %v8075, %v8076
      %v8078 = vsel %vm7594, %v7741, -inf
      %v8079 = vrot.slane %v8078, 4
      %v8080 = vmax.f32 %v8078, %v8079
      %v8081 = vrot.slane %v8080, 2
      %v8082 = vmax.f32 %v8080, %v8081
      %v8083 = vrot.slane %v8082, 1
      %v8084 = vmax.f32 %v8082, %v8083
      %vm8085 = vcmask 1044176
      %8086 = vst.msk [vmem:[#allocation3] sm:$0xf] %vm8085, 0
      %8087 = vst.msk [vmem:[#allocation3 + $0x4] sm:$0xf] %vm8085, 0
      %8088 = vst.msk [vmem:[#allocation3 + $0x8] sm:$0xf] %vm8085, 0
      %vm8089 = vcmask 1041104
      %vm8090 = vmand %vm8089, %vm1824
      %v8091 = vld [vmem:[#allocation3 + $0xc] sm:$0x1]
      %v8092 = vsel %vm8090, 0, %v8091
      %8093 = vst [vmem:[#allocation3 + $0xc] sm:$0x1] %v8092
      %v8094 = vpack.c.bf16 %v7748, %v7748
      %v8095 = vpack.c.bf16 %v7755, %v7755
      %v8096 = vpack.c.bf16 %v7762, %v7762
      %v8097 = vpack.c.bf16 %v7769, %v7769
      %v8098 = vpack.c.bf16 %v7776, %v7776
      %v8099 = vpack.c.bf16 %v7797, %v7797
      %v8100 = vpack.c.bf16 %v7804, %v7804
      %v8101 = vpack.c.bf16 %v7811, %v7811
      %v8102 = vpack.c.bf16 %v7818, %v7818
      %v8103 = vpack.c.bf16 %v7825, %v7825
      %v8104 = vpack.c.bf16 %v7846, %v7846
      %v8105 = vpack.c.bf16 %v7853, %v7853
      %v8106 = vpack.c.bf16 %v7860, %v7860
      %v8107 = vpack.c.bf16 %v7867, %v7867
      %v8108 = vpack.c.bf16 %v7874, %v7874
      %v8109 = vpack.c.bf16 %v7895, %v7895
      %v8110 = vpack.c.bf16 %v7902, %v7902
      %v8111 = vpack.c.bf16 %v7909, %v7909
      %v8112 = vpack.c.bf16 %v7916, %v7916
      %v8113 = vpack.c.bf16 %v7923, %v7923
      %v8114 = vpack.c.bf16 %v7944, %v7944
      %v8115 = vpack.c.bf16 %v7951, %v7951
      %v8116 = vpack.c.bf16 %v7958, %v7958
      %v8117 = vpack.c.bf16 %v7965, %v7965
      %v8118 = vpack.c.bf16 %v7972, %v7972
      %v8144 = vunpack.c.l.b16 %v8094
      %v8145 = vunpack.c.l.b16 %v8095
      %v8146 = vunpack.c.l.b16 %v8096
      %v8147 = vunpack.c.l.b16 %v8097
      %v8148 = vunpack.c.l.b16 %v8098
      %v8149 = vunpack.c.l.b16 %v8099
      %v8150 = vunpack.c.l.b16 %v8100
      %v8151 = vunpack.c.l.b16 %v8101
      %v8152 = vunpack.c.l.b16 %v8102
      %v8153 = vunpack.c.l.b16 %v8103
      %v8154 = vunpack.c.l.b16 %v8104
      %v8155 = vunpack.c.l.b16 %v8105
      %v8156 = vunpack.c.l.b16 %v8106
      %v8157 = vunpack.c.l.b16 %v8107
      %v8158 = vunpack.c.l.b16 %v8108
      %v8159 = vunpack.c.l.b16 %v8109
      %v8160 = vunpack.c.l.b16 %v8110
      %v8161 = vunpack.c.l.b16 %v8111
      %v8162 = vunpack.c.l.b16 %v8112
      %v8163 = vunpack.c.l.b16 %v8113
      %v8164 = vunpack.c.l.b16 %v8114
      %v8165 = vunpack.c.l.b16 %v8115
      %v8166 = vunpack.c.l.b16 %v8116
      %v8167 = vunpack.c.l.b16 %v8117
      %v8168 = vunpack.c.l.b16 %v8118
      %v8169 = vpack.c.b16 %v8144, %v8144
      %v8170 = vpack.c.b16 %v8145, %v8145
      %v8171 = vpack.c.b16 %v8146, %v8146
      %v8172 = vpack.c.b16 %v8147, %v8147
      %v8173 = vpack.c.b16 %v8148, %v8148
      %v8174 = vpack.c.b16 %v8149, %v8149
      %v8175 = vpack.c.b16 %v8150, %v8150
      %v8176 = vpack.c.b16 %v8151, %v8151
      %v8177 = vpack.c.b16 %v8152, %v8152
      %v8178 = vpack.c.b16 %v8153, %v8153
      %v8179 = vpack.c.b16 %v8154, %v8154
      %v8180 = vpack.c.b16 %v8155, %v8155
      %v8181 = vpack.c.b16 %v8156, %v8156
      %v8182 = vpack.c.b16 %v8157, %v8157
      %v8183 = vpack.c.b16 %v8158, %v8158
      %v8184 = vpack.c.b16 %v8159, %v8159
      %v8185 = vpack.c.b16 %v8160, %v8160
      %v8186 = vpack.c.b16 %v8161, %v8161
      %v8187 = vpack.c.b16 %v8162, %v8162
      %v8188 = vpack.c.b16 %v8163, %v8163
      %v8189 = vpack.c.b16 %v8164, %v8164
      %v8190 = vpack.c.b16 %v8165, %v8165
      %v8191 = vpack.c.b16 %v8166, %v8166
      %v8192 = vpack.c.b16 %v8167, %v8167
      %v8193 = vpack.c.b16 %v8168, %v8168
      %v8194 = vunpack.c.l.b16 %v8169
      %v8195 = vunpack.c.l.b16 %v8170
      %v8196 = vunpack.c.l.b16 %v8171
      %v8197 = vunpack.c.l.b16 %v8172
      %v8198 = vunpack.c.l.b16 %v8173
      %v8199 = vunpack.c.l.b16 %v8174
      %v8200 = vunpack.c.l.b16 %v8175
      %v8201 = vunpack.c.l.b16 %v8176
      %v8202 = vunpack.c.l.b16 %v8177
      %v8203 = vunpack.c.l.b16 %v8178
      %v8204 = vunpack.c.l.b16 %v8179
      %v8205 = vunpack.c.l.b16 %v8180
      %v8206 = vunpack.c.l.b16 %v8181
      %v8207 = vunpack.c.l.b16 %v8182
      %v8208 = vunpack.c.l.b16 %v8183
      %v8209 = vunpack.c.l.b16 %v8184
      %v8210 = vunpack.c.l.b16 %v8185
      %v8211 = vunpack.c.l.b16 %v8186
      %v8212 = vunpack.c.l.b16 %v8187
      %v8213 = vunpack.c.l.b16 %v8188
      %v8214 = vunpack.c.l.b16 %v8189
      %v8215 = vunpack.c.l.b16 %v8190
      %v8216 = vunpack.c.l.b16 %v8191
      %v8217 = vunpack.c.l.b16 %v8192
      %v8218 = vunpack.c.l.b16 %v8193
      %vm8219 = vcmask 1041409
      %v8220 = vsel %vm8219, %v8195, %v8194
      %vm8221 = vcmask 1042434
      %v8222 = vsel %vm8221, %v8196, %v8220
      %vm8223 = vcmask 1043459
      %v8224 = vsel %vm8223, %v8197, %v8222
      %vm8225 = vcmask 1044484
      %v8226 = vsel %vm8225, %v8198, %v8224
      %vm8227 = vcmask 1045509
      %v8228 = vsel %vm8227, %v8199, %v8226
      %vm8229 = vcmask 1046534
      %v8230 = vsel %vm8229, %v8200, %v8228
      %vm8231 = vcmask 1047559
      %v8232 = vsel %vm8231, %v8201, %v8230
      %v8233 = vsel %vm8219, %v8203, %v8202
      %v8234 = vsel %vm8221, %v8204, %v8233
      %v8235 = vsel %vm8223, %v8205, %v8234
      %v8236 = vsel %vm8225, %v8206, %v8235
      %v8237 = vsel %vm8227, %v8207, %v8236
      %v8238 = vsel %vm8229, %v8208, %v8237
      %v8239 = vsel %vm8231, %v8209, %v8238
      %v8240 = vsel %vm8219, %v8211, %v8210
      %v8241 = vsel %vm8221, %v8212, %v8240
      %v8242 = vsel %vm8223, %v8213, %v8241
      %v8243 = vsel %vm8225, %v8214, %v8242
      %v8244 = vsel %vm8227, %v8215, %v8243
      %v8245 = vsel %vm8229, %v8216, %v8244
      %v8246 = vsel %vm8231, %v8217, %v8245
      %v8247 = vpack.c.b16 %v8232, %v8232
      %v8248 = vpack.c.b16 %v8239, %v8239
      %v8249 = vpack.c.b16 %v8246, %v8246
      %v8250 = vpack.c.b16 %v8218, %v8218
      %vm8255 = vcmask 76800
      %8256 = vst.msk [vmem:[#allocation3] sm:$0xf] %vm8255, %v8247
      %8257 = vst.msk [vmem:[#allocation3 + $0x4] sm:$0xf] %vm8255, %v8248
      %8258 = vst.msk [vmem:[#allocation3 + $0x8] sm:$0xf] %vm8255, %v8249
      %vm8259 = vcmask 73728
      %vm8260 = vmand %vm8259, %vm1824
      %v8261 = vld [vmem:[#allocation3 + $0xc] sm:$0x1]
      %v8262 = vsel %vm8260, %v8250, %v8261
      %8263 = vst [vmem:[#allocation3 + $0xc] sm:$0x1] %v8262
      %v8264 = vpack.c.bf16 %v7783, %v7783
      %v8265 = vpack.c.bf16 %v7832, %v7832
      %v8266 = vpack.c.bf16 %v7881, %v7881
      %v8267 = vpack.c.bf16 %v7930, %v7930
      %v8268 = vpack.c.bf16 %v7979, %v7979
      %v8274 = vunpack.c.l.b16 %v8264
      %v8275 = vunpack.c.l.b16 %v8265
      %v8276 = vunpack.c.l.b16 %v8266
      %v8277 = vunpack.c.l.b16 %v8267
      %v8278 = vunpack.c.l.b16 %v8268
      %v8279 = vpack.c.b16 %v8274, %v8274
      %v8280 = vpack.c.b16 %v8275, %v8275
      %v8281 = vpack.c.b16 %v8276, %v8276
      %v8282 = vpack.c.b16 %v8277, %v8277
      %v8283 = vpack.c.b16 %v8278, %v8278
      %v8284 = vunpack.c.l.b16 %v8279
      %v8285 = vunpack.c.l.b16 %v8280
      %v8286 = vunpack.c.l.b16 %v8281
      %v8287 = vunpack.c.l.b16 %v8282
      %v8288 = vunpack.c.l.b16 %v8283
      %v8289 = vsel %vm8219, %v8196, %v8195
      %v8290 = vsel %vm8221, %v8197, %v8289
      %v8291 = vsel %vm8223, %v8198, %v8290
      %v8292 = vsel %vm8225, %v8284, %v8291
      %v8293 = vsel %vm8227, %v8200, %v8292
      %v8294 = vsel %vm8229, %v8201, %v8293
      %v8295 = vsel %vm8231, %v8202, %v8294
      %v8296 = vsel %vm8219, %v8285, %v8203
      %v8297 = vsel %vm8221, %v8205, %v8296
      %v8298 = vsel %vm8223, %v8206, %v8297
      %v8299 = vsel %vm8225, %v8207, %v8298
      %v8300 = vsel %vm8227, %v8208, %v8299
      %v8301 = vsel %vm8229, %v8286, %v8300
      %v8302 = vsel %vm8231, %v8210, %v8301
      %v8303 = vsel %vm8219, %v8212, %v8211
      %v8304 = vsel %vm8221, %v8213, %v8303
      %v8305 = vsel %vm8223, %v8287, %v8304
      %v8306 = vsel %vm8225, %v8215, %v8305
      %v8307 = vsel %vm8227, %v8216, %v8306
      %v8308 = vsel %vm8229, %v8217, %v8307
      %v8309 = vsel %vm8231, %v8218, %v8308
      %v8310 = vpack.c.b16 %v8295, %v8295
      %v8311 = vpack.c.b16 %v8302, %v8302
      %v8312 = vpack.c.b16 %v8309, %v8309
      %v8313 = vpack.c.b16 %v8288, %v8288
      %8314 = vrot.lane.b32.xlu0 %v8310, 10
      %v8315 = vpop.permute.xlu0 %8314
      %8316 = vrot.lane.b32.xlu0 %v8311, 10
      %v8317 = vpop.permute.xlu0 %8316
      %8318 = vrot.lane.b32.xlu0 %v8312, 10
      %v8319 = vpop.permute.xlu0 %8318
      %8320 = vrot.lane.b32.xlu0 %v8313, 10
      %v8321 = vpop.permute.xlu0 %8320
      %vm8326 = vcmask 158800
      %8327 = vst.msk [vmem:[#allocation3] sm:$0xf] %vm8326, %v8315
      %8328 = vst.msk [vmem:[#allocation3 + $0x4] sm:$0xf] %vm8326, %v8317
      %8329 = vst.msk [vmem:[#allocation3 + $0x8] sm:$0xf] %vm8326, %v8319
      %vm8330 = vcmask 155728
      %vm8331 = vmand %vm8330, %vm1824
      %v8332 = vld [vmem:[#allocation3 + $0xc] sm:$0x1]
      %v8333 = vsel %vm8331, %v8321, %v8332
      %8334 = vst [vmem:[#allocation3 + $0xc] sm:$0x1] %v8333
      %v8335 = vpack.c.bf16 %v7790, %v7790
      %v8336 = vpack.c.bf16 %v7839, %v7839
      %v8337 = vpack.c.bf16 %v7888, %v7888
      %v8338 = vpack.c.bf16 %v7937, %v7937
      %v8339 = vpack.c.bf16 %v7986, %v7986
      %v8345 = vunpack.c.l.b16 %v8335
      %v8346 = vunpack.c.l.b16 %v8336
      %v8347 = vunpack.c.l.b16 %v8337
      %v8348 = vunpack.c.l.b16 %v8338
      %v8349 = vunpack.c.l.b16 %v8339
      %v8350 = vpack.c.b16 %v8345, %v8345
      %v8351 = vpack.c.b16 %v8346, %v8346
      %v8352 = vpack.c.b16 %v8347, %v8347
      %v8353 = vpack.c.b16 %v8348, %v8348
      %v8354 = vpack.c.b16 %v8349, %v8349
      %v8355 = vunpack.c.l.b16 %v8350
      %v8356 = vunpack.c.l.b16 %v8351
      %v8357 = vunpack.c.l.b16 %v8352
      %v8358 = vunpack.c.l.b16 %v8353
      %v8359 = vunpack.c.l.b16 %v8354
      %v8360 = vsel %vm8219, %v8197, %v8196
      %v8361 = vsel %vm8221, %v8198, %v8360
      %v8362 = vsel %vm8223, %v8284, %v8361
      %v8363 = vsel %vm8225, %v8355, %v8362
      %v8364 = vsel %vm8227, %v8201, %v8363
      %v8365 = vsel %vm8229, %v8202, %v8364
      %v8366 = vsel %vm8231, %v8203, %v8365
      %v8367 = vsel %vm8219, %v8356, %v8285
      %v8368 = vsel %vm8221, %v8206, %v8367
      %v8369 = vsel %vm8223, %v8207, %v8368
      %v8370 = vsel %vm8225, %v8208, %v8369
      %v8371 = vsel %vm8227, %v8286, %v8370
      %v8372 = vsel %vm8229, %v8357, %v8371
      %v8373 = vsel %vm8231, %v8211, %v8372
      %v8374 = vsel %vm8219, %v8213, %v8212
      %v8375 = vsel %vm8221, %v8287, %v8374
      %v8376 = vsel %vm8223, %v8358, %v8375
      %v8377 = vsel %vm8225, %v8216, %v8376
      %v8378 = vsel %vm8227, %v8217, %v8377
      %v8379 = vsel %vm8229, %v8218, %v8378
      %v8380 = vsel %vm8231, %v8288, %v8379
      %v8381 = vpack.c.b16 %v8366, %v8366
      %v8382 = vpack.c.b16 %v8373, %v8373
      %v8383 = vpack.c.b16 %v8380, %v8380
      %v8384 = vpack.c.b16 %v8359, %v8359
      %8385 = vrot.lane.b32.xlu0 %v8381, 20
      %v8386 = vpop.permute.xlu0 %8385
      %8387 = vrot.lane.b32.xlu0 %v8382, 20
      %v8388 = vpop.permute.xlu0 %8387
      %8389 = vrot.lane.b32.xlu0 %v8383, 20
      %v8390 = vpop.permute.xlu0 %8389
      %8391 = vrot.lane.b32.xlu0 %v8384, 20
      %v8392 = vpop.permute.xlu0 %8391
      %vm8397 = vcmask 240800
      %8398 = vst.msk [vmem:[#allocation3] sm:$0xf] %vm8397, %v8386
      %8399 = vst.msk [vmem:[#allocation3 + $0x4] sm:$0xf] %vm8397, %v8388
      %8400 = vst.msk [vmem:[#allocation3 + $0x8] sm:$0xf] %vm8397, %v8390
      %vm8401 = vcmask 237728
      %vm8402 = vmand %vm8401, %vm1824
      %v8403 = vld [vmem:[#allocation3 + $0xc] sm:$0x1]
      %v8404 = vsel %vm8402, %v8392, %v8403
      %8405 = vst [vmem:[#allocation3 + $0xc] sm:$0x1] %v8404
      %v8406 = vpack.c.bf16 %v7993, %v7993
      %v8407 = vpack.c.bf16 %v8000, %v8000
      %v8408 = vpack.c.bf16 %v8007, %v8007
      %v8409 = vpack.c.bf16 %v8014, %v8014
      %v8410 = vpack.c.bf16 %v8021, %v8021
      %v8416 = vunpack.c.l.b16 %v8406
      %v8417 = vunpack.c.l.b16 %v8407
      %v8418 = vunpack.c.l.b16 %v8408
      %v8419 = vunpack.c.l.b16 %v8409
      %v8420 = vunpack.c.l.b16 %v8410
      %v8421 = vpack.c.b16 %v8416, %v8416
      %v8422 = vpack.c.b16 %v8417, %v8417
      %v8423 = vpack.c.b16 %v8418, %v8418
      %v8424 = vpack.c.b16 %v8419, %v8419
      %v8425 = vpack.c.b16 %v8420, %v8420
      %v8426 = vunpack.c.l.b16 %v8421
      %v8427 = vunpack.c.l.b16 %v8422
      %v8428 = vunpack.c.l.b16 %v8423
      %v8429 = vunpack.c.l.b16 %v8424
      %v8430 = vunpack.c.l.b16 %v8425
      %v8431 = vsel %vm8219, %v8200, %v8199
      %v8432 = vsel %vm8221, %v8201, %v8431
      %v8433 = vsel %vm8223, %v8202, %v8432
      %v8434 = vsel %vm8225, %v8203, %v8433
      %v8435 = vsel %vm8227, %v8204, %v8434
      %v8436 = vsel %vm8229, %v8205, %v8435
      %v8437 = vsel %vm8231, %v8206, %v8436
      %v8438 = vsel %vm8219, %v8208, %v8207
      %v8439 = vsel %vm8221, %v8209, %v8438
      %v8440 = vsel %vm8223, %v8210, %v8439
      %v8441 = vsel %vm8225, %v8211, %v8440
      %v8442 = vsel %vm8227, %v8212, %v8441
      %v8443 = vsel %vm8229, %v8213, %v8442
      %v8444 = vsel %vm8231, %v8214, %v8443
      %v8445 = vsel %vm8219, %v8216, %v8215
      %v8446 = vsel %vm8221, %v8217, %v8445
      %v8447 = vsel %vm8223, %v8218, %v8446
      %v8448 = vsel %vm8225, %v8426, %v8447
      %v8449 = vsel %vm8227, %v8427, %v8448
      %v8450 = vsel %vm8229, %v8428, %v8449
      %v8451 = vsel %vm8231, %v8429, %v8450
      %v8452 = vpack.c.b16 %v8437, %v8437
      %v8453 = vpack.c.b16 %v8444, %v8444
      %v8454 = vpack.c.b16 %v8451, %v8451
      %v8455 = vpack.c.b16 %v8430, %v8430
      %8456 = vrot.lane.b32.xlu0 %v8452, 30
      %v8457 = vpop.permute.xlu0 %8456
      %8458 = vrot.lane.b32.xlu0 %v8453, 30
      %v8459 = vpop.permute.xlu0 %8458
      %8460 = vrot.lane.b32.xlu0 %v8454, 30
      %v8461 = vpop.permute.xlu0 %8460
      %8462 = vrot.lane.b32.xlu0 %v8455, 30
      %v8463 = vpop.permute.xlu0 %8462
      %vm8468 = vcmask 322800
      %8469 = vst.msk [vmem:[#allocation3] sm:$0xf] %vm8468, %v8457
      %8470 = vst.msk [vmem:[#allocation3 + $0x4] sm:$0xf] %vm8468, %v8459
      %8471 = vst.msk [vmem:[#allocation3 + $0x8] sm:$0xf] %vm8468, %v8461
      %vm8472 = vcmask 319728
      %vm8473 = vmand %vm8472, %vm1824
      %v8474 = vld [vmem:[#allocation3 + $0xc] sm:$0x1]
      %v8475 = vsel %vm8473, %v8463, %v8474
      %8476 = vst [vmem:[#allocation3 + $0xc] sm:$0x1] %v8475
      %v8477 = vpack.c.bf16 %v8028, %v8028
      %v8479 = vunpack.c.l.b16 %v8477
      %v8480 = vpack.c.b16 %v8479, %v8479
      %v8481 = vunpack.c.l.b16 %v8480
      %v8482 = vsel %vm8219, %v8201, %v8200
      %v8483 = vsel %vm8221, %v8202, %v8482
      %v8484 = vsel %vm8223, %v8203, %v8483
      %v8485 = vsel %vm8225, %v8285, %v8484
      %v8486 = vsel %vm8227, %v8205, %v8485
      %v8487 = vsel %vm8229, %v8206, %v8486
      %v8488 = vsel %vm8231, %v8207, %v8487
      %v8489 = vsel %vm8219, %v8286, %v8208
      %v8490 = vsel %vm8221, %v8210, %v8489
      %v8491 = vsel %vm8223, %v8211, %v8490
      %v8492 = vsel %vm8225, %v8212, %v8491
      %v8493 = vsel %vm8227, %v8213, %v8492
      %v8494 = vsel %vm8229, %v8287, %v8493
      %v8495 = vsel %vm8231, %v8215, %v8494
      %v8496 = vsel %vm8219, %v8217, %v8216
      %v8497 = vsel %vm8221, %v8218, %v8496
      %v8498 = vsel %vm8223, %v8288, %v8497
      %v8499 = vsel %vm8225, %v8427, %v8498
      %v8500 = vsel %vm8227, %v8428, %v8499
      %v8501 = vsel %vm8229, %v8429, %v8500
      %v8502 = vsel %vm8231, %v8430, %v8501
      %v8503 = vpack.c.b16 %v8488, %v8488
      %v8504 = vpack.c.b16 %v8495, %v8495
      %v8505 = vpack.c.b16 %v8502, %v8502
      %v8506 = vpack.c.b16 %v8481, %v8481
      %8507 = vrot.lane.b32.xlu0 %v8503, 40
      %v8508 = vpop.permute.xlu0 %8507
      %8509 = vrot.lane.b32.xlu0 %v8504, 40
      %v8510 = vpop.permute.xlu0 %8509
      %8511 = vrot.lane.b32.xlu0 %v8505, 40
      %v8512 = vpop.permute.xlu0 %8511
      %8513 = vrot.lane.b32.xlu0 %v8506, 40
      %v8514 = vpop.permute.xlu0 %8513
      %vm8519 = vcmask 404800
      %8520 = vst.msk [vmem:[#allocation3] sm:$0xf] %vm8519, %v8508
      %8521 = vst.msk [vmem:[#allocation3 + $0x4] sm:$0xf] %vm8519, %v8510
      %8522 = vst.msk [vmem:[#allocation3 + $0x8] sm:$0xf] %vm8519, %v8512
      %vm8523 = vcmask 401728
      %vm8524 = vmand %vm8523, %vm1824
      %v8525 = vld [vmem:[#allocation3 + $0xc] sm:$0x1]
      %v8526 = vsel %vm8524, %v8514, %v8525
      %8527 = vst [vmem:[#allocation3 + $0xc] sm:$0x1] %v8526
      %v8528 = vpack.c.bf16 %v8035, %v8035
      %v8530 = vunpack.c.l.b16 %v8528
      %v8531 = vpack.c.b16 %v8530, %v8530
      %v8532 = vunpack.c.l.b16 %v8531
      %v8533 = vsel %vm8219, %v8202, %v8201
      %v8534 = vsel %vm8221, %v8203, %v8533
      %v8535 = vsel %vm8223, %v8285, %v8534
      %v8536 = vsel %vm8225, %v8356, %v8535
      %v8537 = vsel %vm8227, %v8206, %v8536
      %v8538 = vsel %vm8229, %v8207, %v8537
      %v8539 = vsel %vm8231, %v8208, %v8538
      %v8540 = vsel %vm8219, %v8357, %v8286
      %v8541 = vsel %vm8221, %v8211, %v8540
      %v8542 = vsel %vm8223, %v8212, %v8541
      %v8543 = vsel %vm8225, %v8213, %v8542
      %v8544 = vsel %vm8227, %v8287, %v8543
      %v8545 = vsel %vm8229, %v8358, %v8544
      %v8546 = vsel %vm8231, %v8216, %v8545
      %v8547 = vsel %vm8219, %v8218, %v8217
      %v8548 = vsel %vm8221, %v8288, %v8547
      %v8549 = vsel %vm8223, %v8359, %v8548
      %v8550 = vsel %vm8225, %v8428, %v8549
      %v8551 = vsel %vm8227, %v8429, %v8550
      %v8552 = vsel %vm8229, %v8430, %v8551
      %v8553 = vsel %vm8231, %v8481, %v8552
      %v8554 = vpack.c.b16 %v8539, %v8539
      %v8555 = vpack.c.b16 %v8546, %v8546
      %v8556 = vpack.c.b16 %v8553, %v8553
      %v8557 = vpack.c.b16 %v8532, %v8532
      %8558 = vrot.lane.b32.xlu0 %v8554, 50
      %v8559 = vpop.permute.xlu0 %8558
      %8560 = vrot.lane.b32.xlu0 %v8555, 50
      %v8561 = vpop.permute.xlu0 %8560
      %8562 = vrot.lane.b32.xlu0 %v8556, 50
      %v8563 = vpop.permute.xlu0 %8562
      %8564 = vrot.lane.b32.xlu0 %v8557, 50
      %v8565 = vpop.permute.xlu0 %8564
      %vm8570 = vcmask 486800
      %8571 = vst.msk [vmem:[#allocation3] sm:$0xf] %vm8570, %v8559
      %8572 = vst.msk [vmem:[#allocation3 + $0x4] sm:$0xf] %vm8570, %v8561
      %8573 = vst.msk [vmem:[#allocation3 + $0x8] sm:$0xf] %vm8570, %v8563
      %vm8574 = vcmask 483728
      %vm8575 = vmand %vm8574, %vm1824
      %v8576 = vld [vmem:[#allocation3 + $0xc] sm:$0x1]
      %v8577 = vsel %vm8575, %v8565, %v8576
      %8578 = vst [vmem:[#allocation3 + $0xc] sm:$0x1] %v8577
      %v8579 = vpack.c.bf16 %v8042, %v8042
      %v8580 = vpack.c.bf16 %v8049, %v8049
      %v8581 = vpack.c.bf16 %v8056, %v8056
      %v8582 = vpack.c.bf16 %v8063, %v8063
      %v8583 = vpack.c.bf16 %v8070, %v8070
      %v8589 = vunpack.c.l.b16 %v8579
      %v8590 = vunpack.c.l.b16 %v8580
      %v8591 = vunpack.c.l.b16 %v8581
      %v8592 = vunpack.c.l.b16 %v8582
      %v8593 = vunpack.c.l.b16 %v8583
      %v8594 = vpack.c.b16 %v8589, %v8589
      %v8595 = vpack.c.b16 %v8590, %v8590
      %v8596 = vpack.c.b16 %v8591, %v8591
      %v8597 = vpack.c.b16 %v8592, %v8592
      %v8598 = vpack.c.b16 %v8593, %v8593
      %v8599 = vunpack.c.l.b16 %v8594
      %v8600 = vunpack.c.l.b16 %v8595
      %v8601 = vunpack.c.l.b16 %v8596
      %v8602 = vunpack.c.l.b16 %v8597
      %v8603 = vunpack.c.l.b16 %v8598
      %v8604 = vsel %vm8219, %v8205, %v8204
      %v8605 = vsel %vm8221, %v8206, %v8604
      %v8606 = vsel %vm8223, %v8207, %v8605
      %v8607 = vsel %vm8225, %v8208, %v8606
      %v8608 = vsel %vm8227, %v8209, %v8607
      %v8609 = vsel %vm8229, %v8210, %v8608
      %v8610 = vsel %vm8231, %v8211, %v8609
      %v8611 = vsel %vm8221, %v8214, %v8374
      %v8612 = vsel %vm8223, %v8215, %v8611
      %v8613 = vsel %vm8225, %v8216, %v8612
      %v8614 = vsel %vm8227, %v8217, %v8613
      %v8615 = vsel %vm8229, %v8218, %v8614
      %v8616 = vsel %vm8231, %v8426, %v8615
      %v8617 = vsel %vm8219, %v8428, %v8427
      %v8618 = vsel %vm8221, %v8429, %v8617
      %v8619 = vsel %vm8223, %v8430, %v8618
      %v8620 = vsel %vm8225, %v8599, %v8619
      %v8621 = vsel %vm8227, %v8600, %v8620
      %v8622 = vsel %vm8229, %v8601, %v8621
      %v8623 = vsel %vm8231, %v8602, %v8622
      %v8624 = vpack.c.b16 %v8610, %v8610
      %v8625 = vpack.c.b16 %v8616, %v8616
      %v8626 = vpack.c.b16 %v8623, %v8623
      %v8627 = vpack.c.b16 %v8603, %v8603
      %8628 = vrot.lane.b32.xlu0 %v8624, 60
      %v8629 = vpop.permute.xlu0 %8628
      %8630 = vrot.lane.b32.xlu0 %v8625, 60
      %v8631 = vpop.permute.xlu0 %8630
      %8632 = vrot.lane.b32.xlu0 %v8626, 60
      %v8633 = vpop.permute.xlu0 %8632
      %8634 = vrot.lane.b32.xlu0 %v8627, 60
      %v8635 = vpop.permute.xlu0 %8634
      %vm8640 = vcmask 568800
      %8641 = vst.msk [vmem:[#allocation3] sm:$0xf] %vm8640, %v8629
      %8642 = vst.msk [vmem:[#allocation3 + $0x4] sm:$0xf] %vm8640, %v8631
      %8643 = vst.msk [vmem:[#allocation3 + $0x8] sm:$0xf] %vm8640, %v8633
      %vm8644 = vcmask 565728
      %vm8645 = vmand %vm8644, %vm1824
      %v8646 = vld [vmem:[#allocation3 + $0xc] sm:$0x1]
      %v8647 = vsel %vm8645, %v8635, %v8646
      %8648 = vst [vmem:[#allocation3 + $0xc] sm:$0x1] %v8647
      %v8649 = vpack.c.bf16 %v8077, %v8077
      %v8651 = vunpack.c.l.b16 %v8649
      %v8652 = vpack.c.b16 %v8651, %v8651
      %v8653 = vunpack.c.l.b16 %v8652
      %v8654 = vsel %vm8219, %v8206, %v8205
      %v8655 = vsel %vm8221, %v8207, %v8654
      %v8656 = vsel %vm8223, %v8208, %v8655
      %v8657 = vsel %vm8225, %v8286, %v8656
      %v8658 = vsel %vm8227, %v8210, %v8657
      %v8659 = vsel %vm8229, %v8211, %v8658
      %v8660 = vsel %vm8231, %v8212, %v8659
      %v8661 = vsel %vm8219, %v8287, %v8213
      %v8662 = vsel %vm8221, %v8215, %v8661
      %v8663 = vsel %vm8223, %v8216, %v8662
      %v8664 = vsel %vm8225, %v8217, %v8663
      %v8665 = vsel %vm8227, %v8218, %v8664
      %v8666 = vsel %vm8229, %v8288, %v8665
      %v8667 = vsel %vm8231, %v8427, %v8666
      %v8668 = vsel %vm8219, %v8429, %v8428
      %v8669 = vsel %vm8221, %v8430, %v8668
      %v8670 = vsel %vm8223, %v8481, %v8669
      %v8671 = vsel %vm8225, %v8600, %v8670
      %v8672 = vsel %vm8227, %v8601, %v8671
      %v8673 = vsel %vm8229, %v8602, %v8672
      %v8674 = vsel %vm8231, %v8603, %v8673
      %v8675 = vpack.c.b16 %v8660, %v8660
      %v8676 = vpack.c.b16 %v8667, %v8667
      %v8677 = vpack.c.b16 %v8674, %v8674
      %v8678 = vpack.c.b16 %v8653, %v8653
      %8679 = vrot.lane.b32.xlu0 %v8675, 70
      %v8680 = vpop.permute.xlu0 %8679
      %8681 = vrot.lane.b32.xlu0 %v8676, 70
      %v8682 = vpop.permute.xlu0 %8681
      %8683 = vrot.lane.b32.xlu0 %v8677, 70
      %v8684 = vpop.permute.xlu0 %8683
      %8685 = vrot.lane.b32.xlu0 %v8678, 70
      %v8686 = vpop.permute.xlu0 %8685
      %vm8691 = vcmask 650800
      %8692 = vst.msk [vmem:[#allocation3] sm:$0xf] %vm8691, %v8680
      %8693 = vst.msk [vmem:[#allocation3 + $0x4] sm:$0xf] %vm8691, %v8682
      %8694 = vst.msk [vmem:[#allocation3 + $0x8] sm:$0xf] %vm8691, %v8684
      %vm8695 = vcmask 647728
      %vm8696 = vmand %vm8695, %vm1824
      %v8697 = vld [vmem:[#allocation3 + $0xc] sm:$0x1]
      %v8698 = vsel %vm8696, %v8686, %v8697
      %8699 = vst [vmem:[#allocation3 + $0xc] sm:$0x1] %v8698
      %v8700 = vpack.c.bf16 %v8084, %v8084
      %v8702 = vunpack.c.l.b16 %v8700
      %v8703 = vpack.c.b16 %v8702, %v8702
      %v8704 = vunpack.c.l.b16 %v8703
      %v8705 = vsel %vm8219, %v8207, %v8206
      %v8706 = vsel %vm8221, %v8208, %v8705
      %v8707 = vsel %vm8223, %v8286, %v8706
      %v8708 = vsel %vm8225, %v8357, %v8707
      %v8709 = vsel %vm8227, %v8211, %v8708
      %v8710 = vsel %vm8229, %v8212, %v8709
      %v8711 = vsel %vm8231, %v8213, %v8710
      %v8712 = vsel %vm8219, %v8358, %v8287
      %v8713 = vsel %vm8221, %v8216, %v8712
      %v8714 = vsel %vm8223, %v8217, %v8713
      %v8715 = vsel %vm8225, %v8218, %v8714
      %v8716 = vsel %vm8227, %v8288, %v8715
      %v8717 = vsel %vm8229, %v8359, %v8716
      %v8718 = vsel %vm8231, %v8428, %v8717
      %v8719 = vsel %vm8219, %v8430, %v8429
      %v8720 = vsel %vm8221, %v8481, %v8719
      %v8721 = vsel %vm8223, %v8532, %v8720
      %v8722 = vsel %vm8225, %v8601, %v8721
      %v8723 = vsel %vm8227, %v8602, %v8722
      %v8724 = vsel %vm8229, %v8603, %v8723
      %v8725 = vsel %vm8231, %v8653, %v8724
      %v8726 = vpack.c.b16 %v8711, %v8711
      %v8727 = vpack.c.b16 %v8718, %v8718
      %v8728 = vpack.c.b16 %v8725, %v8725
      %v8729 = vpack.c.b16 %v8704, %v8704
      %8730 = vrot.lane.b32.xlu0 %v8726, 80
      %v8731 = vpop.permute.xlu0 %8730
      %8732 = vrot.lane.b32.xlu0 %v8727, 80
      %v8733 = vpop.permute.xlu0 %8732
      %8734 = vrot.lane.b32.xlu0 %v8728, 80
      %v8735 = vpop.permute.xlu0 %8734
      %8736 = vrot.lane.b32.xlu0 %v8729, 80
      %v8737 = vpop.permute.xlu0 %8736
      %vm8742 = vcmask 732800
      %8743 = vst.msk [vmem:[#allocation3] sm:$0xf] %vm8742, %v8731
      %8744 = vst.msk [vmem:[#allocation3 + $0x4] sm:$0xf] %vm8742, %v8733
      %8745 = vst.msk [vmem:[#allocation3 + $0x8] sm:$0xf] %vm8742, %v8735
      %vm8746 = vcmask 729728
      %vm8747 = vmand %vm8746, %vm1824
      %v8748 = vld [vmem:[#allocation3 + $0xc] sm:$0x1]
      %v8749 = vsel %vm8747, %v8737, %v8748
      %8750 = vst [vmem:[#allocation3 + $0xc] sm:$0x1] %v8749
      %v8751 = vld [vmem:[#allocation3] sm:$0xf]
      %v8752 = vld [vmem:[#allocation3 + $0x4] sm:$0xf]
      %v8753 = vld [vmem:[#allocation3 + $0x8] sm:$0xf]
      %v8754 = vld [vmem:[#allocation3 + $0xc] sm:$0x1]
      %v8755 = vld [vmem:[%s4] sm:$0xf]
      %v8756 = vld [vmem:[%s4 + $0x4] sm:$0xf]
      %v8757 = vld [vmem:[%s4 + $0x8] sm:$0xf]
      %v8758 = vld [vmem:[%s4 + $0xc] sm:$0xf]
      %v8759 = vld [vmem:[%s4 + $0x10] sm:$0xf]
      %v8760 = vld [vmem:[%s4 + $0x14] sm:$0xf]
      %v8761 = vld [vmem:[%s4 + $0x18] sm:$0xf]
      %v8762 = vld [vmem:[%s4 + $0x1c] sm:$0xf]
      %v8763 = vld [vmem:[%s4 + $0x20] sm:$0xf]
      %v8764 = vld [vmem:[%s4 + $0x24] sm:$0xf]
      %v8765 = vld [vmem:[%s4 + $0x28] sm:$0xf]
      %v8766 = vld [vmem:[%s4 + $0x2c] sm:$0xf]
      %v8767 = vld [vmem:[%s4 + $0x30] sm:$0xf]
      %v8768 = vld [vmem:[%s4 + $0x34] sm:$0xf]
      %v8769 = vld [vmem:[%s4 + $0x38] sm:$0xf]
      %v8770 = vld [vmem:[%s4 + $0x3c] sm:$0xf]
      %v8771 = vld [vmem:[%s5] sm:$0x1]
      %v8773 = vlaneseq
      %v8774 = vshrl.u32 %v8773, 7
      %v8775 = vsub.s32 0, %v8774
      %v8776 = vrot.slane %v8771, %v8775
      %v8782 = vunpack.c.l.b16 %v8751
      %v8783 = vunpack.c.l.b16 %v8752
      %v8784 = vunpack.c.l.b16 %v8753
      %v8785 = vunpack.c.l.b16 %v8754
      %v8786 = vpack.c.b16 %v8783, %v8782
      %v8787 = vpack.c.b16 %v8785, %v8784
      %v8806 = vunpack.c.l.b16 %v8755
      %v8807 = vunpack.c.l.b16 %v8756
      %v8808 = vunpack.c.l.b16 %v8757
      %v8809 = vunpack.c.l.b16 %v8758
      %v8810 = vunpack.c.l.b16 %v8759
      %v8811 = vunpack.c.l.b16 %v8760
      %v8812 = vunpack.c.l.b16 %v8761
      %v8813 = vunpack.c.l.b16 %v8762
      %v8814 = vunpack.c.l.b16 %v8763
      %v8815 = vunpack.c.l.b16 %v8764
      %v8816 = vunpack.c.l.b16 %v8765
      %v8817 = vunpack.c.l.b16 %v8766
      %v8818 = vunpack.c.l.b16 %v8767
      %v8819 = vunpack.c.l.b16 %v8768
      %v8820 = vunpack.c.l.b16 %v8769
      %v8821 = vunpack.c.l.b16 %v8770
      %v8822 = vpack.c.b16 %v8807, %v8806
      %v8823 = vpack.c.b16 %v8809, %v8808
      %v8824 = vpack.c.b16 %v8811, %v8810
      %v8825 = vpack.c.b16 %v8813, %v8812
      %v8826 = vpack.c.b16 %v8815, %v8814
      %v8827 = vpack.c.b16 %v8817, %v8816
      %v8828 = vpack.c.b16 %v8819, %v8818
      %v8829 = vpack.c.b16 %v8821, %v8820
      %8838 = vmatprep.subr.bf16.mxu0 0
      %8839 = vmatpush1.bf16.msra.mxu0 %v8822
      %8840 = vmatprep.subr.bf16.mxu0 0
      %8841 = vmatpush1.bf16.msra.mxu0 %v8823
      %8842 = vmatprep.subr.bf16.mxu0 0
      %8843 = vmatpush1.bf16.msra.mxu0 %v8824
      %8844 = vmatprep.subr.bf16.mxu0 0
      %8845 = vmatpush1.bf16.msra.mxu0 %v8825
      %8846 = vmatprep.subr.bf16.mxu0 0
      %8847 = vmatpush1.bf16.msra.mxu0 %v8826
      %8848 = vmatprep.subr.bf16.mxu0 0
      %8849 = vmatpush1.bf16.msra.mxu0 %v8827
      %8850 = vmatprep.subr.bf16.mxu0 0
      %8851 = vmatpush1.bf16.msra.mxu0 %v8828
      %8852 = vmatprep.subr.bf16.mxu0 0
      %8853 = vmatpush1.bf16.msra.mxu0 %v8829
      %8854 = vmatprep.subr.bf16.mxu0 0
      %8855 = vmatpush1.bf16.msra.mxu0 0
      %8856 = vmatprep.subr.bf16.mxu0 0
      %8857 = vmatpush1.bf16.msra.mxu0 0
      %8858 = vmatprep.subr.bf16.mxu0 0
      %8859 = vmatpush1.bf16.msra.mxu0 0
      %8860 = vmatprep.subr.bf16.mxu0 0
      %8861 = vmatpush1.bf16.msra.mxu0 0
      %8862 = vmatprep.subr.bf16.mxu0 0
      %8863 = vmatpush1.bf16.msra.mxu0 0
      %8864 = vmatprep.subr.bf16.mxu0 0
      %8865 = vmatpush1.bf16.msra.mxu0 0
      %8866 = vmatprep.subr.bf16.mxu0 0
      %8867 = vmatpush1.bf16.msra.mxu0 0
      %8868 = vmatprep.subr.bf16.mxu0 0
      %8869 = vmatpush1.bf16.msra.mxu0 0
      %8870 = vmatprep.mubr.bf16.mxu0 0
      %8871 = vmatmul.mubr.bf16.gmra.mrb[0].mxu0 %v8786
      %v8872 = vpop.f32.mrb[0].mxu0
      %v8873 = vadd.f32 %v8776, %v8872
      %v8874 = vpop.f32.mrb[0].mxu0
      %v8875 = vpop.f32.mrb[0].mxu0
      %v8876 = vadd.f32 %v8776, %v8875
      %v8877 = vpop.f32.mrb[0].mxu0
      %8878 = vmatprep.mubr.bf16.mxu0 0
      %8879 = vmatmul.mubr.bf16.gmra.mrb[0].mxu0 %v8787
      %v8880 = vpop.f32.mrb[0].mxu0
      %v8881 = vadd.f32 %v8776, %v8880
      %v8882 = vpop.f32.mrb[0].mxu0
      %v8883 = vpop.f32.mrb[0].mxu0
      %v8884 = vadd.f32 %v8776, %v8883
      %v8885 = vpop.f32.mrb[0].mxu0
      %8886 = vdwg.mxu0
      %v8887 = vld [vmem:[%s6] sm:$0x1]
      %vm8888 = vcmp.gt.f32.partialorder %v8873, 0.0
      %vm8889 = vcmp.gt.f32.partialorder %v8876, 0.0
      %vm8890 = vcmp.gt.f32.partialorder %v8881, 0.0
      %vm8891 = vcmp.gt.f32.partialorder %v8884, 0.0
      %v8893 = vlaneseq
      %v8894 = vshrl.u32 %v8893, 7
      %v8895 = vsub.s32 0, %v8894
      %v8896 = vrot.slane %v8887, %v8895
      %v8898 = vmul.f32 %v8873, %v8896
      %v8899 = vmul.f32 %v8876, %v8896
      %v8900 = vmul.f32 %v8881, %v8896
      %v8901 = vmul.f32 %v8884, %v8896
      %v8902 = vsel %vm8888, %v8873, %v8898
      %v8903 = vsel %vm8889, %v8876, %v8899
      %v8904 = vsel %vm8890, %v8881, %v8900
      %v8905 = vsel %vm8891, %v8884, %v8901
      %v8910 = vcombine.high %v8902, %v8902
      %v8912 = vunpack.c.l.s4 1966171168
      %v8913 = vunpack.c.0.s8 %v8912
      %v8914 = vlaneseq
      %v8915 = vshrl.u32 %v8914, 7
      %v8916 = vsub.s32 %v8913, %v8915
      %v8917 = vrot.slane %v8902, %v8916
      %v8919 = vunpack.c.l.s4 1966171168
      %v8920 = vunpack.c.0.s8 %v8919
      %v8921 = vlaneseq
      %v8922 = vshrl.u32 %v8921, 7
      %v8923 = vsub.s32 %v8920, %v8922
      %v8924 = vrot.slane %v8910, %v8923
      %v8925 = vcombine.high %v8917, %v8917
      %v8926 = vcombine.high %v8924, %v8924
      %v8928 = vunpack.c.l.s4 1966171168
      %v8929 = vunpack.c.0.s8 %v8928
      %v8930 = vlaneseq
      %v8931 = vshrl.u32 %v8930, 7
      %v8932 = vsub.s32 %v8929, %v8931
      %v8933 = vrot.slane %v8917, %v8932
      %v8935 = vunpack.c.l.s4 1966171168
      %v8936 = vunpack.c.0.s8 %v8935
      %v8937 = vlaneseq
      %v8938 = vshrl.u32 %v8937, 7
      %v8939 = vsub.s32 %v8936, %v8938
      %v8940 = vrot.slane %v8924, %v8939
      %v8942 = vunpack.c.l.s4 1966171168
      %v8943 = vunpack.c.0.s8 %v8942
      %v8944 = vlaneseq
      %v8945 = vshrl.u32 %v8944, 7
      %v8946 = vsub.s32 %v8943, %v8945
      %v8947 = vrot.slane %v8925, %v8946
      %v8949 = vunpack.c.l.s4 1966171168
      %v8950 = vunpack.c.0.s8 %v8949
      %v8951 = vlaneseq
      %v8952 = vshrl.u32 %v8951, 7
      %v8953 = vsub.s32 %v8950, %v8952
      %v8954 = vrot.slane %v8926, %v8953
      %v8955 = vcombine.high %v8933, %v8933
      %v8956 = vcombine.high %v8940, %v8940
      %v8957 = vcombine.high %v8947, %v8947
      %v8958 = vcombine.high %v8954, %v8954
      %v8959 = vcombine.high %v8903, %v8903
      %v8961 = vunpack.c.l.s4 1966171168
      %v8962 = vunpack.c.0.s8 %v8961
      %v8963 = vlaneseq
      %v8964 = vshrl.u32 %v8963, 7
      %v8965 = vsub.s32 %v8962, %v8964
      %v8966 = vrot.slane %v8903, %v8965
      %v8968 = vunpack.c.l.s4 1966171168
      %v8969 = vunpack.c.0.s8 %v8968
      %v8970 = vlaneseq
      %v8971 = vshrl.u32 %v8970, 7
      %v8972 = vsub.s32 %v8969, %v8971
      %v8973 = vrot.slane %v8959, %v8972
      %v8974 = vcombine.high %v8966, %v8966
      %v8975 = vcombine.high %v8973, %v8973
      %v8977 = vunpack.c.l.s4 1966171168
      %v8978 = vunpack.c.0.s8 %v8977
      %v8979 = vlaneseq
      %v8980 = vshrl.u32 %v8979, 7
      %v8981 = vsub.s32 %v8978, %v8980
      %v8982 = vrot.slane %v8966, %v8981
      %v8984 = vunpack.c.l.s4 1966171168
      %v8985 = vunpack.c.0.s8 %v8984
      %v8986 = vlaneseq
      %v8987 = vshrl.u32 %v8986, 7
      %v8988 = vsub.s32 %v8985, %v8987
      %v8989 = vrot.slane %v8973, %v8988
      %v8991 = vunpack.c.l.s4 1966171168
      %v8992 = vunpack.c.0.s8 %v8991
      %v8993 = vlaneseq
      %v8994 = vshrl.u32 %v8993, 7
      %v8995 = vsub.s32 %v8992, %v8994
      %v8996 = vrot.slane %v8974, %v8995
      %v8998 = vunpack.c.l.s4 1966171168
      %v8999 = vunpack.c.0.s8 %v8998
      %v9000 = vlaneseq
      %v9001 = vshrl.u32 %v9000, 7
      %v9002 = vsub.s32 %v8999, %v9001
      %v9003 = vrot.slane %v8975, %v9002
      %v9004 = vcombine.high %v8982, %v8982
      %v9005 = vcombine.high %v8989, %v8989
      %v9006 = vcombine.high %v8996, %v8996
      %v9007 = vcombine.high %v9003, %v9003
      %v9008 = vcombine.high %v8904, %v8904
      %v9010 = vunpack.c.l.s4 1966171168
      %v9011 = vunpack.c.0.s8 %v9010
      %v9012 = vlaneseq
      %v9013 = vshrl.u32 %v9012, 7
      %v9014 = vsub.s32 %v9011, %v9013
      %v9015 = vrot.slane %v8904, %v9014
      %v9017 = vunpack.c.l.s4 1966171168
      %v9018 = vunpack.c.0.s8 %v9017
      %v9019 = vlaneseq
      %v9020 = vshrl.u32 %v9019, 7
      %v9021 = vsub.s32 %v9018, %v9020
      %v9022 = vrot.slane %v9008, %v9021
      %v9023 = vcombine.high %v9015, %v9015
      %v9024 = vcombine.high %v9022, %v9022
      %v9026 = vunpack.c.l.s4 1966171168
      %v9027 = vunpack.c.0.s8 %v9026
      %v9028 = vlaneseq
      %v9029 = vshrl.u32 %v9028, 7
      %v9030 = vsub.s32 %v9027, %v9029
      %v9031 = vrot.slane %v9015, %v9030
      %v9033 = vunpack.c.l.s4 1966171168
      %v9034 = vunpack.c.0.s8 %v9033
      %v9035 = vlaneseq
      %v9036 = vshrl.u32 %v9035, 7
      %v9037 = vsub.s32 %v9034, %v9036
      %v9038 = vrot.slane %v9022, %v9037
      %v9040 = vunpack.c.l.s4 1966171168
      %v9041 = vunpack.c.0.s8 %v9040
      %v9042 = vlaneseq
      %v9043 = vshrl.u32 %v9042, 7
      %v9044 = vsub.s32 %v9041, %v9043
      %v9045 = vrot.slane %v9023, %v9044
      %v9047 = vunpack.c.l.s4 1966171168
      %v9048 = vunpack.c.0.s8 %v9047
      %v9049 = vlaneseq
      %v9050 = vshrl.u32 %v9049, 7
      %v9051 = vsub.s32 %v9048, %v9050
      %v9052 = vrot.slane %v9024, %v9051
      %v9053 = vcombine.high %v9031, %v9031
      %v9054 = vcombine.high %v9038, %v9038
      %v9055 = vcombine.high %v9045, %v9045
      %v9056 = vcombine.high %v9052, %v9052
      %v9058 = vunpack.c.l.s4 1966171168
      %v9059 = vunpack.c.0.s8 %v9058
      %v9060 = vlaneseq
      %v9061 = vshrl.u32 %v9060, 7
      %v9062 = vsub.s32 %v9059, %v9061
      %v9063 = vrot.slane %v8905, %v9062
      %v9065 = vunpack.c.l.s4 1966171168
      %v9066 = vunpack.c.0.s8 %v9065
      %v9067 = vlaneseq
      %v9068 = vshrl.u32 %v9067, 7
      %v9069 = vsub.s32 %v9066, %v9068
      %v9070 = vrot.slane %v9063, %v9069
      %vm9071 = vcmask 1043584
      %9072 = vst.msk [vmem:[#allocation4 + $0x4] sm:$0xf] %vm9071, 0
      %vm9073 = vcmask 1040512
      %vm9074 = vmand %vm9073, %vm1824
      %v9075 = vld [vmem:[#allocation4 + $0xc] sm:$0x1]
      %v9076 = vsel %vm9074, 0, %v9075
      %9077 = vst [vmem:[#allocation4 + $0xc] sm:$0x1] %v9076
      %v9078 = vcombine.low %v8933, %v8947
      %v9079 = vcombine.low %v8955, %v8954
      %v9080 = vcombine.low %v8956, %v8958
      %v9081 = vcombine.low %v9004, %v9006
      %v9083 = vunpack.c.l.s4 1966171168
      %v9084 = vunpack.c.0.s8 %v9083
      %v9085 = vlaneseq
      %v9086 = vshrl.u32 %v9085, 7
      %v9087 = vsub.s32 %v9084, %v9086
      %v9088 = vrot.slane %v9078, %v9087
      %v9090 = vunpack.c.l.s4 1966171168
      %v9091 = vunpack.c.0.s8 %v9090
      %v9092 = vlaneseq
      %v9093 = vshrl.u32 %v9092, 7
      %v9094 = vsub.s32 %v9091, %v9093
      %v9095 = vrot.slane %v9079, %v9094
      %v9097 = vunpack.c.l.s4 1966171168
      %v9098 = vunpack.c.0.s8 %v9097
      %v9099 = vlaneseq
      %v9100 = vshrl.u32 %v9099, 7
      %v9101 = vsub.s32 %v9098, %v9100
      %v9102 = vrot.slane %v9080, %v9101
      %v9104 = vunpack.c.l.s4 1966171168
      %v9105 = vunpack.c.0.s8 %v9104
      %v9106 = vlaneseq
      %v9107 = vshrl.u32 %v9106, 7
      %v9108 = vsub.s32 %v9105, %v9107
      %v9109 = vrot.slane %v9081, %v9108
      %v9110 = vcombine.low %v9088, %v9095
      %v9111 = vcombine.low %v9102, %v9109
      %v9113 = vunpack.c.l.s4 1966171168
      %v9114 = vunpack.c.0.s8 %v9113
      %v9115 = vlaneseq
      %v9116 = vshrl.u32 %v9115, 7
      %v9117 = vsub.s32 %v9114, %v9116
      %v9118 = vrot.slane %v9110, %v9117
      %v9120 = vunpack.c.l.s4 1966171168
      %v9121 = vunpack.c.0.s8 %v9120
      %v9122 = vlaneseq
      %v9123 = vshrl.u32 %v9122, 7
      %v9124 = vsub.s32 %v9121, %v9123
      %v9125 = vrot.slane %v9111, %v9124
      %v9126 = vcombine.low %v9118, %v9125
      %v9128 = vunpack.c.l.s4 1966171168
      %v9129 = vunpack.c.0.s8 %v9128
      %v9130 = vlaneseq
      %v9131 = vshrl.u32 %v9130, 7
      %v9132 = vsub.s32 %v9129, %v9131
      %v9133 = vrot.slane %v8989, %v9132
      %v9135 = vunpack.c.l.s4 1966171168
      %v9136 = vunpack.c.0.s8 %v9135
      %v9137 = vlaneseq
      %v9138 = vshrl.u32 %v9137, 7
      %v9139 = vsub.s32 %v9136, %v9138
      %v9140 = vrot.slane %v9133, %v9139
      %v9143 = vpack.c.bf16 %v9140, %v9126
      %v9145 = vunpack.c.l.b16 %v9143
      %v9146 = vunpack.c.h.b16 %v9143
      %v9147 = vpack.c.b16 %v9145, %v9145
      %v9148 = vpack.c.b16 %v9146, %v9146
      %vm9151 = vcmask 125952
      %9152 = vst.msk [vmem:[#allocation4] sm:$0xf] %vm9151, %v9147
      %vm9153 = vcmask 122880
      %vm9154 = vmand %vm9153, %vm1824
      %v9155 = vld [vmem:[#allocation4 + $0x8] sm:$0x1]
      %v9156 = vsel %vm9154, %v9148, %v9155
      %9157 = vst [vmem:[#allocation4 + $0x8] sm:$0x1] %v9156
      %v9158 = vcombine.low %v8947, %v8955
      %v9159 = vcombine.low %v8957, %v8956
      %v9160 = vcombine.low %v8958, %v8982
      %v9161 = vcombine.low %v9006, %v8989
      %v9163 = vunpack.c.l.s4 1966171168
      %v9164 = vunpack.c.0.s8 %v9163
      %v9165 = vlaneseq
      %v9166 = vshrl.u32 %v9165, 7
      %v9167 = vsub.s32 %v9164, %v9166
      %v9168 = vrot.slane %v9158, %v9167
      %v9170 = vunpack.c.l.s4 1966171168
      %v9171 = vunpack.c.0.s8 %v9170
      %v9172 = vlaneseq
      %v9173 = vshrl.u32 %v9172, 7
      %v9174 = vsub.s32 %v9171, %v9173
      %v9175 = vrot.slane %v9159, %v9174
      %v9177 = vunpack.c.l.s4 1966171168
      %v9178 = vunpack.c.0.s8 %v9177
      %v9179 = vlaneseq
      %v9180 = vshrl.u32 %v9179, 7
      %v9181 = vsub.s32 %v9178, %v9180
      %v9182 = vrot.slane %v9160, %v9181
      %v9184 = vunpack.c.l.s4 1966171168
      %v9185 = vunpack.c.0.s8 %v9184
      %v9186 = vlaneseq
      %v9187 = vshrl.u32 %v9186, 7
      %v9188 = vsub.s32 %v9185, %v9187
      %v9189 = vrot.slane %v9161, %v9188
      %v9190 = vcombine.low %v9168, %v9175
      %v9191 = vcombine.low %v9182, %v9189
      %v9193 = vunpack.c.l.s4 1966171168
      %v9194 = vunpack.c.0.s8 %v9193
      %v9195 = vlaneseq
      %v9196 = vshrl.u32 %v9195, 7
      %v9197 = vsub.s32 %v9194, %v9196
      %v9198 = vrot.slane %v9190, %v9197
      %v9200 = vunpack.c.l.s4 1966171168
      %v9201 = vunpack.c.0.s8 %v9200
      %v9202 = vlaneseq
      %v9203 = vshrl.u32 %v9202, 7
      %v9204 = vsub.s32 %v9201, %v9203
      %v9205 = vrot.slane %v9191, %v9204
      %v9206 = vcombine.low %v9198, %v9205
      %v9208 = vunpack.c.l.s4 1966171168
      %v9209 = vunpack.c.0.s8 %v9208
      %v9210 = vlaneseq
      %v9211 = vshrl.u32 %v9210, 7
      %v9212 = vsub.s32 %v9209, %v9211
      %v9213 = vrot.slane %v9003, %v9212
      %v9215 = vunpack.c.l.s4 1966171168
      %v9216 = vunpack.c.0.s8 %v9215
      %v9217 = vlaneseq
      %v9218 = vshrl.u32 %v9217, 7
      %v9219 = vsub.s32 %v9216, %v9218
      %v9220 = vrot.slane %v9213, %v9219
      %v9223 = vpack.c.bf16 %v9220, %v9206
      %v9225 = vunpack.c.l.b16 %v9223
      %v9226 = vunpack.c.h.b16 %v9223
      %v9227 = vpack.c.b16 %v9225, %v9225
      %v9228 = vpack.c.b16 %v9226, %v9226
      %9229 = vrot.lane.b32.xlu0 %v9227, 16
      %v9230 = vpop.permute.xlu0 %9229
      %9231 = vrot.lane.b32.xlu0 %v9228, 16
      %v9232 = vpop.permute.xlu0 %9231
      %vm9235 = vcmask 257152
      %9236 = vst.msk [vmem:[#allocation4] sm:$0xf] %vm9235, %v9230
      %vm9237 = vcmask 254080
      %vm9238 = vmand %vm9237, %vm1824
      %v9239 = vld [vmem:[#allocation4 + $0x8] sm:$0x1]
      %v9240 = vsel %vm9238, %v9232, %v9239
      %9241 = vst [vmem:[#allocation4 + $0x8] sm:$0x1] %v9240
      %v9242 = vcombine.low %v8955, %v8957
      %v9243 = vcombine.low %v8940, %v8958
      %v9244 = vcombine.low %v8982, %v8996
      %v9245 = vcombine.low %v8989, %v9003
      %v9247 = vunpack.c.l.s4 1966171168
      %v9248 = vunpack.c.0.s8 %v9247
      %v9249 = vlaneseq
      %v9250 = vshrl.u32 %v9249, 7
      %v9251 = vsub.s32 %v9248, %v9250
      %v9252 = vrot.slane %v9242, %v9251
      %v9254 = vunpack.c.l.s4 1966171168
      %v9255 = vunpack.c.0.s8 %v9254
      %v9256 = vlaneseq
      %v9257 = vshrl.u32 %v9256, 7
      %v9258 = vsub.s32 %v9255, %v9257
      %v9259 = vrot.slane %v9243, %v9258
      %v9261 = vunpack.c.l.s4 1966171168
      %v9262 = vunpack.c.0.s8 %v9261
      %v9263 = vlaneseq
      %v9264 = vshrl.u32 %v9263, 7
      %v9265 = vsub.s32 %v9262, %v9264
      %v9266 = vrot.slane %v9244, %v9265
      %v9268 = vunpack.c.l.s4 1966171168
      %v9269 = vunpack.c.0.s8 %v9268
      %v9270 = vlaneseq
      %v9271 = vshrl.u32 %v9270, 7
      %v9272 = vsub.s32 %v9269, %v9271
      %v9273 = vrot.slane %v9245, %v9272
      %v9274 = vcombine.low %v9252, %v9259
      %v9275 = vcombine.low %v9266, %v9273
      %v9277 = vunpack.c.l.s4 1966171168
      %v9278 = vunpack.c.0.s8 %v9277
      %v9279 = vlaneseq
      %v9280 = vshrl.u32 %v9279, 7
      %v9281 = vsub.s32 %v9278, %v9280
      %v9282 = vrot.slane %v9274, %v9281
      %v9284 = vunpack.c.l.s4 1966171168
      %v9285 = vunpack.c.0.s8 %v9284
      %v9286 = vlaneseq
      %v9287 = vshrl.u32 %v9286, 7
      %v9288 = vsub.s32 %v9285, %v9287
      %v9289 = vrot.slane %v9275, %v9288
      %v9290 = vcombine.low %v9282, %v9289
      %v9292 = vunpack.c.l.s4 1966171168
      %v9293 = vunpack.c.0.s8 %v9292
      %v9294 = vlaneseq
      %v9295 = vshrl.u32 %v9294, 7
      %v9296 = vsub.s32 %v9293, %v9295
      %v9297 = vrot.slane %v9005, %v9296
      %v9299 = vunpack.c.l.s4 1966171168
      %v9300 = vunpack.c.0.s8 %v9299
      %v9301 = vlaneseq
      %v9302 = vshrl.u32 %v9301, 7
      %v9303 = vsub.s32 %v9300, %v9302
      %v9304 = vrot.slane %v9297, %v9303
      %v9307 = vpack.c.bf16 %v9304, %v9290
      %v9309 = vunpack.c.l.b16 %v9307
      %v9310 = vunpack.c.h.b16 %v9307
      %v9311 = vpack.c.b16 %v9309, %v9309
      %v9312 = vpack.c.b16 %v9310, %v9310
      %9313 = vrot.lane.b32.xlu0 %v9311, 32
      %v9314 = vpop.permute.xlu0 %9313
      %9315 = vrot.lane.b32.xlu0 %v9312, 32
      %v9316 = vpop.permute.xlu0 %9315
      %vm9319 = vcmask 388352
      %9320 = vst.msk [vmem:[#allocation4] sm:$0xf] %vm9319, %v9314
      %vm9321 = vcmask 385280
      %vm9322 = vmand %vm9321, %vm1824
      %v9323 = vld [vmem:[#allocation4 + $0x8] sm:$0x1]
      %v9324 = vsel %vm9322, %v9316, %v9323
      %9325 = vst [vmem:[#allocation4 + $0x8] sm:$0x1] %v9324
      %v9326 = vcombine.low %v8954, %v8956
      %v9327 = vcombine.low %v8958, %v9004
      %v9328 = vcombine.low %v9007, %v9031
      %v9330 = vunpack.c.l.s4 1966171168
      %v9331 = vunpack.c.0.s8 %v9330
      %v9332 = vlaneseq
      %v9333 = vshrl.u32 %v9332, 7
      %v9334 = vsub.s32 %v9331, %v9333
      %v9335 = vrot.slane %v9326, %v9334
      %v9337 = vunpack.c.l.s4 1966171168
      %v9338 = vunpack.c.0.s8 %v9337
      %v9339 = vlaneseq
      %v9340 = vshrl.u32 %v9339, 7
      %v9341 = vsub.s32 %v9338, %v9340
      %v9342 = vrot.slane %v9327, %v9341
      %v9344 = vunpack.c.l.s4 1966171168
      %v9345 = vunpack.c.0.s8 %v9344
      %v9346 = vlaneseq
      %v9347 = vshrl.u32 %v9346, 7
      %v9348 = vsub.s32 %v9345, %v9347
      %v9349 = vrot.slane %v9328, %v9348
      %v9350 = vcombine.low %v9335, %v9342
      %v9351 = vcombine.low %v9189, %v9349
      %v9353 = vunpack.c.l.s4 1966171168
      %v9354 = vunpack.c.0.s8 %v9353
      %v9355 = vlaneseq
      %v9356 = vshrl.u32 %v9355, 7
      %v9357 = vsub.s32 %v9354, %v9356
      %v9358 = vrot.slane %v9350, %v9357
      %v9360 = vunpack.c.l.s4 1966171168
      %v9361 = vunpack.c.0.s8 %v9360
      %v9362 = vlaneseq
      %v9363 = vshrl.u32 %v9362, 7
      %v9364 = vsub.s32 %v9361, %v9363
      %v9365 = vrot.slane %v9351, %v9364
      %v9366 = vcombine.low %v9358, %v9365
      %v9368 = vunpack.c.l.s4 1966171168
      %v9369 = vunpack.c.0.s8 %v9368
      %v9370 = vlaneseq
      %v9371 = vshrl.u32 %v9370, 7
      %v9372 = vsub.s32 %v9369, %v9371
      %v9373 = vrot.slane %v9045, %v9372
      %v9375 = vunpack.c.l.s4 1966171168
      %v9376 = vunpack.c.0.s8 %v9375
      %v9377 = vlaneseq
      %v9378 = vshrl.u32 %v9377, 7
      %v9379 = vsub.s32 %v9376, %v9378
      %v9380 = vrot.slane %v9373, %v9379
      %v9383 = vpack.c.bf16 %v9380, %v9366
      %v9385 = vunpack.c.l.b16 %v9383
      %v9386 = vunpack.c.h.b16 %v9383
      %v9387 = vpack.c.b16 %v9385, %v9385
      %v9388 = vpack.c.b16 %v9386, %v9386
      %9389 = vrot.lane.b32.xlu0 %v9387, 48
      %v9390 = vpop.permute.xlu0 %9389
      %9391 = vrot.lane.b32.xlu0 %v9388, 48
      %v9392 = vpop.permute.xlu0 %9391
      %vm9395 = vcmask 519552
      %9396 = vst.msk [vmem:[#allocation4] sm:$0xf] %vm9395, %v9390
      %vm9397 = vcmask 516480
      %vm9398 = vmand %vm9397, %vm1824
      %v9399 = vld [vmem:[#allocation4 + $0x8] sm:$0x1]
      %v9400 = vsel %vm9398, %v9392, %v9399
      %9401 = vst [vmem:[#allocation4 + $0x8] sm:$0x1] %v9400
      %v9402 = vcombine.low %v8982, %v9006
      %v9403 = vcombine.low %v9031, %v9045
      %v9405 = vunpack.c.l.s4 1966171168
      %v9406 = vunpack.c.0.s8 %v9405
      %v9407 = vlaneseq
      %v9408 = vshrl.u32 %v9407, 7
      %v9409 = vsub.s32 %v9406, %v9408
      %v9410 = vrot.slane %v9402, %v9409
      %v9412 = vunpack.c.l.s4 1966171168
      %v9413 = vunpack.c.0.s8 %v9412
      %v9414 = vlaneseq
      %v9415 = vshrl.u32 %v9414, 7
      %v9416 = vsub.s32 %v9413, %v9415
      %v9417 = vrot.slane %v9403, %v9416
      %v9418 = vcombine.low %v9102, %v9410
      %v9419 = vcombine.low %v9273, %v9417
      %v9421 = vunpack.c.l.s4 1966171168
      %v9422 = vunpack.c.0.s8 %v9421
      %v9423 = vlaneseq
      %v9424 = vshrl.u32 %v9423, 7
      %v9425 = vsub.s32 %v9422, %v9424
      %v9426 = vrot.slane %v9418, %v9425
      %v9428 = vunpack.c.l.s4 1966171168
      %v9429 = vunpack.c.0.s8 %v9428
      %v9430 = vlaneseq
      %v9431 = vshrl.u32 %v9430, 7
      %v9432 = vsub.s32 %v9429, %v9431
      %v9433 = vrot.slane %v9419, %v9432
      %v9434 = vcombine.low %v9426, %v9433
      %v9436 = vunpack.c.l.s4 1966171168
      %v9437 = vunpack.c.0.s8 %v9436
      %v9438 = vlaneseq
      %v9439 = vshrl.u32 %v9438, 7
      %v9440 = vsub.s32 %v9437, %v9439
      %v9441 = vrot.slane %v9053, %v9440
      %v9443 = vunpack.c.l.s4 1966171168
      %v9444 = vunpack.c.0.s8 %v9443
      %v9445 = vlaneseq
      %v9446 = vshrl.u32 %v9445, 7
      %v9447 = vsub.s32 %v9444, %v9446
      %v9448 = vrot.slane %v9441, %v9447
      %v9451 = vpack.c.bf16 %v9448, %v9434
      %v9453 = vunpack.c.l.b16 %v9451
      %v9454 = vunpack.c.h.b16 %v9451
      %v9455 = vpack.c.b16 %v9453, %v9453
      %v9456 = vpack.c.b16 %v9454, %v9454
      %9457 = vrot.lane.b32.xlu0 %v9455, 64
      %v9458 = vpop.permute.xlu0 %9457
      %9459 = vrot.lane.b32.xlu0 %v9456, 64
      %v9460 = vpop.permute.xlu0 %9459
      %vm9463 = vcmask 650752
      %9464 = vst.msk [vmem:[#allocation4] sm:$0xf] %vm9463, %v9458
      %vm9465 = vcmask 647680
      %vm9466 = vmand %vm9465, %vm1824
      %v9467 = vld [vmem:[#allocation4 + $0x8] sm:$0x1]
      %v9468 = vsel %vm9466, %v9460, %v9467
      %9469 = vst [vmem:[#allocation4 + $0x8] sm:$0x1] %v9468
      %v9470 = vcombine.low %v8996, %v8989
      %v9471 = vcombine.low %v9003, %v9005
      %v9472 = vcombine.low %v9045, %v9053
      %v9474 = vunpack.c.l.s4 1966171168
      %v9475 = vunpack.c.0.s8 %v9474
      %v9476 = vlaneseq
      %v9477 = vshrl.u32 %v9476, 7
      %v9478 = vsub.s32 %v9475, %v9477
      %v9479 = vrot.slane %v9470, %v9478
      %v9481 = vunpack.c.l.s4 1966171168
      %v9482 = vunpack.c.0.s8 %v9481
      %v9483 = vlaneseq
      %v9484 = vshrl.u32 %v9483, 7
      %v9485 = vsub.s32 %v9482, %v9484
      %v9486 = vrot.slane %v9471, %v9485
      %v9488 = vunpack.c.l.s4 1966171168
      %v9489 = vunpack.c.0.s8 %v9488
      %v9490 = vlaneseq
      %v9491 = vshrl.u32 %v9490, 7
      %v9492 = vsub.s32 %v9489, %v9491
      %v9493 = vrot.slane %v9472, %v9492
      %v9494 = vcombine.low %v9182, %v9479
      %v9495 = vcombine.low %v9486, %v9493
      %v9497 = vunpack.c.l.s4 1966171168
      %v9498 = vunpack.c.0.s8 %v9497
      %v9499 = vlaneseq
      %v9500 = vshrl.u32 %v9499, 7
      %v9501 = vsub.s32 %v9498, %v9500
      %v9502 = vrot.slane %v9494, %v9501
      %v9504 = vunpack.c.l.s4 1966171168
      %v9505 = vunpack.c.0.s8 %v9504
      %v9506 = vlaneseq
      %v9507 = vshrl.u32 %v9506, 7
      %v9508 = vsub.s32 %v9505, %v9507
      %v9509 = vrot.slane %v9495, %v9508
      %v9510 = vcombine.low %v9502, %v9509
      %v9512 = vunpack.c.l.s4 1966171168
      %v9513 = vunpack.c.0.s8 %v9512
      %v9514 = vlaneseq
      %v9515 = vshrl.u32 %v9514, 7
      %v9516 = vsub.s32 %v9513, %v9515
      %v9517 = vrot.slane %v9055, %v9516
      %v9519 = vunpack.c.l.s4 1966171168
      %v9520 = vunpack.c.0.s8 %v9519
      %v9521 = vlaneseq
      %v9522 = vshrl.u32 %v9521, 7
      %v9523 = vsub.s32 %v9520, %v9522
      %v9524 = vrot.slane %v9517, %v9523
      %v9527 = vpack.c.bf16 %v9524, %v9510
      %v9529 = vunpack.c.l.b16 %v9527
      %v9530 = vunpack.c.h.b16 %v9527
      %v9531 = vpack.c.b16 %v9529, %v9529
      %v9532 = vpack.c.b16 %v9530, %v9530
      %9533 = vrot.lane.b32.xlu0 %v9531, 80
      %v9534 = vpop.permute.xlu0 %9533
      %9535 = vrot.lane.b32.xlu0 %v9532, 80
      %v9536 = vpop.permute.xlu0 %9535
      %vm9539 = vcmask 781952
      %9540 = vst.msk [vmem:[#allocation4] sm:$0xf] %vm9539, %v9534
      %vm9541 = vcmask 778880
      %vm9542 = vmand %vm9541, %vm1824
      %v9543 = vld [vmem:[#allocation4 + $0x8] sm:$0x1]
      %v9544 = vsel %vm9542, %v9536, %v9543
      %9545 = vst [vmem:[#allocation4 + $0x8] sm:$0x1] %v9544
      %v9546 = vcombine.low %v8989, %v9007
      %v9547 = vcombine.low %v9038, %v9052
      %v9549 = vunpack.c.l.s4 1966171168
      %v9550 = vunpack.c.0.s8 %v9549
      %v9551 = vlaneseq
      %v9552 = vshrl.u32 %v9551, 7
      %v9553 = vsub.s32 %v9550, %v9552
      %v9554 = vrot.slane %v9546, %v9553
      %v9556 = vunpack.c.l.s4 1966171168
      %v9557 = vunpack.c.0.s8 %v9556
      %v9558 = vlaneseq
      %v9559 = vshrl.u32 %v9558, 7
      %v9560 = vsub.s32 %v9557, %v9559
      %v9561 = vrot.slane %v9547, %v9560
      %v9562 = vcombine.low %v9109, %v9554
      %v9563 = vcombine.low %v9417, %v9561
      %v9565 = vunpack.c.l.s4 1966171168
      %v9566 = vunpack.c.0.s8 %v9565
      %v9567 = vlaneseq
      %v9568 = vshrl.u32 %v9567, 7
      %v9569 = vsub.s32 %v9566, %v9568
      %v9570 = vrot.slane %v9562, %v9569
      %v9572 = vunpack.c.l.s4 1966171168
      %v9573 = vunpack.c.0.s8 %v9572
      %v9574 = vlaneseq
      %v9575 = vshrl.u32 %v9574, 7
      %v9576 = vsub.s32 %v9573, %v9575
      %v9577 = vrot.slane %v9563, %v9576
      %v9578 = vcombine.low %v9570, %v9577
      %v9580 = vunpack.c.l.s4 1966171168
      %v9581 = vunpack.c.0.s8 %v9580
      %v9582 = vlaneseq
      %v9583 = vshrl.u32 %v9582, 7
      %v9584 = vsub.s32 %v9581, %v9583
      %v9585 = vrot.slane %v9054, %v9584
      %v9587 = vunpack.c.l.s4 1966171168
      %v9588 = vunpack.c.0.s8 %v9587
      %v9589 = vlaneseq
      %v9590 = vshrl.u32 %v9589, 7
      %v9591 = vsub.s32 %v9588, %v9590
      %v9592 = vrot.slane %v9585, %v9591
      %v9595 = vpack.c.bf16 %v9592, %v9578
      %v9597 = vunpack.c.l.b16 %v9595
      %v9598 = vunpack.c.h.b16 %v9595
      %v9599 = vpack.c.b16 %v9597, %v9597
      %v9600 = vpack.c.b16 %v9598, %v9598
      %9601 = vrot.lane.b32.xlu0 %v9599, 96
      %v9602 = vpop.permute.xlu0 %9601
      %9603 = vrot.lane.b32.xlu0 %v9600, 96
      %v9604 = vpop.permute.xlu0 %9603
      %vm9607 = vcmask 913152
      %9608 = vst.msk [vmem:[#allocation4] sm:$0xf] %vm9607, %v9602
      %vm9609 = vcmask 910080
      %vm9610 = vmand %vm9609, %vm1824
      %v9611 = vld [vmem:[#allocation4 + $0x8] sm:$0x1]
      %v9612 = vsel %vm9610, %v9604, %v9611
      %9613 = vst [vmem:[#allocation4 + $0x8] sm:$0x1] %v9612
      %v9614 = vcombine.low %v9003, %v9031
      %v9615 = vcombine.low %v9052, %v9054
      %v9617 = vunpack.c.l.s4 1966171168
      %v9618 = vunpack.c.0.s8 %v9617
      %v9619 = vlaneseq
      %v9620 = vshrl.u32 %v9619, 7
      %v9621 = vsub.s32 %v9618, %v9620
      %v9622 = vrot.slane %v9614, %v9621
      %v9624 = vunpack.c.l.s4 1966171168
      %v9625 = vunpack.c.0.s8 %v9624
      %v9626 = vlaneseq
      %v9627 = vshrl.u32 %v9626, 7
      %v9628 = vsub.s32 %v9625, %v9627
      %v9629 = vrot.slane %v9615, %v9628
      %v9630 = vcombine.low %v9189, %v9622
      %v9631 = vcombine.low %v9493, %v9629
      %v9633 = vunpack.c.l.s4 1966171168
      %v9634 = vunpack.c.0.s8 %v9633
      %v9635 = vlaneseq
      %v9636 = vshrl.u32 %v9635, 7
      %v9637 = vsub.s32 %v9634, %v9636
      %v9638 = vrot.slane %v9630, %v9637
      %v9640 = vunpack.c.l.s4 1966171168
      %v9641 = vunpack.c.0.s8 %v9640
      %v9642 = vlaneseq
      %v9643 = vshrl.u32 %v9642, 7
      %v9644 = vsub.s32 %v9641, %v9643
      %v9645 = vrot.slane %v9631, %v9644
      %v9646 = vcombine.low %v9638, %v9645
      %v9648 = vunpack.c.l.s4 1966171168
      %v9649 = vunpack.c.0.s8 %v9648
      %v9650 = vlaneseq
      %v9651 = vshrl.u32 %v9650, 7
      %v9652 = vsub.s32 %v9649, %v9651
      %v9653 = vrot.slane %v9056, %v9652
      %v9655 = vunpack.c.l.s4 1966171168
      %v9656 = vunpack.c.0.s8 %v9655
      %v9657 = vlaneseq
      %v9658 = vshrl.u32 %v9657, 7
      %v9659 = vsub.s32 %v9656, %v9658
      %v9660 = vrot.slane %v9653, %v9659
      %v9663 = vpack.c.bf16 %v9660, %v9646
      %v9665 = vunpack.c.l.b16 %v9663
      %v9666 = vunpack.c.h.b16 %v9663
      %v9667 = vpack.c.b16 %v9665, %v9665
      %v9668 = vpack.c.b16 %v9666, %v9666
      %9669 = vrot.lane.b32.xlu0 %v9667, 112
      %v9670 = vpop.permute.xlu0 %9669
      %9671 = vrot.lane.b32.xlu0 %v9668, 112
      %v9672 = vpop.permute.xlu0 %9671
      %vm9675 = vcmask 1044352
      %9676 = vst.msk [vmem:[#allocation4] sm:$0xf] %vm9675, %v9670
      %vm9677 = vcmask 1041280
      %vm9678 = vmand %vm9677, %vm1824
      %v9679 = vld [vmem:[#allocation4 + $0x8] sm:$0x1]
      %v9680 = vsel %vm9678, %v9672, %v9679
      %9681 = vst [vmem:[#allocation4 + $0x8] sm:$0x1] %v9680
      %v9682 = vcombine.low %v9005, %v9045
      %v9683 = vcombine.low %v9053, %v9055
      %v9684 = vcombine.low %v9054, %v9056
      %v9686 = vunpack.c.l.s4 1966171168
      %v9687 = vunpack.c.0.s8 %v9686
      %v9688 = vlaneseq
      %v9689 = vshrl.u32 %v9688, 7
      %v9690 = vsub.s32 %v9687, %v9689
      %v9691 = vrot.slane %v9682, %v9690
      %v9693 = vunpack.c.l.s4 1966171168
      %v9694 = vunpack.c.0.s8 %v9693
      %v9695 = vlaneseq
      %v9696 = vshrl.u32 %v9695, 7
      %v9697 = vsub.s32 %v9694, %v9696
      %v9698 = vrot.slane %v9683, %v9697
      %v9700 = vunpack.c.l.s4 1966171168
      %v9701 = vunpack.c.0.s8 %v9700
      %v9702 = vlaneseq
      %v9703 = vshrl.u32 %v9702, 7
      %v9704 = vsub.s32 %v9701, %v9703
      %v9705 = vrot.slane %v9684, %v9704
      %v9706 = vcombine.low %v9273, %v9691
      %v9707 = vcombine.low %v9698, %v9705
      %v9709 = vunpack.c.l.s4 1966171168
      %v9710 = vunpack.c.0.s8 %v9709
      %v9711 = vlaneseq
      %v9712 = vshrl.u32 %v9711, 7
      %v9713 = vsub.s32 %v9710, %v9712
      %v9714 = vrot.slane %v9706, %v9713
      %v9716 = vunpack.c.l.s4 1966171168
      %v9717 = vunpack.c.0.s8 %v9716
      %v9718 = vlaneseq
      %v9719 = vshrl.u32 %v9718, 7
      %v9720 = vsub.s32 %v9717, %v9719
      %v9721 = vrot.slane %v9707, %v9720
      %v9722 = vcombine.low %v9714, %v9721
      %v9724 = vunpack.c.l.s4 1966171168
      %v9725 = vunpack.c.0.s8 %v9724
      %v9726 = vlaneseq
      %v9727 = vshrl.u32 %v9726, 7
      %v9728 = vsub.s32 %v9725, %v9727
      %v9729 = vrot.slane %v9070, %v9728
      %v9731 = vunpack.c.l.s4 1966171168
      %v9732 = vunpack.c.0.s8 %v9731
      %v9733 = vlaneseq
      %v9734 = vshrl.u32 %v9733, 7
      %v9735 = vsub.s32 %v9732, %v9734
      %v9736 = vrot.slane %v9729, %v9735
      %v9739 = vpack.c.bf16 %v9736, %v9722
      %v9741 = vunpack.c.l.b16 %v9739
      %v9742 = vunpack.c.h.b16 %v9739
      %v9743 = vpack.c.b16 %v9741, %v9741
      %v9744 = vpack.c.b16 %v9742, %v9742
      %9747 = vst.msk [vmem:[#allocation4 + $0x4] sm:$0xf] %vm9151, %v9743
      %v9748 = vld [vmem:[#allocation4 + $0xc] sm:$0x1]
      %v9749 = vsel %vm9154, %v9744, %v9748
      %9750 = vst [vmem:[#allocation4 + $0xc] sm:$0x1] %v9749
      %v9751 = vld [vmem:[#allocation4] sm:$0xff]
      %v9752 = vld [vmem:[#allocation4 + $0x8] sm:$0x11]
      %v9753 = vld [vmem:[%s7] sm:$0xf]
      %v9754 = vld [vmem:[%s7 + $0x4] sm:$0xf]
      %v9755 = vld [vmem:[%s7 + $0x8] sm:$0xf]
      %v9756 = vld [vmem:[%s7 + $0xc] sm:$0xf]
      %v9757 = vld [vmem:[%s7 + $0x10] sm:$0xf]
      %v9758 = vld [vmem:[%s7 + $0x14] sm:$0xf]
      %v9759 = vld [vmem:[%s7 + $0x18] sm:$0xf]
      %v9760 = vld [vmem:[%s7 + $0x1c] sm:$0xf]
      %v9761 = vld [vmem:[%s7 + $0x20] sm:$0xf]
      %v9762 = vld [vmem:[%s7 + $0x24] sm:$0xf]
      %v9763 = vld [vmem:[%s7 + $0x28] sm:$0xf]
      %v9764 = vld [vmem:[%s7 + $0x2c] sm:$0xf]
      %v9765 = vld [vmem:[%s7 + $0x30] sm:$0xf]
      %v9766 = vld [vmem:[%s7 + $0x34] sm:$0xf]
      %v9767 = vld [vmem:[%s7 + $0x38] sm:$0xf]
      %v9768 = vld [vmem:[%s7 + $0x3c] sm:$0xf]
      %v9769 = vld [vmem:[%s7 + $0x40] sm:$0xf]
      %v9770 = vld [vmem:[%s7 + $0x44] sm:$0xf]
      %v9771 = vld [vmem:[%s7 + $0x48] sm:$0xf]
      %v9772 = vld [vmem:[%s7 + $0x4c] sm:$0xf]
      %v9773 = vld [vmem:[%s7 + $0x50] sm:$0xf]
      %v9774 = vld [vmem:[%s7 + $0x54] sm:$0xf]
      %v9775 = vld [vmem:[%s7 + $0x58] sm:$0xf]
      %v9776 = vld [vmem:[%s7 + $0x5c] sm:$0xf]
      %v9777 = vld [vmem:[%s7 + $0x60] sm:$0xf]
      %v9778 = vld [vmem:[%s7 + $0x64] sm:$0xf]
      %v9779 = vld [vmem:[%s7 + $0x68] sm:$0xf]
      %v9780 = vld [vmem:[%s7 + $0x6c] sm:$0xf]
      %v9781 = vld [vmem:[%s7 + $0x70] sm:$0xf]
      %v9782 = vld [vmem:[%s7 + $0x74] sm:$0xf]
      %v9783 = vld [vmem:[%s7 + $0x78] sm:$0xf]
      %v9784 = vld [vmem:[%s7 + $0x7c] sm:$0xf]
      %v9785 = vld [vmem:[%s8] sm:$0x1]
      %v9787 = vlaneseq
      %v9788 = vshrl.u32 %v9787, 7
      %v9789 = vsub.s32 0, %v9788
      %v9790 = vrot.slane %v9785, %v9789
      %v9794 = vunpack.c.l.b16 %v9751
      %v9795 = vunpack.c.h.b16 %v9751
      %v9796 = vunpack.c.l.b16 %v9752
      %v9797 = vunpack.c.h.b16 %v9752
      %v9798 = vpack.c.b16 %v9796, %v9794
      %v9799 = vpack.c.b16 %v9797, %v9795
      %v9834 = vunpack.c.l.b16 %v9753
      %v9835 = vunpack.c.l.b16 %v9754
      %v9836 = vunpack.c.l.b16 %v9755
      %v9837 = vunpack.c.l.b16 %v9756
      %v9838 = vunpack.c.l.b16 %v9757
      %v9839 = vunpack.c.l.b16 %v9758
      %v9840 = vunpack.c.l.b16 %v9759
      %v9841 = vunpack.c.l.b16 %v9760
      %v9842 = vunpack.c.l.b16 %v9761
      %v9843 = vunpack.c.l.b16 %v9762
      %v9844 = vunpack.c.l.b16 %v9763
      %v9845 = vunpack.c.l.b16 %v9764
      %v9846 = vunpack.c.l.b16 %v9765
      %v9847 = vunpack.c.l.b16 %v9766
      %v9848 = vunpack.c.l.b16 %v9767
      %v9849 = vunpack.c.l.b16 %v9768
      %v9850 = vunpack.c.l.b16 %v9769
      %v9851 = vunpack.c.l.b16 %v9770
      %v9852 = vunpack.c.l.b16 %v9771
      %v9853 = vunpack.c.l.b16 %v9772
      %v9854 = vunpack.c.l.b16 %v9773
      %v9855 = vunpack.c.l.b16 %v9774
      %v9856 = vunpack.c.l.b16 %v9775
      %v9857 = vunpack.c.l.b16 %v9776
      %v9858 = vunpack.c.l.b16 %v9777
      %v9859 = vunpack.c.l.b16 %v9778
      %v9860 = vunpack.c.l.b16 %v9779
      %v9861 = vunpack.c.l.b16 %v9780
      %v9862 = vunpack.c.l.b16 %v9781
      %v9863 = vunpack.c.l.b16 %v9782
      %v9864 = vunpack.c.l.b16 %v9783
      %v9865 = vunpack.c.l.b16 %v9784
      %v9866 = vpack.c.b16 %v9835, %v9834
      %v9867 = vpack.c.b16 %v9837, %v9836
      %v9868 = vpack.c.b16 %v9839, %v9838
      %v9869 = vpack.c.b16 %v9841, %v9840
      %v9870 = vpack.c.b16 %v9843, %v9842
      %v9871 = vpack.c.b16 %v9845, %v9844
      %v9872 = vpack.c.b16 %v9847, %v9846
      %v9873 = vpack.c.b16 %v9849, %v9848
      %v9874 = vpack.c.b16 %v9851, %v9850
      %v9875 = vpack.c.b16 %v9853, %v9852
      %v9876 = vpack.c.b16 %v9855, %v9854
      %v9877 = vpack.c.b16 %v9857, %v9856
      %v9878 = vpack.c.b16 %v9859, %v9858
      %v9879 = vpack.c.b16 %v9861, %v9860
      %v9880 = vpack.c.b16 %v9863, %v9862
      %v9881 = vpack.c.b16 %v9865, %v9864
      %9898 = vmatprep.subr.bf16.mxu0 0
      %9899 = vmatpush1.bf16.msra.mxu0 %v9866
      %9900 = vmatprep.subr.bf16.mxu0 0
      %9901 = vmatpush1.bf16.msra.mxu0 %v9867
      %9902 = vmatprep.subr.bf16.mxu0 0
      %9903 = vmatpush1.bf16.msra.mxu0 %v9868
      %9904 = vmatprep.subr.bf16.mxu0 0
      %9905 = vmatpush1.bf16.msra.mxu0 %v9869
      %9906 = vmatprep.subr.bf16.mxu0 0
      %9907 = vmatpush1.bf16.msra.mxu0 %v9870
      %9908 = vmatprep.subr.bf16.mxu0 0
      %9909 = vmatpush1.bf16.msra.mxu0 %v9871
      %9910 = vmatprep.subr.bf16.mxu0 0
      %9911 = vmatpush1.bf16.msra.mxu0 %v9872
      %9912 = vmatprep.subr.bf16.mxu0 0
      %9913 = vmatpush1.bf16.msra.mxu0 %v9873
      %9914 = vmatprep.subr.bf16.mxu0 0
      %9915 = vmatpush1.bf16.msra.mxu0 %v9874
      %9916 = vmatprep.subr.bf16.mxu0 0
      %9917 = vmatpush1.bf16.msra.mxu0 %v9875
      %9918 = vmatprep.subr.bf16.mxu0 0
      %9919 = vmatpush1.bf16.msra.mxu0 %v9876
      %9920 = vmatprep.subr.bf16.mxu0 0
      %9921 = vmatpush1.bf16.msra.mxu0 %v9877
      %9922 = vmatprep.subr.bf16.mxu0 0
      %9923 = vmatpush1.bf16.msra.mxu0 %v9878
      %9924 = vmatprep.subr.bf16.mxu0 0
      %9925 = vmatpush1.bf16.msra.mxu0 %v9879
      %9926 = vmatprep.subr.bf16.mxu0 0
      %9927 = vmatpush1.bf16.msra.mxu0 %v9880
      %9928 = vmatprep.subr.bf16.mxu0 0
      %9929 = vmatpush1.bf16.msra.mxu0 %v9881
      %9930 = vmatprep.mubr.bf16.mxu0 %v9799
      %9931 = vmatmul.mubr.bf16.gmra.mrb[0].mxu0 %v9798
      %v9932 = vpop.f32.mrb[0].mxu0
      %v9933 = vadd.f32 %v9790, %v9932
      %v9934 = vpop.f32.mrb[0].mxu0
      %v9935 = vpop.f32.mrb[0].mxu0
      %v9936 = vadd.f32 %v9790, %v9935
      %v9937 = vpop.f32.mrb[0].mxu0
      %9938 = vdwg.mxu0
      %v9939 = vld [vmem:[%s9] sm:$0x1]
      %vm9940 = vcmp.gt.f32.partialorder %v9933, 0.0
      %vm9941 = vcmp.gt.f32.partialorder %v9936, 0.0
      %v9943 = vlaneseq
      %v9944 = vshrl.u32 %v9943, 7
      %v9945 = vsub.s32 0, %v9944
      %v9946 = vrot.slane %v9939, %v9945
      %v9948 = vmul.f32 %v9933, %v9946
      %v9949 = vmul.f32 %v9936, %v9946
      %v9950 = vsel %vm9940, %v9933, %v9948
      %v9951 = vsel %vm9941, %v9936, %v9949
      %v9952 = vpack.c.bf16 %v9951, %v9950
      %v9953 = vld [vmem:[%s10] sm:$0xf]
      %v9954 = vld [vmem:[%s10 + $0x4] sm:$0xf]
      %v9955 = vld [vmem:[%s10 + $0x8] sm:$0xf]
      %v9956 = vld [vmem:[%s10 + $0xc] sm:$0xf]
      %v9957 = vld [vmem:[%s11] sm:$0x1]
      %v9959 = vlaneseq
      %v9960 = vshrl.u32 %v9959, 7
      %v9961 = vsub.s32 0, %v9960
      %v9962 = vrot.slane %v9957, %v9961
      %v9968 = vunpack.c.l.b16 %v9953
      %v9969 = vunpack.c.l.b16 %v9954
      %v9970 = vunpack.c.l.b16 %v9955
      %v9971 = vunpack.c.l.b16 %v9956
      %v9972 = vpack.c.b16 %v9969, %v9968
      %v9973 = vpack.c.b16 %v9971, %v9970
      %v9977 = vsel %vm6797, %v9952, 0
      %9979 = vmatprep.subr.bf16.mxu0 0
      %9980 = vmatpush1.bf16.msra.mxu0 %v9972
      %9981 = vmatprep.subr.bf16.mxu0 0
      %9982 = vmatpush1.bf16.msra.mxu0 %v9973
      %9983 = vmatprep.subr.bf16.mxu0 0
      %9984 = vmatpush1.bf16.msra.mxu0 0
      %9985 = vmatprep.subr.bf16.mxu0 0
      %9986 = vmatpush1.bf16.msra.mxu0 0
      %9987 = vmatprep.subr.bf16.mxu0 0
      %9988 = vmatpush1.bf16.msra.mxu0 0
      %9989 = vmatprep.subr.bf16.mxu0 0
      %9990 = vmatpush1.bf16.msra.mxu0 0
      %9991 = vmatprep.subr.bf16.mxu0 0
      %9992 = vmatpush1.bf16.msra.mxu0 0
      %9993 = vmatprep.subr.bf16.mxu0 0
      %9994 = vmatpush1.bf16.msra.mxu0 0
      %9995 = vmatprep.subr.bf16.mxu0 0
      %9996 = vmatpush1.bf16.msra.mxu0 0
      %9997 = vmatprep.subr.bf16.mxu0 0
      %9998 = vmatpush1.bf16.msra.mxu0 0
      %9999 = vmatprep.subr.bf16.mxu0 0
      %10000 = vmatpush1.bf16.msra.mxu0 0
      %10001 = vmatprep.subr.bf16.mxu0 0
      %10002 = vmatpush1.bf16.msra.mxu0 0
      %10003 = vmatprep.subr.bf16.mxu0 0
      %10004 = vmatpush1.bf16.msra.mxu0 0
      %10005 = vmatprep.subr.bf16.mxu0 0
      %10006 = vmatpush1.bf16.msra.mxu0 0
      %10007 = vmatprep.subr.bf16.mxu0 0
      %10008 = vmatpush1.bf16.msra.mxu0 0
      %10009 = vmatprep.subr.bf16.mxu0 0
      %10010 = vmatpush1.bf16.msra.mxu0 0
      %10011 = vmatprep.mubr.bf16.mxu0 0
      %10012 = vmatmul.mubr.bf16.gmra.mrb[0].mxu0 %v9977
      %v10013 = vpop.f32.mrb[0].mxu0
      %v10014 = vadd.f32 %v9962, %v10013
      %v10015 = vpop.f32.mrb[0].mxu0
      %v10016 = vpop.f32.mrb[0].mxu0
      %v10017 = vadd.f32 %v9962, %v10016
      %v10018 = vpop.f32.mrb[0].mxu0
      %10019 = vdwg.mxu0
      %10020 = vxpose.xlu0.b32.start [1/16] %v10014, 128
      %10021 = vxpose.xlu0.b32.cont [2/16] %v10017, 128
      %10022 = vxpose.xlu0.b32.cont [3/16] 0.0, 128
      %10023 = vxpose.xlu0.b32.cont [4/16] 0.0, 128
      %10024 = vxpose.xlu0.b32.cont [5/16] 0.0, 128
      %10025 = vxpose.xlu0.b32.cont [6/16] 0.0, 128
      %10026 = vxpose.xlu0.b32.cont [7/16] 0.0, 128
      %10027 = vxpose.xlu0.b32.cont [8/16] 0.0, 128
      %10028 = vxpose.xlu0.b32.cont [9/16] 0.0, 128
      %10029 = vxpose.xlu0.b32.cont [10/16] 0.0, 128
      %10030 = vxpose.xlu0.b32.cont [11/16] 0.0, 128
      %10031 = vxpose.xlu0.b32.cont [12/16] 0.0, 128
      %10032 = vxpose.xlu0.b32.cont [13/16] 0.0, 128
      %10033 = vxpose.xlu0.b32.cont [14/16] 0.0, 128
      %10034 = vxpose.xlu0.b32.cont [15/16] 0.0, 128
      %10035 = vxpose.xlu0.b32.end [16/16] 0.0, 128
      %v10036 = vpop.trf.xlu0
      %v10037 = vpop.trf.xlu0
      %v10038 = vpop.trf.xlu0
      %v10039 = vpop.trf.xlu0
      %v10040 = vpop.trf.xlu0
      %v10041 = vpop.trf.xlu0
      %v10042 = vpop.trf.xlu0
      %v10043 = vpop.trf.xlu0
      %v10044 = vpop.trf.xlu0
      %v10045 = vpop.trf.xlu0
      %v10046 = vpop.trf.xlu0
      %v10047 = vpop.trf.xlu0
      %v10048 = vpop.trf.xlu0
      %v10049 = vpop.trf.xlu0
      %v10050 = vpop.trf.xlu0
      %v10051 = vpop.trf.xlu0
      %vm10052 = vcmask 66560
      %v10053 = vsel %vm10052, %v10036, -inf
      %10054 = vmax.xlane.f32.xlu0 %v10053
      %v10055 = vpop.xlane.xlu0 %10054
      %vm10056 = vcmask 1041408
      %v10057 = vsel %vm10056, %v10055, -inf
      %v10058 = vrot.slane %v10057, 4
      %v10059 = vmax.f32 %v10057, %v10058
      %v10060 = vrot.slane %v10059, 2
      %v10061 = vmax.f32 %v10059, %v10060
      %v10062 = vrot.slane %v10061, 1
      %v10063 = vmax.f32 %v10061, %v10062
      %v10064 = vsub.f32 %v10036, %v10063
      %v10065 = vmul.f32 %v10064, 1.442695
      %v10066 = vpow.pop %v10065
      %v10067 = vsel %vm10052, %v10066, 0.0
      %10068 = vadd.xlane.f32.xlu0 %v10067
      %v10069 = vpop.xlane.xlu0 %10068
      %v10070 = vsel %vm10056, %v10069, 0.0
      %v10071 = vrot.slane %v10070, 4
      %v10072 = vadd.f32 %v10070, %v10071
      %v10073 = vrot.slane %v10072, 2
      %v10074 = vadd.f32 %v10072, %v10073
      %v10075 = vrot.slane %v10074, 1
      %v10076 = vadd.f32 %v10074, %v10075
      %v10077 = vrcp.pop %v10076
      %v10078 = vmul.f32 %v10066, %v10077
      %v10079 = vsel %vm10056, %v10078, %v10036
      %vm10080 = vcmask 72704
      %v10081 = vsel %vm10080, %v10079, 0.0
      %v10082 = vsel %vm10080, %v10037, 0.0
      %10083 = vst [vmem:[%s413] sm:$0xff] %v10081
      %10084 = vst [vmem:[%s413 + $0x8] sm:$0xff] %v10082
      %p10085 = scmp.lt.s32.totalorder %s23, 1
      %s10086 = scalar_select %p10085, %s23, 1
      %s10087 = smul.addr %s10086, 2
      %s10088 = smul.addr %s10087, 8
      %s10089 = scalar_lea.vmem %s12, %s10088
      // Predicated region
      $region69: #{pnet_forward.1} parent=67 // pred_check
        %p10090 = pneg %p298
      $region70: #{pnet_forward.1} parent=67 // pred_check_branch
        %10092 = sbr.rel (%p10090) target = $region72
      $region71: #{pnet_forward.1} parent=67 // pred_region
        _
      $region72: #{pnet_forward.1} parent=67 // pred_fallthru
        _
    $region68: #{pnet_forward.1} parent=5 // pred_fallthru
      _
    %p10093 = scmp.le.s32.totalorder 2, %s18
    // Predicated region
    $region73: #{pnet_forward.1} parent=5 // pred_check
      %p10094 = pneg %p10093
    $region74: #{pnet_forward.1} parent=5 // pred_check_branch
      %10096 = sbr.rel (%p10094) target = $region76
    $region75: #{pnet_forward.1} parent=5 // pred_region
      %s10097 = ssub.s32 %s18, 2
      // Predicated region
      $region77: #{pnet_forward.1} parent=75 // pred_check
        %p10098 = pneg %p304
      $region78: #{pnet_forward.1} parent=75 // pred_check_branch
        %10100 = sbr.rel (%p10098) target = $region80
      $region79: #{pnet_forward.1} parent=75 // pred_region
        %p10101 = scmp.lt.s32.totalorder %s24, 1
        %s10102 = scalar_select %p10101, %s24, 1
        %s10103 = smul.addr %s10102, 2
        %s10104 = smul.addr %s10103, 8
        %s10105 = scalar_lea.vmem %s12, %s10104
      $region80: #{pnet_forward.1} parent=75 // pred_fallthru
        _
    $region76: #{pnet_forward.1} parent=5 // pred_fallthru
      _
  $region6: #{pnet_forward.1} parent=0 // loop_footer
    %s22 = sadd.s32 1, %s18
  $region7: #{pnet_forward.1} parent=0 // loop_footer_branch
    %17 = sbr.rel target = $region3
  $region8: #{pnet_forward.1} parent=0 // loop_exit
    _

</llo_original>
